<compile_context>
chip_gen: v7x
topology: tpu7x:2x2x1
jax: 0.10.0
libtpu: 0.0.40
codegen_flags: <defaults>
</compile_context>

<pallas_src>
import functools

import jax
import jax.numpy as jnp
from jax.experimental import pallas as pl
from jax.experimental.pallas import tpu as pltpu


# ---------------------------------------------------------------------------
# Fused stage kernel: L x (3x3 conv + bias + ReLU)  [+ 2x2/2 max-pool]
# ---------------------------------------------------------------------------
def _stage_kernel(x_ref, w0_ref, wr_ref, b_ref, *rest,
                  H, W, C, Cin, L, pool, fold, TM):
    """Grid is (N, L): one image per outer step, one conv layer per inner step.

    x_ref  : (H, W, Cin)          stage input (batch dim squeezed), f32
    w0_ref : (9, Cin, C)          layer-0 weights [(dy,dx), cin, cout], bf16, VMEM-resident
    wr_ref : fold : (L-1, 3, 3C, C)  [dx, (dy,cin), cout]          bf16, VMEM-resident
             !fold: (L-1, 9, C, C)   [(dy,dx), cin, cout]          bf16, VMEM-resident
    b_ref  : (L, 1, C)            biases, f32, VMEM-resident
    rest   : pool  -> val_ref (Ho,Wo,C) f32, idx_ref (Ho,Wo,C) i32, pbuf, acc_ref
             !pool -> y_ref (H,W,C) f32, pbuf, acc_ref
    pbuf   : (H+2, W+2, C) bf16   zero-haloed activation scratch (persists over l)
    acc_ref: (H*W, C) f32         conv accumulator scratch
    """
    if pool:
        val_ref, idx_ref, pbuf, acc_ref = rest
    else:
        y_ref, pbuf, acc_ref = rest
    l = pl.program_id(1)

    # ---- layer 0: seed the halo buffer with the stage input, conv with true Cin ----
    @pl.when(l == 0)
    def _():
        pbuf[...] = jnp.zeros_like(pbuf)
        pbuf[1:H + 1, 1:W + 1, 0:Cin] = x_ref[...].astype(pbuf.dtype)
        for r0 in range(0, H, TM):
            hm = min(TM, H - r0)
            acc = None
            for dy in range(3):
                for dx in range(3):
                    cols = pbuf[r0 + dy:r0 + dy + hm, dx:dx + W, 0:Cin]
                    cols = cols.reshape(hm * W, Cin)
                    p = jnp.dot(cols, w0_ref[3 * dy + dx],
                                preferred_element_type=jnp.float32)
                    acc = p if acc is None else acc + p
            acc_ref[r0 * W:(r0 + hm) * W, :] = acc

    # ---- layers 1..L-1: VMEM-resident weight stack indexed by the layer id ----
    @pl.when(l > 0)
    def _():
        li = l - 1
        for r0 in range(0, H, TM):
            hm = min(TM, H - r0)
            acc = None
            if fold:
                # dy folded into the contraction (K = 3C); worthwhile only for C < 256.
                rows = jnp.concatenate(
                    [pbuf[r0 + dy:r0 + dy + hm, :, :] for dy in range(3)], axis=-1)
                for dx in range(3):
                    cols = rows[:, dx:dx + W, :].reshape(hm * W, 3 * C)
                    p = jnp.dot(cols, wr_ref[li, dx],
                                preferred_element_type=jnp.float32)
                    acc = p if acc is None else acc + p
            else:
                # K = C already fills the MXU contraction: 9 direct dots, no concat.
                for dy in range(3):
                    for dx in range(3):
                        cols = pbuf[r0 + dy:r0 + dy + hm, dx:dx + W, :]
                        cols = cols.reshape(hm * W, C)
                        p = jnp.dot(cols, wr_ref[li, 3 * dy + dx],
                                    preferred_element_type=jnp.float32)
                        acc = p if acc is None else acc + p
            acc_ref[r0 * W:(r0 + hm) * W, :] = acc

    # shared epilogue: bias + ReLU in f32
    y = jnp.maximum(acc_ref[...] + b_ref[l], 0.0)          # (H*W, C) f32

    # intermediate layers: write back into the halo-buffer interior (bf16, VMEM only)
    @pl.when(l < L - 1)
    def _():
        pbuf[1:H + 1, 1:W + 1, :] = y.reshape(H, W, C).astype(pbuf.dtype)

    # last layer: emit the stage output (stages 1-4 fuse the 2x2/2 max-pool with
    # PyTorch-style flat spatial indices; stage 5 emits the raw activation).
    @pl.when(l == L - 1)
    def _():
        if pool:
            Ho, Wo = H // 2, W // 2
            y4 = y.reshape(Ho, 2, Wo, 2, C)
            tl, tr = y4[:, 0, :, 0, :], y4[:, 0, :, 1, :]
            bl, br = y4[:, 1, :, 0, :], y4[:, 1, :, 1, :]
            row = jax.lax.broadcasted_iota(jnp.int32, (Ho, Wo, C), 0)
            col = jax.lax.broadcasted_iota(jnp.int32, (Ho, Wo, C), 1)
            i_tl = (2 * row) * W + 2 * col
            # first-max-wins tie-break over window order (0,0),(0,1),(1,0),(1,1)
            m1 = jnp.maximum(tl, tr)
            j1 = jnp.where(tl >= tr, i_tl, i_tl + 1)
            m2 = jnp.maximum(bl, br)
            j2 = jnp.where(bl >= br, i_tl + W, i_tl + W + 1)
            val_ref[...] = jnp.maximum(m1, m2)
            # TODO(synk): PyTorch pool indices are int64; JAX x64 is off -> int32.
            # TODO(synk): C=64 stage writeback is lane-masked (<128 lanes); a
            # lane-dense (Ho, Wo*C) output view would use unmasked stores.
            idx_ref[...] = jnp.where(m1 >= m2, j1, j2)
        else:
            y_ref[...] = y.reshape(H, W, C)


def _run_stage(x_nhwc, pk, mt):
    """Run one fused VGG stage. pk: packed weights dict, mt: static meta dict."""
    N, H, W, _ = x_nhwc.shape
    C, L, Cin, fold, pool = mt["C"], mt["L"], mt["cin"], mt["fold"], mt["pool"]
    TM = min(H, max(1, 512 // W))        # bound im2col copies to ~TM*W rows per dot

    kernel = functools.partial(_stage_kernel, H=H, W=W, C=C, Cin=Cin, L=L,
                               pool=pool, fold=fold, TM=TM)

    # Weights/biases: whole-array VMEM residency (fetched once per call, single
    # buffer) -- weight traffic no longer scales with N*L grid steps.
    resident = pl.BlockSpec(memory_space=pltpu.MemorySpace.VMEM)
    in_specs = [pl.BlockSpec((None, H, W, Cin), lambda n, l: (n, 0, 0, 0)),
                resident, resident, resident]

    if pool:
        Ho, Wo = H // 2, W // 2
        out_shape = (jax.ShapeDtypeStruct((N, Ho, Wo, C), jnp.float32),
                     jax.ShapeDtypeStruct((N, Ho, Wo, C), jnp.int32))
        out_specs = (pl.BlockSpec((None, Ho, Wo, C), lambda n, l: (n, 0, 0, 0)),
                     pl.BlockSpec((None, Ho, Wo, C), lambda n, l: (n, 0, 0, 0)))
    else:
        out_shape = jax.ShapeDtypeStruct((N, H, W, C), jnp.float32)
        out_specs = pl.BlockSpec((None, H, W, C), lambda n, l: (n, 0, 0, 0))

    return pl.pallas_call(
        kernel,
        out_shape=out_shape,
        grid=(N, L),
        in_specs=in_specs,
        out_specs=out_specs,
        scratch_shapes=[pltpu.VMEM((H + 2, W + 2, C), jnp.bfloat16),   # haloed activation
                        pltpu.VMEM((H * W, C), jnp.float32)],          # conv accumulator
        # Worst case (stage 5): ~19 MiB resident bf16 weights + small scratch.
        # 48 MiB covers every generation (above v5e's 16 MiB default scoped limit,
        # below v7x's 64 MiB physical VMEM).
        compiler_params=pltpu.CompilerParams(
            dimension_semantics=("parallel", "arbitrary"),
            vmem_limit_bytes=48 * 1024 * 1024),
    )(x_nhwc, pk["w0"], pk["wr"], pk["b"])


# ---------------------------------------------------------------------------
# Parameters, packing & forward pass (mirrors VGG.forward)
# ---------------------------------------------------------------------------
LAYERS = [
    ("conv1_1", 3, 64), ("conv1_2", 64, 64),
    ("conv2_1", 64, 128), ("conv2_2", 128, 128),
    ("conv3_1", 128, 256), ("conv3_2", 256, 256),
    ("conv3_3", 256, 256), ("conv3_4", 256, 256),
    ("conv4_1", 256, 512), ("conv4_2", 512, 512),
    ("conv4_3", 512, 512), ("conv4_4", 512, 512),
    ("conv5_1", 512, 512), ("conv5_2", 512, 512),
    ("conv5_3", 512, 512), ("conv5_4", 512, 512),
]

STAGES = [
    ["conv1_1", "conv1_2"],
    ["conv2_1", "conv2_2"],
    ["conv3_1", "conv3_2", "conv3_3", "conv3_4"],
    ["conv4_1", "conv4_2", "conv4_3", "conv4_4"],
    ["conv5_1", "conv5_2", "conv5_3", "conv5_4"],
]


def init_params(key):
    params = {}
    for name, cin, cout in LAYERS:
        key, kw, kb = jax.random.split(key, 3)
        std = (2.0 / (9 * cin)) ** 0.5
        w = std * jax.random.normal(kw, (3, 3, cin, cout), jnp.float32)  # HWIO
        b = 0.01 * jax.random.normal(kb, (cout,), jnp.float32)
        params[name] = (w, b)
    return params


def pack_params(params):
    """One-time repack of raw HWIO/f32 params into kernel layouts (bf16)."""
    packed, metas = [], []
    for si, stage in enumerate(STAGES):
        w0, b0 = params[stage[0]]
        cin, C = int(w0.shape[2]), int(w0.shape[3])
        cin_p = max(16, cin)                 # only the 3-channel network input pads
        if cin_p != cin:
            w0 = jnp.pad(w0, ((0, 0), (0, 0), (0, cin_p - cin), (0, 0)))
        fold = C < 256                       # fold dy into K only for small-C stages
        w0p = w0.reshape(9, cin_p, C).astype(jnp.bfloat16)        # [(dy,dx), cin, cout]
        wr, bs = [], [b0.reshape(1, C)]
        for nm in stage[1:]:
            w, b = params[nm]
            if fold:                                              # [dx, (dy,cin), cout]
                wr.append(jnp.transpose(w, (1, 0, 2, 3)).reshape(3, 3 * C, C))
            else:                                                 # [(dy,dx), cin, cout]
                wr.append(w.reshape(9, C, C))
            bs.append(b.reshape(1, C))
        packed.append(dict(w0=w0p,
                           wr=jnp.stack(wr).astype(jnp.bfloat16),
                           b=jnp.stack(bs).astype(jnp.float32)))
        metas.append(dict(cin=cin_p, C=C, L=len(stage), fold=fold,
                          pool=si < len(STAGES) - 1))
    return packed, metas


def _to_nchw(x):
    return jnp.transpose(x, (0, 3, 1, 2))


def vgg_forward(x_nchw, packed, metas):
    """Returns ([(conv2,id1,s1),(conv3,id2,s2),(conv4,id3,s3),(conv5,id4,s4)], out)
    with tensors in NCHW and sizes as NCHW tuples (like torch.Size)."""
    x = jnp.transpose(x_nchw, (0, 2, 3, 1))           # NCHW -> NHWC
    pad_c = metas[0]["cin"] - x.shape[-1]
    if pad_c > 0:                                     # 3 -> 16 input channels (zeros)
        x = jnp.pad(x, ((0, 0), (0, 0), (0, 0), (0, pad_c)))
    feats = []
    for pk, mt in zip(packed, metas):
        N, H, W, _ = x.shape
        if mt["pool"]:
            s = (N, mt["C"], H, W)                    # pre-pool activation size
            pooled, idx = _run_stage(x, pk, mt)
            feats.append((_to_nchw(pooled), _to_nchw(idx), s))
            x = pooled
        else:
            x = _run_stage(x, pk, mt)
    return feats, _to_nchw(x)


# ---------------------------------------------------------------------------
# Pure-JAX reference (mimics the kernel's bf16-operand / f32-accumulate numerics)
# ---------------------------------------------------------------------------
def ref_forward(x_nchw, params):
    x = jnp.transpose(x_nchw, (0, 2, 3, 1))

    def conv(x, nm):
        w, b = params[nm]
        y = jax.lax.conv_general_dilated(
            x.astype(jnp.bfloat16), w.astype(jnp.bfloat16),
            window_strides=(1, 1), padding=((1, 1), (1, 1)),
            dimension_numbers=("NHWC", "HWIO", "NHWC"),
            preferred_element_type=jnp.float32)
        return jnp.maximum(y + b, 0.0)

    def pool(x):
        return jax.lax.reduce_window(x, -jnp.inf, jax.lax.max,
                                     (1, 2, 2, 1), (1, 2, 2, 1), "VALID")

    pooled = []
    for i, stage in enumerate(STAGES):
        for nm in stage:
            x = conv(x, nm)
        if i < len(STAGES) - 1:
            x = pool(x)
            pooled.append(jnp.transpose(x, (0, 3, 1, 2)))
    return pooled, jnp.transpose(x, (0, 3, 1, 2))


if __name__ == "__main__":
    key = jax.random.PRNGKey(0)
    k_in, k_par = jax.random.split(key)

    # Small shapes consistent with the module: batch=2, 3 input channels, 16x16.
    x = jax.random.normal(k_in, (2, 3, 16, 16), jnp.float32)
    params = init_params(k_par)
    packed, metas = pack_params(params)

    feats, out = vgg_forward(x, packed, metas)
    out = jax.block_until_ready(out)
    for (cv, idx, s) in feats:
        jax.block_until_ready(cv)
        jax.block_until_ready(idx)

    # sanity: shapes follow the PyTorch module
    assert out.shape == (2, 512, 1, 1)
    assert feats[0][0].shape == (2, 64, 8, 8) and feats[0][1].dtype == jnp.int32
    assert feats[1][0].shape == (2, 128, 4, 4)
    assert feats[2][0].shape == (2, 256, 2, 2)
    assert feats[3][0].shape == (2, 512, 1, 1)
    assert feats[0][2] == (2, 64, 16, 16)

    # numerical check vs the bf16-emulating reference: final output + pooled features
    ref_pooled, ref_out = ref_forward(x, params)
    ref_out = jax.block_until_ready(ref_out)
    tol = dict(rtol=2e-2, atol=2e-2)
    assert jnp.allclose(out, ref_out, **tol), float(jnp.max(jnp.abs(out - ref_out)))
    for ours, theirs in zip([f[0] for f in feats], ref_pooled):
        assert jnp.allclose(ours, theirs, **tol), \
            float(jnp.max(jnp.abs(ours - theirs)))

    # index self-consistency: gathering the stage-1 pre-pool activation (reference,
    # same bf16 numerics) at the returned indices must reproduce the pooled values.
    a1 = jnp.transpose(x, (0, 2, 3, 1))
    for nm in STAGES[0]:
        w, b = params[nm]
        a1 = jax.lax.conv_general_dilated(
            a1.astype(jnp.bfloat16), w.astype(jnp.bfloat16), (1, 1), ((1, 1), (1, 1)),
            dimension_numbers=("NHWC", "HWIO", "NHWC"),
            preferred_element_type=jnp.float32)
        a1 = jnp.maximum(a1 + b, 0.0)
    a1 = jnp.transpose(a1, (0, 3, 1, 2))                       # (2, 64, 16, 16)
    pooled1, idx1 = feats[0][0], feats[0][1]
    gathered = jnp.take_along_axis(
        a1.reshape(2, 64, -1), idx1.reshape(2, 64, -1), axis=2
    ).reshape(pooled1.shape)
    assert jnp.allclose(gathered, pooled1, **tol)

    print("KERNEL_OK")
</pallas_src>

<mosaic_0001>
module attributes {stable_mosaic.version = 11 : i64} {
  func.func @_stage_kernel(%arg0: i32, %arg1: i32, %arg2: memref<1x16x16x16xf32, #tpu.memory_space<vmem>>, %arg3: memref<9x16x64xbf16, #tpu.memory_space<vmem>>, %arg4: memref<1x3x192x64xbf16, #tpu.memory_space<vmem>>, %arg5: memref<2x1x64xf32, #tpu.memory_space<vmem>>, %arg6: memref<1x8x8x64xf32, #tpu.memory_space<vmem>>, %arg7: memref<1x8x8x64xi32, #tpu.memory_space<vmem>>, %arg8: memref<18x18x64xbf16, #tpu.memory_space<vmem>>, %arg9: memref<256x64xf32, #tpu.memory_space<vmem>>) attributes {dimension_semantics = [#tpu.dimension_semantics<parallel>, #tpu.dimension_semantics<arbitrary>], iteration_bounds = array<i64: 2, 2>, scalar_prefetch = 0 : i64, scratch_operands = 2 : i64, tpu.core_type = #tpu.core_type<tc>, window_params = [{transform_indices = @transform_0, window_bounds = array<i64: 1, 16, 16, 16>}, {pipeline_mode = #tpu.pipeline_mode<synchronous>, transform_indices = @transform_1, window_bounds = array<i64: 9, 16, 64>}, {pipeline_mode = #tpu.pipeline_mode<synchronous>, transform_indices = @transform_2, window_bounds = array<i64: 1, 3, 192, 64>}, {pipeline_mode = #tpu.pipeline_mode<synchronous>, transform_indices = @transform_3, window_bounds = array<i64: 2, 1, 64>}, {transform_indices = @transform_4, window_bounds = array<i64: 1, 8, 8, 64>}, {transform_indices = @transform_5, window_bounds = array<i64: 1, 8, 8, 64>}]} {
    %c0_i32 = arith.constant 0 : i32
    %0 = arith.cmpi eq, %arg1, %c0_i32 : i32
    %1 = arith.extui %0 : i1 to i32
    %c0_i32_0 = arith.constant 0 : i32
    %2 = arith.cmpi ne, %1, %c0_i32_0 : i32
    scf.if %2 {
      %cst_9 = arith.constant 0.000000e+00 : bf16
      %20 = vector.broadcast %cst_9 : bf16 to vector<18x18x64xbf16>
      %c0_10 = arith.constant 0 : index
      %c0_11 = arith.constant 0 : index
      %c0_12 = arith.constant 0 : index
      %21 = vector.load %arg8[%c0_10, %c0_11, %c0_12] : memref<18x18x64xbf16, #tpu.memory_space<vmem>>, vector<18x18x64xbf16>
      tpu.vector_store %arg8[%c0_10, %c0_11, %c0_12], %20 {strides = array<i32>} : memref<18x18x64xbf16, #tpu.memory_space<vmem>>, vector<18x18x64xbf16>,
      %c0_13 = arith.constant 0 : index
      %c0_14 = arith.constant 0 : index
      %c0_15 = arith.constant 0 : index
      %c0_16 = arith.constant 0 : index
      %22 = vector.load %arg2[%c0_13, %c0_14, %c0_15, %c0_16] : memref<1x16x16x16xf32, #tpu.memory_space<vmem>>, vector<1x16x16x16xf32>
      %23 = vector.shape_cast %22 : vector<1x16x16x16xf32> to vector<16x16x16xf32>
      %24 = arith.truncf %23 : vector<16x16x16xf32> to vector<16x16x16xbf16>
      %c1 = arith.constant 1 : index
      %c1_17 = arith.constant 1 : index
      %c0_18 = arith.constant 0 : index
      %25 = vector.load %arg8[%c1, %c1_17, %c0_18] : memref<18x18x64xbf16, #tpu.memory_space<vmem>>, vector<16x16x16xbf16>
      tpu.vector_store %arg8[%c1, %c1_17, %c0_18], %24 {strides = array<i32>} : memref<18x18x64xbf16, #tpu.memory_space<vmem>>, vector<16x16x16xbf16>,
      %c0_19 = arith.constant 0 : index
      %c0_20 = arith.constant 0 : index
      %c0_21 = arith.constant 0 : index
      %26 = vector.load %arg8[%c0_19, %c0_20, %c0_21] : memref<18x18x64xbf16, #tpu.memory_space<vmem>>, vector<16x16x16xbf16>
      %27 = vector.shape_cast %26 : vector<16x16x16xbf16> to vector<256x16xbf16>
      %c0_22 = arith.constant 0 : index
      %c0_23 = arith.constant 0 : index
      %c0_24 = arith.constant 0 : index
      %28 = vector.load %arg3[%c0_22, %c0_23, %c0_24] : memref<9x16x64xbf16, #tpu.memory_space<vmem>>, vector<1x16x64xbf16>
      %29 = vector.shape_cast %28 : vector<1x16x64xbf16> to vector<16x64xbf16>
      %cst_25 = arith.constant dense<0.000000e+00> : vector<256x64xf32>
      %30 = tpu.matmul %27, %29, %cst_25 {dimension_numbers = #tpu.dot_dimension_numbers<[1], [0], [0], [1], [0, 0, 1, 1], [], []>} : vector<256x16xbf16>, vector<16x64xbf16>, vector<256x64xf32> -> vector<256x64xf32>
      %c0_26 = arith.constant 0 : index
      %c1_27 = arith.constant 1 : index
      %c0_28 = arith.constant 0 : index
      %31 = vector.load %arg8[%c0_26, %c1_27, %c0_28] : memref<18x18x64xbf16, #tpu.memory_space<vmem>>, vector<16x16x16xbf16>
      %32 = vector.shape_cast %31 : vector<16x16x16xbf16> to vector<256x16xbf16>
      %c1_29 = arith.constant 1 : index
      %c0_30 = arith.constant 0 : index
      %c0_31 = arith.constant 0 : index
      %33 = vector.load %arg3[%c1_29, %c0_30, %c0_31] : memref<9x16x64xbf16, #tpu.memory_space<vmem>>, vector<1x16x64xbf16>
      %34 = vector.shape_cast %33 : vector<1x16x64xbf16> to vector<16x64xbf16>
      %cst_32 = arith.constant dense<0.000000e+00> : vector<256x64xf32>
      %35 = tpu.matmul %32, %34, %cst_32 {dimension_numbers = #tpu.dot_dimension_numbers<[1], [0], [0], [1], [0, 0, 1, 1], [], []>} : vector<256x16xbf16>, vector<16x64xbf16>, vector<256x64xf32> -> vector<256x64xf32>
      %36 = arith.addf %30, %35 : vector<256x64xf32>
      %c0_33 = arith.constant 0 : index
      %c2 = arith.constant 2 : index
      %c0_34 = arith.constant 0 : index
      %37 = vector.load %arg8[%c0_33, %c2, %c0_34] : memref<18x18x64xbf16, #tpu.memory_space<vmem>>, vector<16x16x16xbf16>
      %38 = vector.shape_cast %37 : vector<16x16x16xbf16> to vector<256x16xbf16>
      %c2_35 = arith.constant 2 : index
      %c0_36 = arith.constant 0 : index
      %c0_37 = arith.constant 0 : index
      %39 = vector.load %arg3[%c2_35, %c0_36, %c0_37] : memref<9x16x64xbf16, #tpu.memory_space<vmem>>, vector<1x16x64xbf16>
      %40 = vector.shape_cast %39 : vector<1x16x64xbf16> to vector<16x64xbf16>
      %cst_38 = arith.constant dense<0.000000e+00> : vector<256x64xf32>
      %41 = tpu.matmul %38, %40, %cst_38 {dimension_numbers = #tpu.dot_dimension_numbers<[1], [0], [0], [1], [0, 0, 1, 1], [], []>} : vector<256x16xbf16>, vector<16x64xbf16>, vector<256x64xf32> -> vector<256x64xf32>
      %42 = arith.addf %36, %41 : vector<256x64xf32>
      %c1_39 = arith.constant 1 : index
      %c0_40 = arith.constant 0 : index
      %c0_41 = arith.constant 0 : index
      %43 = vector.load %arg8[%c1_39, %c0_40, %c0_41] : memref<18x18x64xbf16, #tpu.memory_space<vmem>>, vector<16x16x16xbf16>
      %44 = vector.shape_cast %43 : vector<16x16x16xbf16> to vector<256x16xbf16>
      %c3 = arith.constant 3 : index
      %c0_42 = arith.constant 0 : index
      %c0_43 = arith.constant 0 : index
      %45 = vector.load %arg3[%c3, %c0_42, %c0_43] : memref<9x16x64xbf16, #tpu.memory_space<vmem>>, vector<1x16x64xbf16>
      %46 = vector.shape_cast %45 : vector<1x16x64xbf16> to vector<16x64xbf16>
      %cst_44 = arith.constant dense<0.000000e+00> : vector<256x64xf32>
      %47 = tpu.matmul %44, %46, %cst_44 {dimension_numbers = #tpu.dot_dimension_numbers<[1], [0], [0], [1], [0, 0, 1, 1], [], []>} : vector<256x16xbf16>, vector<16x64xbf16>, vector<256x64xf32> -> vector<256x64xf32>
      %48 = arith.addf %42, %47 : vector<256x64xf32>
      %c1_45 = arith.constant 1 : index
      %c1_46 = arith.constant 1 : index
      %c0_47 = arith.constant 0 : index
      %49 = vector.load %arg8[%c1_45, %c1_46, %c0_47] : memref<18x18x64xbf16, #tpu.memory_space<vmem>>, vector<16x16x16xbf16>
      %50 = vector.shape_cast %49 : vector<16x16x16xbf16> to vector<256x16xbf16>
      %c4 = arith.constant 4 : index
      %c0_48 = arith.constant 0 : index
      %c0_49 = arith.constant 0 : index
      %51 = vector.load %arg3[%c4, %c0_48, %c0_49] : memref<9x16x64xbf16, #tpu.memory_space<vmem>>, vector<1x16x64xbf16>
      %52 = vector.shape_cast %51 : vector<1x16x64xbf16> to vector<16x64xbf16>
      %cst_50 = arith.constant dense<0.000000e+00> : vector<256x64xf32>
      %53 = tpu.matmul %50, %52, %cst_50 {dimension_numbers = #tpu.dot_dimension_numbers<[1], [0], [0], [1], [0, 0, 1, 1], [], []>} : vector<256x16xbf16>, vector<16x64xbf16>, vector<256x64xf32> -> vector<256x64xf32>
      %54 = arith.addf %48, %53 : vector<256x64xf32>
      %c1_51 = arith.constant 1 : index
      %c2_52 = arith.constant 2 : index
      %c0_53 = arith.constant 0 : index
      %55 = vector.load %arg8[%c1_51, %c2_52, %c0_53] : memref<18x18x64xbf16, #tpu.memory_space<vmem>>, vector<16x16x16xbf16>
      %56 = vector.shape_cast %55 : vector<16x16x16xbf16> to vector<256x16xbf16>
      %c5 = arith.constant 5 : index
      %c0_54 = arith.constant 0 : index
      %c0_55 = arith.constant 0 : index
      %57 = vector.load %arg3[%c5, %c0_54, %c0_55] : memref<9x16x64xbf16, #tpu.memory_space<vmem>>, vector<1x16x64xbf16>
      %58 = vector.shape_cast %57 : vector<1x16x64xbf16> to vector<16x64xbf16>
      %cst_56 = arith.constant dense<0.000000e+00> : vector<256x64xf32>
      %59 = tpu.matmul %56, %58, %cst_56 {dimension_numbers = #tpu.dot_dimension_numbers<[1], [0], [0], [1], [0, 0, 1, 1], [], []>} : vector<256x16xbf16>, vector<16x64xbf16>, vector<256x64xf32> -> vector<256x64xf32>
      %60 = arith.addf %54, %59 : vector<256x64xf32>
      %c2_57 = arith.constant 2 : index
      %c0_58 = arith.constant 0 : index
      %c0_59 = arith.constant 0 : index
      %61 = vector.load %arg8[%c2_57, %c0_58, %c0_59] : memref<18x18x64xbf16, #tpu.memory_space<vmem>>, vector<16x16x16xbf16>
      %62 = vector.shape_cast %61 : vector<16x16x16xbf16> to vector<256x16xbf16>
      %c6 = arith.constant 6 : index
      %c0_60 = arith.constant 0 : index
      %c0_61 = arith.constant 0 : index
      %63 = vector.load %arg3[%c6, %c0_60, %c0_61] : memref<9x16x64xbf16, #tpu.memory_space<vmem>>, vector<1x16x64xbf16>
      %64 = vector.shape_cast %63 : vector<1x16x64xbf16> to vector<16x64xbf16>
      %cst_62 = arith.constant dense<0.000000e+00> : vector<256x64xf32>
      %65 = tpu.matmul %62, %64, %cst_62 {dimension_numbers = #tpu.dot_dimension_numbers<[1], [0], [0], [1], [0, 0, 1, 1], [], []>} : vector<256x16xbf16>, vector<16x64xbf16>, vector<256x64xf32> -> vector<256x64xf32>
      %66 = arith.addf %60, %65 : vector<256x64xf32>
      %c2_63 = arith.constant 2 : index
      %c1_64 = arith.constant 1 : index
      %c0_65 = arith.constant 0 : index
      %67 = vector.load %arg8[%c2_63, %c1_64, %c0_65] : memref<18x18x64xbf16, #tpu.memory_space<vmem>>, vector<16x16x16xbf16>
      %68 = vector.shape_cast %67 : vector<16x16x16xbf16> to vector<256x16xbf16>
      %c7 = arith.constant 7 : index
      %c0_66 = arith.constant 0 : index
      %c0_67 = arith.constant 0 : index
      %69 = vector.load %arg3[%c7, %c0_66, %c0_67] : memref<9x16x64xbf16, #tpu.memory_space<vmem>>, vector<1x16x64xbf16>
      %70 = vector.shape_cast %69 : vector<1x16x64xbf16> to vector<16x64xbf16>
      %cst_68 = arith.constant dense<0.000000e+00> : vector<256x64xf32>
      %71 = tpu.matmul %68, %70, %cst_68 {dimension_numbers = #tpu.dot_dimension_numbers<[1], [0], [0], [1], [0, 0, 1, 1], [], []>} : vector<256x16xbf16>, vector<16x64xbf16>, vector<256x64xf32> -> vector<256x64xf32>
      %72 = arith.addf %66, %71 : vector<256x64xf32>
      %c2_69 = arith.constant 2 : index
      %c2_70 = arith.constant 2 : index
      %c0_71 = arith.constant 0 : index
      %73 = vector.load %arg8[%c2_69, %c2_70, %c0_71] : memref<18x18x64xbf16, #tpu.memory_space<vmem>>, vector<16x16x16xbf16>
      %74 = vector.shape_cast %73 : vector<16x16x16xbf16> to vector<256x16xbf16>
      %c8 = arith.constant 8 : index
      %c0_72 = arith.constant 0 : index
      %c0_73 = arith.constant 0 : index
      %75 = vector.load %arg3[%c8, %c0_72, %c0_73] : memref<9x16x64xbf16, #tpu.memory_space<vmem>>, vector<1x16x64xbf16>
      %76 = vector.shape_cast %75 : vector<1x16x64xbf16> to vector<16x64xbf16>
      %cst_74 = arith.constant dense<0.000000e+00> : vector<256x64xf32>
      %77 = tpu.matmul %74, %76, %cst_74 {dimension_numbers = #tpu.dot_dimension_numbers<[1], [0], [0], [1], [0, 0, 1, 1], [], []>} : vector<256x16xbf16>, vector<16x64xbf16>, vector<256x64xf32> -> vector<256x64xf32>
      %78 = arith.addf %72, %77 : vector<256x64xf32>
      %c0_75 = arith.constant 0 : index
      %c0_76 = arith.constant 0 : index
      %79 = vector.load %arg9[%c0_75, %c0_76] : memref<256x64xf32, #tpu.memory_space<vmem>>, vector<256x64xf32>
      tpu.vector_store %arg9[%c0_75, %c0_76], %78 {strides = array<i32>} : memref<256x64xf32, #tpu.memory_space<vmem>>, vector<256x64xf32>,
    } else {
    }
    %c0_i32_1 = arith.constant 0 : i32
    %3 = arith.cmpi sgt, %arg1, %c0_i32_1 : i32
    %4 = arith.extui %3 : i1 to i32
    %c0_i32_2 = arith.constant 0 : i32
    %5 = arith.cmpi ne, %4, %c0_i32_2 : i32
    scf.if %5 {
      %c1_i32_9 = arith.constant 1 : i32
      %20 = arith.subi %arg1, %c1_i32_9 : i32
      %c0_10 = arith.constant 0 : index
      %c0_11 = arith.constant 0 : index
      %c0_12 = arith.constant 0 : index
      %21 = vector.load %arg8[%c0_10, %c0_11, %c0_12] : memref<18x18x64xbf16, #tpu.memory_space<vmem>>, vector<16x18x64xbf16>
      %c1 = arith.constant 1 : index
      %c0_13 = arith.constant 0 : index
      %c0_14 = arith.constant 0 : index
      %22 = vector.load %arg8[%c1, %c0_13, %c0_14] : memref<18x18x64xbf16, #tpu.memory_space<vmem>>, vector<16x18x64xbf16>
      %c2 = arith.constant 2 : index
      %c0_15 = arith.constant 0 : index
      %c0_16 = arith.constant 0 : index
      %23 = vector.load %arg8[%c2, %c0_15, %c0_16] : memref<18x18x64xbf16, #tpu.memory_space<vmem>>, vector<16x18x64xbf16>
      %24 = tpu.concatenate %21, %22, %23 in 2 : vector<16x18x64xbf16>, vector<16x18x64xbf16>, vector<16x18x64xbf16> -> vector<16x18x192xbf16>
      %25 = vector.extract_strided_slice %24 {offsets = [0, 0, 0], sizes = [16, 16, 192], strides = [1, 1, 1]} : vector<16x18x192xbf16> to vector<16x16x192xbf16>
      %26 = vector.shape_cast %25 : vector<16x16x192xbf16> to vector<256x192xbf16>
      %27 = arith.index_cast %20 : i32 to index
      %c0_17 = arith.constant 0 : index
      %c0_18 = arith.constant 0 : index
      %c0_19 = arith.constant 0 : index
      %28 = vector.load %arg4[%27, %c0_17, %c0_18, %c0_19] : memref<1x3x192x64xbf16, #tpu.memory_space<vmem>>, vector<1x1x192x64xbf16>
      %29 = vector.shape_cast %28 : vector<1x1x192x64xbf16> to vector<192x64xbf16>
      %cst_20 = arith.constant dense<0.000000e+00> : vector<256x64xf32>
      %30 = tpu.matmul %26, %29, %cst_20 {dimension_numbers = #tpu.dot_dimension_numbers<[1], [0], [0], [1], [0, 0, 1, 1], [], []>} : vector<256x192xbf16>, vector<192x64xbf16>, vector<256x64xf32> -> vector<256x64xf32>
      %31 = vector.extract_strided_slice %24 {offsets = [0, 1, 0], sizes = [16, 16, 192], strides = [1, 1, 1]} : vector<16x18x192xbf16> to vector<16x16x192xbf16>
      %32 = vector.shape_cast %31 : vector<16x16x192xbf16> to vector<256x192xbf16>
      %33 = arith.index_cast %20 : i32 to index
      %c1_21 = arith.constant 1 : index
      %c0_22 = arith.constant 0 : index
      %c0_23 = arith.constant 0 : index
      %34 = vector.load %arg4[%33, %c1_21, %c0_22, %c0_23] : memref<1x3x192x64xbf16, #tpu.memory_space<vmem>>, vector<1x1x192x64xbf16>
      %35 = vector.shape_cast %34 : vector<1x1x192x64xbf16> to vector<192x64xbf16>
      %cst_24 = arith.constant dense<0.000000e+00> : vector<256x64xf32>
      %36 = tpu.matmul %32, %35, %cst_24 {dimension_numbers = #tpu.dot_dimension_numbers<[1], [0], [0], [1], [0, 0, 1, 1], [], []>} : vector<256x192xbf16>, vector<192x64xbf16>, vector<256x64xf32> -> vector<256x64xf32>
      %37 = arith.addf %30, %36 : vector<256x64xf32>
      %38 = vector.extract_strided_slice %24 {offsets = [0, 2, 0], sizes = [16, 16, 192], strides = [1, 1, 1]} : vector<16x18x192xbf16> to vector<16x16x192xbf16>
      %39 = vector.shape_cast %38 : vector<16x16x192xbf16> to vector<256x192xbf16>
      %40 = arith.index_cast %20 : i32 to index
      %c2_25 = arith.constant 2 : index
      %c0_26 = arith.constant 0 : index
      %c0_27 = arith.constant 0 : index
      %41 = vector.load %arg4[%40, %c2_25, %c0_26, %c0_27] : memref<1x3x192x64xbf16, #tpu.memory_space<vmem>>, vector<1x1x192x64xbf16>
      %42 = vector.shape_cast %41 : vector<1x1x192x64xbf16> to vector<192x64xbf16>
      %cst_28 = arith.constant dense<0.000000e+00> : vector<256x64xf32>
      %43 = tpu.matmul %39, %42, %cst_28 {dimension_numbers = #tpu.dot_dimension_numbers<[1], [0], [0], [1], [0, 0, 1, 1], [], []>} : vector<256x192xbf16>, vector<192x64xbf16>, vector<256x64xf32> -> vector<256x64xf32>
      %44 = arith.addf %37, %43 : vector<256x64xf32>
      %c0_29 = arith.constant 0 : index
      %c0_30 = arith.constant 0 : index
      %45 = vector.load %arg9[%c0_29, %c0_30] : memref<256x64xf32, #tpu.memory_space<vmem>>, vector<256x64xf32>
      tpu.vector_store %arg9[%c0_29, %c0_30], %44 {strides = array<i32>} : memref<256x64xf32, #tpu.memory_space<vmem>>, vector<256x64xf32>,
    } else {
    }
    %c0 = arith.constant 0 : index
    %c0_3 = arith.constant 0 : index
    %6 = vector.load %arg9[%c0, %c0_3] : memref<256x64xf32, #tpu.memory_space<vmem>>, vector<256x64xf32>
    %7 = arith.index_cast %arg1 : i32 to index
    %c0_4 = arith.constant 0 : index
    %c0_5 = arith.constant 0 : index
    %8 = vector.load %arg5[%7, %c0_4, %c0_5] : memref<2x1x64xf32, #tpu.memory_space<vmem>>, vector<1x1x64xf32>
    %9 = vector.shape_cast %8 : vector<1x1x64xf32> to vector<1x64xf32>
    %10 = vector.broadcast %9 : vector<1x64xf32> to vector<256x64xf32>
    %11 = arith.addf %6, %10 : vector<256x64xf32>
    %cst = arith.constant 0.000000e+00 : f32
    %12 = vector.broadcast %cst : f32 to vector<256x64xf32>
    %13 = arith.maximumf %11, %12 : vector<256x64xf32>
    %c1_i32 = arith.constant 1 : i32
    %14 = arith.cmpi slt, %arg1, %c1_i32 : i32
    %15 = arith.extui %14 : i1 to i32
    %c0_i32_6 = arith.constant 0 : i32
    %16 = arith.cmpi ne, %15, %c0_i32_6 : i32
    scf.if %16 {
      %20 = vector.shape_cast %13 : vector<256x64xf32> to vector<16x16x64xf32>
      %21 = arith.truncf %20 : vector<16x16x64xf32> to vector<16x16x64xbf16>
      %c1 = arith.constant 1 : index
      %c1_9 = arith.constant 1 : index
      %c0_10 = arith.constant 0 : index
      %22 = vector.load %arg8[%c1, %c1_9, %c0_10] : memref<18x18x64xbf16, #tpu.memory_space<vmem>>, vector<16x16x64xbf16>
      tpu.vector_store %arg8[%c1, %c1_9, %c0_10], %21 {strides = array<i32>} : memref<18x18x64xbf16, #tpu.memory_space<vmem>>, vector<16x16x64xbf16>,
    } else {
    }
    %c1_i32_7 = arith.constant 1 : i32
    %17 = arith.cmpi eq, %arg1, %c1_i32_7 : i32
    %18 = arith.extui %17 : i1 to i32
    %c0_i32_8 = arith.constant 0 : i32
    %19 = arith.cmpi ne, %18, %c0_i32_8 : i32
    scf.if %19 {
      %20 = vector.shape_cast %13 : vector<256x64xf32> to vector<8x2x8x2x64xf32>
      %21 = vector.extract_strided_slice %20 {offsets = [0, 0, 0, 0, 0], sizes = [8, 1, 8, 1, 64], strides = [1, 1, 1, 1, 1]} : vector<8x2x8x2x64xf32> to vector<8x1x8x1x64xf32>
      %22 = vector.shape_cast %21 : vector<8x1x8x1x64xf32> to vector<8x8x64xf32>
      %23 = vector.extract_strided_slice %20 {offsets = [0, 0, 0, 1, 0], sizes = [8, 1, 8, 1, 64], strides = [1, 1, 1, 1, 1]} : vector<8x2x8x2x64xf32> to vector<8x1x8x1x64xf32>
      %24 = vector.shape_cast %23 : vector<8x1x8x1x64xf32> to vector<8x8x64xf32>
      %25 = vector.extract_strided_slice %20 {offsets = [0, 1, 0, 0, 0], sizes = [8, 1, 8, 1, 64], strides = [1, 1, 1, 1, 1]} : vector<8x2x8x2x64xf32> to vector<8x1x8x1x64xf32>
      %26 = vector.shape_cast %25 : vector<8x1x8x1x64xf32> to vector<8x8x64xf32>
      %27 = vector.extract_strided_slice %20 {offsets = [0, 1, 0, 1, 0], sizes = [8, 1, 8, 1, 64], strides = [1, 1, 1, 1, 1]} : vector<8x2x8x2x64xf32> to vector<8x1x8x1x64xf32>
      %28 = vector.shape_cast %27 : vector<8x1x8x1x64xf32> to vector<8x8x64xf32>
      %29 = tpu.iota {dimensions = array<i32: 0>} : vector<8x8x64xi32>
      %30 = tpu.iota {dimensions = array<i32: 1>} : vector<8x8x64xi32>
      %c2_i32 = arith.constant 2 : i32
      %31 = vector.broadcast %c2_i32 : i32 to vector<8x8x64xi32>
      %32 = arith.muli %31, %29 : vector<8x8x64xi32>
      %c16_i32 = arith.constant 16 : i32
      %33 = vector.broadcast %c16_i32 : i32 to vector<8x8x64xi32>
      %34 = arith.muli %32, %33 : vector<8x8x64xi32>
      %c2_i32_9 = arith.constant 2 : i32
      %35 = vector.broadcast %c2_i32_9 : i32 to vector<8x8x64xi32>
      %36 = arith.muli %35, %30 : vector<8x8x64xi32>
      %37 = arith.addi %34, %36 : vector<8x8x64xi32>
      %38 = arith.maximumf %22, %24 : vector<8x8x64xf32>
      %39 = arith.cmpf oge, %22, %24 : vector<8x8x64xf32>
      %c1_i32_10 = arith.constant 1 : i32
      %40 = vector.broadcast %c1_i32_10 : i32 to vector<8x8x64xi32>
      %41 = arith.addi %37, %40 : vector<8x8x64xi32>
      %42 = arith.select %39, %37, %41 : vector<8x8x64xi1>, vector<8x8x64xi32>
      %43 = arith.maximumf %26, %28 : vector<8x8x64xf32>
      %44 = arith.cmpf oge, %26, %28 : vector<8x8x64xf32>
      %c16_i32_11 = arith.constant 16 : i32
      %45 = vector.broadcast %c16_i32_11 : i32 to vector<8x8x64xi32>
      %46 = arith.addi %37, %45 : vector<8x8x64xi32>
      %c16_i32_12 = arith.constant 16 : i32
      %47 = vector.broadcast %c16_i32_12 : i32 to vector<8x8x64xi32>
      %48 = arith.addi %37, %47 : vector<8x8x64xi32>
      %c1_i32_13 = arith.constant 1 : i32
      %49 = vector.broadcast %c1_i32_13 : i32 to vector<8x8x64xi32>
      %50 = arith.addi %48, %49 : vector<8x8x64xi32>
      %51 = arith.select %44, %46, %50 : vector<8x8x64xi1>, vector<8x8x64xi32>
      %52 = arith.maximumf %38, %43 : vector<8x8x64xf32>
      %c0_14 = arith.constant 0 : index
      %c0_15 = arith.constant 0 : index
      %c0_16 = arith.constant 0 : index
      %c0_17 = arith.constant 0 : index
      %53 = vector.load %arg6[%c0_14, %c0_15, %c0_16, %c0_17] : memref<1x8x8x64xf32, #tpu.memory_space<vmem>>, vector<1x8x8x64xf32>
      %54 = vector.shape_cast %53 : vector<1x8x8x64xf32> to vector<8x8x64xf32>
      %55 = vector.shape_cast %52 : vector<8x8x64xf32> to vector<1x8x8x64xf32>
      tpu.vector_store %arg6[%c0_14, %c0_15, %c0_16, %c0_17], %55 {strides = array<i32>} : memref<1x8x8x64xf32, #tpu.memory_space<vmem>>, vector<1x8x8x64xf32>,
      %56 = arith.cmpf oge, %38, %43 : vector<8x8x64xf32>
      %57 = arith.select %56, %42, %51 : vector<8x8x64xi1>, vector<8x8x64xi32>
      %c0_18 = arith.constant 0 : index
      %c0_19 = arith.constant 0 : index
      %c0_20 = arith.constant 0 : index
      %c0_21 = arith.constant 0 : index
      %58 = vector.load %arg7[%c0_18, %c0_19, %c0_20, %c0_21] : memref<1x8x8x64xi32, #tpu.memory_space<vmem>>, vector<1x8x8x64xi32>
      %59 = vector.shape_cast %58 : vector<1x8x8x64xi32> to vector<8x8x64xi32>
      %60 = vector.shape_cast %57 : vector<8x8x64xi32> to vector<1x8x8x64xi32>
      tpu.vector_store %arg7[%c0_18, %c0_19, %c0_20, %c0_21], %60 {strides = array<i32>} : memref<1x8x8x64xi32, #tpu.memory_space<vmem>>, vector<1x8x8x64xi32>,
    } else {
    }
    return
  }
  func.func @transform_0(%arg0: i32, %arg1: i32) -> (i32, i32, i32, i32) {
    %c0_i32 = arith.constant 0 : i32
    %c0_i32_0 = arith.constant 0 : i32
    %c0_i32_1 = arith.constant 0 : i32
    %c0_i32_2 = arith.constant 0 : i32
    return %arg0, %c0_i32, %c0_i32_0, %c0_i32_1 : i32, i32, i32, i32
  }
  func.func @transform_1(%arg0: i32, %arg1: i32) -> (i32, i32, i32) {
    %c0_i32 = arith.constant 0 : i32
    %c0_i32_0 = arith.constant 0 : i32
    %c0_i32_1 = arith.constant 0 : i32
    %c0_i32_2 = arith.constant 0 : i32
    return %c0_i32, %c0_i32_0, %c0_i32_1 : i32, i32, i32
  }
  func.func @transform_2(%arg0: i32, %arg1: i32) -> (i32, i32, i32, i32) {
    %c0_i32 = arith.constant 0 : i32
    %c0_i32_0 = arith.constant 0 : i32
    %c0_i32_1 = arith.constant 0 : i32
    %c0_i32_2 = arith.constant 0 : i32
    %c0_i32_3 = arith.constant 0 : i32
    return %c0_i32, %c0_i32_0, %c0_i32_1, %c0_i32_2 : i32, i32, i32, i32
  }
  func.func @transform_3(%arg0: i32, %arg1: i32) -> (i32, i32, i32) {
    %c0_i32 = arith.constant 0 : i32
    %c0_i32_0 = arith.constant 0 : i32
    %c0_i32_1 = arith.constant 0 : i32
    %c0_i32_2 = arith.constant 0 : i32
    return %c0_i32, %c0_i32_0, %c0_i32_1 : i32, i32, i32
  }
  func.func @transform_4(%arg0: i32, %arg1: i32) -> (i32, i32, i32, i32) {
    %c0_i32 = arith.constant 0 : i32
    %c0_i32_0 = arith.constant 0 : i32
    %c0_i32_1 = arith.constant 0 : i32
    %c0_i32_2 = arith.constant 0 : i32
    return %arg0, %c0_i32, %c0_i32_0, %c0_i32_1 : i32, i32, i32, i32
  }
  func.func @transform_5(%arg0: i32, %arg1: i32) -> (i32, i32, i32, i32) {
    %c0_i32 = arith.constant 0 : i32
    %c0_i32_0 = arith.constant 0 : i32
    %c0_i32_1 = arith.constant 0 : i32
    %c0_i32_2 = arith.constant 0 : i32
    return %arg0, %c0_i32, %c0_i32_0, %c0_i32_1 : i32, i32, i32, i32
  }
}

</mosaic_0001>

<llo_original>
// kernel: tpu_custom_call.1
$region0: #{tpu_custom_call.1}
  #allocation0 [shape = 'u32[]', space=smem, size = 0x4, offset = 0x4, fixed_abs, tag = 'smem constant byte address 0x4 - core index']
  #allocation1 [shape = 'u32[144,128]{1,0:T(1,128)}', space=vmem, size = 0x12000, scoped, tag = 'internal scratch']
  #allocation2 [shape = 'bf16[18,18,64]{2,1,0:T(8,128)(2,1)}', space=vmem, size = 0x1b000, scoped, tag = 'scratch operand']
  #allocation3 [shape = 'f32[256,64]{1,0:T(8,128)}', space=vmem, size = 0x20000, scoped, tag = 'scratch operand']
  %s0 = inlined_call_operand.hbm [shape: f32[2,16,16,16], index: 0, kind: input, shape index: {}]
  %s1 = inlined_call_operand.vmem [shape: bf16[9,16,64], index: 1, kind: input, shape index: {}]
  %s2 = inlined_call_operand.vmem [shape: bf16[1,3,192,64], index: 2, kind: input, shape index: {}]
  %s3 = inlined_call_operand.vmem [shape: f32[2,1,64], index: 3, kind: input, shape index: {}]
  %s4 = inlined_call_operand.hbm [shape: f32[2,8,8,64], index: 4, kind: output, shape index: {0}]
  %s5 = inlined_call_operand.hbm [shape: s32[2,8,8,64], index: 5, kind: output, shape index: {1}]
  %6 = xla_tuple %s4, %s5
  %s7 = sld [smem:[#allocation0]]
  $region77: #{tpu_custom_call.1} parent=0
    _
  %s9 = ssub.s32 1, %s7
  %s10 = scalar_select 0, %s9, %s7
  $region1: #{tpu_custom_call.1} parent=0
    #allocation4 [shape = 'u8[262144]{0}', space=vmem, size = 0x40000, scoped, tag = 'input window, operand 0']
    #allocation5 [shape = 's32[2]{0}', space=sflag, size = 0x8, scoped, tag = 'scoped memory for tpu_custom_call.1']
    #allocation6 [shape = 's32[2]{0}', space=sflag, size = 0x8, scoped, tag = 'scoped memory for tpu_custom_call.1']
    #allocation7 [shape = 'u8[65536]{0}', space=vmem, size = 0x10000, scoped, tag = 'output window, operand 0']
    #allocation8 [shape = 'u8[65536]{0}', space=vmem, size = 0x10000, scoped, tag = 'output window, operand 1']
    #allocation9 [shape = 's32[2]{0}', space=sflag, size = 0x8, scoped, tag = 'scoped memory for tpu_custom_call.1']
    %11 = vsyncpa [#allocation5], 0
    %s12 = scalar_lea.sflag [#allocation5], 1
    %13 = vsyncpa %s12, 0
    %14 = vsyncpa [#allocation6], 0
    %s15 = scalar_lea.sflag [#allocation6], 1
    %16 = vsyncpa %s15, 0
    %17 = vsyncpa [#allocation9], 0
    %s18 = scalar_lea.sflag [#allocation9], 1
    %19 = vsyncpa %s18, 0
    loop: start=0, step=1, limit=6
    $region2: #{tpu_custom_call.1} parent=1 // loop_pre_header
      _
    $region3: #{tpu_custom_call.1} parent=1 // loop_header
      %s21 = sphi 0, %s25
      %p22 = scmp.ge.s32.totalorder %s21, 6
      %s28 = sphi 0, %s40
      %s29 = sphi 0, %s36
      %s30 = sphi 0, %s28
      %s31 = sphi 0, %s29
      %s32 = sphi 0, %s30
      %s33 = sphi 0, %s31
      %s43 = sphi 0, %s45
      %s46 = sphi 0, %s43
      %s47 = sphi 0, %s46
      %s63 = sphi 0, %s47
      %s67 = sphi 0, %s67
      %s69 = sphi 0, %s67
      %s70 = sphi 0, %s69
      %s84 = sphi 0, %s70
      %s88 = sphi 0, %s88
      %s90 = sphi 0, %s88
      %s91 = sphi 0, %s90
      %s105 = sphi 0, %s91
      %s109 = sphi 0, %s109
      %s111 = sphi 0, %s109
      %s112 = sphi 0, %s111
      %s126 = sphi 0, %s112
      %s132 = sphi 0, %s134
      %s135 = sphi 0, %s132
      %s136 = sphi 0, %s135
      %s152 = sphi 0, %s136
      %s158 = sphi 0, %s160
      %s161 = sphi 0, %s158
      %s162 = sphi 0, %s161
      %s178 = sphi 0, %s162
    $region4: #{tpu_custom_call.1} parent=1 // loop_header_branch
      %24 = sbr.rel (%p22) target = $region8
    $region5: #{tpu_custom_call.1} parent=1 // loop_body
      %s26 = ssub.s32 %s21, 1
      %s27 = ssub.s32 %s21, 2
      %s34 = sadd.s32 1, %s29
      %p35 = scmp.ge.s32.totalorder %s34, 2
      %s36 = scalar_select %p35, 0, %s34
      %s37 = sadd.s32 1, %s28
      %s38 = scalar_select %p35, %s37, %s28
      %p39 = scmp.ge.s32.totalorder %s38, 2
      %s40 = scalar_select %p39, 0, %s38
      %s41 = ssub.s32 %s28, %s40
      %p42 = scmp.eq.s32.totalorder %s41, 0
      %s44 = sadd.s32 %s43, 1
      %s45 = scalar_select %p42, %s43, %s44
      %p48 = pneg %p42
      %p49 = scmp.eq.s32.totalorder %s21, 3
      %p50 = por %p48, %p49
      %p51 = scmp.ne.s32.totalorder %s43, %s46
      %p52 = scmp.eq.s32.totalorder %s21, 0
      %p53 = por %p51, %p52
      %p54 = scmp.ne.s32.totalorder %s43, %s46
      %p55 = scmp.eq.s32.totalorder %s26, 3
      %p56 = por %p54, %p55
      %p57 = scmp.ne.s32.totalorder %s46, %s47
      %p58 = scmp.eq.s32.totalorder %s26, 0
      %p59 = por %p57, %p58
      %p60 = scmp.ne.s32.totalorder %s46, %s47
      %p61 = scmp.eq.s32.totalorder %s27, 3
      %p62 = por %p60, %p61
      %p64 = scmp.ne.s32.totalorder %s47, %s63
      %p65 = scmp.eq.s32.totalorder %s27, 0
      %p66 = por %p64, %p65
      %s68 = sadd.s32 %s67, 1
      %p71 = scmp.eq.s32.totalorder %s21, 3
      %p72 = scmp.ne.s32.totalorder %s67, %s69
      %p73 = scmp.eq.s32.totalorder %s21, 0
      %p74 = por %p72, %p73
      %p75 = scmp.ne.s32.totalorder %s67, %s69
      %p76 = scmp.eq.s32.totalorder %s26, 3
      %p77 = por %p75, %p76
      %p78 = scmp.ne.s32.totalorder %s69, %s70
      %p79 = scmp.eq.s32.totalorder %s26, 0
      %p80 = por %p78, %p79
      %p81 = scmp.ne.s32.totalorder %s69, %s70
      %p82 = scmp.eq.s32.totalorder %s27, 3
      %p83 = por %p81, %p82
      %p85 = scmp.ne.s32.totalorder %s70, %s84
      %p86 = scmp.eq.s32.totalorder %s27, 0
      %p87 = por %p85, %p86
      %s89 = sadd.s32 %s88, 1
      %p92 = scmp.eq.s32.totalorder %s21, 3
      %p93 = scmp.ne.s32.totalorder %s88, %s90
      %p94 = scmp.eq.s32.totalorder %s21, 0
      %p95 = por %p93, %p94
      %p96 = scmp.ne.s32.totalorder %s88, %s90
      %p97 = scmp.eq.s32.totalorder %s26, 3
      %p98 = por %p96, %p97
      %p99 = scmp.ne.s32.totalorder %s90, %s91
      %p100 = scmp.eq.s32.totalorder %s26, 0
      %p101 = por %p99, %p100
      %p102 = scmp.ne.s32.totalorder %s90, %s91
      %p103 = scmp.eq.s32.totalorder %s27, 3
      %p104 = por %p102, %p103
      %p106 = scmp.ne.s32.totalorder %s91, %s105
      %p107 = scmp.eq.s32.totalorder %s27, 0
      %p108 = por %p106, %p107
      %s110 = sadd.s32 %s109, 1
      %p113 = scmp.eq.s32.totalorder %s21, 3
      %p114 = scmp.ne.s32.totalorder %s109, %s111
      %p115 = scmp.eq.s32.totalorder %s21, 0
      %p116 = por %p114, %p115
      %p117 = scmp.ne.s32.totalorder %s109, %s111
      %p118 = scmp.eq.s32.totalorder %s26, 3
      %p119 = por %p117, %p118
      %p120 = scmp.ne.s32.totalorder %s111, %s112
      %p121 = scmp.eq.s32.totalorder %s26, 0
      %p122 = por %p120, %p121
      %p123 = scmp.ne.s32.totalorder %s111, %s112
      %p124 = scmp.eq.s32.totalorder %s27, 3
      %p125 = por %p123, %p124
      %p127 = scmp.ne.s32.totalorder %s112, %s126
      %p128 = scmp.eq.s32.totalorder %s27, 0
      %p129 = por %p127, %p128
      %s130 = ssub.s32 %s28, %s40
      %p131 = scmp.eq.s32.totalorder %s130, 0
      %s133 = sadd.s32 %s132, 1
      %s134 = scalar_select %p131, %s132, %s133
      %p137 = pneg %p131
      %p138 = scmp.eq.s32.totalorder %s21, 3
      %p139 = por %p137, %p138
      %p140 = scmp.ne.s32.totalorder %s132, %s135
      %p141 = scmp.eq.s32.totalorder %s21, 0
      %p142 = por %p140, %p141
      %p143 = scmp.ne.s32.totalorder %s132, %s135
      %p144 = scmp.eq.s32.totalorder %s26, 3
      %p145 = por %p143, %p144
      %p146 = scmp.ne.s32.totalorder %s135, %s136
      %p147 = scmp.eq.s32.totalorder %s26, 0
      %p148 = por %p146, %p147
      %p149 = scmp.ne.s32.totalorder %s135, %s136
      %p150 = scmp.eq.s32.totalorder %s27, 3
      %p151 = por %p149, %p150
      %p153 = scmp.ne.s32.totalorder %s136, %s152
      %p154 = scmp.eq.s32.totalorder %s27, 0
      %p155 = por %p153, %p154
      %s156 = ssub.s32 %s28, %s40
      %p157 = scmp.eq.s32.totalorder %s156, 0
      %s159 = sadd.s32 %s158, 1
      %s160 = scalar_select %p157, %s158, %s159
      %p163 = pneg %p157
      %p164 = scmp.eq.s32.totalorder %s21, 3
      %p165 = por %p163, %p164
      %p166 = scmp.ne.s32.totalorder %s158, %s161
      %p167 = scmp.eq.s32.totalorder %s21, 0
      %p168 = por %p166, %p167
      %p169 = scmp.ne.s32.totalorder %s158, %s161
      %p170 = scmp.eq.s32.totalorder %s26, 3
      %p171 = por %p169, %p170
      %p172 = scmp.ne.s32.totalorder %s161, %s162
      %p173 = scmp.eq.s32.totalorder %s26, 0
      %p174 = por %p172, %p173
      %p175 = scmp.ne.s32.totalorder %s161, %s162
      %p176 = scmp.eq.s32.totalorder %s27, 3
      %p177 = por %p175, %p176
      %p179 = scmp.ne.s32.totalorder %s162, %s178
      %p180 = scmp.eq.s32.totalorder %s27, 0
      %p181 = por %p179, %p180
      %p182 = scmp.le.s32.totalorder 1, %s21
      %p183 = scmp.lt.s32.totalorder %s21, 5
      %p184 = pnand %p182, %p183
      %p185 = pneg %p184
      // Predicated region
      $region9: #{tpu_custom_call.1} parent=5 // pred_check
        _
      $region10: #{tpu_custom_call.1} parent=5 // pred_check_branch
        %187 = sbr.rel (%p184) target = $region12
      $region11: #{tpu_custom_call.1} parent=5 // pred_region
        %s188 = ssub.s32 %s21, 1
        // Predicated region
        $region13: #{tpu_custom_call.1} parent=11 // pred_check
          %p189 = pneg %p80
        $region14: #{tpu_custom_call.1} parent=11 // pred_check_branch
          %191 = sbr.rel (%p189) target = $region16
        $region15: #{tpu_custom_call.1} parent=11 // pred_region
          _
        $region16: #{tpu_custom_call.1} parent=11 // pred_fallthru
          _
        // Predicated region
        $region17: #{tpu_custom_call.1} parent=11 // pred_check
          %p192 = pneg %p101
        $region18: #{tpu_custom_call.1} parent=11 // pred_check_branch
          %194 = sbr.rel (%p192) target = $region20
        $region19: #{tpu_custom_call.1} parent=11 // pred_region
          _
        $region20: #{tpu_custom_call.1} parent=11 // pred_fallthru
          _
        // Predicated region
        $region21: #{tpu_custom_call.1} parent=11 // pred_check
          %p195 = pneg %p122
        $region22: #{tpu_custom_call.1} parent=11 // pred_check_branch
          %197 = sbr.rel (%p195) target = $region24
        $region23: #{tpu_custom_call.1} parent=11 // pred_region
          _
        $region24: #{tpu_custom_call.1} parent=11 // pred_fallthru
          _
      $region12: #{tpu_custom_call.1} parent=5 // pred_fallthru
        _
      %p198 = scmp.lt.s32.totalorder %s21, 4
      // Predicated region
      $region25: #{tpu_custom_call.1} parent=5 // pred_check
        %p199 = pneg %p198
      $region26: #{tpu_custom_call.1} parent=5 // pred_check_branch
        %201 = sbr.rel (%p199) target = $region28
      $region27: #{tpu_custom_call.1} parent=5 // pred_region
        // Predicated region
        $region29: #{tpu_custom_call.1} parent=27 // pred_check
          %p202 = pneg %p53
        $region30: #{tpu_custom_call.1} parent=27 // pred_check_branch
          %204 = sbr.rel (%p202) target = $region32
        $region31: #{tpu_custom_call.1} parent=27 // pred_region
          %s205 = sand.u32 %s43, 1
          %s206 = scalar_lea.sflag [#allocation5], %s205
          %s207 = sand.u32 %s43, 1
          %s208 = smul.addr %s207, 256
          %s209 = scalar_lea.vmem [#allocation4], %s208
          %s211 = ssub.s32 4096, 4096
          %212 = vsyncadd %s206, %s211
          %s213 = smul.addr %s28, 32
          %s214 = smul.addr %s213, 128
          %s215 = scalar_lea.hbm %s0, %s214
          %s216 = sshll.u32 %s209, 4
          %s217 = int_to_ptr.vmem [resolvable:$true] %s216
          %222 = dma.hbm_to_vmem [thread:$0]  %s215, 4096, %s217, %s206, 128, 128, 8
        $region32: #{tpu_custom_call.1} parent=27 // pred_fallthru
          _
      $region28: #{tpu_custom_call.1} parent=5 // pred_fallthru
        _
      %p223 = scmp.le.s32.totalorder 1, %s21
      %p224 = scmp.lt.s32.totalorder %s21, 5
      %p225 = pnand %p223, %p224
      %p226 = pneg %p225
      // Predicated region
      $region33: #{tpu_custom_call.1} parent=5 // pred_check
        _
      $region34: #{tpu_custom_call.1} parent=5 // pred_check_branch
        %228 = sbr.rel (%p225) target = $region36
      $region35: #{tpu_custom_call.1} parent=5 // pred_region
        %s229 = ssub.s32 %s21, 1
        %s230 = sand.u32 %s46, 1
        %s231 = scalar_lea.sflag [#allocation5], %s230
        %s232 = sand.u32 %s46, 1
        %s233 = smul.addr %s232, 256
        %s234 = scalar_lea.vmem [#allocation4], %s233
        // Predicated region
        $region37: #{tpu_custom_call.1} parent=35 // pred_check
          %p235 = pneg %p59
        $region38: #{tpu_custom_call.1} parent=35 // pred_check_branch
          %237 = sbr.rel (%p235) target = $region40
        $region39: #{tpu_custom_call.1} parent=35 // pred_region
          %238 = dma.done %s231, 4096
        $region40: #{tpu_custom_call.1} parent=35 // pred_fallthru
          _
        %s239 = sand.u32 %s46, 1
        %s240 = scalar_lea.sflag [#allocation5], %s239
        %s241 = sand.u32 %s46, 1
        %s242 = smul.addr %s241, 256
        %s243 = scalar_lea.vmem [#allocation4], %s242
        %p244 = pneg %p59
        %p245 = pneg %p56
        %p246 = pneg %p80
        %p247 = pneg %p77
        %p248 = pneg %p101
        %p249 = pneg %p98
        %p250 = pneg %p122
        %p251 = pneg %p119
        %p252 = pneg %p148
        %p253 = pneg %p145
        %s254 = sand.u32 %s135, 1
        %s255 = scalar_lea.sflag [#allocation6], %s254
        %s256 = sand.u32 %s135, 1
        %s257 = smul.addr %s256, 64
        %s258 = scalar_lea.vmem [#allocation7], %s257
        %p259 = pneg %p174
        %p260 = pneg %p171
        %s261 = sand.u32 %s161, 1
        %s262 = scalar_lea.sflag [#allocation9], %s261
        %s263 = sand.u32 %s161, 1
        %s264 = smul.addr %s263, 64
        %s265 = scalar_lea.vmem [#allocation8], %s264
        %p267 = scmp.eq.s32.totalorder %s31, 0
        // Predicated region
        $region41: #{tpu_custom_call.1} parent=35 // pred_check
          %p268 = pneg %p267
        $region42: #{tpu_custom_call.1} parent=35 // pred_check_branch
          %270 = sbr.rel (%p268) target = $region44
        $region43: #{tpu_custom_call.1} parent=35 // pred_region
          %vm271 = vcmask 519168
          %272 = vst.msk [vmem:[#allocation2] sm:$0xf] %vm271, 0
          %273 = vst.msk [vmem:[#allocation2 + $0x4] sm:$0xf] %vm271, 0
          %vm274 = vcmask 516096
          %275 = vst.msk [vmem:[#allocation2 + $0x8] sm:$0x1] %vm274, 0
          %276 = vst.msk [vmem:[#allocation2 + $0xc] sm:$0xf] %vm271, 0
          %277 = vst.msk [vmem:[#allocation2 + $0x10] sm:$0xf] %vm271, 0
          %278 = vst.msk [vmem:[#allocation2 + $0x14] sm:$0x1] %vm274, 0
          %279 = vst.msk [vmem:[#allocation2 + $0x18] sm:$0xf] %vm271, 0
          %280 = vst.msk [vmem:[#allocation2 + $0x1c] sm:$0xf] %vm271, 0
          %281 = vst.msk [vmem:[#allocation2 + $0x20] sm:$0x1] %vm274, 0
          %282 = vst.msk [vmem:[#allocation2 + $0x24] sm:$0xf] %vm271, 0
          %283 = vst.msk [vmem:[#allocation2 + $0x28] sm:$0xf] %vm271, 0
          %284 = vst.msk [vmem:[#allocation2 + $0x2c] sm:$0x1] %vm274, 0
          %285 = vst.msk [vmem:[#allocation2 + $0x30] sm:$0xf] %vm271, 0
          %286 = vst.msk [vmem:[#allocation2 + $0x34] sm:$0xf] %vm271, 0
          %287 = vst.msk [vmem:[#allocation2 + $0x38] sm:$0x1] %vm274, 0
          %288 = vst.msk [vmem:[#allocation2 + $0x3c] sm:$0xf] %vm271, 0
          %289 = vst.msk [vmem:[#allocation2 + $0x40] sm:$0xf] %vm271, 0
          %290 = vst.msk [vmem:[#allocation2 + $0x44] sm:$0x1] %vm274, 0
          %291 = vst.msk [vmem:[#allocation2 + $0x48] sm:$0xf] %vm271, 0
          %292 = vst.msk [vmem:[#allocation2 + $0x4c] sm:$0xf] %vm271, 0
          %293 = vst.msk [vmem:[#allocation2 + $0x50] sm:$0x1] %vm274, 0
          %294 = vst.msk [vmem:[#allocation2 + $0x54] sm:$0xf] %vm271, 0
          %295 = vst.msk [vmem:[#allocation2 + $0x58] sm:$0xf] %vm271, 0
          %296 = vst.msk [vmem:[#allocation2 + $0x5c] sm:$0x1] %vm274, 0
          %297 = vst.msk [vmem:[#allocation2 + $0x60] sm:$0xf] %vm271, 0
          %298 = vst.msk [vmem:[#allocation2 + $0x64] sm:$0xf] %vm271, 0
          %299 = vst.msk [vmem:[#allocation2 + $0x68] sm:$0x1] %vm274, 0
          %300 = vst.msk [vmem:[#allocation2 + $0x6c] sm:$0xf] %vm271, 0
          %301 = vst.msk [vmem:[#allocation2 + $0x70] sm:$0xf] %vm271, 0
          %302 = vst.msk [vmem:[#allocation2 + $0x74] sm:$0x1] %vm274, 0
          %303 = vst.msk [vmem:[#allocation2 + $0x78] sm:$0xf] %vm271, 0
          %304 = vst.msk [vmem:[#allocation2 + $0x7c] sm:$0xf] %vm271, 0
          %305 = vst.msk [vmem:[#allocation2 + $0x80] sm:$0x1] %vm274, 0
          %306 = vst.msk [vmem:[#allocation2 + $0x84] sm:$0xf] %vm271, 0
          %307 = vst.msk [vmem:[#allocation2 + $0x88] sm:$0xf] %vm271, 0
          %308 = vst.msk [vmem:[#allocation2 + $0x8c] sm:$0x1] %vm274, 0
          %309 = vst.msk [vmem:[#allocation2 + $0x90] sm:$0xf] %vm271, 0
          %310 = vst.msk [vmem:[#allocation2 + $0x94] sm:$0xf] %vm271, 0
          %311 = vst.msk [vmem:[#allocation2 + $0x98] sm:$0x1] %vm274, 0
          %312 = vst.msk [vmem:[#allocation2 + $0x9c] sm:$0xf] %vm271, 0
          %313 = vst.msk [vmem:[#allocation2 + $0xa0] sm:$0xf] %vm271, 0
          %314 = vst.msk [vmem:[#allocation2 + $0xa4] sm:$0x1] %vm274, 0
          %315 = vst.msk [vmem:[#allocation2 + $0xa8] sm:$0xf] %vm271, 0
          %316 = vst.msk [vmem:[#allocation2 + $0xac] sm:$0xf] %vm271, 0
          %317 = vst.msk [vmem:[#allocation2 + $0xb0] sm:$0x1] %vm274, 0
          %318 = vst.msk [vmem:[#allocation2 + $0xb4] sm:$0xf] %vm271, 0
          %319 = vst.msk [vmem:[#allocation2 + $0xb8] sm:$0xf] %vm271, 0
          %320 = vst.msk [vmem:[#allocation2 + $0xbc] sm:$0x1] %vm274, 0
          %321 = vst.msk [vmem:[#allocation2 + $0xc0] sm:$0xf] %vm271, 0
          %322 = vst.msk [vmem:[#allocation2 + $0xc4] sm:$0xf] %vm271, 0
          %323 = vst.msk [vmem:[#allocation2 + $0xc8] sm:$0x1] %vm274, 0
          %324 = vst.msk [vmem:[#allocation2 + $0xcc] sm:$0xf] %vm271, 0
          %325 = vst.msk [vmem:[#allocation2 + $0xd0] sm:$0xf] %vm271, 0
          %326 = vst.msk [vmem:[#allocation2 + $0xd4] sm:$0x1] %vm274, 0
          %v327 = vld [vmem:[%s234] sm:$0xff]
          %v328 = vld [vmem:[%s234 + $0x8] sm:$0xff]
          %v329 = vld [vmem:[%s234 + $0x10] sm:$0xff]
          %v330 = vld [vmem:[%s234 + $0x18] sm:$0xff]
          %v331 = vld [vmem:[%s234 + $0x20] sm:$0xff]
          %v332 = vld [vmem:[%s234 + $0x28] sm:$0xff]
          %v333 = vld [vmem:[%s234 + $0x30] sm:$0xff]
          %v334 = vld [vmem:[%s234 + $0x38] sm:$0xff]
          %v335 = vld [vmem:[%s234 + $0x40] sm:$0xff]
          %v336 = vld [vmem:[%s234 + $0x48] sm:$0xff]
          %v337 = vld [vmem:[%s234 + $0x50] sm:$0xff]
          %v338 = vld [vmem:[%s234 + $0x58] sm:$0xff]
          %v339 = vld [vmem:[%s234 + $0x60] sm:$0xff]
          %v340 = vld [vmem:[%s234 + $0x68] sm:$0xff]
          %v341 = vld [vmem:[%s234 + $0x70] sm:$0xff]
          %v342 = vld [vmem:[%s234 + $0x78] sm:$0xff]
          %v343 = vld [vmem:[%s234 + $0x80] sm:$0xff]
          %v344 = vld [vmem:[%s234 + $0x88] sm:$0xff]
          %v345 = vld [vmem:[%s234 + $0x90] sm:$0xff]
          %v346 = vld [vmem:[%s234 + $0x98] sm:$0xff]
          %v347 = vld [vmem:[%s234 + $0xa0] sm:$0xff]
          %v348 = vld [vmem:[%s234 + $0xa8] sm:$0xff]
          %v349 = vld [vmem:[%s234 + $0xb0] sm:$0xff]
          %v350 = vld [vmem:[%s234 + $0xb8] sm:$0xff]
          %v351 = vld [vmem:[%s234 + $0xc0] sm:$0xff]
          %v352 = vld [vmem:[%s234 + $0xc8] sm:$0xff]
          %v353 = vld [vmem:[%s234 + $0xd0] sm:$0xff]
          %v354 = vld [vmem:[%s234 + $0xd8] sm:$0xff]
          %v355 = vld [vmem:[%s234 + $0xe0] sm:$0xff]
          %v356 = vld [vmem:[%s234 + $0xe8] sm:$0xff]
          %v357 = vld [vmem:[%s234 + $0xf0] sm:$0xff]
          %v358 = vld [vmem:[%s234 + $0xf8] sm:$0xff]
          %v359 = vpack.c.bf16 %v328, %v327
          %v360 = vpack.c.bf16 %v330, %v329
          %v361 = vpack.c.bf16 %v332, %v331
          %v362 = vpack.c.bf16 %v334, %v333
          %v363 = vpack.c.bf16 %v336, %v335
          %v364 = vpack.c.bf16 %v338, %v337
          %v365 = vpack.c.bf16 %v340, %v339
          %v366 = vpack.c.bf16 %v342, %v341
          %v367 = vpack.c.bf16 %v344, %v343
          %v368 = vpack.c.bf16 %v346, %v345
          %v369 = vpack.c.bf16 %v348, %v347
          %v370 = vpack.c.bf16 %v350, %v349
          %v371 = vpack.c.bf16 %v352, %v351
          %v372 = vpack.c.bf16 %v354, %v353
          %v373 = vpack.c.bf16 %v356, %v355
          %v374 = vpack.c.bf16 %v358, %v357
          %v391 = vunpack.c.l.b16 %v359
          %v392 = vunpack.c.h.b16 %v359
          %v393 = vunpack.c.l.b16 %v360
          %v394 = vunpack.c.h.b16 %v360
          %v395 = vunpack.c.l.b16 %v361
          %v396 = vunpack.c.h.b16 %v361
          %v397 = vunpack.c.l.b16 %v362
          %v398 = vunpack.c.h.b16 %v362
          %v399 = vunpack.c.l.b16 %v363
          %v400 = vunpack.c.h.b16 %v363
          %v401 = vunpack.c.l.b16 %v364
          %v402 = vunpack.c.h.b16 %v364
          %v403 = vunpack.c.l.b16 %v365
          %v404 = vunpack.c.h.b16 %v365
          %v405 = vunpack.c.l.b16 %v366
          %v406 = vunpack.c.h.b16 %v366
          %v407 = vunpack.c.l.b16 %v367
          %v408 = vunpack.c.h.b16 %v367
          %v409 = vunpack.c.l.b16 %v368
          %v410 = vunpack.c.h.b16 %v368
          %v411 = vunpack.c.l.b16 %v369
          %v412 = vunpack.c.h.b16 %v369
          %v413 = vunpack.c.l.b16 %v370
          %v414 = vunpack.c.h.b16 %v370
          %v415 = vunpack.c.l.b16 %v371
          %v416 = vunpack.c.h.b16 %v371
          %v417 = vunpack.c.l.b16 %v372
          %v418 = vunpack.c.h.b16 %v372
          %v419 = vunpack.c.l.b16 %v373
          %v420 = vunpack.c.h.b16 %v373
          %v421 = vunpack.c.l.b16 %v374
          %v422 = vunpack.c.h.b16 %v374
          %v423 = vpack.c.b16 %v391, %v391
          %v424 = vpack.c.b16 %v392, %v392
          %v425 = vpack.c.b16 %v393, %v393
          %v426 = vpack.c.b16 %v394, %v394
          %v427 = vpack.c.b16 %v395, %v395
          %v428 = vpack.c.b16 %v396, %v396
          %v429 = vpack.c.b16 %v397, %v397
          %v430 = vpack.c.b16 %v398, %v398
          %v431 = vpack.c.b16 %v399, %v399
          %v432 = vpack.c.b16 %v400, %v400
          %v433 = vpack.c.b16 %v401, %v401
          %v434 = vpack.c.b16 %v402, %v402
          %v435 = vpack.c.b16 %v403, %v403
          %v436 = vpack.c.b16 %v404, %v404
          %v437 = vpack.c.b16 %v405, %v405
          %v438 = vpack.c.b16 %v406, %v406
          %v439 = vpack.c.b16 %v407, %v407
          %v440 = vpack.c.b16 %v408, %v408
          %v441 = vpack.c.b16 %v409, %v409
          %v442 = vpack.c.b16 %v410, %v410
          %v443 = vpack.c.b16 %v411, %v411
          %v444 = vpack.c.b16 %v412, %v412
          %v445 = vpack.c.b16 %v413, %v413
          %v446 = vpack.c.b16 %v414, %v414
          %v447 = vpack.c.b16 %v415, %v415
          %v448 = vpack.c.b16 %v416, %v416
          %v449 = vpack.c.b16 %v417, %v417
          %v450 = vpack.c.b16 %v418, %v418
          %v451 = vpack.c.b16 %v419, %v419
          %v452 = vpack.c.b16 %v420, %v420
          %v453 = vpack.c.b16 %v421, %v421
          %v454 = vpack.c.b16 %v422, %v422
          %vm455 = vsmask.f32 256
          %vm456 = vsmask.f32 4368
          %vm457 = vmor %vm455, %vm456
          %v459 = vshrl.u32 %v423, 16
          %v461 = vrot.slane %v459, 7
          %v462 = vshll.u32 %v423, 16
          %v464 = vor.u32 %v461, %v462
          %v465 = vrot.slane %v461, 4
          %v467 = vshrl.u32 %v424, 16
          %v469 = vrot.slane %v467, 7
          %v470 = vshll.u32 %v424, 16
          %v472 = vor.u32 %v469, %v470
          %v473 = vsel %vm457, %v465, %v472
          %v474 = vrot.slane %v469, 4
          %v476 = vshrl.u32 %v425, 16
          %v478 = vrot.slane %v476, 7
          %v479 = vshll.u32 %v425, 16
          %v481 = vor.u32 %v478, %v479
          %v482 = vrot.slane %v478, 4
          %v484 = vshrl.u32 %v426, 16
          %v486 = vrot.slane %v484, 7
          %v487 = vshll.u32 %v426, 16
          %v489 = vor.u32 %v486, %v487
          %v490 = vsel %vm457, %v482, %v489
          %v491 = vrot.slane %v486, 4
          %v493 = vshrl.u32 %v427, 16
          %v495 = vrot.slane %v493, 7
          %v496 = vshll.u32 %v427, 16
          %v498 = vor.u32 %v495, %v496
          %v499 = vrot.slane %v495, 4
          %v501 = vshrl.u32 %v428, 16
          %v503 = vrot.slane %v501, 7
          %v504 = vshll.u32 %v428, 16
          %v506 = vor.u32 %v503, %v504
          %v507 = vsel %vm457, %v499, %v506
          %v508 = vrot.slane %v503, 4
          %v510 = vshrl.u32 %v429, 16
          %v512 = vrot.slane %v510, 7
          %v513 = vshll.u32 %v429, 16
          %v515 = vor.u32 %v512, %v513
          %v516 = vrot.slane %v512, 4
          %v518 = vshrl.u32 %v430, 16
          %v520 = vrot.slane %v518, 7
          %v521 = vshll.u32 %v430, 16
          %v523 = vor.u32 %v520, %v521
          %v524 = vsel %vm457, %v516, %v523
          %v525 = vrot.slane %v520, 4
          %v527 = vshrl.u32 %v431, 16
          %v529 = vrot.slane %v527, 7
          %v530 = vshll.u32 %v431, 16
          %v532 = vor.u32 %v529, %v530
          %v533 = vrot.slane %v529, 4
          %v535 = vshrl.u32 %v432, 16
          %v537 = vrot.slane %v535, 7
          %v538 = vshll.u32 %v432, 16
          %v540 = vor.u32 %v537, %v538
          %v541 = vsel %vm457, %v533, %v540
          %v542 = vrot.slane %v537, 4
          %v544 = vshrl.u32 %v433, 16
          %v546 = vrot.slane %v544, 7
          %v547 = vshll.u32 %v433, 16
          %v549 = vor.u32 %v546, %v547
          %v550 = vrot.slane %v546, 4
          %v552 = vshrl.u32 %v434, 16
          %v554 = vrot.slane %v552, 7
          %v555 = vshll.u32 %v434, 16
          %v557 = vor.u32 %v554, %v555
          %v558 = vsel %vm457, %v550, %v557
          %v559 = vrot.slane %v554, 4
          %v561 = vshrl.u32 %v435, 16
          %v563 = vrot.slane %v561, 7
          %v564 = vshll.u32 %v435, 16
          %v566 = vor.u32 %v563, %v564
          %v567 = vrot.slane %v563, 4
          %v569 = vshrl.u32 %v436, 16
          %v571 = vrot.slane %v569, 7
          %v572 = vshll.u32 %v436, 16
          %v574 = vor.u32 %v571, %v572
          %v575 = vsel %vm457, %v567, %v574
          %v576 = vrot.slane %v571, 4
          %v578 = vshrl.u32 %v437, 16
          %v580 = vrot.slane %v578, 7
          %v581 = vshll.u32 %v437, 16
          %v583 = vor.u32 %v580, %v581
          %v584 = vrot.slane %v580, 4
          %v586 = vshrl.u32 %v438, 16
          %v588 = vrot.slane %v586, 7
          %v589 = vshll.u32 %v438, 16
          %v591 = vor.u32 %v588, %v589
          %v592 = vsel %vm457, %v584, %v591
          %v593 = vrot.slane %v588, 4
          %v595 = vshrl.u32 %v439, 16
          %v597 = vrot.slane %v595, 7
          %v598 = vshll.u32 %v439, 16
          %v600 = vor.u32 %v597, %v598
          %v601 = vrot.slane %v597, 4
          %v603 = vshrl.u32 %v440, 16
          %v605 = vrot.slane %v603, 7
          %v606 = vshll.u32 %v440, 16
          %v608 = vor.u32 %v605, %v606
          %v609 = vsel %vm457, %v601, %v608
          %v610 = vrot.slane %v605, 4
          %v612 = vshrl.u32 %v441, 16
          %v614 = vrot.slane %v612, 7
          %v615 = vshll.u32 %v441, 16
          %v617 = vor.u32 %v614, %v615
          %v618 = vrot.slane %v614, 4
          %v620 = vshrl.u32 %v442, 16
          %v622 = vrot.slane %v620, 7
          %v623 = vshll.u32 %v442, 16
          %v625 = vor.u32 %v622, %v623
          %v626 = vsel %vm457, %v618, %v625
          %v627 = vrot.slane %v622, 4
          %v629 = vshrl.u32 %v443, 16
          %v631 = vrot.slane %v629, 7
          %v632 = vshll.u32 %v443, 16
          %v634 = vor.u32 %v631, %v632
          %v635 = vrot.slane %v631, 4
          %v637 = vshrl.u32 %v444, 16
          %v639 = vrot.slane %v637, 7
          %v640 = vshll.u32 %v444, 16
          %v642 = vor.u32 %v639, %v640
          %v643 = vsel %vm457, %v635, %v642
          %v644 = vrot.slane %v639, 4
          %v646 = vshrl.u32 %v445, 16
          %v648 = vrot.slane %v646, 7
          %v649 = vshll.u32 %v445, 16
          %v651 = vor.u32 %v648, %v649
          %v652 = vrot.slane %v648, 4
          %v654 = vshrl.u32 %v446, 16
          %v656 = vrot.slane %v654, 7
          %v657 = vshll.u32 %v446, 16
          %v659 = vor.u32 %v656, %v657
          %v660 = vsel %vm457, %v652, %v659
          %v661 = vrot.slane %v656, 4
          %v663 = vshrl.u32 %v447, 16
          %v665 = vrot.slane %v663, 7
          %v666 = vshll.u32 %v447, 16
          %v668 = vor.u32 %v665, %v666
          %v669 = vrot.slane %v665, 4
          %v671 = vshrl.u32 %v448, 16
          %v673 = vrot.slane %v671, 7
          %v674 = vshll.u32 %v448, 16
          %v676 = vor.u32 %v673, %v674
          %v677 = vsel %vm457, %v669, %v676
          %v678 = vrot.slane %v673, 4
          %v680 = vshrl.u32 %v449, 16
          %v682 = vrot.slane %v680, 7
          %v683 = vshll.u32 %v449, 16
          %v685 = vor.u32 %v682, %v683
          %v686 = vrot.slane %v682, 4
          %v688 = vshrl.u32 %v450, 16
          %v690 = vrot.slane %v688, 7
          %v691 = vshll.u32 %v450, 16
          %v693 = vor.u32 %v690, %v691
          %v694 = vsel %vm457, %v686, %v693
          %v695 = vrot.slane %v690, 4
          %v697 = vshrl.u32 %v451, 16
          %v699 = vrot.slane %v697, 7
          %v700 = vshll.u32 %v451, 16
          %v702 = vor.u32 %v699, %v700
          %v703 = vrot.slane %v699, 4
          %v705 = vshrl.u32 %v452, 16
          %v707 = vrot.slane %v705, 7
          %v708 = vshll.u32 %v452, 16
          %v710 = vor.u32 %v707, %v708
          %v711 = vsel %vm457, %v703, %v710
          %v712 = vrot.slane %v707, 4
          %v714 = vshrl.u32 %v453, 16
          %v716 = vrot.slane %v714, 7
          %v717 = vshll.u32 %v453, 16
          %v719 = vor.u32 %v716, %v717
          %v720 = vrot.slane %v716, 4
          %v722 = vshrl.u32 %v454, 16
          %v724 = vrot.slane %v722, 7
          %v725 = vshll.u32 %v454, 16
          %v727 = vor.u32 %v724, %v725
          %v728 = vsel %vm457, %v720, %v727
          %v729 = vrot.slane %v724, 4
          %s778 = scalar_lea.vmem [#allocation2], 12
          %vm779 = vcmask 125952
          %vm780 = vsmask.f32 7938
          %vm781 = vmand %vm779, %vm780
          %v782 = vld [vmem:[%s778] sm:$0xf]
          %v783 = vsel %vm781, %v464, %v782
          %784 = vst [vmem:[%s778] sm:$0xf] %v783
          %vm785 = vcmask 125952
          %786 = vst.msk [vmem:[%s778 + $0x4] sm:$0xf] %vm785, %v473
          %vm787 = vcmask 122880
          %vm788 = vmand %vm787, %vm455
          %v789 = vld [vmem:[%s778 + $0x8] sm:$0x1]
          %v790 = vsel %vm788, %v474, %v789
          %791 = vst [vmem:[%s778 + $0x8] sm:$0x1] %v790
          %v792 = vld [vmem:[%s778 + $0xc] sm:$0xf]
          %v793 = vsel %vm781, %v481, %v792
          %794 = vst [vmem:[%s778 + $0xc] sm:$0xf] %v793
          %795 = vst.msk [vmem:[%s778 + $0x10] sm:$0xf] %vm785, %v490
          %v796 = vld [vmem:[%s778 + $0x14] sm:$0x1]
          %v797 = vsel %vm788, %v491, %v796
          %798 = vst [vmem:[%s778 + $0x14] sm:$0x1] %v797
          %v799 = vld [vmem:[%s778 + $0x18] sm:$0xf]
          %v800 = vsel %vm781, %v498, %v799
          %801 = vst [vmem:[%s778 + $0x18] sm:$0xf] %v800
          %802 = vst.msk [vmem:[%s778 + $0x1c] sm:$0xf] %vm785, %v507
          %v803 = vld [vmem:[%s778 + $0x20] sm:$0x1]
          %v804 = vsel %vm788, %v508, %v803
          %805 = vst [vmem:[%s778 + $0x20] sm:$0x1] %v804
          %v806 = vld [vmem:[%s778 + $0x24] sm:$0xf]
          %v807 = vsel %vm781, %v515, %v806
          %808 = vst [vmem:[%s778 + $0x24] sm:$0xf] %v807
          %809 = vst.msk [vmem:[%s778 + $0x28] sm:$0xf] %vm785, %v524
          %v810 = vld [vmem:[%s778 + $0x2c] sm:$0x1]
          %v811 = vsel %vm788, %v525, %v810
          %812 = vst [vmem:[%s778 + $0x2c] sm:$0x1] %v811
          %v813 = vld [vmem:[%s778 + $0x30] sm:$0xf]
          %v814 = vsel %vm781, %v532, %v813
          %815 = vst [vmem:[%s778 + $0x30] sm:$0xf] %v814
          %816 = vst.msk [vmem:[%s778 + $0x34] sm:$0xf] %vm785, %v541
          %v817 = vld [vmem:[%s778 + $0x38] sm:$0x1]
          %v818 = vsel %vm788, %v542, %v817
          %819 = vst [vmem:[%s778 + $0x38] sm:$0x1] %v818
          %v820 = vld [vmem:[%s778 + $0x3c] sm:$0xf]
          %v821 = vsel %vm781, %v549, %v820
          %822 = vst [vmem:[%s778 + $0x3c] sm:$0xf] %v821
          %823 = vst.msk [vmem:[%s778 + $0x40] sm:$0xf] %vm785, %v558
          %v824 = vld [vmem:[%s778 + $0x44] sm:$0x1]
          %v825 = vsel %vm788, %v559, %v824
          %826 = vst [vmem:[%s778 + $0x44] sm:$0x1] %v825
          %v827 = vld [vmem:[%s778 + $0x48] sm:$0xf]
          %v828 = vsel %vm781, %v566, %v827
          %829 = vst [vmem:[%s778 + $0x48] sm:$0xf] %v828
          %830 = vst.msk [vmem:[%s778 + $0x4c] sm:$0xf] %vm785, %v575
          %v831 = vld [vmem:[%s778 + $0x50] sm:$0x1]
          %v832 = vsel %vm788, %v576, %v831
          %833 = vst [vmem:[%s778 + $0x50] sm:$0x1] %v832
          %v834 = vld [vmem:[%s778 + $0x54] sm:$0xf]
          %v835 = vsel %vm781, %v583, %v834
          %836 = vst [vmem:[%s778 + $0x54] sm:$0xf] %v835
          %837 = vst.msk [vmem:[%s778 + $0x58] sm:$0xf] %vm785, %v592
          %v838 = vld [vmem:[%s778 + $0x5c] sm:$0x1]
          %v839 = vsel %vm788, %v593, %v838
          %840 = vst [vmem:[%s778 + $0x5c] sm:$0x1] %v839
          %v841 = vld [vmem:[%s778 + $0x60] sm:$0xf]
          %v842 = vsel %vm781, %v600, %v841
          %843 = vst [vmem:[%s778 + $0x60] sm:$0xf] %v842
          %844 = vst.msk [vmem:[%s778 + $0x64] sm:$0xf] %vm785, %v609
          %v845 = vld [vmem:[%s778 + $0x68] sm:$0x1]
          %v846 = vsel %vm788, %v610, %v845
          %847 = vst [vmem:[%s778 + $0x68] sm:$0x1] %v846
          %v848 = vld [vmem:[%s778 + $0x6c] sm:$0xf]
          %v849 = vsel %vm781, %v617, %v848
          %850 = vst [vmem:[%s778 + $0x6c] sm:$0xf] %v849
          %851 = vst.msk [vmem:[%s778 + $0x70] sm:$0xf] %vm785, %v626
          %v852 = vld [vmem:[%s778 + $0x74] sm:$0x1]
          %v853 = vsel %vm788, %v627, %v852
          %854 = vst [vmem:[%s778 + $0x74] sm:$0x1] %v853
          %v855 = vld [vmem:[%s778 + $0x78] sm:$0xf]
          %v856 = vsel %vm781, %v634, %v855
          %857 = vst [vmem:[%s778 + $0x78] sm:$0xf] %v856
          %858 = vst.msk [vmem:[%s778 + $0x7c] sm:$0xf] %vm785, %v643
          %v859 = vld [vmem:[%s778 + $0x80] sm:$0x1]
          %v860 = vsel %vm788, %v644, %v859
          %861 = vst [vmem:[%s778 + $0x80] sm:$0x1] %v860
          %v862 = vld [vmem:[%s778 + $0x84] sm:$0xf]
          %v863 = vsel %vm781, %v651, %v862
          %864 = vst [vmem:[%s778 + $0x84] sm:$0xf] %v863
          %865 = vst.msk [vmem:[%s778 + $0x88] sm:$0xf] %vm785, %v660
          %v866 = vld [vmem:[%s778 + $0x8c] sm:$0x1]
          %v867 = vsel %vm788, %v661, %v866
          %868 = vst [vmem:[%s778 + $0x8c] sm:$0x1] %v867
          %v869 = vld [vmem:[%s778 + $0x90] sm:$0xf]
          %v870 = vsel %vm781, %v668, %v869
          %871 = vst [vmem:[%s778 + $0x90] sm:$0xf] %v870
          %872 = vst.msk [vmem:[%s778 + $0x94] sm:$0xf] %vm785, %v677
          %v873 = vld [vmem:[%s778 + $0x98] sm:$0x1]
          %v874 = vsel %vm788, %v678, %v873
          %875 = vst [vmem:[%s778 + $0x98] sm:$0x1] %v874
          %v876 = vld [vmem:[%s778 + $0x9c] sm:$0xf]
          %v877 = vsel %vm781, %v685, %v876
          %878 = vst [vmem:[%s778 + $0x9c] sm:$0xf] %v877
          %879 = vst.msk [vmem:[%s778 + $0xa0] sm:$0xf] %vm785, %v694
          %v880 = vld [vmem:[%s778 + $0xa4] sm:$0x1]
          %v881 = vsel %vm788, %v695, %v880
          %882 = vst [vmem:[%s778 + $0xa4] sm:$0x1] %v881
          %v883 = vld [vmem:[%s778 + $0xa8] sm:$0xf]
          %v884 = vsel %vm781, %v702, %v883
          %885 = vst [vmem:[%s778 + $0xa8] sm:$0xf] %v884
          %886 = vst.msk [vmem:[%s778 + $0xac] sm:$0xf] %vm785, %v711
          %v887 = vld [vmem:[%s778 + $0xb0] sm:$0x1]
          %v888 = vsel %vm788, %v712, %v887
          %889 = vst [vmem:[%s778 + $0xb0] sm:$0x1] %v888
          %v890 = vld [vmem:[%s778 + $0xb4] sm:$0xf]
          %v891 = vsel %vm781, %v719, %v890
          %892 = vst [vmem:[%s778 + $0xb4] sm:$0xf] %v891
          %893 = vst.msk [vmem:[%s778 + $0xb8] sm:$0xf] %vm785, %v728
          %v894 = vld [vmem:[%s778 + $0xbc] sm:$0x1]
          %v895 = vsel %vm788, %v729, %v894
          %896 = vst [vmem:[%s778 + $0xbc] sm:$0x1] %v895
          %v897 = vld [vmem:[#allocation2] sm:$0xf]
          %v898 = vld [vmem:[#allocation2 + $0x4] sm:$0xf]
          %v899 = vld [vmem:[#allocation2 + $0xc] sm:$0xf]
          %v900 = vld [vmem:[#allocation2 + $0x10] sm:$0xf]
          %v901 = vld [vmem:[#allocation2 + $0x18] sm:$0xf]
          %v902 = vld [vmem:[#allocation2 + $0x1c] sm:$0xf]
          %v903 = vld [vmem:[#allocation2 + $0x24] sm:$0xf]
          %v904 = vld [vmem:[#allocation2 + $0x28] sm:$0xf]
          %v905 = vld [vmem:[#allocation2 + $0x30] sm:$0xf]
          %v906 = vld [vmem:[#allocation2 + $0x34] sm:$0xf]
          %v907 = vld [vmem:[#allocation2 + $0x3c] sm:$0xf]
          %v908 = vld [vmem:[#allocation2 + $0x40] sm:$0xf]
          %v909 = vld [vmem:[#allocation2 + $0x48] sm:$0xf]
          %v910 = vld [vmem:[#allocation2 + $0x4c] sm:$0xf]
          %v911 = vld [vmem:[#allocation2 + $0x54] sm:$0xf]
          %v912 = vld [vmem:[#allocation2 + $0x58] sm:$0xf]
          %v913 = vld [vmem:[#allocation2 + $0x60] sm:$0xf]
          %v914 = vld [vmem:[#allocation2 + $0x64] sm:$0xf]
          %v915 = vld [vmem:[#allocation2 + $0x6c] sm:$0xf]
          %v916 = vld [vmem:[#allocation2 + $0x70] sm:$0xf]
          %v917 = vld [vmem:[#allocation2 + $0x78] sm:$0xf]
          %v918 = vld [vmem:[#allocation2 + $0x7c] sm:$0xf]
          %v919 = vld [vmem:[#allocation2 + $0x84] sm:$0xf]
          %v920 = vld [vmem:[#allocation2 + $0x88] sm:$0xf]
          %v921 = vld [vmem:[#allocation2 + $0x90] sm:$0xf]
          %v922 = vld [vmem:[#allocation2 + $0x94] sm:$0xf]
          %v923 = vld [vmem:[#allocation2 + $0x9c] sm:$0xf]
          %v924 = vld [vmem:[#allocation2 + $0xa0] sm:$0xf]
          %v925 = vld [vmem:[#allocation2 + $0xa8] sm:$0xf]
          %v926 = vld [vmem:[#allocation2 + $0xac] sm:$0xf]
          %v927 = vld [vmem:[#allocation2 + $0xb4] sm:$0xf]
          %v928 = vld [vmem:[#allocation2 + $0xb8] sm:$0xf]
          %v929 = vld [vmem:[%s1] sm:$0xf]
          %v930 = vld [vmem:[%s1 + $0x4] sm:$0xf]
          %v931 = vld [vmem:[#allocation2 + $0x8] sm:$0x1]
          %v932 = vld [vmem:[#allocation2 + $0x14] sm:$0x1]
          %v933 = vld [vmem:[#allocation2 + $0x20] sm:$0x1]
          %v934 = vld [vmem:[#allocation2 + $0x2c] sm:$0x1]
          %v935 = vld [vmem:[#allocation2 + $0x38] sm:$0x1]
          %v936 = vld [vmem:[#allocation2 + $0x44] sm:$0x1]
          %v937 = vld [vmem:[#allocation2 + $0x50] sm:$0x1]
          %v938 = vld [vmem:[#allocation2 + $0x5c] sm:$0x1]
          %v939 = vld [vmem:[#allocation2 + $0x68] sm:$0x1]
          %v940 = vld [vmem:[#allocation2 + $0x74] sm:$0x1]
          %v941 = vld [vmem:[#allocation2 + $0x80] sm:$0x1]
          %v942 = vld [vmem:[#allocation2 + $0x8c] sm:$0x1]
          %v943 = vld [vmem:[#allocation2 + $0x98] sm:$0x1]
          %v944 = vld [vmem:[#allocation2 + $0xa4] sm:$0x1]
          %v945 = vld [vmem:[#allocation2 + $0xb0] sm:$0x1]
          %v946 = vld [vmem:[#allocation2 + $0xbc] sm:$0x1]
          %vm947 = vsmask.f32 3328
          %vm948 = vsmask.f32 7440
          %vm949 = vmor %vm947, %vm948
          %v951 = vshrl.u32 %v897, 16
          %v953 = vrot.slane %v951, 4
          %v954 = vshll.u32 %v897, 16
          %v956 = vrot.slane %v954, 5
          %v957 = vor.u32 %v953, %v956
          %v958 = vrot.slane %v957, 4
          %v960 = vshll.u32 %v898, 16
          %v962 = vrot.slane %v960, 5
          %v963 = vsel %vm949, %v958, %v962
          %v964 = vshrl.u32 %v898, 16
          %v966 = vrot.slane %v964, 4
          %v967 = vor.u32 %v966, %v962
          %v968 = vrot.slane %v967, 4
          %v970 = vshll.u32 %v931, 16
          %v972 = vrot.slane %v970, 5
          %v973 = vsel %vm949, %v968, %v972
          %v975 = vshrl.u32 %v899, 16
          %v977 = vrot.slane %v975, 4
          %v978 = vshll.u32 %v899, 16
          %v980 = vrot.slane %v978, 5
          %v981 = vor.u32 %v977, %v980
          %v982 = vrot.slane %v981, 4
          %v984 = vshll.u32 %v900, 16
          %v986 = vrot.slane %v984, 5
          %v987 = vsel %vm949, %v982, %v986
          %v988 = vshrl.u32 %v900, 16
          %v990 = vrot.slane %v988, 4
          %v991 = vor.u32 %v990, %v986
          %v992 = vrot.slane %v991, 4
          %v994 = vshll.u32 %v932, 16
          %v996 = vrot.slane %v994, 5
          %v997 = vsel %vm949, %v992, %v996
          %v999 = vshrl.u32 %v901, 16
          %v1001 = vrot.slane %v999, 4
          %v1002 = vshll.u32 %v901, 16
          %v1004 = vrot.slane %v1002, 5
          %v1005 = vor.u32 %v1001, %v1004
          %v1006 = vrot.slane %v1005, 4
          %v1008 = vshll.u32 %v902, 16
          %v1010 = vrot.slane %v1008, 5
          %v1011 = vsel %vm949, %v1006, %v1010
          %v1012 = vshrl.u32 %v902, 16
          %v1014 = vrot.slane %v1012, 4
          %v1015 = vor.u32 %v1014, %v1010
          %v1016 = vrot.slane %v1015, 4
          %v1018 = vshll.u32 %v933, 16
          %v1020 = vrot.slane %v1018, 5
          %v1021 = vsel %vm949, %v1016, %v1020
          %v1023 = vshrl.u32 %v903, 16
          %v1025 = vrot.slane %v1023, 4
          %v1026 = vshll.u32 %v903, 16
          %v1028 = vrot.slane %v1026, 5
          %v1029 = vor.u32 %v1025, %v1028
          %v1030 = vrot.slane %v1029, 4
          %v1032 = vshll.u32 %v904, 16
          %v1034 = vrot.slane %v1032, 5
          %v1035 = vsel %vm949, %v1030, %v1034
          %v1036 = vshrl.u32 %v904, 16
          %v1038 = vrot.slane %v1036, 4
          %v1039 = vor.u32 %v1038, %v1034
          %v1040 = vrot.slane %v1039, 4
          %v1042 = vshll.u32 %v934, 16
          %v1044 = vrot.slane %v1042, 5
          %v1045 = vsel %vm949, %v1040, %v1044
          %v1047 = vshrl.u32 %v905, 16
          %v1049 = vrot.slane %v1047, 4
          %v1050 = vshll.u32 %v905, 16
          %v1052 = vrot.slane %v1050, 5
          %v1053 = vor.u32 %v1049, %v1052
          %v1054 = vrot.slane %v1053, 4
          %v1056 = vshll.u32 %v906, 16
          %v1058 = vrot.slane %v1056, 5
          %v1059 = vsel %vm949, %v1054, %v1058
          %v1060 = vshrl.u32 %v906, 16
          %v1062 = vrot.slane %v1060, 4
          %v1063 = vor.u32 %v1062, %v1058
          %v1064 = vrot.slane %v1063, 4
          %v1066 = vshll.u32 %v935, 16
          %v1068 = vrot.slane %v1066, 5
          %v1069 = vsel %vm949, %v1064, %v1068
          %v1071 = vshrl.u32 %v907, 16
          %v1073 = vrot.slane %v1071, 4
          %v1074 = vshll.u32 %v907, 16
          %v1076 = vrot.slane %v1074, 5
          %v1077 = vor.u32 %v1073, %v1076
          %v1078 = vrot.slane %v1077, 4
          %v1080 = vshll.u32 %v908, 16
          %v1082 = vrot.slane %v1080, 5
          %v1083 = vsel %vm949, %v1078, %v1082
          %v1084 = vshrl.u32 %v908, 16
          %v1086 = vrot.slane %v1084, 4
          %v1087 = vor.u32 %v1086, %v1082
          %v1088 = vrot.slane %v1087, 4
          %v1090 = vshll.u32 %v936, 16
          %v1092 = vrot.slane %v1090, 5
          %v1093 = vsel %vm949, %v1088, %v1092
          %v1095 = vshrl.u32 %v909, 16
          %v1097 = vrot.slane %v1095, 4
          %v1098 = vshll.u32 %v909, 16
          %v1100 = vrot.slane %v1098, 5
          %v1101 = vor.u32 %v1097, %v1100
          %v1102 = vrot.slane %v1101, 4
          %v1104 = vshll.u32 %v910, 16
          %v1106 = vrot.slane %v1104, 5
          %v1107 = vsel %vm949, %v1102, %v1106
          %v1108 = vshrl.u32 %v910, 16
          %v1110 = vrot.slane %v1108, 4
          %v1111 = vor.u32 %v1110, %v1106
          %v1112 = vrot.slane %v1111, 4
          %v1114 = vshll.u32 %v937, 16
          %v1116 = vrot.slane %v1114, 5
          %v1117 = vsel %vm949, %v1112, %v1116
          %v1119 = vshrl.u32 %v911, 16
          %v1121 = vrot.slane %v1119, 4
          %v1122 = vshll.u32 %v911, 16
          %v1124 = vrot.slane %v1122, 5
          %v1125 = vor.u32 %v1121, %v1124
          %v1126 = vrot.slane %v1125, 4
          %v1128 = vshll.u32 %v912, 16
          %v1130 = vrot.slane %v1128, 5
          %v1131 = vsel %vm949, %v1126, %v1130
          %v1132 = vshrl.u32 %v912, 16
          %v1134 = vrot.slane %v1132, 4
          %v1135 = vor.u32 %v1134, %v1130
          %v1136 = vrot.slane %v1135, 4
          %v1138 = vshll.u32 %v938, 16
          %v1140 = vrot.slane %v1138, 5
          %v1141 = vsel %vm949, %v1136, %v1140
          %v1143 = vshrl.u32 %v913, 16
          %v1145 = vrot.slane %v1143, 4
          %v1146 = vshll.u32 %v913, 16
          %v1148 = vrot.slane %v1146, 5
          %v1149 = vor.u32 %v1145, %v1148
          %v1150 = vrot.slane %v1149, 4
          %v1152 = vshll.u32 %v914, 16
          %v1154 = vrot.slane %v1152, 5
          %v1155 = vsel %vm949, %v1150, %v1154
          %v1156 = vshrl.u32 %v914, 16
          %v1158 = vrot.slane %v1156, 4
          %v1159 = vor.u32 %v1158, %v1154
          %v1160 = vrot.slane %v1159, 4
          %v1162 = vshll.u32 %v939, 16
          %v1164 = vrot.slane %v1162, 5
          %v1165 = vsel %vm949, %v1160, %v1164
          %v1167 = vshrl.u32 %v915, 16
          %v1169 = vrot.slane %v1167, 4
          %v1170 = vshll.u32 %v915, 16
          %v1172 = vrot.slane %v1170, 5
          %v1173 = vor.u32 %v1169, %v1172
          %v1174 = vrot.slane %v1173, 4
          %v1176 = vshll.u32 %v916, 16
          %v1178 = vrot.slane %v1176, 5
          %v1179 = vsel %vm949, %v1174, %v1178
          %v1180 = vshrl.u32 %v916, 16
          %v1182 = vrot.slane %v1180, 4
          %v1183 = vor.u32 %v1182, %v1178
          %v1184 = vrot.slane %v1183, 4
          %v1186 = vshll.u32 %v940, 16
          %v1188 = vrot.slane %v1186, 5
          %v1189 = vsel %vm949, %v1184, %v1188
          %v1191 = vshrl.u32 %v917, 16
          %v1193 = vrot.slane %v1191, 4
          %v1194 = vshll.u32 %v917, 16
          %v1196 = vrot.slane %v1194, 5
          %v1197 = vor.u32 %v1193, %v1196
          %v1198 = vrot.slane %v1197, 4
          %v1200 = vshll.u32 %v918, 16
          %v1202 = vrot.slane %v1200, 5
          %v1203 = vsel %vm949, %v1198, %v1202
          %v1204 = vshrl.u32 %v918, 16
          %v1206 = vrot.slane %v1204, 4
          %v1207 = vor.u32 %v1206, %v1202
          %v1208 = vrot.slane %v1207, 4
          %v1210 = vshll.u32 %v941, 16
          %v1212 = vrot.slane %v1210, 5
          %v1213 = vsel %vm949, %v1208, %v1212
          %v1215 = vshrl.u32 %v919, 16
          %v1217 = vrot.slane %v1215, 4
          %v1218 = vshll.u32 %v919, 16
          %v1220 = vrot.slane %v1218, 5
          %v1221 = vor.u32 %v1217, %v1220
          %v1222 = vrot.slane %v1221, 4
          %v1224 = vshll.u32 %v920, 16
          %v1226 = vrot.slane %v1224, 5
          %v1227 = vsel %vm949, %v1222, %v1226
          %v1228 = vshrl.u32 %v920, 16
          %v1230 = vrot.slane %v1228, 4
          %v1231 = vor.u32 %v1230, %v1226
          %v1232 = vrot.slane %v1231, 4
          %v1234 = vshll.u32 %v942, 16
          %v1236 = vrot.slane %v1234, 5
          %v1237 = vsel %vm949, %v1232, %v1236
          %v1239 = vshrl.u32 %v921, 16
          %v1241 = vrot.slane %v1239, 4
          %v1242 = vshll.u32 %v921, 16
          %v1244 = vrot.slane %v1242, 5
          %v1245 = vor.u32 %v1241, %v1244
          %v1246 = vrot.slane %v1245, 4
          %v1248 = vshll.u32 %v922, 16
          %v1250 = vrot.slane %v1248, 5
          %v1251 = vsel %vm949, %v1246, %v1250
          %v1252 = vshrl.u32 %v922, 16
          %v1254 = vrot.slane %v1252, 4
          %v1255 = vor.u32 %v1254, %v1250
          %v1256 = vrot.slane %v1255, 4
          %v1258 = vshll.u32 %v943, 16
          %v1260 = vrot.slane %v1258, 5
          %v1261 = vsel %vm949, %v1256, %v1260
          %v1263 = vshrl.u32 %v923, 16
          %v1265 = vrot.slane %v1263, 4
          %v1266 = vshll.u32 %v923, 16
          %v1268 = vrot.slane %v1266, 5
          %v1269 = vor.u32 %v1265, %v1268
          %v1270 = vrot.slane %v1269, 4
          %v1272 = vshll.u32 %v924, 16
          %v1274 = vrot.slane %v1272, 5
          %v1275 = vsel %vm949, %v1270, %v1274
          %v1276 = vshrl.u32 %v924, 16
          %v1278 = vrot.slane %v1276, 4
          %v1279 = vor.u32 %v1278, %v1274
          %v1280 = vrot.slane %v1279, 4
          %v1282 = vshll.u32 %v944, 16
          %v1284 = vrot.slane %v1282, 5
          %v1285 = vsel %vm949, %v1280, %v1284
          %v1287 = vshrl.u32 %v925, 16
          %v1289 = vrot.slane %v1287, 4
          %v1290 = vshll.u32 %v925, 16
          %v1292 = vrot.slane %v1290, 5
          %v1293 = vor.u32 %v1289, %v1292
          %v1294 = vrot.slane %v1293, 4
          %v1296 = vshll.u32 %v926, 16
          %v1298 = vrot.slane %v1296, 5
          %v1299 = vsel %vm949, %v1294, %v1298
          %v1300 = vshrl.u32 %v926, 16
          %v1302 = vrot.slane %v1300, 4
          %v1303 = vor.u32 %v1302, %v1298
          %v1304 = vrot.slane %v1303, 4
          %v1306 = vshll.u32 %v945, 16
          %v1308 = vrot.slane %v1306, 5
          %v1309 = vsel %vm949, %v1304, %v1308
          %v1311 = vshrl.u32 %v927, 16
          %v1313 = vrot.slane %v1311, 4
          %v1314 = vshll.u32 %v927, 16
          %v1316 = vrot.slane %v1314, 5
          %v1317 = vor.u32 %v1313, %v1316
          %v1318 = vrot.slane %v1317, 4
          %v1320 = vshll.u32 %v928, 16
          %v1322 = vrot.slane %v1320, 5
          %v1323 = vsel %vm949, %v1318, %v1322
          %v1324 = vshrl.u32 %v928, 16
          %v1326 = vrot.slane %v1324, 4
          %v1327 = vor.u32 %v1326, %v1322
          %v1328 = vrot.slane %v1327, 4
          %v1330 = vshll.u32 %v946, 16
          %v1332 = vrot.slane %v1330, 5
          %v1333 = vsel %vm949, %v1328, %v1332
          %s1334 = scalar_lea.vmem %s1, 8
          %v1335 = vld [vmem:[%s1334] sm:$0xf]
          %v1336 = vld [vmem:[%s1334 + $0x4] sm:$0xf]
          %v1337 = vunpack.c.l.b16 %v963
          %v1338 = vunpack.c.l.b16 %v973
          %v1339 = vunpack.c.l.b16 %v987
          %v1340 = vunpack.c.l.b16 %v997
          %v1341 = vunpack.c.l.b16 %v1011
          %v1342 = vunpack.c.l.b16 %v1021
          %v1343 = vunpack.c.l.b16 %v1035
          %v1344 = vunpack.c.l.b16 %v1045
          %v1345 = vunpack.c.l.b16 %v1059
          %v1346 = vunpack.c.l.b16 %v1069
          %v1347 = vunpack.c.l.b16 %v1083
          %v1348 = vunpack.c.l.b16 %v1093
          %v1349 = vunpack.c.l.b16 %v1107
          %v1350 = vunpack.c.l.b16 %v1117
          %v1351 = vunpack.c.l.b16 %v1131
          %v1352 = vunpack.c.l.b16 %v1141
          %v1353 = vunpack.c.l.b16 %v1155
          %v1354 = vunpack.c.l.b16 %v1165
          %v1355 = vunpack.c.l.b16 %v1179
          %v1356 = vunpack.c.l.b16 %v1189
          %v1357 = vunpack.c.l.b16 %v1203
          %v1358 = vunpack.c.l.b16 %v1213
          %v1359 = vunpack.c.l.b16 %v1227
          %v1360 = vunpack.c.l.b16 %v1237
          %v1361 = vunpack.c.l.b16 %v1251
          %v1362 = vunpack.c.l.b16 %v1261
          %v1363 = vunpack.c.l.b16 %v1275
          %v1364 = vunpack.c.l.b16 %v1285
          %v1365 = vunpack.c.l.b16 %v1299
          %v1366 = vunpack.c.l.b16 %v1309
          %v1367 = vunpack.c.l.b16 %v1323
          %v1368 = vunpack.c.l.b16 %v1333
          %v1369 = vpack.c.b16 %v1338, %v1337
          %v1370 = vpack.c.b16 %v1340, %v1339
          %v1371 = vpack.c.b16 %v1342, %v1341
          %v1372 = vpack.c.b16 %v1344, %v1343
          %v1373 = vpack.c.b16 %v1346, %v1345
          %v1374 = vpack.c.b16 %v1348, %v1347
          %v1375 = vpack.c.b16 %v1350, %v1349
          %v1376 = vpack.c.b16 %v1352, %v1351
          %v1377 = vpack.c.b16 %v1354, %v1353
          %v1378 = vpack.c.b16 %v1356, %v1355
          %v1379 = vpack.c.b16 %v1358, %v1357
          %v1380 = vpack.c.b16 %v1360, %v1359
          %v1381 = vpack.c.b16 %v1362, %v1361
          %v1382 = vpack.c.b16 %v1364, %v1363
          %v1383 = vpack.c.b16 %v1366, %v1365
          %v1384 = vpack.c.b16 %v1368, %v1367
          %v1387 = vunpack.c.l.b16 %v1335
          %v1388 = vunpack.c.l.b16 %v1336
          %v1389 = vpack.c.b16 %v1388, %v1387
          %vm1391 = vcmask 130048
          %v1393 = vsel %vm1391, %v1369, 0
          %v1396 = vsel %vm1391, %v1370, 0
          %v1399 = vsel %vm1391, %v1371, 0
          %v1402 = vsel %vm1391, %v1372, 0
          %v1405 = vsel %vm1391, %v1373, 0
          %v1408 = vsel %vm1391, %v1374, 0
          %v1411 = vsel %vm1391, %v1375, 0
          %v1414 = vsel %vm1391, %v1376, 0
          %v1417 = vsel %vm1391, %v1377, 0
          %v1420 = vsel %vm1391, %v1378, 0
          %v1423 = vsel %vm1391, %v1379, 0
          %v1426 = vsel %vm1391, %v1380, 0
          %v1429 = vsel %vm1391, %v1381, 0
          %v1432 = vsel %vm1391, %v1382, 0
          %v1435 = vsel %vm1391, %v1383, 0
          %v1438 = vsel %vm1391, %v1384, 0
          %1440 = vmatprep.subr.bf16.mxu0 0
          %1441 = vmatpush1.bf16.msra.mxu0 %v1389
          %1442 = vmatprep.subr.bf16.mxu0 0
          %1443 = vmatpush1.bf16.msra.mxu0 0
          %1444 = vmatprep.subr.bf16.mxu0 0
          %1445 = vmatpush1.bf16.msra.mxu0 0
          %1446 = vmatprep.subr.bf16.mxu0 0
          %1447 = vmatpush1.bf16.msra.mxu0 0
          %1448 = vmatprep.subr.bf16.mxu0 0
          %1449 = vmatpush1.bf16.msra.mxu0 0
          %1450 = vmatprep.subr.bf16.mxu0 0
          %1451 = vmatpush1.bf16.msra.mxu0 0
          %1452 = vmatprep.subr.bf16.mxu0 0
          %1453 = vmatpush1.bf16.msra.mxu0 0
          %1454 = vmatprep.subr.bf16.mxu0 0
          %1455 = vmatpush1.bf16.msra.mxu0 0
          %1456 = vmatprep.subr.bf16.mxu0 0
          %1457 = vmatpush1.bf16.msra.mxu0 0
          %1458 = vmatprep.subr.bf16.mxu0 0
          %1459 = vmatpush1.bf16.msra.mxu0 0
          %1460 = vmatprep.subr.bf16.mxu0 0
          %1461 = vmatpush1.bf16.msra.mxu0 0
          %1462 = vmatprep.subr.bf16.mxu0 0
          %1463 = vmatpush1.bf16.msra.mxu0 0
          %1464 = vmatprep.subr.bf16.mxu0 0
          %1465 = vmatpush1.bf16.msra.mxu0 0
          %1466 = vmatprep.subr.bf16.mxu0 0
          %1467 = vmatpush1.bf16.msra.mxu0 0
          %1468 = vmatprep.subr.bf16.mxu0 0
          %1469 = vmatpush1.bf16.msra.mxu0 0
          %1470 = vmatprep.subr.bf16.mxu0 0
          %1471 = vmatpush1.bf16.msra.mxu0 0
          %1472 = vmatprep.mubr.bf16.mxu0 0
          %1473 = vmatmul.mubr.bf16.gmra.mrb[0].mxu0 %v1393
          %v1474 = vpop.f32.mrb[0].mxu0
          %v1475 = vadd.f32 0.0, %v1474
          %v1476 = vpop.f32.mrb[0].mxu0
          %v1477 = vpop.f32.mrb[0].mxu0
          %v1478 = vadd.f32 0.0, %v1477
          %v1479 = vpop.f32.mrb[0].mxu0
          %1480 = vmatprep.mubr.bf16.mxu0 0
          %1481 = vmatmul.mubr.bf16.gmra.mrb[0].mxu0 %v1396
          %v1482 = vpop.f32.mrb[0].mxu0
          %v1483 = vadd.f32 0.0, %v1482
          %v1484 = vpop.f32.mrb[0].mxu0
          %v1485 = vpop.f32.mrb[0].mxu0
          %v1486 = vadd.f32 0.0, %v1485
          %v1487 = vpop.f32.mrb[0].mxu0
          %1488 = vmatprep.mubr.bf16.mxu0 0
          %1489 = vmatmul.mubr.bf16.gmra.mrb[0].mxu0 %v1399
          %v1490 = vpop.f32.mrb[0].mxu0
          %v1491 = vadd.f32 0.0, %v1490
          %v1492 = vpop.f32.mrb[0].mxu0
          %v1493 = vpop.f32.mrb[0].mxu0
          %v1494 = vadd.f32 0.0, %v1493
          %v1495 = vpop.f32.mrb[0].mxu0
          %1496 = vmatprep.mubr.bf16.mxu0 0
          %1497 = vmatmul.mubr.bf16.gmra.mrb[0].mxu0 %v1402
          %v1498 = vpop.f32.mrb[0].mxu0
          %v1499 = vadd.f32 0.0, %v1498
          %v1500 = vpop.f32.mrb[0].mxu0
          %v1501 = vpop.f32.mrb[0].mxu0
          %v1502 = vadd.f32 0.0, %v1501
          %v1503 = vpop.f32.mrb[0].mxu0
          %1504 = vmatprep.mubr.bf16.mxu0 0
          %1505 = vmatmul.mubr.bf16.gmra.mrb[0].mxu0 %v1405
          %v1506 = vpop.f32.mrb[0].mxu0
          %v1507 = vadd.f32 0.0, %v1506
          %v1508 = vpop.f32.mrb[0].mxu0
          %v1509 = vpop.f32.mrb[0].mxu0
          %v1510 = vadd.f32 0.0, %v1509
          %v1511 = vpop.f32.mrb[0].mxu0
          %1512 = vmatprep.mubr.bf16.mxu0 0
          %1513 = vmatmul.mubr.bf16.gmra.mrb[0].mxu0 %v1408
          %v1514 = vpop.f32.mrb[0].mxu0
          %v1515 = vadd.f32 0.0, %v1514
          %v1516 = vpop.f32.mrb[0].mxu0
          %v1517 = vpop.f32.mrb[0].mxu0
          %v1518 = vadd.f32 0.0, %v1517
          %v1519 = vpop.f32.mrb[0].mxu0
          %1520 = vmatprep.mubr.bf16.mxu0 0
          %1521 = vmatmul.mubr.bf16.gmra.mrb[0].mxu0 %v1411
          %v1522 = vpop.f32.mrb[0].mxu0
          %v1523 = vadd.f32 0.0, %v1522
          %v1524 = vpop.f32.mrb[0].mxu0
          %v1525 = vpop.f32.mrb[0].mxu0
          %v1526 = vadd.f32 0.0, %v1525
          %v1527 = vpop.f32.mrb[0].mxu0
          %1528 = vmatprep.mubr.bf16.mxu0 0
          %1529 = vmatmul.mubr.bf16.gmra.mrb[0].mxu0 %v1414
          %v1530 = vpop.f32.mrb[0].mxu0
          %v1531 = vadd.f32 0.0, %v1530
          %v1532 = vpop.f32.mrb[0].mxu0
          %v1533 = vpop.f32.mrb[0].mxu0
          %v1534 = vadd.f32 0.0, %v1533
          %v1535 = vpop.f32.mrb[0].mxu0
          %1536 = vmatprep.mubr.bf16.mxu0 0
          %1537 = vmatmul.mubr.bf16.gmra.mrb[0].mxu0 %v1417
          %v1538 = vpop.f32.mrb[0].mxu0
          %v1539 = vadd.f32 0.0, %v1538
          %v1540 = vpop.f32.mrb[0].mxu0
          %v1541 = vpop.f32.mrb[0].mxu0
          %v1542 = vadd.f32 0.0, %v1541
          %v1543 = vpop.f32.mrb[0].mxu0
          %1544 = vmatprep.mubr.bf16.mxu0 0
          %1545 = vmatmul.mubr.bf16.gmra.mrb[0].mxu0 %v1420
          %v1546 = vpop.f32.mrb[0].mxu0
          %v1547 = vadd.f32 0.0, %v1546
          %v1548 = vpop.f32.mrb[0].mxu0
          %v1549 = vpop.f32.mrb[0].mxu0
          %v1550 = vadd.f32 0.0, %v1549
          %v1551 = vpop.f32.mrb[0].mxu0
          %1552 = vmatprep.mubr.bf16.mxu0 0
          %1553 = vmatmul.mubr.bf16.gmra.mrb[0].mxu0 %v1423
          %v1554 = vpop.f32.mrb[0].mxu0
          %v1555 = vadd.f32 0.0, %v1554
          %v1556 = vpop.f32.mrb[0].mxu0
          %v1557 = vpop.f32.mrb[0].mxu0
          %v1558 = vadd.f32 0.0, %v1557
          %v1559 = vpop.f32.mrb[0].mxu0
          %1560 = vmatprep.mubr.bf16.mxu0 0
          %1561 = vmatmul.mubr.bf16.gmra.mrb[0].mxu0 %v1426
          %v1562 = vpop.f32.mrb[0].mxu0
          %v1563 = vadd.f32 0.0, %v1562
          %v1564 = vpop.f32.mrb[0].mxu0
          %v1565 = vpop.f32.mrb[0].mxu0
          %v1566 = vadd.f32 0.0, %v1565
          %v1567 = vpop.f32.mrb[0].mxu0
          %1568 = vmatprep.mubr.bf16.mxu0 0
          %1569 = vmatmul.mubr.bf16.gmra.mrb[0].mxu0 %v1429
          %v1570 = vpop.f32.mrb[0].mxu0
          %v1571 = vadd.f32 0.0, %v1570
          %v1572 = vpop.f32.mrb[0].mxu0
          %v1573 = vpop.f32.mrb[0].mxu0
          %v1574 = vadd.f32 0.0, %v1573
          %v1575 = vpop.f32.mrb[0].mxu0
          %1576 = vmatprep.mubr.bf16.mxu0 0
          %1577 = vmatmul.mubr.bf16.gmra.mrb[0].mxu0 %v1432
          %v1578 = vpop.f32.mrb[0].mxu0
          %v1579 = vadd.f32 0.0, %v1578
          %v1580 = vpop.f32.mrb[0].mxu0
          %v1581 = vpop.f32.mrb[0].mxu0
          %v1582 = vadd.f32 0.0, %v1581
          %v1583 = vpop.f32.mrb[0].mxu0
          %1584 = vmatprep.mubr.bf16.mxu0 0
          %1585 = vmatmul.mubr.bf16.gmra.mrb[0].mxu0 %v1435
          %v1586 = vpop.f32.mrb[0].mxu0
          %v1587 = vadd.f32 0.0, %v1586
          %v1588 = vpop.f32.mrb[0].mxu0
          %v1589 = vpop.f32.mrb[0].mxu0
          %v1590 = vadd.f32 0.0, %v1589
          %v1591 = vpop.f32.mrb[0].mxu0
          %1592 = vmatprep.mubr.bf16.mxu0 0
          %1593 = vmatmul.mubr.bf16.gmra.mrb[0].mxu0 %v1438
          %v1594 = vpop.f32.mrb[0].mxu0
          %v1595 = vadd.f32 0.0, %v1594
          %v1596 = vpop.f32.mrb[0].mxu0
          %v1597 = vpop.f32.mrb[0].mxu0
          %v1598 = vadd.f32 0.0, %v1597
          %v1599 = vpop.f32.mrb[0].mxu0
          %1600 = vdwg.mxu0
          %v1633 = vunpack.c.l.b16 %v897
          %v1634 = vunpack.c.l.b16 %v898
          %v1635 = vunpack.c.l.b16 %v899
          %v1636 = vunpack.c.l.b16 %v900
          %v1637 = vunpack.c.l.b16 %v901
          %v1638 = vunpack.c.l.b16 %v902
          %v1639 = vunpack.c.l.b16 %v903
          %v1640 = vunpack.c.l.b16 %v904
          %v1641 = vunpack.c.l.b16 %v905
          %v1642 = vunpack.c.l.b16 %v906
          %v1643 = vunpack.c.l.b16 %v907
          %v1644 = vunpack.c.l.b16 %v908
          %v1645 = vunpack.c.l.b16 %v909
          %v1646 = vunpack.c.l.b16 %v910
          %v1647 = vunpack.c.l.b16 %v911
          %v1648 = vunpack.c.l.b16 %v912
          %v1649 = vunpack.c.l.b16 %v913
          %v1650 = vunpack.c.l.b16 %v914
          %v1651 = vunpack.c.l.b16 %v915
          %v1652 = vunpack.c.l.b16 %v916
          %v1653 = vunpack.c.l.b16 %v917
          %v1654 = vunpack.c.l.b16 %v918
          %v1655 = vunpack.c.l.b16 %v919
          %v1656 = vunpack.c.l.b16 %v920
          %v1657 = vunpack.c.l.b16 %v921
          %v1658 = vunpack.c.l.b16 %v922
          %v1659 = vunpack.c.l.b16 %v923
          %v1660 = vunpack.c.l.b16 %v924
          %v1661 = vunpack.c.l.b16 %v925
          %v1662 = vunpack.c.l.b16 %v926
          %v1663 = vunpack.c.l.b16 %v927
          %v1664 = vunpack.c.l.b16 %v928
          %v1665 = vpack.c.b16 %v1634, %v1633
          %v1666 = vpack.c.b16 %v1636, %v1635
          %v1667 = vpack.c.b16 %v1638, %v1637
          %v1668 = vpack.c.b16 %v1640, %v1639
          %v1669 = vpack.c.b16 %v1642, %v1641
          %v1670 = vpack.c.b16 %v1644, %v1643
          %v1671 = vpack.c.b16 %v1646, %v1645
          %v1672 = vpack.c.b16 %v1648, %v1647
          %v1673 = vpack.c.b16 %v1650, %v1649
          %v1674 = vpack.c.b16 %v1652, %v1651
          %v1675 = vpack.c.b16 %v1654, %v1653
          %v1676 = vpack.c.b16 %v1656, %v1655
          %v1677 = vpack.c.b16 %v1658, %v1657
          %v1678 = vpack.c.b16 %v1660, %v1659
          %v1679 = vpack.c.b16 %v1662, %v1661
          %v1680 = vpack.c.b16 %v1664, %v1663
          %v1683 = vunpack.c.l.b16 %v929
          %v1684 = vunpack.c.l.b16 %v930
          %v1685 = vpack.c.b16 %v1684, %v1683
          %v1688 = vsel %vm1391, %v1665, 0
          %v1691 = vsel %vm1391, %v1666, 0
          %v1694 = vsel %vm1391, %v1667, 0
          %v1697 = vsel %vm1391, %v1668, 0
          %v1700 = vsel %vm1391, %v1669, 0
          %v1703 = vsel %vm1391, %v1670, 0
          %v1706 = vsel %vm1391, %v1671, 0
          %v1709 = vsel %vm1391, %v1672, 0
          %v1712 = vsel %vm1391, %v1673, 0
          %v1715 = vsel %vm1391, %v1674, 0
          %v1718 = vsel %vm1391, %v1675, 0
          %v1721 = vsel %vm1391, %v1676, 0
          %v1724 = vsel %vm1391, %v1677, 0
          %v1727 = vsel %vm1391, %v1678, 0
          %v1730 = vsel %vm1391, %v1679, 0
          %v1733 = vsel %vm1391, %v1680, 0
          %1735 = vmatprep.subr.bf16.mxu0 0
          %1736 = vmatpush1.bf16.msra.mxu0 %v1685
          %1737 = vmatprep.subr.bf16.mxu0 0
          %1738 = vmatpush1.bf16.msra.mxu0 0
          %1739 = vmatprep.subr.bf16.mxu0 0
          %1740 = vmatpush1.bf16.msra.mxu0 0
          %1741 = vmatprep.subr.bf16.mxu0 0
          %1742 = vmatpush1.bf16.msra.mxu0 0
          %1743 = vmatprep.subr.bf16.mxu0 0
          %1744 = vmatpush1.bf16.msra.mxu0 0
          %1745 = vmatprep.subr.bf16.mxu0 0
          %1746 = vmatpush1.bf16.msra.mxu0 0
          %1747 = vmatprep.subr.bf16.mxu0 0
          %1748 = vmatpush1.bf16.msra.mxu0 0
          %1749 = vmatprep.subr.bf16.mxu0 0
          %1750 = vmatpush1.bf16.msra.mxu0 0
          %1751 = vmatprep.subr.bf16.mxu0 0
          %1752 = vmatpush1.bf16.msra.mxu0 0
          %1753 = vmatprep.subr.bf16.mxu0 0
          %1754 = vmatpush1.bf16.msra.mxu0 0
          %1755 = vmatprep.subr.bf16.mxu0 0
          %1756 = vmatpush1.bf16.msra.mxu0 0
          %1757 = vmatprep.subr.bf16.mxu0 0
          %1758 = vmatpush1.bf16.msra.mxu0 0
          %1759 = vmatprep.subr.bf16.mxu0 0
          %1760 = vmatpush1.bf16.msra.mxu0 0
          %1761 = vmatprep.subr.bf16.mxu0 0
          %1762 = vmatpush1.bf16.msra.mxu0 0
          %1763 = vmatprep.subr.bf16.mxu0 0
          %1764 = vmatpush1.bf16.msra.mxu0 0
          %1765 = vmatprep.subr.bf16.mxu0 0
          %1766 = vmatpush1.bf16.msra.mxu0 0
          %1767 = vmatprep.mubr.bf16.mxu0 0
          %1768 = vmatmul.mubr.bf16.gmra.mrb[0].mxu0 %v1688
          %v1769 = vpop.f32.mrb[0].mxu0
          %v1770 = vadd.f32 %v1475, %v1769
          %v1771 = vpop.f32.mrb[0].mxu0
          %v1772 = vpop.f32.mrb[0].mxu0
          %v1773 = vadd.f32 %v1478, %v1772
          %v1774 = vpop.f32.mrb[0].mxu0
          %1775 = vmatprep.mubr.bf16.mxu0 0
          %1776 = vmatmul.mubr.bf16.gmra.mrb[0].mxu0 %v1691
          %v1777 = vpop.f32.mrb[0].mxu0
          %v1778 = vadd.f32 %v1483, %v1777
          %v1779 = vpop.f32.mrb[0].mxu0
          %v1780 = vpop.f32.mrb[0].mxu0
          %v1781 = vadd.f32 %v1486, %v1780
          %v1782 = vpop.f32.mrb[0].mxu0
          %1783 = vmatprep.mubr.bf16.mxu0 0
          %1784 = vmatmul.mubr.bf16.gmra.mrb[0].mxu0 %v1694
          %v1785 = vpop.f32.mrb[0].mxu0
          %v1786 = vadd.f32 %v1491, %v1785
          %v1787 = vpop.f32.mrb[0].mxu0
          %v1788 = vpop.f32.mrb[0].mxu0
          %v1789 = vadd.f32 %v1494, %v1788
          %v1790 = vpop.f32.mrb[0].mxu0
          %1791 = vmatprep.mubr.bf16.mxu0 0
          %1792 = vmatmul.mubr.bf16.gmra.mrb[0].mxu0 %v1697
          %v1793 = vpop.f32.mrb[0].mxu0
          %v1794 = vadd.f32 %v1499, %v1793
          %v1795 = vpop.f32.mrb[0].mxu0
          %v1796 = vpop.f32.mrb[0].mxu0
          %v1797 = vadd.f32 %v1502, %v1796
          %v1798 = vpop.f32.mrb[0].mxu0
          %1799 = vmatprep.mubr.bf16.mxu0 0
          %1800 = vmatmul.mubr.bf16.gmra.mrb[0].mxu0 %v1700
          %v1801 = vpop.f32.mrb[0].mxu0
          %v1802 = vadd.f32 %v1507, %v1801
          %v1803 = vpop.f32.mrb[0].mxu0
          %v1804 = vpop.f32.mrb[0].mxu0
          %v1805 = vadd.f32 %v1510, %v1804
          %v1806 = vpop.f32.mrb[0].mxu0
          %1807 = vmatprep.mubr.bf16.mxu0 0
          %1808 = vmatmul.mubr.bf16.gmra.mrb[0].mxu0 %v1703
          %v1809 = vpop.f32.mrb[0].mxu0
          %v1810 = vadd.f32 %v1515, %v1809
          %v1811 = vpop.f32.mrb[0].mxu0
          %v1812 = vpop.f32.mrb[0].mxu0
          %v1813 = vadd.f32 %v1518, %v1812
          %v1814 = vpop.f32.mrb[0].mxu0
          %1815 = vmatprep.mubr.bf16.mxu0 0
          %1816 = vmatmul.mubr.bf16.gmra.mrb[0].mxu0 %v1706
          %v1817 = vpop.f32.mrb[0].mxu0
          %v1818 = vadd.f32 %v1523, %v1817
          %v1819 = vpop.f32.mrb[0].mxu0
          %v1820 = vpop.f32.mrb[0].mxu0
          %v1821 = vadd.f32 %v1526, %v1820
          %v1822 = vpop.f32.mrb[0].mxu0
          %1823 = vmatprep.mubr.bf16.mxu0 0
          %1824 = vmatmul.mubr.bf16.gmra.mrb[0].mxu0 %v1709
          %v1825 = vpop.f32.mrb[0].mxu0
          %v1826 = vadd.f32 %v1531, %v1825
          %v1827 = vpop.f32.mrb[0].mxu0
          %v1828 = vpop.f32.mrb[0].mxu0
          %v1829 = vadd.f32 %v1534, %v1828
          %v1830 = vpop.f32.mrb[0].mxu0
          %1831 = vmatprep.mubr.bf16.mxu0 0
          %1832 = vmatmul.mubr.bf16.gmra.mrb[0].mxu0 %v1712
          %v1833 = vpop.f32.mrb[0].mxu0
          %v1834 = vadd.f32 %v1539, %v1833
          %v1835 = vpop.f32.mrb[0].mxu0
          %v1836 = vpop.f32.mrb[0].mxu0
          %v1837 = vadd.f32 %v1542, %v1836
          %v1838 = vpop.f32.mrb[0].mxu0
          %1839 = vmatprep.mubr.bf16.mxu0 0
          %1840 = vmatmul.mubr.bf16.gmra.mrb[0].mxu0 %v1715
          %v1841 = vpop.f32.mrb[0].mxu0
          %v1842 = vadd.f32 %v1547, %v1841
          %v1843 = vpop.f32.mrb[0].mxu0
          %v1844 = vpop.f32.mrb[0].mxu0
          %v1845 = vadd.f32 %v1550, %v1844
          %v1846 = vpop.f32.mrb[0].mxu0
          %1847 = vmatprep.mubr.bf16.mxu0 0
          %1848 = vmatmul.mubr.bf16.gmra.mrb[0].mxu0 %v1718
          %v1849 = vpop.f32.mrb[0].mxu0
          %v1850 = vadd.f32 %v1555, %v1849
          %v1851 = vpop.f32.mrb[0].mxu0
          %v1852 = vpop.f32.mrb[0].mxu0
          %v1853 = vadd.f32 %v1558, %v1852
          %v1854 = vpop.f32.mrb[0].mxu0
          %1855 = vmatprep.mubr.bf16.mxu0 0
          %1856 = vmatmul.mubr.bf16.gmra.mrb[0].mxu0 %v1721
          %v1857 = vpop.f32.mrb[0].mxu0
          %v1858 = vadd.f32 %v1563, %v1857
          %v1859 = vpop.f32.mrb[0].mxu0
          %v1860 = vpop.f32.mrb[0].mxu0
          %v1861 = vadd.f32 %v1566, %v1860
          %v1862 = vpop.f32.mrb[0].mxu0
          %1863 = vmatprep.mubr.bf16.mxu0 0
          %1864 = vmatmul.mubr.bf16.gmra.mrb[0].mxu0 %v1724
          %v1865 = vpop.f32.mrb[0].mxu0
          %v1866 = vadd.f32 %v1571, %v1865
          %v1867 = vpop.f32.mrb[0].mxu0
          %v1868 = vpop.f32.mrb[0].mxu0
          %v1869 = vadd.f32 %v1574, %v1868
          %v1870 = vpop.f32.mrb[0].mxu0
          %1871 = vmatprep.mubr.bf16.mxu0 0
          %1872 = vmatmul.mubr.bf16.gmra.mrb[0].mxu0 %v1727
          %v1873 = vpop.f32.mrb[0].mxu0
          %v1874 = vadd.f32 %v1579, %v1873
          %v1875 = vpop.f32.mrb[0].mxu0
          %v1876 = vpop.f32.mrb[0].mxu0
          %v1877 = vadd.f32 %v1582, %v1876
          %v1878 = vpop.f32.mrb[0].mxu0
          %1879 = vmatprep.mubr.bf16.mxu0 0
          %1880 = vmatmul.mubr.bf16.gmra.mrb[0].mxu0 %v1730
          %v1881 = vpop.f32.mrb[0].mxu0
          %v1882 = vadd.f32 %v1587, %v1881
          %v1883 = vpop.f32.mrb[0].mxu0
          %v1884 = vpop.f32.mrb[0].mxu0
          %v1885 = vadd.f32 %v1590, %v1884
          %v1886 = vpop.f32.mrb[0].mxu0
          %1887 = vmatprep.mubr.bf16.mxu0 0
          %1888 = vmatmul.mubr.bf16.gmra.mrb[0].mxu0 %v1733
          %v1889 = vpop.f32.mrb[0].mxu0
          %v1890 = vadd.f32 %v1595, %v1889
          %v1891 = vpop.f32.mrb[0].mxu0
          %v1892 = vpop.f32.mrb[0].mxu0
          %v1893 = vadd.f32 %v1598, %v1892
          %v1894 = vpop.f32.mrb[0].mxu0
          %1895 = vdwg.mxu0
          %v1896 = vld [vmem:[#allocation2] sm:$0xe]
          %v1897 = vld [vmem:[#allocation2 + $0xc] sm:$0xe]
          %v1898 = vld [vmem:[#allocation2 + $0x18] sm:$0xe]
          %v1899 = vld [vmem:[#allocation2 + $0x24] sm:$0xe]
          %v1900 = vld [vmem:[#allocation2 + $0x30] sm:$0xe]
          %v1901 = vld [vmem:[#allocation2 + $0x3c] sm:$0xe]
          %v1902 = vld [vmem:[#allocation2 + $0x48] sm:$0xe]
          %v1903 = vld [vmem:[#allocation2 + $0x54] sm:$0xe]
          %v1904 = vld [vmem:[#allocation2 + $0x60] sm:$0xe]
          %v1905 = vld [vmem:[#allocation2 + $0x6c] sm:$0xe]
          %v1906 = vld [vmem:[#allocation2 + $0x78] sm:$0xe]
          %v1907 = vld [vmem:[#allocation2 + $0x84] sm:$0xe]
          %v1908 = vld [vmem:[#allocation2 + $0x90] sm:$0xe]
          %v1909 = vld [vmem:[#allocation2 + $0x9c] sm:$0xe]
          %v1910 = vld [vmem:[#allocation2 + $0xa8] sm:$0xe]
          %v1911 = vld [vmem:[#allocation2 + $0xb4] sm:$0xe]
          %vm1944 = vcmask 1042432
          %vm1945 = vcmask 1046532
          %vm1946 = vmor %vm1944, %vm1945
          %v1947 = vrot.slane %v1896, 5
          %v1948 = vrot.slane %v1947, 4
          %v1949 = vrot.slane %v898, 5
          %v1950 = vsel %vm1946, %v1948, %v1949
          %v1951 = vrot.slane %v1949, 4
          %v1952 = vrot.slane %v931, 5
          %v1953 = vsel %vm1946, %v1951, %v1952
          %v1954 = vrot.slane %v1897, 5
          %v1955 = vrot.slane %v1954, 4
          %v1956 = vrot.slane %v900, 5
          %v1957 = vsel %vm1946, %v1955, %v1956
          %v1958 = vrot.slane %v1956, 4
          %v1959 = vrot.slane %v932, 5
          %v1960 = vsel %vm1946, %v1958, %v1959
          %v1961 = vrot.slane %v1898, 5
          %v1962 = vrot.slane %v1961, 4
          %v1963 = vrot.slane %v902, 5
          %v1964 = vsel %vm1946, %v1962, %v1963
          %v1965 = vrot.slane %v1963, 4
          %v1966 = vrot.slane %v933, 5
          %v1967 = vsel %vm1946, %v1965, %v1966
          %v1968 = vrot.slane %v1899, 5
          %v1969 = vrot.slane %v1968, 4
          %v1970 = vrot.slane %v904, 5
          %v1971 = vsel %vm1946, %v1969, %v1970
          %v1972 = vrot.slane %v1970, 4
          %v1973 = vrot.slane %v934, 5
          %v1974 = vsel %vm1946, %v1972, %v1973
          %v1975 = vrot.slane %v1900, 5
          %v1976 = vrot.slane %v1975, 4
          %v1977 = vrot.slane %v906, 5
          %v1978 = vsel %vm1946, %v1976, %v1977
          %v1979 = vrot.slane %v1977, 4
          %v1980 = vrot.slane %v935, 5
          %v1981 = vsel %vm1946, %v1979, %v1980
          %v1982 = vrot.slane %v1901, 5
          %v1983 = vrot.slane %v1982, 4
          %v1984 = vrot.slane %v908, 5
          %v1985 = vsel %vm1946, %v1983, %v1984
          %v1986 = vrot.slane %v1984, 4
          %v1987 = vrot.slane %v936, 5
          %v1988 = vsel %vm1946, %v1986, %v1987
          %v1989 = vrot.slane %v1902, 5
          %v1990 = vrot.slane %v1989, 4
          %v1991 = vrot.slane %v910, 5
          %v1992 = vsel %vm1946, %v1990, %v1991
          %v1993 = vrot.slane %v1991, 4
          %v1994 = vrot.slane %v937, 5
          %v1995 = vsel %vm1946, %v1993, %v1994
          %v1996 = vrot.slane %v1903, 5
          %v1997 = vrot.slane %v1996, 4
          %v1998 = vrot.slane %v912, 5
          %v1999 = vsel %vm1946, %v1997, %v1998
          %v2000 = vrot.slane %v1998, 4
          %v2001 = vrot.slane %v938, 5
          %v2002 = vsel %vm1946, %v2000, %v2001
          %v2003 = vrot.slane %v1904, 5
          %v2004 = vrot.slane %v2003, 4
          %v2005 = vrot.slane %v914, 5
          %v2006 = vsel %vm1946, %v2004, %v2005
          %v2007 = vrot.slane %v2005, 4
          %v2008 = vrot.slane %v939, 5
          %v2009 = vsel %vm1946, %v2007, %v2008
          %v2010 = vrot.slane %v1905, 5
          %v2011 = vrot.slane %v2010, 4
          %v2012 = vrot.slane %v916, 5
          %v2013 = vsel %vm1946, %v2011, %v2012
          %v2014 = vrot.slane %v2012, 4
          %v2015 = vrot.slane %v940, 5
          %v2016 = vsel %vm1946, %v2014, %v2015
          %v2017 = vrot.slane %v1906, 5
          %v2018 = vrot.slane %v2017, 4
          %v2019 = vrot.slane %v918, 5
          %v2020 = vsel %vm1946, %v2018, %v2019
          %v2021 = vrot.slane %v2019, 4
          %v2022 = vrot.slane %v941, 5
          %v2023 = vsel %vm1946, %v2021, %v2022
          %v2024 = vrot.slane %v1907, 5
          %v2025 = vrot.slane %v2024, 4
          %v2026 = vrot.slane %v920, 5
          %v2027 = vsel %vm1946, %v2025, %v2026
          %v2028 = vrot.slane %v2026, 4
          %v2029 = vrot.slane %v942, 5
          %v2030 = vsel %vm1946, %v2028, %v2029
          %v2031 = vrot.slane %v1908, 5
          %v2032 = vrot.slane %v2031, 4
          %v2033 = vrot.slane %v922, 5
          %v2034 = vsel %vm1946, %v2032, %v2033
          %v2035 = vrot.slane %v2033, 4
          %v2036 = vrot.slane %v943, 5
          %v2037 = vsel %vm1946, %v2035, %v2036
          %v2038 = vrot.slane %v1909, 5
          %v2039 = vrot.slane %v2038, 4
          %v2040 = vrot.slane %v924, 5
          %v2041 = vsel %vm1946, %v2039, %v2040
          %v2042 = vrot.slane %v2040, 4
          %v2043 = vrot.slane %v944, 5
          %v2044 = vsel %vm1946, %v2042, %v2043
          %v2045 = vrot.slane %v1910, 5
          %v2046 = vrot.slane %v2045, 4
          %v2047 = vrot.slane %v926, 5
          %v2048 = vsel %vm1946, %v2046, %v2047
          %v2049 = vrot.slane %v2047, 4
          %v2050 = vrot.slane %v945, 5
          %v2051 = vsel %vm1946, %v2049, %v2050
          %v2052 = vrot.slane %v1911, 5
          %v2053 = vrot.slane %v2052, 4
          %v2054 = vrot.slane %v928, 5
          %v2055 = vsel %vm1946, %v2053, %v2054
          %v2056 = vrot.slane %v2054, 4
          %v2057 = vrot.slane %v946, 5
          %v2058 = vsel %vm1946, %v2056, %v2057
          %s2059 = scalar_lea.vmem %s1, 16
          %v2060 = vld [vmem:[%s2059] sm:$0xf]
          %v2061 = vld [vmem:[%s2059 + $0x4] sm:$0xf]
          %v2062 = vunpack.c.l.b16 %v1950
          %v2063 = vunpack.c.l.b16 %v1953
          %v2064 = vunpack.c.l.b16 %v1957
          %v2065 = vunpack.c.l.b16 %v1960
          %v2066 = vunpack.c.l.b16 %v1964
          %v2067 = vunpack.c.l.b16 %v1967
          %v2068 = vunpack.c.l.b16 %v1971
          %v2069 = vunpack.c.l.b16 %v1974
          %v2070 = vunpack.c.l.b16 %v1978
          %v2071 = vunpack.c.l.b16 %v1981
          %v2072 = vunpack.c.l.b16 %v1985
          %v2073 = vunpack.c.l.b16 %v1988
          %v2074 = vunpack.c.l.b16 %v1992
          %v2075 = vunpack.c.l.b16 %v1995
          %v2076 = vunpack.c.l.b16 %v1999
          %v2077 = vunpack.c.l.b16 %v2002
          %v2078 = vunpack.c.l.b16 %v2006
          %v2079 = vunpack.c.l.b16 %v2009
          %v2080 = vunpack.c.l.b16 %v2013
          %v2081 = vunpack.c.l.b16 %v2016
          %v2082 = vunpack.c.l.b16 %v2020
          %v2083 = vunpack.c.l.b16 %v2023
          %v2084 = vunpack.c.l.b16 %v2027
          %v2085 = vunpack.c.l.b16 %v2030
          %v2086 = vunpack.c.l.b16 %v2034
          %v2087 = vunpack.c.l.b16 %v2037
          %v2088 = vunpack.c.l.b16 %v2041
          %v2089 = vunpack.c.l.b16 %v2044
          %v2090 = vunpack.c.l.b16 %v2048
          %v2091 = vunpack.c.l.b16 %v2051
          %v2092 = vunpack.c.l.b16 %v2055
          %v2093 = vunpack.c.l.b16 %v2058
          %v2094 = vpack.c.b16 %v2063, %v2062
          %v2095 = vpack.c.b16 %v2065, %v2064
          %v2096 = vpack.c.b16 %v2067, %v2066
          %v2097 = vpack.c.b16 %v2069, %v2068
          %v2098 = vpack.c.b16 %v2071, %v2070
          %v2099 = vpack.c.b16 %v2073, %v2072
          %v2100 = vpack.c.b16 %v2075, %v2074
          %v2101 = vpack.c.b16 %v2077, %v2076
          %v2102 = vpack.c.b16 %v2079, %v2078
          %v2103 = vpack.c.b16 %v2081, %v2080
          %v2104 = vpack.c.b16 %v2083, %v2082
          %v2105 = vpack.c.b16 %v2085, %v2084
          %v2106 = vpack.c.b16 %v2087, %v2086
          %v2107 = vpack.c.b16 %v2089, %v2088
          %v2108 = vpack.c.b16 %v2091, %v2090
          %v2109 = vpack.c.b16 %v2093, %v2092
          %v2112 = vunpack.c.l.b16 %v2060
          %v2113 = vunpack.c.l.b16 %v2061
          %v2114 = vpack.c.b16 %v2113, %v2112
          %v2117 = vsel %vm1391, %v2094, 0
          %v2120 = vsel %vm1391, %v2095, 0
          %v2123 = vsel %vm1391, %v2096, 0
          %v2126 = vsel %vm1391, %v2097, 0
          %v2129 = vsel %vm1391, %v2098, 0
          %v2132 = vsel %vm1391, %v2099, 0
          %v2135 = vsel %vm1391, %v2100, 0
          %v2138 = vsel %vm1391, %v2101, 0
          %v2141 = vsel %vm1391, %v2102, 0
          %v2144 = vsel %vm1391, %v2103, 0
          %v2147 = vsel %vm1391, %v2104, 0
          %v2150 = vsel %vm1391, %v2105, 0
          %v2153 = vsel %vm1391, %v2106, 0
          %v2156 = vsel %vm1391, %v2107, 0
          %v2159 = vsel %vm1391, %v2108, 0
          %v2162 = vsel %vm1391, %v2109, 0
          %2164 = vmatprep.subr.bf16.mxu0 0
          %2165 = vmatpush1.bf16.msra.mxu0 %v2114
          %2166 = vmatprep.subr.bf16.mxu0 0
          %2167 = vmatpush1.bf16.msra.mxu0 0
          %2168 = vmatprep.subr.bf16.mxu0 0
          %2169 = vmatpush1.bf16.msra.mxu0 0
          %2170 = vmatprep.subr.bf16.mxu0 0
          %2171 = vmatpush1.bf16.msra.mxu0 0
          %2172 = vmatprep.subr.bf16.mxu0 0
          %2173 = vmatpush1.bf16.msra.mxu0 0
          %2174 = vmatprep.subr.bf16.mxu0 0
          %2175 = vmatpush1.bf16.msra.mxu0 0
          %2176 = vmatprep.subr.bf16.mxu0 0
          %2177 = vmatpush1.bf16.msra.mxu0 0
          %2178 = vmatprep.subr.bf16.mxu0 0
          %2179 = vmatpush1.bf16.msra.mxu0 0
          %2180 = vmatprep.subr.bf16.mxu0 0
          %2181 = vmatpush1.bf16.msra.mxu0 0
          %2182 = vmatprep.subr.bf16.mxu0 0
          %2183 = vmatpush1.bf16.msra.mxu0 0
          %2184 = vmatprep.subr.bf16.mxu0 0
          %2185 = vmatpush1.bf16.msra.mxu0 0
          %2186 = vmatprep.subr.bf16.mxu0 0
          %2187 = vmatpush1.bf16.msra.mxu0 0
          %2188 = vmatprep.subr.bf16.mxu0 0
          %2189 = vmatpush1.bf16.msra.mxu0 0
          %2190 = vmatprep.subr.bf16.mxu0 0
          %2191 = vmatpush1.bf16.msra.mxu0 0
          %2192 = vmatprep.subr.bf16.mxu0 0
          %2193 = vmatpush1.bf16.msra.mxu0 0
          %2194 = vmatprep.subr.bf16.mxu0 0
          %2195 = vmatpush1.bf16.msra.mxu0 0
          %2196 = vmatprep.mubr.bf16.mxu0 0
          %2197 = vmatmul.mubr.bf16.gmra.mrb[0].mxu0 %v2117
          %v2198 = vpop.f32.mrb[0].mxu0
          %v2199 = vadd.f32 0.0, %v2198
          %v2200 = vpop.f32.mrb[0].mxu0
          %v2201 = vpop.f32.mrb[0].mxu0
          %v2202 = vadd.f32 0.0, %v2201
          %v2203 = vpop.f32.mrb[0].mxu0
          %2204 = vmatprep.mubr.bf16.mxu0 0
          %2205 = vmatmul.mubr.bf16.gmra.mrb[0].mxu0 %v2120
          %v2206 = vpop.f32.mrb[0].mxu0
          %v2207 = vadd.f32 0.0, %v2206
          %v2208 = vpop.f32.mrb[0].mxu0
          %v2209 = vpop.f32.mrb[0].mxu0
          %v2210 = vadd.f32 0.0, %v2209
          %v2211 = vpop.f32.mrb[0].mxu0
          %2212 = vmatprep.mubr.bf16.mxu0 0
          %2213 = vmatmul.mubr.bf16.gmra.mrb[0].mxu0 %v2123
          %v2214 = vpop.f32.mrb[0].mxu0
          %v2215 = vadd.f32 0.0, %v2214
          %v2216 = vpop.f32.mrb[0].mxu0
          %v2217 = vpop.f32.mrb[0].mxu0
          %v2218 = vadd.f32 0.0, %v2217
          %v2219 = vpop.f32.mrb[0].mxu0
          %2220 = vmatprep.mubr.bf16.mxu0 0
          %2221 = vmatmul.mubr.bf16.gmra.mrb[0].mxu0 %v2126
          %v2222 = vpop.f32.mrb[0].mxu0
          %v2223 = vadd.f32 0.0, %v2222
          %v2224 = vpop.f32.mrb[0].mxu0
          %v2225 = vpop.f32.mrb[0].mxu0
          %v2226 = vadd.f32 0.0, %v2225
          %v2227 = vpop.f32.mrb[0].mxu0
          %2228 = vmatprep.mubr.bf16.mxu0 0
          %2229 = vmatmul.mubr.bf16.gmra.mrb[0].mxu0 %v2129
          %v2230 = vpop.f32.mrb[0].mxu0
          %v2231 = vadd.f32 0.0, %v2230
          %v2232 = vpop.f32.mrb[0].mxu0
          %v2233 = vpop.f32.mrb[0].mxu0
          %v2234 = vadd.f32 0.0, %v2233
          %v2235 = vpop.f32.mrb[0].mxu0
          %2236 = vmatprep.mubr.bf16.mxu0 0
          %2237 = vmatmul.mubr.bf16.gmra.mrb[0].mxu0 %v2132
          %v2238 = vpop.f32.mrb[0].mxu0
          %v2239 = vadd.f32 0.0, %v2238
          %v2240 = vpop.f32.mrb[0].mxu0
          %v2241 = vpop.f32.mrb[0].mxu0
          %v2242 = vadd.f32 0.0, %v2241
          %v2243 = vpop.f32.mrb[0].mxu0
          %2244 = vmatprep.mubr.bf16.mxu0 0
          %2245 = vmatmul.mubr.bf16.gmra.mrb[0].mxu0 %v2135
          %v2246 = vpop.f32.mrb[0].mxu0
          %v2247 = vadd.f32 0.0, %v2246
          %v2248 = vpop.f32.mrb[0].mxu0
          %v2249 = vpop.f32.mrb[0].mxu0
          %v2250 = vadd.f32 0.0, %v2249
          %v2251 = vpop.f32.mrb[0].mxu0
          %2252 = vmatprep.mubr.bf16.mxu0 0
          %2253 = vmatmul.mubr.bf16.gmra.mrb[0].mxu0 %v2138
          %v2254 = vpop.f32.mrb[0].mxu0
          %v2255 = vadd.f32 0.0, %v2254
          %v2256 = vpop.f32.mrb[0].mxu0
          %v2257 = vpop.f32.mrb[0].mxu0
          %v2258 = vadd.f32 0.0, %v2257
          %v2259 = vpop.f32.mrb[0].mxu0
          %2260 = vmatprep.mubr.bf16.mxu0 0
          %2261 = vmatmul.mubr.bf16.gmra.mrb[0].mxu0 %v2141
          %v2262 = vpop.f32.mrb[0].mxu0
          %v2263 = vadd.f32 0.0, %v2262
          %v2264 = vpop.f32.mrb[0].mxu0
          %v2265 = vpop.f32.mrb[0].mxu0
          %v2266 = vadd.f32 0.0, %v2265
          %v2267 = vpop.f32.mrb[0].mxu0
          %2268 = vmatprep.mubr.bf16.mxu0 0
          %2269 = vmatmul.mubr.bf16.gmra.mrb[0].mxu0 %v2144
          %v2270 = vpop.f32.mrb[0].mxu0
          %v2271 = vadd.f32 0.0, %v2270
          %v2272 = vpop.f32.mrb[0].mxu0
          %v2273 = vpop.f32.mrb[0].mxu0
          %v2274 = vadd.f32 0.0, %v2273
          %v2275 = vpop.f32.mrb[0].mxu0
          %2276 = vmatprep.mubr.bf16.mxu0 0
          %2277 = vmatmul.mubr.bf16.gmra.mrb[0].mxu0 %v2147
          %v2278 = vpop.f32.mrb[0].mxu0
          %v2279 = vadd.f32 0.0, %v2278
          %v2280 = vpop.f32.mrb[0].mxu0
          %v2281 = vpop.f32.mrb[0].mxu0
          %v2282 = vadd.f32 0.0, %v2281
          %v2283 = vpop.f32.mrb[0].mxu0
          %2284 = vmatprep.mubr.bf16.mxu0 0
          %2285 = vmatmul.mubr.bf16.gmra.mrb[0].mxu0 %v2150
          %v2286 = vpop.f32.mrb[0].mxu0
          %v2287 = vadd.f32 0.0, %v2286
          %v2288 = vpop.f32.mrb[0].mxu0
          %v2289 = vpop.f32.mrb[0].mxu0
          %v2290 = vadd.f32 0.0, %v2289
          %v2291 = vpop.f32.mrb[0].mxu0
          %2292 = vmatprep.mubr.bf16.mxu0 0
          %2293 = vmatmul.mubr.bf16.gmra.mrb[0].mxu0 %v2153
          %v2294 = vpop.f32.mrb[0].mxu0
          %v2295 = vadd.f32 0.0, %v2294
          %v2296 = vpop.f32.mrb[0].mxu0
          %v2297 = vpop.f32.mrb[0].mxu0
          %v2298 = vadd.f32 0.0, %v2297
          %v2299 = vpop.f32.mrb[0].mxu0
          %2300 = vmatprep.mubr.bf16.mxu0 0
          %2301 = vmatmul.mubr.bf16.gmra.mrb[0].mxu0 %v2156
          %v2302 = vpop.f32.mrb[0].mxu0
          %v2303 = vadd.f32 0.0, %v2302
          %v2304 = vpop.f32.mrb[0].mxu0
          %v2305 = vpop.f32.mrb[0].mxu0
          %v2306 = vadd.f32 0.0, %v2305
          %v2307 = vpop.f32.mrb[0].mxu0
          %2308 = vmatprep.mubr.bf16.mxu0 0
          %2309 = vmatmul.mubr.bf16.gmra.mrb[0].mxu0 %v2159
          %v2310 = vpop.f32.mrb[0].mxu0
          %v2311 = vadd.f32 0.0, %v2310
          %v2312 = vpop.f32.mrb[0].mxu0
          %v2313 = vpop.f32.mrb[0].mxu0
          %v2314 = vadd.f32 0.0, %v2313
          %v2315 = vpop.f32.mrb[0].mxu0
          %2316 = vmatprep.mubr.bf16.mxu0 0
          %2317 = vmatmul.mubr.bf16.gmra.mrb[0].mxu0 %v2162
          %v2318 = vpop.f32.mrb[0].mxu0
          %v2319 = vadd.f32 0.0, %v2318
          %v2320 = vpop.f32.mrb[0].mxu0
          %v2321 = vpop.f32.mrb[0].mxu0
          %v2322 = vadd.f32 0.0, %v2321
          %v2323 = vpop.f32.mrb[0].mxu0
          %2324 = vdwg.mxu0
          %v2325 = vadd.f32 %v1770, %v2199
          %v2326 = vadd.f32 %v1773, %v2202
          %v2327 = vadd.f32 %v1778, %v2207
          %v2328 = vadd.f32 %v1781, %v2210
          %v2329 = vadd.f32 %v1786, %v2215
          %v2330 = vadd.f32 %v1789, %v2218
          %v2331 = vadd.f32 %v1794, %v2223
          %v2332 = vadd.f32 %v1797, %v2226
          %v2333 = vadd.f32 %v1802, %v2231
          %v2334 = vadd.f32 %v1805, %v2234
          %v2335 = vadd.f32 %v1810, %v2239
          %v2336 = vadd.f32 %v1813, %v2242
          %v2337 = vadd.f32 %v1818, %v2247
          %v2338 = vadd.f32 %v1821, %v2250
          %v2339 = vadd.f32 %v1826, %v2255
          %v2340 = vadd.f32 %v1829, %v2258
          %v2341 = vadd.f32 %v1834, %v2263
          %v2342 = vadd.f32 %v1837, %v2266
          %v2343 = vadd.f32 %v1842, %v2271
          %v2344 = vadd.f32 %v1845, %v2274
          %v2345 = vadd.f32 %v1850, %v2279
          %v2346 = vadd.f32 %v1853, %v2282
          %v2347 = vadd.f32 %v1858, %v2287
          %v2348 = vadd.f32 %v1861, %v2290
          %v2349 = vadd.f32 %v1866, %v2295
          %v2350 = vadd.f32 %v1869, %v2298
          %v2351 = vadd.f32 %v1874, %v2303
          %v2352 = vadd.f32 %v1877, %v2306
          %v2353 = vadd.f32 %v1882, %v2311
          %v2354 = vadd.f32 %v1885, %v2314
          %v2355 = vadd.f32 %v1890, %v2319
          %v2356 = vadd.f32 %v1893, %v2322
          %v2357 = vld [vmem:[%s778] sm:$0xf]
          %v2358 = vld [vmem:[%s778 + $0x4] sm:$0xf]
          %v2359 = vld [vmem:[%s778 + $0xc] sm:$0xf]
          %v2360 = vld [vmem:[%s778 + $0x10] sm:$0xf]
          %v2361 = vld [vmem:[%s778 + $0x18] sm:$0xf]
          %v2362 = vld [vmem:[%s778 + $0x1c] sm:$0xf]
          %v2363 = vld [vmem:[%s778 + $0x24] sm:$0xf]
          %v2364 = vld [vmem:[%s778 + $0x28] sm:$0xf]
          %v2365 = vld [vmem:[%s778 + $0x30] sm:$0xf]
          %v2366 = vld [vmem:[%s778 + $0x34] sm:$0xf]
          %v2367 = vld [vmem:[%s778 + $0x3c] sm:$0xf]
          %v2368 = vld [vmem:[%s778 + $0x40] sm:$0xf]
          %v2369 = vld [vmem:[%s778 + $0x48] sm:$0xf]
          %v2370 = vld [vmem:[%s778 + $0x4c] sm:$0xf]
          %v2371 = vld [vmem:[%s778 + $0x54] sm:$0xf]
          %v2372 = vld [vmem:[%s778 + $0x58] sm:$0xf]
          %v2373 = vld [vmem:[%s778 + $0x60] sm:$0xf]
          %v2374 = vld [vmem:[%s778 + $0x64] sm:$0xf]
          %v2375 = vld [vmem:[%s778 + $0x6c] sm:$0xf]
          %v2376 = vld [vmem:[%s778 + $0x70] sm:$0xf]
          %v2377 = vld [vmem:[%s778 + $0x78] sm:$0xf]
          %v2378 = vld [vmem:[%s778 + $0x7c] sm:$0xf]
          %v2379 = vld [vmem:[%s778 + $0x84] sm:$0xf]
          %v2380 = vld [vmem:[%s778 + $0x88] sm:$0xf]
          %v2381 = vld [vmem:[%s778 + $0x90] sm:$0xf]
          %v2382 = vld [vmem:[%s778 + $0x94] sm:$0xf]
          %v2383 = vld [vmem:[%s778 + $0x9c] sm:$0xf]
          %v2384 = vld [vmem:[%s778 + $0xa0] sm:$0xf]
          %v2385 = vld [vmem:[%s778 + $0xa8] sm:$0xf]
          %v2386 = vld [vmem:[%s778 + $0xac] sm:$0xf]
          %v2387 = vld [vmem:[%s778 + $0xb4] sm:$0xf]
          %v2388 = vld [vmem:[%s778 + $0xb8] sm:$0xf]
          %s2389 = scalar_lea.vmem %s1, 24
          %v2390 = vld [vmem:[%s2389] sm:$0xf]
          %v2391 = vld [vmem:[%s2389 + $0x4] sm:$0xf]
          %v2424 = vunpack.c.l.b16 %v2357
          %v2425 = vunpack.c.l.b16 %v2358
          %v2426 = vunpack.c.l.b16 %v2359
          %v2427 = vunpack.c.l.b16 %v2360
          %v2428 = vunpack.c.l.b16 %v2361
          %v2429 = vunpack.c.l.b16 %v2362
          %v2430 = vunpack.c.l.b16 %v2363
          %v2431 = vunpack.c.l.b16 %v2364
          %v2432 = vunpack.c.l.b16 %v2365
          %v2433 = vunpack.c.l.b16 %v2366
          %v2434 = vunpack.c.l.b16 %v2367
          %v2435 = vunpack.c.l.b16 %v2368
          %v2436 = vunpack.c.l.b16 %v2369
          %v2437 = vunpack.c.l.b16 %v2370
          %v2438 = vunpack.c.l.b16 %v2371
          %v2439 = vunpack.c.l.b16 %v2372
          %v2440 = vunpack.c.l.b16 %v2373
          %v2441 = vunpack.c.l.b16 %v2374
          %v2442 = vunpack.c.l.b16 %v2375
          %v2443 = vunpack.c.l.b16 %v2376
          %v2444 = vunpack.c.l.b16 %v2377
          %v2445 = vunpack.c.l.b16 %v2378
          %v2446 = vunpack.c.l.b16 %v2379
          %v2447 = vunpack.c.l.b16 %v2380
          %v2448 = vunpack.c.l.b16 %v2381
          %v2449 = vunpack.c.l.b16 %v2382
          %v2450 = vunpack.c.l.b16 %v2383
          %v2451 = vunpack.c.l.b16 %v2384
          %v2452 = vunpack.c.l.b16 %v2385
          %v2453 = vunpack.c.l.b16 %v2386
          %v2454 = vunpack.c.l.b16 %v2387
          %v2455 = vunpack.c.l.b16 %v2388
          %v2456 = vpack.c.b16 %v2425, %v2424
          %v2457 = vpack.c.b16 %v2427, %v2426
          %v2458 = vpack.c.b16 %v2429, %v2428
          %v2459 = vpack.c.b16 %v2431, %v2430
          %v2460 = vpack.c.b16 %v2433, %v2432
          %v2461 = vpack.c.b16 %v2435, %v2434
          %v2462 = vpack.c.b16 %v2437, %v2436
          %v2463 = vpack.c.b16 %v2439, %v2438
          %v2464 = vpack.c.b16 %v2441, %v2440
          %v2465 = vpack.c.b16 %v2443, %v2442
          %v2466 = vpack.c.b16 %v2445, %v2444
          %v2467 = vpack.c.b16 %v2447, %v2446
          %v2468 = vpack.c.b16 %v2449, %v2448
          %v2469 = vpack.c.b16 %v2451, %v2450
          %v2470 = vpack.c.b16 %v2453, %v2452
          %v2471 = vpack.c.b16 %v2455, %v2454
          %v2474 = vunpack.c.l.b16 %v2390
          %v2475 = vunpack.c.l.b16 %v2391
          %v2476 = vpack.c.b16 %v2475, %v2474
          %v2479 = vsel %vm1391, %v2456, 0
          %v2482 = vsel %vm1391, %v2457, 0
          %v2485 = vsel %vm1391, %v2458, 0
          %v2488 = vsel %vm1391, %v2459, 0
          %v2491 = vsel %vm1391, %v2460, 0
          %v2494 = vsel %vm1391, %v2461, 0
          %v2497 = vsel %vm1391, %v2462, 0
          %v2500 = vsel %vm1391, %v2463, 0
          %v2503 = vsel %vm1391, %v2464, 0
          %v2506 = vsel %vm1391, %v2465, 0
          %v2509 = vsel %vm1391, %v2466, 0
          %v2512 = vsel %vm1391, %v2467, 0
          %v2515 = vsel %vm1391, %v2468, 0
          %v2518 = vsel %vm1391, %v2469, 0
          %v2521 = vsel %vm1391, %v2470, 0
          %v2524 = vsel %vm1391, %v2471, 0
          %2526 = vmatprep.subr.bf16.mxu0 0
          %2527 = vmatpush1.bf16.msra.mxu0 %v2476
          %2528 = vmatprep.subr.bf16.mxu0 0
          %2529 = vmatpush1.bf16.msra.mxu0 0
          %2530 = vmatprep.subr.bf16.mxu0 0
          %2531 = vmatpush1.bf16.msra.mxu0 0
          %2532 = vmatprep.subr.bf16.mxu0 0
          %2533 = vmatpush1.bf16.msra.mxu0 0
          %2534 = vmatprep.subr.bf16.mxu0 0
          %2535 = vmatpush1.bf16.msra.mxu0 0
          %2536 = vmatprep.subr.bf16.mxu0 0
          %2537 = vmatpush1.bf16.msra.mxu0 0
          %2538 = vmatprep.subr.bf16.mxu0 0
          %2539 = vmatpush1.bf16.msra.mxu0 0
          %2540 = vmatprep.subr.bf16.mxu0 0
          %2541 = vmatpush1.bf16.msra.mxu0 0
          %2542 = vmatprep.subr.bf16.mxu0 0
          %2543 = vmatpush1.bf16.msra.mxu0 0
          %2544 = vmatprep.subr.bf16.mxu0 0
          %2545 = vmatpush1.bf16.msra.mxu0 0
          %2546 = vmatprep.subr.bf16.mxu0 0
          %2547 = vmatpush1.bf16.msra.mxu0 0
          %2548 = vmatprep.subr.bf16.mxu0 0
          %2549 = vmatpush1.bf16.msra.mxu0 0
          %2550 = vmatprep.subr.bf16.mxu0 0
          %2551 = vmatpush1.bf16.msra.mxu0 0
          %2552 = vmatprep.subr.bf16.mxu0 0
          %2553 = vmatpush1.bf16.msra.mxu0 0
          %2554 = vmatprep.subr.bf16.mxu0 0
          %2555 = vmatpush1.bf16.msra.mxu0 0
          %2556 = vmatprep.subr.bf16.mxu0 0
          %2557 = vmatpush1.bf16.msra.mxu0 0
          %2558 = vmatprep.mubr.bf16.mxu0 0
          %2559 = vmatmul.mubr.bf16.gmra.mrb[0].mxu0 %v2479
          %v2560 = vpop.f32.mrb[0].mxu0
          %v2561 = vadd.f32 0.0, %v2560
          %v2562 = vpop.f32.mrb[0].mxu0
          %v2563 = vpop.f32.mrb[0].mxu0
          %v2564 = vadd.f32 0.0, %v2563
          %v2565 = vpop.f32.mrb[0].mxu0
          %2566 = vmatprep.mubr.bf16.mxu0 0
          %2567 = vmatmul.mubr.bf16.gmra.mrb[0].mxu0 %v2482
          %v2568 = vpop.f32.mrb[0].mxu0
          %v2569 = vadd.f32 0.0, %v2568
          %v2570 = vpop.f32.mrb[0].mxu0
          %v2571 = vpop.f32.mrb[0].mxu0
          %v2572 = vadd.f32 0.0, %v2571
          %v2573 = vpop.f32.mrb[0].mxu0
          %2574 = vmatprep.mubr.bf16.mxu0 0
          %2575 = vmatmul.mubr.bf16.gmra.mrb[0].mxu0 %v2485
          %v2576 = vpop.f32.mrb[0].mxu0
          %v2577 = vadd.f32 0.0, %v2576
          %v2578 = vpop.f32.mrb[0].mxu0
          %v2579 = vpop.f32.mrb[0].mxu0
          %v2580 = vadd.f32 0.0, %v2579
          %v2581 = vpop.f32.mrb[0].mxu0
          %2582 = vmatprep.mubr.bf16.mxu0 0
          %2583 = vmatmul.mubr.bf16.gmra.mrb[0].mxu0 %v2488
          %v2584 = vpop.f32.mrb[0].mxu0
          %v2585 = vadd.f32 0.0, %v2584
          %v2586 = vpop.f32.mrb[0].mxu0
          %v2587 = vpop.f32.mrb[0].mxu0
          %v2588 = vadd.f32 0.0, %v2587
          %v2589 = vpop.f32.mrb[0].mxu0
          %2590 = vmatprep.mubr.bf16.mxu0 0
          %2591 = vmatmul.mubr.bf16.gmra.mrb[0].mxu0 %v2491
          %v2592 = vpop.f32.mrb[0].mxu0
          %v2593 = vadd.f32 0.0, %v2592
          %v2594 = vpop.f32.mrb[0].mxu0
          %v2595 = vpop.f32.mrb[0].mxu0
          %v2596 = vadd.f32 0.0, %v2595
          %v2597 = vpop.f32.mrb[0].mxu0
          %2598 = vmatprep.mubr.bf16.mxu0 0
          %2599 = vmatmul.mubr.bf16.gmra.mrb[0].mxu0 %v2494
          %v2600 = vpop.f32.mrb[0].mxu0
          %v2601 = vadd.f32 0.0, %v2600
          %v2602 = vpop.f32.mrb[0].mxu0
          %v2603 = vpop.f32.mrb[0].mxu0
          %v2604 = vadd.f32 0.0, %v2603
          %v2605 = vpop.f32.mrb[0].mxu0
          %2606 = vmatprep.mubr.bf16.mxu0 0
          %2607 = vmatmul.mubr.bf16.gmra.mrb[0].mxu0 %v2497
          %v2608 = vpop.f32.mrb[0].mxu0
          %v2609 = vadd.f32 0.0, %v2608
          %v2610 = vpop.f32.mrb[0].mxu0
          %v2611 = vpop.f32.mrb[0].mxu0
          %v2612 = vadd.f32 0.0, %v2611
          %v2613 = vpop.f32.mrb[0].mxu0
          %2614 = vmatprep.mubr.bf16.mxu0 0
          %2615 = vmatmul.mubr.bf16.gmra.mrb[0].mxu0 %v2500
          %v2616 = vpop.f32.mrb[0].mxu0
          %v2617 = vadd.f32 0.0, %v2616
          %v2618 = vpop.f32.mrb[0].mxu0
          %v2619 = vpop.f32.mrb[0].mxu0
          %v2620 = vadd.f32 0.0, %v2619
          %v2621 = vpop.f32.mrb[0].mxu0
          %2622 = vmatprep.mubr.bf16.mxu0 0
          %2623 = vmatmul.mubr.bf16.gmra.mrb[0].mxu0 %v2503
          %v2624 = vpop.f32.mrb[0].mxu0
          %v2625 = vadd.f32 0.0, %v2624
          %v2626 = vpop.f32.mrb[0].mxu0
          %v2627 = vpop.f32.mrb[0].mxu0
          %v2628 = vadd.f32 0.0, %v2627
          %v2629 = vpop.f32.mrb[0].mxu0
          %2630 = vmatprep.mubr.bf16.mxu0 0
          %2631 = vmatmul.mubr.bf16.gmra.mrb[0].mxu0 %v2506
          %v2632 = vpop.f32.mrb[0].mxu0
          %v2633 = vadd.f32 0.0, %v2632
          %v2634 = vpop.f32.mrb[0].mxu0
          %v2635 = vpop.f32.mrb[0].mxu0
          %v2636 = vadd.f32 0.0, %v2635
          %v2637 = vpop.f32.mrb[0].mxu0
          %2638 = vmatprep.mubr.bf16.mxu0 0
          %2639 = vmatmul.mubr.bf16.gmra.mrb[0].mxu0 %v2509
          %v2640 = vpop.f32.mrb[0].mxu0
          %v2641 = vadd.f32 0.0, %v2640
          %v2642 = vpop.f32.mrb[0].mxu0
          %v2643 = vpop.f32.mrb[0].mxu0
          %v2644 = vadd.f32 0.0, %v2643
          %v2645 = vpop.f32.mrb[0].mxu0
          %2646 = vmatprep.mubr.bf16.mxu0 0
          %2647 = vmatmul.mubr.bf16.gmra.mrb[0].mxu0 %v2512
          %v2648 = vpop.f32.mrb[0].mxu0
          %v2649 = vadd.f32 0.0, %v2648
          %v2650 = vpop.f32.mrb[0].mxu0
          %v2651 = vpop.f32.mrb[0].mxu0
          %v2652 = vadd.f32 0.0, %v2651
          %v2653 = vpop.f32.mrb[0].mxu0
          %2654 = vmatprep.mubr.bf16.mxu0 0
          %2655 = vmatmul.mubr.bf16.gmra.mrb[0].mxu0 %v2515
          %v2656 = vpop.f32.mrb[0].mxu0
          %v2657 = vadd.f32 0.0, %v2656
          %v2658 = vpop.f32.mrb[0].mxu0
          %v2659 = vpop.f32.mrb[0].mxu0
          %v2660 = vadd.f32 0.0, %v2659
          %v2661 = vpop.f32.mrb[0].mxu0
          %2662 = vmatprep.mubr.bf16.mxu0 0
          %2663 = vmatmul.mubr.bf16.gmra.mrb[0].mxu0 %v2518
          %v2664 = vpop.f32.mrb[0].mxu0
          %v2665 = vadd.f32 0.0, %v2664
          %v2666 = vpop.f32.mrb[0].mxu0
          %v2667 = vpop.f32.mrb[0].mxu0
          %v2668 = vadd.f32 0.0, %v2667
          %v2669 = vpop.f32.mrb[0].mxu0
          %2670 = vmatprep.mubr.bf16.mxu0 0
          %2671 = vmatmul.mubr.bf16.gmra.mrb[0].mxu0 %v2521
          %v2672 = vpop.f32.mrb[0].mxu0
          %v2673 = vadd.f32 0.0, %v2672
          %v2674 = vpop.f32.mrb[0].mxu0
          %v2675 = vpop.f32.mrb[0].mxu0
          %v2676 = vadd.f32 0.0, %v2675
          %v2677 = vpop.f32.mrb[0].mxu0
          %2678 = vmatprep.mubr.bf16.mxu0 0
          %2679 = vmatmul.mubr.bf16.gmra.mrb[0].mxu0 %v2524
          %v2680 = vpop.f32.mrb[0].mxu0
          %v2681 = vadd.f32 0.0, %v2680
          %v2682 = vpop.f32.mrb[0].mxu0
          %v2683 = vpop.f32.mrb[0].mxu0
          %v2684 = vadd.f32 0.0, %v2683
          %v2685 = vpop.f32.mrb[0].mxu0
          %2686 = vdwg.mxu0
          %v2687 = vadd.f32 %v2325, %v2561
          %v2688 = vadd.f32 %v2326, %v2564
          %v2689 = vadd.f32 %v2327, %v2569
          %v2690 = vadd.f32 %v2328, %v2572
          %v2691 = vadd.f32 %v2329, %v2577
          %v2692 = vadd.f32 %v2330, %v2580
          %v2693 = vadd.f32 %v2331, %v2585
          %v2694 = vadd.f32 %v2332, %v2588
          %v2695 = vadd.f32 %v2333, %v2593
          %v2696 = vadd.f32 %v2334, %v2596
          %v2697 = vadd.f32 %v2335, %v2601
          %v2698 = vadd.f32 %v2336, %v2604
          %v2699 = vadd.f32 %v2337, %v2609
          %v2700 = vadd.f32 %v2338, %v2612
          %v2701 = vadd.f32 %v2339, %v2617
          %v2702 = vadd.f32 %v2340, %v2620
          %v2703 = vadd.f32 %v2341, %v2625
          %v2704 = vadd.f32 %v2342, %v2628
          %v2705 = vadd.f32 %v2343, %v2633
          %v2706 = vadd.f32 %v2344, %v2636
          %v2707 = vadd.f32 %v2345, %v2641
          %v2708 = vadd.f32 %v2346, %v2644
          %v2709 = vadd.f32 %v2347, %v2649
          %v2710 = vadd.f32 %v2348, %v2652
          %v2711 = vadd.f32 %v2349, %v2657
          %v2712 = vadd.f32 %v2350, %v2660
          %v2713 = vadd.f32 %v2351, %v2665
          %v2714 = vadd.f32 %v2352, %v2668
          %v2715 = vadd.f32 %v2353, %v2673
          %v2716 = vadd.f32 %v2354, %v2676
          %v2717 = vadd.f32 %v2355, %v2681
          %v2718 = vadd.f32 %v2356, %v2684
          %v2719 = vld [vmem:[%s778] sm:$0xf]
          %v2720 = vld [vmem:[%s778 + $0x4] sm:$0xf]
          %v2721 = vld [vmem:[%s778 + $0x8] sm:$0x1]
          %v2722 = vld [vmem:[%s778 + $0xc] sm:$0xf]
          %v2723 = vld [vmem:[%s778 + $0x10] sm:$0xf]
          %v2724 = vld [vmem:[%s778 + $0x14] sm:$0x1]
          %v2725 = vld [vmem:[%s778 + $0x18] sm:$0xf]
          %v2726 = vld [vmem:[%s778 + $0x1c] sm:$0xf]
          %v2727 = vld [vmem:[%s778 + $0x20] sm:$0x1]
          %v2728 = vld [vmem:[%s778 + $0x24] sm:$0xf]
          %v2729 = vld [vmem:[%s778 + $0x28] sm:$0xf]
          %v2730 = vld [vmem:[%s778 + $0x2c] sm:$0x1]
          %v2731 = vld [vmem:[%s778 + $0x30] sm:$0xf]
          %v2732 = vld [vmem:[%s778 + $0x34] sm:$0xf]
          %v2733 = vld [vmem:[%s778 + $0x38] sm:$0x1]
          %v2734 = vld [vmem:[%s778 + $0x3c] sm:$0xf]
          %v2735 = vld [vmem:[%s778 + $0x40] sm:$0xf]
          %v2736 = vld [vmem:[%s778 + $0x44] sm:$0x1]
          %v2737 = vld [vmem:[%s778 + $0x48] sm:$0xf]
          %v2738 = vld [vmem:[%s778 + $0x4c] sm:$0xf]
          %v2739 = vld [vmem:[%s778 + $0x50] sm:$0x1]
          %v2740 = vld [vmem:[%s778 + $0x54] sm:$0xf]
          %v2741 = vld [vmem:[%s778 + $0x58] sm:$0xf]
          %v2742 = vld [vmem:[%s778 + $0x5c] sm:$0x1]
          %v2743 = vld [vmem:[%s778 + $0x60] sm:$0xf]
          %v2744 = vld [vmem:[%s778 + $0x64] sm:$0xf]
          %v2745 = vld [vmem:[%s778 + $0x68] sm:$0x1]
          %v2746 = vld [vmem:[%s778 + $0x6c] sm:$0xf]
          %v2747 = vld [vmem:[%s778 + $0x70] sm:$0xf]
          %v2748 = vld [vmem:[%s778 + $0x74] sm:$0x1]
          %v2749 = vld [vmem:[%s778 + $0x78] sm:$0xf]
          %v2750 = vld [vmem:[%s778 + $0x7c] sm:$0xf]
          %v2751 = vld [vmem:[%s778 + $0x80] sm:$0x1]
          %v2752 = vld [vmem:[%s778 + $0x84] sm:$0xf]
          %v2753 = vld [vmem:[%s778 + $0x88] sm:$0xf]
          %v2754 = vld [vmem:[%s778 + $0x8c] sm:$0x1]
          %v2755 = vld [vmem:[%s778 + $0x90] sm:$0xf]
          %v2756 = vld [vmem:[%s778 + $0x94] sm:$0xf]
          %v2757 = vld [vmem:[%s778 + $0x98] sm:$0x1]
          %v2758 = vld [vmem:[%s778 + $0x9c] sm:$0xf]
          %v2759 = vld [vmem:[%s778 + $0xa0] sm:$0xf]
          %v2760 = vld [vmem:[%s778 + $0xa4] sm:$0x1]
          %v2761 = vld [vmem:[%s778 + $0xa8] sm:$0xf]
          %v2762 = vld [vmem:[%s778 + $0xac] sm:$0xf]
          %v2763 = vld [vmem:[%s778 + $0xb0] sm:$0x1]
          %v2764 = vld [vmem:[%s778 + $0xb4] sm:$0xf]
          %v2765 = vld [vmem:[%s778 + $0xb8] sm:$0xf]
          %v2766 = vld [vmem:[%s778 + $0xbc] sm:$0x1]
          %v2768 = vshrl.u32 %v2719, 16
          %v2770 = vrot.slane %v2768, 4
          %v2771 = vshll.u32 %v2719, 16
          %v2773 = vrot.slane %v2771, 5
          %v2774 = vor.u32 %v2770, %v2773
          %v2775 = vrot.slane %v2774, 4
          %v2777 = vshll.u32 %v2720, 16
          %v2779 = vrot.slane %v2777, 5
          %v2780 = vsel %vm949, %v2775, %v2779
          %v2781 = vshrl.u32 %v2720, 16
          %v2783 = vrot.slane %v2781, 4
          %v2784 = vor.u32 %v2783, %v2779
          %v2785 = vrot.slane %v2784, 4
          %v2787 = vshll.u32 %v2721, 16
          %v2789 = vrot.slane %v2787, 5
          %v2790 = vsel %vm949, %v2785, %v2789
          %v2792 = vshrl.u32 %v2722, 16
          %v2794 = vrot.slane %v2792, 4
          %v2795 = vshll.u32 %v2722, 16
          %v2797 = vrot.slane %v2795, 5
          %v2798 = vor.u32 %v2794, %v2797
          %v2799 = vrot.slane %v2798, 4
          %v2801 = vshll.u32 %v2723, 16
          %v2803 = vrot.slane %v2801, 5
          %v2804 = vsel %vm949, %v2799, %v2803
          %v2805 = vshrl.u32 %v2723, 16
          %v2807 = vrot.slane %v2805, 4
          %v2808 = vor.u32 %v2807, %v2803
          %v2809 = vrot.slane %v2808, 4
          %v2811 = vshll.u32 %v2724, 16
          %v2813 = vrot.slane %v2811, 5
          %v2814 = vsel %vm949, %v2809, %v2813
          %v2816 = vshrl.u32 %v2725, 16
          %v2818 = vrot.slane %v2816, 4
          %v2819 = vshll.u32 %v2725, 16
          %v2821 = vrot.slane %v2819, 5
          %v2822 = vor.u32 %v2818, %v2821
          %v2823 = vrot.slane %v2822, 4
          %v2825 = vshll.u32 %v2726, 16
          %v2827 = vrot.slane %v2825, 5
          %v2828 = vsel %vm949, %v2823, %v2827
          %v2829 = vshrl.u32 %v2726, 16
          %v2831 = vrot.slane %v2829, 4
          %v2832 = vor.u32 %v2831, %v2827
          %v2833 = vrot.slane %v2832, 4
          %v2835 = vshll.u32 %v2727, 16
          %v2837 = vrot.slane %v2835, 5
          %v2838 = vsel %vm949, %v2833, %v2837
          %v2840 = vshrl.u32 %v2728, 16
          %v2842 = vrot.slane %v2840, 4
          %v2843 = vshll.u32 %v2728, 16
          %v2845 = vrot.slane %v2843, 5
          %v2846 = vor.u32 %v2842, %v2845
          %v2847 = vrot.slane %v2846, 4
          %v2849 = vshll.u32 %v2729, 16
          %v2851 = vrot.slane %v2849, 5
          %v2852 = vsel %vm949, %v2847, %v2851
          %v2853 = vshrl.u32 %v2729, 16
          %v2855 = vrot.slane %v2853, 4
          %v2856 = vor.u32 %v2855, %v2851
          %v2857 = vrot.slane %v2856, 4
          %v2859 = vshll.u32 %v2730, 16
          %v2861 = vrot.slane %v2859, 5
          %v2862 = vsel %vm949, %v2857, %v2861
          %v2864 = vshrl.u32 %v2731, 16
          %v2866 = vrot.slane %v2864, 4
          %v2867 = vshll.u32 %v2731, 16
          %v2869 = vrot.slane %v2867, 5
          %v2870 = vor.u32 %v2866, %v2869
          %v2871 = vrot.slane %v2870, 4
          %v2873 = vshll.u32 %v2732, 16
          %v2875 = vrot.slane %v2873, 5
          %v2876 = vsel %vm949, %v2871, %v2875
          %v2877 = vshrl.u32 %v2732, 16
          %v2879 = vrot.slane %v2877, 4
          %v2880 = vor.u32 %v2879, %v2875
          %v2881 = vrot.slane %v2880, 4
          %v2883 = vshll.u32 %v2733, 16
          %v2885 = vrot.slane %v2883, 5
          %v2886 = vsel %vm949, %v2881, %v2885
          %v2888 = vshrl.u32 %v2734, 16
          %v2890 = vrot.slane %v2888, 4
          %v2891 = vshll.u32 %v2734, 16
          %v2893 = vrot.slane %v2891, 5
          %v2894 = vor.u32 %v2890, %v2893
          %v2895 = vrot.slane %v2894, 4
          %v2897 = vshll.u32 %v2735, 16
          %v2899 = vrot.slane %v2897, 5
          %v2900 = vsel %vm949, %v2895, %v2899
          %v2901 = vshrl.u32 %v2735, 16
          %v2903 = vrot.slane %v2901, 4
          %v2904 = vor.u32 %v2903, %v2899
          %v2905 = vrot.slane %v2904, 4
          %v2907 = vshll.u32 %v2736, 16
          %v2909 = vrot.slane %v2907, 5
          %v2910 = vsel %vm949, %v2905, %v2909
          %v2912 = vshrl.u32 %v2737, 16
          %v2914 = vrot.slane %v2912, 4
          %v2915 = vshll.u32 %v2737, 16
          %v2917 = vrot.slane %v2915, 5
          %v2918 = vor.u32 %v2914, %v2917
          %v2919 = vrot.slane %v2918, 4
          %v2921 = vshll.u32 %v2738, 16
          %v2923 = vrot.slane %v2921, 5
          %v2924 = vsel %vm949, %v2919, %v2923
          %v2925 = vshrl.u32 %v2738, 16
          %v2927 = vrot.slane %v2925, 4
          %v2928 = vor.u32 %v2927, %v2923
          %v2929 = vrot.slane %v2928, 4
          %v2931 = vshll.u32 %v2739, 16
          %v2933 = vrot.slane %v2931, 5
          %v2934 = vsel %vm949, %v2929, %v2933
          %v2936 = vshrl.u32 %v2740, 16
          %v2938 = vrot.slane %v2936, 4
          %v2939 = vshll.u32 %v2740, 16
          %v2941 = vrot.slane %v2939, 5
          %v2942 = vor.u32 %v2938, %v2941
          %v2943 = vrot.slane %v2942, 4
          %v2945 = vshll.u32 %v2741, 16
          %v2947 = vrot.slane %v2945, 5
          %v2948 = vsel %vm949, %v2943, %v2947
          %v2949 = vshrl.u32 %v2741, 16
          %v2951 = vrot.slane %v2949, 4
          %v2952 = vor.u32 %v2951, %v2947
          %v2953 = vrot.slane %v2952, 4
          %v2955 = vshll.u32 %v2742, 16
          %v2957 = vrot.slane %v2955, 5
          %v2958 = vsel %vm949, %v2953, %v2957
          %v2960 = vshrl.u32 %v2743, 16
          %v2962 = vrot.slane %v2960, 4
          %v2963 = vshll.u32 %v2743, 16
          %v2965 = vrot.slane %v2963, 5
          %v2966 = vor.u32 %v2962, %v2965
          %v2967 = vrot.slane %v2966, 4
          %v2969 = vshll.u32 %v2744, 16
          %v2971 = vrot.slane %v2969, 5
          %v2972 = vsel %vm949, %v2967, %v2971
          %v2973 = vshrl.u32 %v2744, 16
          %v2975 = vrot.slane %v2973, 4
          %v2976 = vor.u32 %v2975, %v2971
          %v2977 = vrot.slane %v2976, 4
          %v2979 = vshll.u32 %v2745, 16
          %v2981 = vrot.slane %v2979, 5
          %v2982 = vsel %vm949, %v2977, %v2981
          %v2984 = vshrl.u32 %v2746, 16
          %v2986 = vrot.slane %v2984, 4
          %v2987 = vshll.u32 %v2746, 16
          %v2989 = vrot.slane %v2987, 5
          %v2990 = vor.u32 %v2986, %v2989
          %v2991 = vrot.slane %v2990, 4
          %v2993 = vshll.u32 %v2747, 16
          %v2995 = vrot.slane %v2993, 5
          %v2996 = vsel %vm949, %v2991, %v2995
          %v2997 = vshrl.u32 %v2747, 16
          %v2999 = vrot.slane %v2997, 4
          %v3000 = vor.u32 %v2999, %v2995
          %v3001 = vrot.slane %v3000, 4
          %v3003 = vshll.u32 %v2748, 16
          %v3005 = vrot.slane %v3003, 5
          %v3006 = vsel %vm949, %v3001, %v3005
          %v3008 = vshrl.u32 %v2749, 16
          %v3010 = vrot.slane %v3008, 4
          %v3011 = vshll.u32 %v2749, 16
          %v3013 = vrot.slane %v3011, 5
          %v3014 = vor.u32 %v3010, %v3013
          %v3015 = vrot.slane %v3014, 4
          %v3017 = vshll.u32 %v2750, 16
          %v3019 = vrot.slane %v3017, 5
          %v3020 = vsel %vm949, %v3015, %v3019
          %v3021 = vshrl.u32 %v2750, 16
          %v3023 = vrot.slane %v3021, 4
          %v3024 = vor.u32 %v3023, %v3019
          %v3025 = vrot.slane %v3024, 4
          %v3027 = vshll.u32 %v2751, 16
          %v3029 = vrot.slane %v3027, 5
          %v3030 = vsel %vm949, %v3025, %v3029
          %v3032 = vshrl.u32 %v2752, 16
          %v3034 = vrot.slane %v3032, 4
          %v3035 = vshll.u32 %v2752, 16
          %v3037 = vrot.slane %v3035, 5
          %v3038 = vor.u32 %v3034, %v3037
          %v3039 = vrot.slane %v3038, 4
          %v3041 = vshll.u32 %v2753, 16
          %v3043 = vrot.slane %v3041, 5
          %v3044 = vsel %vm949, %v3039, %v3043
          %v3045 = vshrl.u32 %v2753, 16
          %v3047 = vrot.slane %v3045, 4
          %v3048 = vor.u32 %v3047, %v3043
          %v3049 = vrot.slane %v3048, 4
          %v3051 = vshll.u32 %v2754, 16
          %v3053 = vrot.slane %v3051, 5
          %v3054 = vsel %vm949, %v3049, %v3053
          %v3056 = vshrl.u32 %v2755, 16
          %v3058 = vrot.slane %v3056, 4
          %v3059 = vshll.u32 %v2755, 16
          %v3061 = vrot.slane %v3059, 5
          %v3062 = vor.u32 %v3058, %v3061
          %v3063 = vrot.slane %v3062, 4
          %v3065 = vshll.u32 %v2756, 16
          %v3067 = vrot.slane %v3065, 5
          %v3068 = vsel %vm949, %v3063, %v3067
          %v3069 = vshrl.u32 %v2756, 16
          %v3071 = vrot.slane %v3069, 4
          %v3072 = vor.u32 %v3071, %v3067
          %v3073 = vrot.slane %v3072, 4
          %v3075 = vshll.u32 %v2757, 16
          %v3077 = vrot.slane %v3075, 5
          %v3078 = vsel %vm949, %v3073, %v3077
          %v3080 = vshrl.u32 %v2758, 16
          %v3082 = vrot.slane %v3080, 4
          %v3083 = vshll.u32 %v2758, 16
          %v3085 = vrot.slane %v3083, 5
          %v3086 = vor.u32 %v3082, %v3085
          %v3087 = vrot.slane %v3086, 4
          %v3089 = vshll.u32 %v2759, 16
          %v3091 = vrot.slane %v3089, 5
          %v3092 = vsel %vm949, %v3087, %v3091
          %v3093 = vshrl.u32 %v2759, 16
          %v3095 = vrot.slane %v3093, 4
          %v3096 = vor.u32 %v3095, %v3091
          %v3097 = vrot.slane %v3096, 4
          %v3099 = vshll.u32 %v2760, 16
          %v3101 = vrot.slane %v3099, 5
          %v3102 = vsel %vm949, %v3097, %v3101
          %v3104 = vshrl.u32 %v2761, 16
          %v3106 = vrot.slane %v3104, 4
          %v3107 = vshll.u32 %v2761, 16
          %v3109 = vrot.slane %v3107, 5
          %v3110 = vor.u32 %v3106, %v3109
          %v3111 = vrot.slane %v3110, 4
          %v3113 = vshll.u32 %v2762, 16
          %v3115 = vrot.slane %v3113, 5
          %v3116 = vsel %vm949, %v3111, %v3115
          %v3117 = vshrl.u32 %v2762, 16
          %v3119 = vrot.slane %v3117, 4
          %v3120 = vor.u32 %v3119, %v3115
          %v3121 = vrot.slane %v3120, 4
          %v3123 = vshll.u32 %v2763, 16
          %v3125 = vrot.slane %v3123, 5
          %v3126 = vsel %vm949, %v3121, %v3125
          %v3128 = vshrl.u32 %v2764, 16
          %v3130 = vrot.slane %v3128, 4
          %v3131 = vshll.u32 %v2764, 16
          %v3133 = vrot.slane %v3131, 5
          %v3134 = vor.u32 %v3130, %v3133
          %v3135 = vrot.slane %v3134, 4
          %v3137 = vshll.u32 %v2765, 16
          %v3139 = vrot.slane %v3137, 5
          %v3140 = vsel %vm949, %v3135, %v3139
          %v3141 = vshrl.u32 %v2765, 16
          %v3143 = vrot.slane %v3141, 4
          %v3144 = vor.u32 %v3143, %v3139
          %v3145 = vrot.slane %v3144, 4
          %v3147 = vshll.u32 %v2766, 16
          %v3149 = vrot.slane %v3147, 5
          %v3150 = vsel %vm949, %v3145, %v3149
          %s3151 = scalar_lea.vmem %s1, 32
          %v3152 = vld [vmem:[%s3151] sm:$0xf]
          %v3153 = vld [vmem:[%s3151 + $0x4] sm:$0xf]
          %v3154 = vunpack.c.l.b16 %v2780
          %v3155 = vunpack.c.l.b16 %v2790
          %v3156 = vunpack.c.l.b16 %v2804
          %v3157 = vunpack.c.l.b16 %v2814
          %v3158 = vunpack.c.l.b16 %v2828
          %v3159 = vunpack.c.l.b16 %v2838
          %v3160 = vunpack.c.l.b16 %v2852
          %v3161 = vunpack.c.l.b16 %v2862
          %v3162 = vunpack.c.l.b16 %v2876
          %v3163 = vunpack.c.l.b16 %v2886
          %v3164 = vunpack.c.l.b16 %v2900
          %v3165 = vunpack.c.l.b16 %v2910
          %v3166 = vunpack.c.l.b16 %v2924
          %v3167 = vunpack.c.l.b16 %v2934
          %v3168 = vunpack.c.l.b16 %v2948
          %v3169 = vunpack.c.l.b16 %v2958
          %v3170 = vunpack.c.l.b16 %v2972
          %v3171 = vunpack.c.l.b16 %v2982
          %v3172 = vunpack.c.l.b16 %v2996
          %v3173 = vunpack.c.l.b16 %v3006
          %v3174 = vunpack.c.l.b16 %v3020
          %v3175 = vunpack.c.l.b16 %v3030
          %v3176 = vunpack.c.l.b16 %v3044
          %v3177 = vunpack.c.l.b16 %v3054
          %v3178 = vunpack.c.l.b16 %v3068
          %v3179 = vunpack.c.l.b16 %v3078
          %v3180 = vunpack.c.l.b16 %v3092
          %v3181 = vunpack.c.l.b16 %v3102
          %v3182 = vunpack.c.l.b16 %v3116
          %v3183 = vunpack.c.l.b16 %v3126
          %v3184 = vunpack.c.l.b16 %v3140
          %v3185 = vunpack.c.l.b16 %v3150
          %v3186 = vpack.c.b16 %v3155, %v3154
          %v3187 = vpack.c.b16 %v3157, %v3156
          %v3188 = vpack.c.b16 %v3159, %v3158
          %v3189 = vpack.c.b16 %v3161, %v3160
          %v3190 = vpack.c.b16 %v3163, %v3162
          %v3191 = vpack.c.b16 %v3165, %v3164
          %v3192 = vpack.c.b16 %v3167, %v3166
          %v3193 = vpack.c.b16 %v3169, %v3168
          %v3194 = vpack.c.b16 %v3171, %v3170
          %v3195 = vpack.c.b16 %v3173, %v3172
          %v3196 = vpack.c.b16 %v3175, %v3174
          %v3197 = vpack.c.b16 %v3177, %v3176
          %v3198 = vpack.c.b16 %v3179, %v3178
          %v3199 = vpack.c.b16 %v3181, %v3180
          %v3200 = vpack.c.b16 %v3183, %v3182
          %v3201 = vpack.c.b16 %v3185, %v3184
          %v3204 = vunpack.c.l.b16 %v3152
          %v3205 = vunpack.c.l.b16 %v3153
          %v3206 = vpack.c.b16 %v3205, %v3204
          %v3209 = vsel %vm1391, %v3186, 0
          %v3212 = vsel %vm1391, %v3187, 0
          %v3215 = vsel %vm1391, %v3188, 0
          %v3218 = vsel %vm1391, %v3189, 0
          %v3221 = vsel %vm1391, %v3190, 0
          %v3224 = vsel %vm1391, %v3191, 0
          %v3227 = vsel %vm1391, %v3192, 0
          %v3230 = vsel %vm1391, %v3193, 0
          %v3233 = vsel %vm1391, %v3194, 0
          %v3236 = vsel %vm1391, %v3195, 0
          %v3239 = vsel %vm1391, %v3196, 0
          %v3242 = vsel %vm1391, %v3197, 0
          %v3245 = vsel %vm1391, %v3198, 0
          %v3248 = vsel %vm1391, %v3199, 0
          %v3251 = vsel %vm1391, %v3200, 0
          %v3254 = vsel %vm1391, %v3201, 0
          %3256 = vmatprep.subr.bf16.mxu0 0
          %3257 = vmatpush1.bf16.msra.mxu0 %v3206
          %3258 = vmatprep.subr.bf16.mxu0 0
          %3259 = vmatpush1.bf16.msra.mxu0 0
          %3260 = vmatprep.subr.bf16.mxu0 0
          %3261 = vmatpush1.bf16.msra.mxu0 0
          %3262 = vmatprep.subr.bf16.mxu0 0
          %3263 = vmatpush1.bf16.msra.mxu0 0
          %3264 = vmatprep.subr.bf16.mxu0 0
          %3265 = vmatpush1.bf16.msra.mxu0 0
          %3266 = vmatprep.subr.bf16.mxu0 0
          %3267 = vmatpush1.bf16.msra.mxu0 0
          %3268 = vmatprep.subr.bf16.mxu0 0
          %3269 = vmatpush1.bf16.msra.mxu0 0
          %3270 = vmatprep.subr.bf16.mxu0 0
          %3271 = vmatpush1.bf16.msra.mxu0 0
          %3272 = vmatprep.subr.bf16.mxu0 0
          %3273 = vmatpush1.bf16.msra.mxu0 0
          %3274 = vmatprep.subr.bf16.mxu0 0
          %3275 = vmatpush1.bf16.msra.mxu0 0
          %3276 = vmatprep.subr.bf16.mxu0 0
          %3277 = vmatpush1.bf16.msra.mxu0 0
          %3278 = vmatprep.subr.bf16.mxu0 0
          %3279 = vmatpush1.bf16.msra.mxu0 0
          %3280 = vmatprep.subr.bf16.mxu0 0
          %3281 = vmatpush1.bf16.msra.mxu0 0
          %3282 = vmatprep.subr.bf16.mxu0 0
          %3283 = vmatpush1.bf16.msra.mxu0 0
          %3284 = vmatprep.subr.bf16.mxu0 0
          %3285 = vmatpush1.bf16.msra.mxu0 0
          %3286 = vmatprep.subr.bf16.mxu0 0
          %3287 = vmatpush1.bf16.msra.mxu0 0
          %3288 = vmatprep.mubr.bf16.mxu0 0
          %3289 = vmatmul.mubr.bf16.gmra.mrb[0].mxu0 %v3209
          %v3290 = vpop.f32.mrb[0].mxu0
          %v3291 = vadd.f32 0.0, %v3290
          %v3292 = vpop.f32.mrb[0].mxu0
          %v3293 = vpop.f32.mrb[0].mxu0
          %v3294 = vadd.f32 0.0, %v3293
          %v3295 = vpop.f32.mrb[0].mxu0
          %3296 = vmatprep.mubr.bf16.mxu0 0
          %3297 = vmatmul.mubr.bf16.gmra.mrb[0].mxu0 %v3212
          %v3298 = vpop.f32.mrb[0].mxu0
          %v3299 = vadd.f32 0.0, %v3298
          %v3300 = vpop.f32.mrb[0].mxu0
          %v3301 = vpop.f32.mrb[0].mxu0
          %v3302 = vadd.f32 0.0, %v3301
          %v3303 = vpop.f32.mrb[0].mxu0
          %3304 = vmatprep.mubr.bf16.mxu0 0
          %3305 = vmatmul.mubr.bf16.gmra.mrb[0].mxu0 %v3215
          %v3306 = vpop.f32.mrb[0].mxu0
          %v3307 = vadd.f32 0.0, %v3306
          %v3308 = vpop.f32.mrb[0].mxu0
          %v3309 = vpop.f32.mrb[0].mxu0
          %v3310 = vadd.f32 0.0, %v3309
          %v3311 = vpop.f32.mrb[0].mxu0
          %3312 = vmatprep.mubr.bf16.mxu0 0
          %3313 = vmatmul.mubr.bf16.gmra.mrb[0].mxu0 %v3218
          %v3314 = vpop.f32.mrb[0].mxu0
          %v3315 = vadd.f32 0.0, %v3314
          %v3316 = vpop.f32.mrb[0].mxu0
          %v3317 = vpop.f32.mrb[0].mxu0
          %v3318 = vadd.f32 0.0, %v3317
          %v3319 = vpop.f32.mrb[0].mxu0
          %3320 = vmatprep.mubr.bf16.mxu0 0
          %3321 = vmatmul.mubr.bf16.gmra.mrb[0].mxu0 %v3221
          %v3322 = vpop.f32.mrb[0].mxu0
          %v3323 = vadd.f32 0.0, %v3322
          %v3324 = vpop.f32.mrb[0].mxu0
          %v3325 = vpop.f32.mrb[0].mxu0
          %v3326 = vadd.f32 0.0, %v3325
          %v3327 = vpop.f32.mrb[0].mxu0
          %3328 = vmatprep.mubr.bf16.mxu0 0
          %3329 = vmatmul.mubr.bf16.gmra.mrb[0].mxu0 %v3224
          %v3330 = vpop.f32.mrb[0].mxu0
          %v3331 = vadd.f32 0.0, %v3330
          %v3332 = vpop.f32.mrb[0].mxu0
          %v3333 = vpop.f32.mrb[0].mxu0
          %v3334 = vadd.f32 0.0, %v3333
          %v3335 = vpop.f32.mrb[0].mxu0
          %3336 = vmatprep.mubr.bf16.mxu0 0
          %3337 = vmatmul.mubr.bf16.gmra.mrb[0].mxu0 %v3227
          %v3338 = vpop.f32.mrb[0].mxu0
          %v3339 = vadd.f32 0.0, %v3338
          %v3340 = vpop.f32.mrb[0].mxu0
          %v3341 = vpop.f32.mrb[0].mxu0
          %v3342 = vadd.f32 0.0, %v3341
          %v3343 = vpop.f32.mrb[0].mxu0
          %3344 = vmatprep.mubr.bf16.mxu0 0
          %3345 = vmatmul.mubr.bf16.gmra.mrb[0].mxu0 %v3230
          %v3346 = vpop.f32.mrb[0].mxu0
          %v3347 = vadd.f32 0.0, %v3346
          %v3348 = vpop.f32.mrb[0].mxu0
          %v3349 = vpop.f32.mrb[0].mxu0
          %v3350 = vadd.f32 0.0, %v3349
          %v3351 = vpop.f32.mrb[0].mxu0
          %3352 = vmatprep.mubr.bf16.mxu0 0
          %3353 = vmatmul.mubr.bf16.gmra.mrb[0].mxu0 %v3233
          %v3354 = vpop.f32.mrb[0].mxu0
          %v3355 = vadd.f32 0.0, %v3354
          %v3356 = vpop.f32.mrb[0].mxu0
          %v3357 = vpop.f32.mrb[0].mxu0
          %v3358 = vadd.f32 0.0, %v3357
          %v3359 = vpop.f32.mrb[0].mxu0
          %3360 = vmatprep.mubr.bf16.mxu0 0
          %3361 = vmatmul.mubr.bf16.gmra.mrb[0].mxu0 %v3236
          %v3362 = vpop.f32.mrb[0].mxu0
          %v3363 = vadd.f32 0.0, %v3362
          %v3364 = vpop.f32.mrb[0].mxu0
          %v3365 = vpop.f32.mrb[0].mxu0
          %v3366 = vadd.f32 0.0, %v3365
          %v3367 = vpop.f32.mrb[0].mxu0
          %3368 = vmatprep.mubr.bf16.mxu0 0
          %3369 = vmatmul.mubr.bf16.gmra.mrb[0].mxu0 %v3239
          %v3370 = vpop.f32.mrb[0].mxu0
          %v3371 = vadd.f32 0.0, %v3370
          %v3372 = vpop.f32.mrb[0].mxu0
          %v3373 = vpop.f32.mrb[0].mxu0
          %v3374 = vadd.f32 0.0, %v3373
          %v3375 = vpop.f32.mrb[0].mxu0
          %3376 = vmatprep.mubr.bf16.mxu0 0
          %3377 = vmatmul.mubr.bf16.gmra.mrb[0].mxu0 %v3242
          %v3378 = vpop.f32.mrb[0].mxu0
          %v3379 = vadd.f32 0.0, %v3378
          %v3380 = vpop.f32.mrb[0].mxu0
          %v3381 = vpop.f32.mrb[0].mxu0
          %v3382 = vadd.f32 0.0, %v3381
          %v3383 = vpop.f32.mrb[0].mxu0
          %3384 = vmatprep.mubr.bf16.mxu0 0
          %3385 = vmatmul.mubr.bf16.gmra.mrb[0].mxu0 %v3245
          %v3386 = vpop.f32.mrb[0].mxu0
          %v3387 = vadd.f32 0.0, %v3386
          %v3388 = vpop.f32.mrb[0].mxu0
          %v3389 = vpop.f32.mrb[0].mxu0
          %v3390 = vadd.f32 0.0, %v3389
          %v3391 = vpop.f32.mrb[0].mxu0
          %3392 = vmatprep.mubr.bf16.mxu0 0
          %3393 = vmatmul.mubr.bf16.gmra.mrb[0].mxu0 %v3248
          %v3394 = vpop.f32.mrb[0].mxu0
          %v3395 = vadd.f32 0.0, %v3394
          %v3396 = vpop.f32.mrb[0].mxu0
          %v3397 = vpop.f32.mrb[0].mxu0
          %v3398 = vadd.f32 0.0, %v3397
          %v3399 = vpop.f32.mrb[0].mxu0
          %3400 = vmatprep.mubr.bf16.mxu0 0
          %3401 = vmatmul.mubr.bf16.gmra.mrb[0].mxu0 %v3251
          %v3402 = vpop.f32.mrb[0].mxu0
          %v3403 = vadd.f32 0.0, %v3402
          %v3404 = vpop.f32.mrb[0].mxu0
          %v3405 = vpop.f32.mrb[0].mxu0
          %v3406 = vadd.f32 0.0, %v3405
          %v3407 = vpop.f32.mrb[0].mxu0
          %3408 = vmatprep.mubr.bf16.mxu0 0
          %3409 = vmatmul.mubr.bf16.gmra.mrb[0].mxu0 %v3254
          %v3410 = vpop.f32.mrb[0].mxu0
          %v3411 = vadd.f32 0.0, %v3410
          %v3412 = vpop.f32.mrb[0].mxu0
          %v3413 = vpop.f32.mrb[0].mxu0
          %v3414 = vadd.f32 0.0, %v3413
          %v3415 = vpop.f32.mrb[0].mxu0
          %3416 = vdwg.mxu0
          %v3417 = vadd.f32 %v2687, %v3291
          %v3418 = vadd.f32 %v2688, %v3294
          %v3419 = vadd.f32 %v2689, %v3299
          %v3420 = vadd.f32 %v2690, %v3302
          %v3421 = vadd.f32 %v2691, %v3307
          %v3422 = vadd.f32 %v2692, %v3310
          %v3423 = vadd.f32 %v2693, %v3315
          %v3424 = vadd.f32 %v2694, %v3318
          %v3425 = vadd.f32 %v2695, %v3323
          %v3426 = vadd.f32 %v2696, %v3326
          %v3427 = vadd.f32 %v2697, %v3331
          %v3428 = vadd.f32 %v2698, %v3334
          %v3429 = vadd.f32 %v2699, %v3339
          %v3430 = vadd.f32 %v2700, %v3342
          %v3431 = vadd.f32 %v2701, %v3347
          %v3432 = vadd.f32 %v2702, %v3350
          %v3433 = vadd.f32 %v2703, %v3355
          %v3434 = vadd.f32 %v2704, %v3358
          %v3435 = vadd.f32 %v2705, %v3363
          %v3436 = vadd.f32 %v2706, %v3366
          %v3437 = vadd.f32 %v2707, %v3371
          %v3438 = vadd.f32 %v2708, %v3374
          %v3439 = vadd.f32 %v2709, %v3379
          %v3440 = vadd.f32 %v2710, %v3382
          %v3441 = vadd.f32 %v2711, %v3387
          %v3442 = vadd.f32 %v2712, %v3390
          %v3443 = vadd.f32 %v2713, %v3395
          %v3444 = vadd.f32 %v2714, %v3398
          %v3445 = vadd.f32 %v2715, %v3403
          %v3446 = vadd.f32 %v2716, %v3406
          %v3447 = vadd.f32 %v2717, %v3411
          %v3448 = vadd.f32 %v2718, %v3414
          %v3449 = vld [vmem:[%s778] sm:$0xe]
          %v3450 = vld [vmem:[%s778 + $0xc] sm:$0xe]
          %v3451 = vld [vmem:[%s778 + $0x18] sm:$0xe]
          %v3452 = vld [vmem:[%s778 + $0x24] sm:$0xe]
          %v3453 = vld [vmem:[%s778 + $0x30] sm:$0xe]
          %v3454 = vld [vmem:[%s778 + $0x3c] sm:$0xe]
          %v3455 = vld [vmem:[%s778 + $0x48] sm:$0xe]
          %v3456 = vld [vmem:[%s778 + $0x54] sm:$0xe]
          %v3457 = vld [vmem:[%s778 + $0x60] sm:$0xe]
          %v3458 = vld [vmem:[%s778 + $0x6c] sm:$0xe]
          %v3459 = vld [vmem:[%s778 + $0x78] sm:$0xe]
          %v3460 = vld [vmem:[%s778 + $0x84] sm:$0xe]
          %v3461 = vld [vmem:[%s778 + $0x90] sm:$0xe]
          %v3462 = vld [vmem:[%s778 + $0x9c] sm:$0xe]
          %v3463 = vld [vmem:[%s778 + $0xa8] sm:$0xe]
          %v3464 = vld [vmem:[%s778 + $0xb4] sm:$0xe]
          %v3513 = vrot.slane %v3449, 5
          %v3514 = vrot.slane %v3513, 4
          %v3515 = vrot.slane %v2720, 5
          %v3516 = vsel %vm1946, %v3514, %v3515
          %v3517 = vrot.slane %v3515, 4
          %v3518 = vrot.slane %v2721, 5
          %v3519 = vsel %vm1946, %v3517, %v3518
          %v3520 = vrot.slane %v3450, 5
          %v3521 = vrot.slane %v3520, 4
          %v3522 = vrot.slane %v2723, 5
          %v3523 = vsel %vm1946, %v3521, %v3522
          %v3524 = vrot.slane %v3522, 4
          %v3525 = vrot.slane %v2724, 5
          %v3526 = vsel %vm1946, %v3524, %v3525
          %v3527 = vrot.slane %v3451, 5
          %v3528 = vrot.slane %v3527, 4
          %v3529 = vrot.slane %v2726, 5
          %v3530 = vsel %vm1946, %v3528, %v3529
          %v3531 = vrot.slane %v3529, 4
          %v3532 = vrot.slane %v2727, 5
          %v3533 = vsel %vm1946, %v3531, %v3532
          %v3534 = vrot.slane %v3452, 5
          %v3535 = vrot.slane %v3534, 4
          %v3536 = vrot.slane %v2729, 5
          %v3537 = vsel %vm1946, %v3535, %v3536
          %v3538 = vrot.slane %v3536, 4
          %v3539 = vrot.slane %v2730, 5
          %v3540 = vsel %vm1946, %v3538, %v3539
          %v3541 = vrot.slane %v3453, 5
          %v3542 = vrot.slane %v3541, 4
          %v3543 = vrot.slane %v2732, 5
          %v3544 = vsel %vm1946, %v3542, %v3543
          %v3545 = vrot.slane %v3543, 4
          %v3546 = vrot.slane %v2733, 5
          %v3547 = vsel %vm1946, %v3545, %v3546
          %v3548 = vrot.slane %v3454, 5
          %v3549 = vrot.slane %v3548, 4
          %v3550 = vrot.slane %v2735, 5
          %v3551 = vsel %vm1946, %v3549, %v3550
          %v3552 = vrot.slane %v3550, 4
          %v3553 = vrot.slane %v2736, 5
          %v3554 = vsel %vm1946, %v3552, %v3553
          %v3555 = vrot.slane %v3455, 5
          %v3556 = vrot.slane %v3555, 4
          %v3557 = vrot.slane %v2738, 5
          %v3558 = vsel %vm1946, %v3556, %v3557
          %v3559 = vrot.slane %v3557, 4
          %v3560 = vrot.slane %v2739, 5
          %v3561 = vsel %vm1946, %v3559, %v3560
          %v3562 = vrot.slane %v3456, 5
          %v3563 = vrot.slane %v3562, 4
          %v3564 = vrot.slane %v2741, 5
          %v3565 = vsel %vm1946, %v3563, %v3564
          %v3566 = vrot.slane %v3564, 4
          %v3567 = vrot.slane %v2742, 5
          %v3568 = vsel %vm1946, %v3566, %v3567
          %v3569 = vrot.slane %v3457, 5
          %v3570 = vrot.slane %v3569, 4
          %v3571 = vrot.slane %v2744, 5
          %v3572 = vsel %vm1946, %v3570, %v3571
          %v3573 = vrot.slane %v3571, 4
          %v3574 = vrot.slane %v2745, 5
          %v3575 = vsel %vm1946, %v3573, %v3574
          %v3576 = vrot.slane %v3458, 5
          %v3577 = vrot.slane %v3576, 4
          %v3578 = vrot.slane %v2747, 5
          %v3579 = vsel %vm1946, %v3577, %v3578
          %v3580 = vrot.slane %v3578, 4
          %v3581 = vrot.slane %v2748, 5
          %v3582 = vsel %vm1946, %v3580, %v3581
          %v3583 = vrot.slane %v3459, 5
          %v3584 = vrot.slane %v3583, 4
          %v3585 = vrot.slane %v2750, 5
          %v3586 = vsel %vm1946, %v3584, %v3585
          %v3587 = vrot.slane %v3585, 4
          %v3588 = vrot.slane %v2751, 5
          %v3589 = vsel %vm1946, %v3587, %v3588
          %v3590 = vrot.slane %v3460, 5
          %v3591 = vrot.slane %v3590, 4
          %v3592 = vrot.slane %v2753, 5
          %v3593 = vsel %vm1946, %v3591, %v3592
          %v3594 = vrot.slane %v3592, 4
          %v3595 = vrot.slane %v2754, 5
          %v3596 = vsel %vm1946, %v3594, %v3595
          %v3597 = vrot.slane %v3461, 5
          %v3598 = vrot.slane %v3597, 4
          %v3599 = vrot.slane %v2756, 5
          %v3600 = vsel %vm1946, %v3598, %v3599
          %v3601 = vrot.slane %v3599, 4
          %v3602 = vrot.slane %v2757, 5
          %v3603 = vsel %vm1946, %v3601, %v3602
          %v3604 = vrot.slane %v3462, 5
          %v3605 = vrot.slane %v3604, 4
          %v3606 = vrot.slane %v2759, 5
          %v3607 = vsel %vm1946, %v3605, %v3606
          %v3608 = vrot.slane %v3606, 4
          %v3609 = vrot.slane %v2760, 5
          %v3610 = vsel %vm1946, %v3608, %v3609
          %v3611 = vrot.slane %v3463, 5
          %v3612 = vrot.slane %v3611, 4
          %v3613 = vrot.slane %v2762, 5
          %v3614 = vsel %vm1946, %v3612, %v3613
          %v3615 = vrot.slane %v3613, 4
          %v3616 = vrot.slane %v2763, 5
          %v3617 = vsel %vm1946, %v3615, %v3616
          %v3618 = vrot.slane %v3464, 5
          %v3619 = vrot.slane %v3618, 4
          %v3620 = vrot.slane %v2765, 5
          %v3621 = vsel %vm1946, %v3619, %v3620
          %v3622 = vrot.slane %v3620, 4
          %v3623 = vrot.slane %v2766, 5
          %v3624 = vsel %vm1946, %v3622, %v3623
          %s3625 = scalar_lea.vmem %s1, 40
          %v3626 = vld [vmem:[%s3625] sm:$0xf]
          %v3627 = vld [vmem:[%s3625 + $0x4] sm:$0xf]
          %v3628 = vunpack.c.l.b16 %v3516
          %v3629 = vunpack.c.l.b16 %v3519
          %v3630 = vunpack.c.l.b16 %v3523
          %v3631 = vunpack.c.l.b16 %v3526
          %v3632 = vunpack.c.l.b16 %v3530
          %v3633 = vunpack.c.l.b16 %v3533
          %v3634 = vunpack.c.l.b16 %v3537
          %v3635 = vunpack.c.l.b16 %v3540
          %v3636 = vunpack.c.l.b16 %v3544
          %v3637 = vunpack.c.l.b16 %v3547
          %v3638 = vunpack.c.l.b16 %v3551
          %v3639 = vunpack.c.l.b16 %v3554
          %v3640 = vunpack.c.l.b16 %v3558
          %v3641 = vunpack.c.l.b16 %v3561
          %v3642 = vunpack.c.l.b16 %v3565
          %v3643 = vunpack.c.l.b16 %v3568
          %v3644 = vunpack.c.l.b16 %v3572
          %v3645 = vunpack.c.l.b16 %v3575
          %v3646 = vunpack.c.l.b16 %v3579
          %v3647 = vunpack.c.l.b16 %v3582
          %v3648 = vunpack.c.l.b16 %v3586
          %v3649 = vunpack.c.l.b16 %v3589
          %v3650 = vunpack.c.l.b16 %v3593
          %v3651 = vunpack.c.l.b16 %v3596
          %v3652 = vunpack.c.l.b16 %v3600
          %v3653 = vunpack.c.l.b16 %v3603
          %v3654 = vunpack.c.l.b16 %v3607
          %v3655 = vunpack.c.l.b16 %v3610
          %v3656 = vunpack.c.l.b16 %v3614
          %v3657 = vunpack.c.l.b16 %v3617
          %v3658 = vunpack.c.l.b16 %v3621
          %v3659 = vunpack.c.l.b16 %v3624
          %v3660 = vpack.c.b16 %v3629, %v3628
          %v3661 = vpack.c.b16 %v3631, %v3630
          %v3662 = vpack.c.b16 %v3633, %v3632
          %v3663 = vpack.c.b16 %v3635, %v3634
          %v3664 = vpack.c.b16 %v3637, %v3636
          %v3665 = vpack.c.b16 %v3639, %v3638
          %v3666 = vpack.c.b16 %v3641, %v3640
          %v3667 = vpack.c.b16 %v3643, %v3642
          %v3668 = vpack.c.b16 %v3645, %v3644
          %v3669 = vpack.c.b16 %v3647, %v3646
          %v3670 = vpack.c.b16 %v3649, %v3648
          %v3671 = vpack.c.b16 %v3651, %v3650
          %v3672 = vpack.c.b16 %v3653, %v3652
          %v3673 = vpack.c.b16 %v3655, %v3654
          %v3674 = vpack.c.b16 %v3657, %v3656
          %v3675 = vpack.c.b16 %v3659, %v3658
          %v3678 = vunpack.c.l.b16 %v3626
          %v3679 = vunpack.c.l.b16 %v3627
          %v3680 = vpack.c.b16 %v3679, %v3678
          %v3683 = vsel %vm1391, %v3660, 0
          %v3686 = vsel %vm1391, %v3661, 0
          %v3689 = vsel %vm1391, %v3662, 0
          %v3692 = vsel %vm1391, %v3663, 0
          %v3695 = vsel %vm1391, %v3664, 0
          %v3698 = vsel %vm1391, %v3665, 0
          %v3701 = vsel %vm1391, %v3666, 0
          %v3704 = vsel %vm1391, %v3667, 0
          %v3707 = vsel %vm1391, %v3668, 0
          %v3710 = vsel %vm1391, %v3669, 0
          %v3713 = vsel %vm1391, %v3670, 0
          %v3716 = vsel %vm1391, %v3671, 0
          %v3719 = vsel %vm1391, %v3672, 0
          %v3722 = vsel %vm1391, %v3673, 0
          %v3725 = vsel %vm1391, %v3674, 0
          %v3728 = vsel %vm1391, %v3675, 0
          %3730 = vmatprep.subr.bf16.mxu0 0
          %3731 = vmatpush1.bf16.msra.mxu0 %v3680
          %3732 = vmatprep.subr.bf16.mxu0 0
          %3733 = vmatpush1.bf16.msra.mxu0 0
          %3734 = vmatprep.subr.bf16.mxu0 0
          %3735 = vmatpush1.bf16.msra.mxu0 0
          %3736 = vmatprep.subr.bf16.mxu0 0
          %3737 = vmatpush1.bf16.msra.mxu0 0
          %3738 = vmatprep.subr.bf16.mxu0 0
          %3739 = vmatpush1.bf16.msra.mxu0 0
          %3740 = vmatprep.subr.bf16.mxu0 0
          %3741 = vmatpush1.bf16.msra.mxu0 0
          %3742 = vmatprep.subr.bf16.mxu0 0
          %3743 = vmatpush1.bf16.msra.mxu0 0
          %3744 = vmatprep.subr.bf16.mxu0 0
          %3745 = vmatpush1.bf16.msra.mxu0 0
          %3746 = vmatprep.subr.bf16.mxu0 0
          %3747 = vmatpush1.bf16.msra.mxu0 0
          %3748 = vmatprep.subr.bf16.mxu0 0
          %3749 = vmatpush1.bf16.msra.mxu0 0
          %3750 = vmatprep.subr.bf16.mxu0 0
          %3751 = vmatpush1.bf16.msra.mxu0 0
          %3752 = vmatprep.subr.bf16.mxu0 0
          %3753 = vmatpush1.bf16.msra.mxu0 0
          %3754 = vmatprep.subr.bf16.mxu0 0
          %3755 = vmatpush1.bf16.msra.mxu0 0
          %3756 = vmatprep.subr.bf16.mxu0 0
          %3757 = vmatpush1.bf16.msra.mxu0 0
          %3758 = vmatprep.subr.bf16.mxu0 0
          %3759 = vmatpush1.bf16.msra.mxu0 0
          %3760 = vmatprep.subr.bf16.mxu0 0
          %3761 = vmatpush1.bf16.msra.mxu0 0
          %3762 = vmatprep.mubr.bf16.mxu0 0
          %3763 = vmatmul.mubr.bf16.gmra.mrb[0].mxu0 %v3683
          %v3764 = vpop.f32.mrb[0].mxu0
          %v3765 = vadd.f32 0.0, %v3764
          %v3766 = vpop.f32.mrb[0].mxu0
          %v3767 = vpop.f32.mrb[0].mxu0
          %v3768 = vadd.f32 0.0, %v3767
          %v3769 = vpop.f32.mrb[0].mxu0
          %3770 = vmatprep.mubr.bf16.mxu0 0
          %3771 = vmatmul.mubr.bf16.gmra.mrb[0].mxu0 %v3686
          %v3772 = vpop.f32.mrb[0].mxu0
          %v3773 = vadd.f32 0.0, %v3772
          %v3774 = vpop.f32.mrb[0].mxu0
          %v3775 = vpop.f32.mrb[0].mxu0
          %v3776 = vadd.f32 0.0, %v3775
          %v3777 = vpop.f32.mrb[0].mxu0
          %3778 = vmatprep.mubr.bf16.mxu0 0
          %3779 = vmatmul.mubr.bf16.gmra.mrb[0].mxu0 %v3689
          %v3780 = vpop.f32.mrb[0].mxu0
          %v3781 = vadd.f32 0.0, %v3780
          %v3782 = vpop.f32.mrb[0].mxu0
          %v3783 = vpop.f32.mrb[0].mxu0
          %v3784 = vadd.f32 0.0, %v3783
          %v3785 = vpop.f32.mrb[0].mxu0
          %3786 = vmatprep.mubr.bf16.mxu0 0
          %3787 = vmatmul.mubr.bf16.gmra.mrb[0].mxu0 %v3692
          %v3788 = vpop.f32.mrb[0].mxu0
          %v3789 = vadd.f32 0.0, %v3788
          %v3790 = vpop.f32.mrb[0].mxu0
          %v3791 = vpop.f32.mrb[0].mxu0
          %v3792 = vadd.f32 0.0, %v3791
          %v3793 = vpop.f32.mrb[0].mxu0
          %3794 = vmatprep.mubr.bf16.mxu0 0
          %3795 = vmatmul.mubr.bf16.gmra.mrb[0].mxu0 %v3695
          %v3796 = vpop.f32.mrb[0].mxu0
          %v3797 = vadd.f32 0.0, %v3796
          %v3798 = vpop.f32.mrb[0].mxu0
          %v3799 = vpop.f32.mrb[0].mxu0
          %v3800 = vadd.f32 0.0, %v3799
          %v3801 = vpop.f32.mrb[0].mxu0
          %3802 = vmatprep.mubr.bf16.mxu0 0
          %3803 = vmatmul.mubr.bf16.gmra.mrb[0].mxu0 %v3698
          %v3804 = vpop.f32.mrb[0].mxu0
          %v3805 = vadd.f32 0.0, %v3804
          %v3806 = vpop.f32.mrb[0].mxu0
          %v3807 = vpop.f32.mrb[0].mxu0
          %v3808 = vadd.f32 0.0, %v3807
          %v3809 = vpop.f32.mrb[0].mxu0
          %3810 = vmatprep.mubr.bf16.mxu0 0
          %3811 = vmatmul.mubr.bf16.gmra.mrb[0].mxu0 %v3701
          %v3812 = vpop.f32.mrb[0].mxu0
          %v3813 = vadd.f32 0.0, %v3812
          %v3814 = vpop.f32.mrb[0].mxu0
          %v3815 = vpop.f32.mrb[0].mxu0
          %v3816 = vadd.f32 0.0, %v3815
          %v3817 = vpop.f32.mrb[0].mxu0
          %3818 = vmatprep.mubr.bf16.mxu0 0
          %3819 = vmatmul.mubr.bf16.gmra.mrb[0].mxu0 %v3704
          %v3820 = vpop.f32.mrb[0].mxu0
          %v3821 = vadd.f32 0.0, %v3820
          %v3822 = vpop.f32.mrb[0].mxu0
          %v3823 = vpop.f32.mrb[0].mxu0
          %v3824 = vadd.f32 0.0, %v3823
          %v3825 = vpop.f32.mrb[0].mxu0
          %3826 = vmatprep.mubr.bf16.mxu0 0
          %3827 = vmatmul.mubr.bf16.gmra.mrb[0].mxu0 %v3707
          %v3828 = vpop.f32.mrb[0].mxu0
          %v3829 = vadd.f32 0.0, %v3828
          %v3830 = vpop.f32.mrb[0].mxu0
          %v3831 = vpop.f32.mrb[0].mxu0
          %v3832 = vadd.f32 0.0, %v3831
          %v3833 = vpop.f32.mrb[0].mxu0
          %3834 = vmatprep.mubr.bf16.mxu0 0
          %3835 = vmatmul.mubr.bf16.gmra.mrb[0].mxu0 %v3710
          %v3836 = vpop.f32.mrb[0].mxu0
          %v3837 = vadd.f32 0.0, %v3836
          %v3838 = vpop.f32.mrb[0].mxu0
          %v3839 = vpop.f32.mrb[0].mxu0
          %v3840 = vadd.f32 0.0, %v3839
          %v3841 = vpop.f32.mrb[0].mxu0
          %3842 = vmatprep.mubr.bf16.mxu0 0
          %3843 = vmatmul.mubr.bf16.gmra.mrb[0].mxu0 %v3713
          %v3844 = vpop.f32.mrb[0].mxu0
          %v3845 = vadd.f32 0.0, %v3844
          %v3846 = vpop.f32.mrb[0].mxu0
          %v3847 = vpop.f32.mrb[0].mxu0
          %v3848 = vadd.f32 0.0, %v3847
          %v3849 = vpop.f32.mrb[0].mxu0
          %3850 = vmatprep.mubr.bf16.mxu0 0
          %3851 = vmatmul.mubr.bf16.gmra.mrb[0].mxu0 %v3716
          %v3852 = vpop.f32.mrb[0].mxu0
          %v3853 = vadd.f32 0.0, %v3852
          %v3854 = vpop.f32.mrb[0].mxu0
          %v3855 = vpop.f32.mrb[0].mxu0
          %v3856 = vadd.f32 0.0, %v3855
          %v3857 = vpop.f32.mrb[0].mxu0
          %3858 = vmatprep.mubr.bf16.mxu0 0
          %3859 = vmatmul.mubr.bf16.gmra.mrb[0].mxu0 %v3719
          %v3860 = vpop.f32.mrb[0].mxu0
          %v3861 = vadd.f32 0.0, %v3860
          %v3862 = vpop.f32.mrb[0].mxu0
          %v3863 = vpop.f32.mrb[0].mxu0
          %v3864 = vadd.f32 0.0, %v3863
          %v3865 = vpop.f32.mrb[0].mxu0
          %3866 = vmatprep.mubr.bf16.mxu0 0
          %3867 = vmatmul.mubr.bf16.gmra.mrb[0].mxu0 %v3722
          %v3868 = vpop.f32.mrb[0].mxu0
          %v3869 = vadd.f32 0.0, %v3868
          %v3870 = vpop.f32.mrb[0].mxu0
          %v3871 = vpop.f32.mrb[0].mxu0
          %v3872 = vadd.f32 0.0, %v3871
          %v3873 = vpop.f32.mrb[0].mxu0
          %3874 = vmatprep.mubr.bf16.mxu0 0
          %3875 = vmatmul.mubr.bf16.gmra.mrb[0].mxu0 %v3725
          %v3876 = vpop.f32.mrb[0].mxu0
          %v3877 = vadd.f32 0.0, %v3876
          %v3878 = vpop.f32.mrb[0].mxu0
          %v3879 = vpop.f32.mrb[0].mxu0
          %v3880 = vadd.f32 0.0, %v3879
          %v3881 = vpop.f32.mrb[0].mxu0
          %3882 = vmatprep.mubr.bf16.mxu0 0
          %3883 = vmatmul.mubr.bf16.gmra.mrb[0].mxu0 %v3728
          %v3884 = vpop.f32.mrb[0].mxu0
          %v3885 = vadd.f32 0.0, %v3884
          %v3886 = vpop.f32.mrb[0].mxu0
          %v3887 = vpop.f32.mrb[0].mxu0
          %v3888 = vadd.f32 0.0, %v3887
          %v3889 = vpop.f32.mrb[0].mxu0
          %3890 = vdwg.mxu0
          %v3891 = vadd.f32 %v3417, %v3765
          %v3892 = vadd.f32 %v3418, %v3768
          %v3893 = vadd.f32 %v3419, %v3773
          %v3894 = vadd.f32 %v3420, %v3776
          %v3895 = vadd.f32 %v3421, %v3781
          %v3896 = vadd.f32 %v3422, %v3784
          %v3897 = vadd.f32 %v3423, %v3789
          %v3898 = vadd.f32 %v3424, %v3792
          %v3899 = vadd.f32 %v3425, %v3797
          %v3900 = vadd.f32 %v3426, %v3800
          %v3901 = vadd.f32 %v3427, %v3805
          %v3902 = vadd.f32 %v3428, %v3808
          %v3903 = vadd.f32 %v3429, %v3813
          %v3904 = vadd.f32 %v3430, %v3816
          %v3905 = vadd.f32 %v3431, %v3821
          %v3906 = vadd.f32 %v3432, %v3824
          %v3907 = vadd.f32 %v3433, %v3829
          %v3908 = vadd.f32 %v3434, %v3832
          %v3909 = vadd.f32 %v3435, %v3837
          %v3910 = vadd.f32 %v3436, %v3840
          %v3911 = vadd.f32 %v3437, %v3845
          %v3912 = vadd.f32 %v3438, %v3848
          %v3913 = vadd.f32 %v3439, %v3853
          %v3914 = vadd.f32 %v3440, %v3856
          %v3915 = vadd.f32 %v3441, %v3861
          %v3916 = vadd.f32 %v3442, %v3864
          %v3917 = vadd.f32 %v3443, %v3869
          %v3918 = vadd.f32 %v3444, %v3872
          %v3919 = vadd.f32 %v3445, %v3877
          %v3920 = vadd.f32 %v3446, %v3880
          %v3921 = vadd.f32 %v3447, %v3885
          %v3922 = vadd.f32 %v3448, %v3888
          %s3923 = scalar_lea.vmem [#allocation2], 24
          %v3924 = vld [vmem:[%s3923] sm:$0xf]
          %v3925 = vld [vmem:[%s3923 + $0x4] sm:$0xf]
          %v3926 = vld [vmem:[%s3923 + $0xc] sm:$0xf]
          %v3927 = vld [vmem:[%s3923 + $0x10] sm:$0xf]
          %v3928 = vld [vmem:[%s3923 + $0x18] sm:$0xf]
          %v3929 = vld [vmem:[%s3923 + $0x1c] sm:$0xf]
          %v3930 = vld [vmem:[%s3923 + $0x24] sm:$0xf]
          %v3931 = vld [vmem:[%s3923 + $0x28] sm:$0xf]
          %v3932 = vld [vmem:[%s3923 + $0x30] sm:$0xf]
          %v3933 = vld [vmem:[%s3923 + $0x34] sm:$0xf]
          %v3934 = vld [vmem:[%s3923 + $0x3c] sm:$0xf]
          %v3935 = vld [vmem:[%s3923 + $0x40] sm:$0xf]
          %v3936 = vld [vmem:[%s3923 + $0x48] sm:$0xf]
          %v3937 = vld [vmem:[%s3923 + $0x4c] sm:$0xf]
          %v3938 = vld [vmem:[%s3923 + $0x54] sm:$0xf]
          %v3939 = vld [vmem:[%s3923 + $0x58] sm:$0xf]
          %v3940 = vld [vmem:[%s3923 + $0x60] sm:$0xf]
          %v3941 = vld [vmem:[%s3923 + $0x64] sm:$0xf]
          %v3942 = vld [vmem:[%s3923 + $0x6c] sm:$0xf]
          %v3943 = vld [vmem:[%s3923 + $0x70] sm:$0xf]
          %v3944 = vld [vmem:[%s3923 + $0x78] sm:$0xf]
          %v3945 = vld [vmem:[%s3923 + $0x7c] sm:$0xf]
          %v3946 = vld [vmem:[%s3923 + $0x84] sm:$0xf]
          %v3947 = vld [vmem:[%s3923 + $0x88] sm:$0xf]
          %v3948 = vld [vmem:[%s3923 + $0x90] sm:$0xf]
          %v3949 = vld [vmem:[%s3923 + $0x94] sm:$0xf]
          %v3950 = vld [vmem:[%s3923 + $0x9c] sm:$0xf]
          %v3951 = vld [vmem:[%s3923 + $0xa0] sm:$0xf]
          %v3952 = vld [vmem:[%s3923 + $0xa8] sm:$0xf]
          %v3953 = vld [vmem:[%s3923 + $0xac] sm:$0xf]
          %v3954 = vld [vmem:[%s3923 + $0xb4] sm:$0xf]
          %v3955 = vld [vmem:[%s3923 + $0xb8] sm:$0xf]
          %s3956 = scalar_lea.vmem %s1, 48
          %v3957 = vld [vmem:[%s3956] sm:$0xf]
          %v3958 = vld [vmem:[%s3956 + $0x4] sm:$0xf]
          %v3991 = vunpack.c.l.b16 %v3924
          %v3992 = vunpack.c.l.b16 %v3925
          %v3993 = vunpack.c.l.b16 %v3926
          %v3994 = vunpack.c.l.b16 %v3927
          %v3995 = vunpack.c.l.b16 %v3928
          %v3996 = vunpack.c.l.b16 %v3929
          %v3997 = vunpack.c.l.b16 %v3930
          %v3998 = vunpack.c.l.b16 %v3931
          %v3999 = vunpack.c.l.b16 %v3932
          %v4000 = vunpack.c.l.b16 %v3933
          %v4001 = vunpack.c.l.b16 %v3934
          %v4002 = vunpack.c.l.b16 %v3935
          %v4003 = vunpack.c.l.b16 %v3936
          %v4004 = vunpack.c.l.b16 %v3937
          %v4005 = vunpack.c.l.b16 %v3938
          %v4006 = vunpack.c.l.b16 %v3939
          %v4007 = vunpack.c.l.b16 %v3940
          %v4008 = vunpack.c.l.b16 %v3941
          %v4009 = vunpack.c.l.b16 %v3942
          %v4010 = vunpack.c.l.b16 %v3943
          %v4011 = vunpack.c.l.b16 %v3944
          %v4012 = vunpack.c.l.b16 %v3945
          %v4013 = vunpack.c.l.b16 %v3946
          %v4014 = vunpack.c.l.b16 %v3947
          %v4015 = vunpack.c.l.b16 %v3948
          %v4016 = vunpack.c.l.b16 %v3949
          %v4017 = vunpack.c.l.b16 %v3950
          %v4018 = vunpack.c.l.b16 %v3951
          %v4019 = vunpack.c.l.b16 %v3952
          %v4020 = vunpack.c.l.b16 %v3953
          %v4021 = vunpack.c.l.b16 %v3954
          %v4022 = vunpack.c.l.b16 %v3955
          %v4023 = vpack.c.b16 %v3992, %v3991
          %v4024 = vpack.c.b16 %v3994, %v3993
          %v4025 = vpack.c.b16 %v3996, %v3995
          %v4026 = vpack.c.b16 %v3998, %v3997
          %v4027 = vpack.c.b16 %v4000, %v3999
          %v4028 = vpack.c.b16 %v4002, %v4001
          %v4029 = vpack.c.b16 %v4004, %v4003
          %v4030 = vpack.c.b16 %v4006, %v4005
          %v4031 = vpack.c.b16 %v4008, %v4007
          %v4032 = vpack.c.b16 %v4010, %v4009
          %v4033 = vpack.c.b16 %v4012, %v4011
          %v4034 = vpack.c.b16 %v4014, %v4013
          %v4035 = vpack.c.b16 %v4016, %v4015
          %v4036 = vpack.c.b16 %v4018, %v4017
          %v4037 = vpack.c.b16 %v4020, %v4019
          %v4038 = vpack.c.b16 %v4022, %v4021
          %v4041 = vunpack.c.l.b16 %v3957
          %v4042 = vunpack.c.l.b16 %v3958
          %v4043 = vpack.c.b16 %v4042, %v4041
          %v4046 = vsel %vm1391, %v4023, 0
          %v4049 = vsel %vm1391, %v4024, 0
          %v4052 = vsel %vm1391, %v4025, 0
          %v4055 = vsel %vm1391, %v4026, 0
          %v4058 = vsel %vm1391, %v4027, 0
          %v4061 = vsel %vm1391, %v4028, 0
          %v4064 = vsel %vm1391, %v4029, 0
          %v4067 = vsel %vm1391, %v4030, 0
          %v4070 = vsel %vm1391, %v4031, 0
          %v4073 = vsel %vm1391, %v4032, 0
          %v4076 = vsel %vm1391, %v4033, 0
          %v4079 = vsel %vm1391, %v4034, 0
          %v4082 = vsel %vm1391, %v4035, 0
          %v4085 = vsel %vm1391, %v4036, 0
          %v4088 = vsel %vm1391, %v4037, 0
          %v4091 = vsel %vm1391, %v4038, 0
          %4093 = vmatprep.subr.bf16.mxu0 0
          %4094 = vmatpush1.bf16.msra.mxu0 %v4043
          %4095 = vmatprep.subr.bf16.mxu0 0
          %4096 = vmatpush1.bf16.msra.mxu0 0
          %4097 = vmatprep.subr.bf16.mxu0 0
          %4098 = vmatpush1.bf16.msra.mxu0 0
          %4099 = vmatprep.subr.bf16.mxu0 0
          %4100 = vmatpush1.bf16.msra.mxu0 0
          %4101 = vmatprep.subr.bf16.mxu0 0
          %4102 = vmatpush1.bf16.msra.mxu0 0
          %4103 = vmatprep.subr.bf16.mxu0 0
          %4104 = vmatpush1.bf16.msra.mxu0 0
          %4105 = vmatprep.subr.bf16.mxu0 0
          %4106 = vmatpush1.bf16.msra.mxu0 0
          %4107 = vmatprep.subr.bf16.mxu0 0
          %4108 = vmatpush1.bf16.msra.mxu0 0
          %4109 = vmatprep.subr.bf16.mxu0 0
          %4110 = vmatpush1.bf16.msra.mxu0 0
          %4111 = vmatprep.subr.bf16.mxu0 0
          %4112 = vmatpush1.bf16.msra.mxu0 0
          %4113 = vmatprep.subr.bf16.mxu0 0
          %4114 = vmatpush1.bf16.msra.mxu0 0
          %4115 = vmatprep.subr.bf16.mxu0 0
          %4116 = vmatpush1.bf16.msra.mxu0 0
          %4117 = vmatprep.subr.bf16.mxu0 0
          %4118 = vmatpush1.bf16.msra.mxu0 0
          %4119 = vmatprep.subr.bf16.mxu0 0
          %4120 = vmatpush1.bf16.msra.mxu0 0
          %4121 = vmatprep.subr.bf16.mxu0 0
          %4122 = vmatpush1.bf16.msra.mxu0 0
          %4123 = vmatprep.subr.bf16.mxu0 0
          %4124 = vmatpush1.bf16.msra.mxu0 0
          %4125 = vmatprep.mubr.bf16.mxu0 0
          %4126 = vmatmul.mubr.bf16.gmra.mrb[0].mxu0 %v4046
          %v4127 = vpop.f32.mrb[0].mxu0
          %v4128 = vadd.f32 0.0, %v4127
          %v4129 = vpop.f32.mrb[0].mxu0
          %v4130 = vpop.f32.mrb[0].mxu0
          %v4131 = vadd.f32 0.0, %v4130
          %v4132 = vpop.f32.mrb[0].mxu0
          %4133 = vmatprep.mubr.bf16.mxu0 0
          %4134 = vmatmul.mubr.bf16.gmra.mrb[0].mxu0 %v4049
          %v4135 = vpop.f32.mrb[0].mxu0
          %v4136 = vadd.f32 0.0, %v4135
          %v4137 = vpop.f32.mrb[0].mxu0
          %v4138 = vpop.f32.mrb[0].mxu0
          %v4139 = vadd.f32 0.0, %v4138
          %v4140 = vpop.f32.mrb[0].mxu0
          %4141 = vmatprep.mubr.bf16.mxu0 0
          %4142 = vmatmul.mubr.bf16.gmra.mrb[0].mxu0 %v4052
          %v4143 = vpop.f32.mrb[0].mxu0
          %v4144 = vadd.f32 0.0, %v4143
          %v4145 = vpop.f32.mrb[0].mxu0
          %v4146 = vpop.f32.mrb[0].mxu0
          %v4147 = vadd.f32 0.0, %v4146
          %v4148 = vpop.f32.mrb[0].mxu0
          %4149 = vmatprep.mubr.bf16.mxu0 0
          %4150 = vmatmul.mubr.bf16.gmra.mrb[0].mxu0 %v4055
          %v4151 = vpop.f32.mrb[0].mxu0
          %v4152 = vadd.f32 0.0, %v4151
          %v4153 = vpop.f32.mrb[0].mxu0
          %v4154 = vpop.f32.mrb[0].mxu0
          %v4155 = vadd.f32 0.0, %v4154
          %v4156 = vpop.f32.mrb[0].mxu0
          %4157 = vmatprep.mubr.bf16.mxu0 0
          %4158 = vmatmul.mubr.bf16.gmra.mrb[0].mxu0 %v4058
          %v4159 = vpop.f32.mrb[0].mxu0
          %v4160 = vadd.f32 0.0, %v4159
          %v4161 = vpop.f32.mrb[0].mxu0
          %v4162 = vpop.f32.mrb[0].mxu0
          %v4163 = vadd.f32 0.0, %v4162
          %v4164 = vpop.f32.mrb[0].mxu0
          %4165 = vmatprep.mubr.bf16.mxu0 0
          %4166 = vmatmul.mubr.bf16.gmra.mrb[0].mxu0 %v4061
          %v4167 = vpop.f32.mrb[0].mxu0
          %v4168 = vadd.f32 0.0, %v4167
          %v4169 = vpop.f32.mrb[0].mxu0
          %v4170 = vpop.f32.mrb[0].mxu0
          %v4171 = vadd.f32 0.0, %v4170
          %v4172 = vpop.f32.mrb[0].mxu0
          %4173 = vmatprep.mubr.bf16.mxu0 0
          %4174 = vmatmul.mubr.bf16.gmra.mrb[0].mxu0 %v4064
          %v4175 = vpop.f32.mrb[0].mxu0
          %v4176 = vadd.f32 0.0, %v4175
          %v4177 = vpop.f32.mrb[0].mxu0
          %v4178 = vpop.f32.mrb[0].mxu0
          %v4179 = vadd.f32 0.0, %v4178
          %v4180 = vpop.f32.mrb[0].mxu0
          %4181 = vmatprep.mubr.bf16.mxu0 0
          %4182 = vmatmul.mubr.bf16.gmra.mrb[0].mxu0 %v4067
          %v4183 = vpop.f32.mrb[0].mxu0
          %v4184 = vadd.f32 0.0, %v4183
          %v4185 = vpop.f32.mrb[0].mxu0
          %v4186 = vpop.f32.mrb[0].mxu0
          %v4187 = vadd.f32 0.0, %v4186
          %v4188 = vpop.f32.mrb[0].mxu0
          %4189 = vmatprep.mubr.bf16.mxu0 0
          %4190 = vmatmul.mubr.bf16.gmra.mrb[0].mxu0 %v4070
          %v4191 = vpop.f32.mrb[0].mxu0
          %v4192 = vadd.f32 0.0, %v4191
          %v4193 = vpop.f32.mrb[0].mxu0
          %v4194 = vpop.f32.mrb[0].mxu0
          %v4195 = vadd.f32 0.0, %v4194
          %v4196 = vpop.f32.mrb[0].mxu0
          %4197 = vmatprep.mubr.bf16.mxu0 0
          %4198 = vmatmul.mubr.bf16.gmra.mrb[0].mxu0 %v4073
          %v4199 = vpop.f32.mrb[0].mxu0
          %v4200 = vadd.f32 0.0, %v4199
          %v4201 = vpop.f32.mrb[0].mxu0
          %v4202 = vpop.f32.mrb[0].mxu0
          %v4203 = vadd.f32 0.0, %v4202
          %v4204 = vpop.f32.mrb[0].mxu0
          %4205 = vmatprep.mubr.bf16.mxu0 0
          %4206 = vmatmul.mubr.bf16.gmra.mrb[0].mxu0 %v4076
          %v4207 = vpop.f32.mrb[0].mxu0
          %v4208 = vadd.f32 0.0, %v4207
          %v4209 = vpop.f32.mrb[0].mxu0
          %v4210 = vpop.f32.mrb[0].mxu0
          %v4211 = vadd.f32 0.0, %v4210
          %v4212 = vpop.f32.mrb[0].mxu0
          %4213 = vmatprep.mubr.bf16.mxu0 0
          %4214 = vmatmul.mubr.bf16.gmra.mrb[0].mxu0 %v4079
          %v4215 = vpop.f32.mrb[0].mxu0
          %v4216 = vadd.f32 0.0, %v4215
          %v4217 = vpop.f32.mrb[0].mxu0
          %v4218 = vpop.f32.mrb[0].mxu0
          %v4219 = vadd.f32 0.0, %v4218
          %v4220 = vpop.f32.mrb[0].mxu0
          %4221 = vmatprep.mubr.bf16.mxu0 0
          %4222 = vmatmul.mubr.bf16.gmra.mrb[0].mxu0 %v4082
          %v4223 = vpop.f32.mrb[0].mxu0
          %v4224 = vadd.f32 0.0, %v4223
          %v4225 = vpop.f32.mrb[0].mxu0
          %v4226 = vpop.f32.mrb[0].mxu0
          %v4227 = vadd.f32 0.0, %v4226
          %v4228 = vpop.f32.mrb[0].mxu0
          %4229 = vmatprep.mubr.bf16.mxu0 0
          %4230 = vmatmul.mubr.bf16.gmra.mrb[0].mxu0 %v4085
          %v4231 = vpop.f32.mrb[0].mxu0
          %v4232 = vadd.f32 0.0, %v4231
          %v4233 = vpop.f32.mrb[0].mxu0
          %v4234 = vpop.f32.mrb[0].mxu0
          %v4235 = vadd.f32 0.0, %v4234
          %v4236 = vpop.f32.mrb[0].mxu0
          %4237 = vmatprep.mubr.bf16.mxu0 0
          %4238 = vmatmul.mubr.bf16.gmra.mrb[0].mxu0 %v4088
          %v4239 = vpop.f32.mrb[0].mxu0
          %v4240 = vadd.f32 0.0, %v4239
          %v4241 = vpop.f32.mrb[0].mxu0
          %v4242 = vpop.f32.mrb[0].mxu0
          %v4243 = vadd.f32 0.0, %v4242
          %v4244 = vpop.f32.mrb[0].mxu0
          %4245 = vmatprep.mubr.bf16.mxu0 0
          %4246 = vmatmul.mubr.bf16.gmra.mrb[0].mxu0 %v4091
          %v4247 = vpop.f32.mrb[0].mxu0
          %v4248 = vadd.f32 0.0, %v4247
          %v4249 = vpop.f32.mrb[0].mxu0
          %v4250 = vpop.f32.mrb[0].mxu0
          %v4251 = vadd.f32 0.0, %v4250
          %v4252 = vpop.f32.mrb[0].mxu0
          %4253 = vdwg.mxu0
          %v4254 = vadd.f32 %v3891, %v4128
          %v4255 = vadd.f32 %v3892, %v4131
          %v4256 = vadd.f32 %v3893, %v4136
          %v4257 = vadd.f32 %v3894, %v4139
          %v4258 = vadd.f32 %v3895, %v4144
          %v4259 = vadd.f32 %v3896, %v4147
          %v4260 = vadd.f32 %v3897, %v4152
          %v4261 = vadd.f32 %v3898, %v4155
          %v4262 = vadd.f32 %v3899, %v4160
          %v4263 = vadd.f32 %v3900, %v4163
          %v4264 = vadd.f32 %v3901, %v4168
          %v4265 = vadd.f32 %v3902, %v4171
          %v4266 = vadd.f32 %v3903, %v4176
          %v4267 = vadd.f32 %v3904, %v4179
          %v4268 = vadd.f32 %v3905, %v4184
          %v4269 = vadd.f32 %v3906, %v4187
          %v4270 = vadd.f32 %v3907, %v4192
          %v4271 = vadd.f32 %v3908, %v4195
          %v4272 = vadd.f32 %v3909, %v4200
          %v4273 = vadd.f32 %v3910, %v4203
          %v4274 = vadd.f32 %v3911, %v4208
          %v4275 = vadd.f32 %v3912, %v4211
          %v4276 = vadd.f32 %v3913, %v4216
          %v4277 = vadd.f32 %v3914, %v4219
          %v4278 = vadd.f32 %v3915, %v4224
          %v4279 = vadd.f32 %v3916, %v4227
          %v4280 = vadd.f32 %v3917, %v4232
          %v4281 = vadd.f32 %v3918, %v4235
          %v4282 = vadd.f32 %v3919, %v4240
          %v4283 = vadd.f32 %v3920, %v4243
          %v4284 = vadd.f32 %v3921, %v4248
          %v4285 = vadd.f32 %v3922, %v4251
          %v4286 = vld [vmem:[%s3923] sm:$0xf]
          %v4287 = vld [vmem:[%s3923 + $0x4] sm:$0xf]
          %v4288 = vld [vmem:[%s3923 + $0x8] sm:$0x1]
          %v4289 = vld [vmem:[%s3923 + $0xc] sm:$0xf]
          %v4290 = vld [vmem:[%s3923 + $0x10] sm:$0xf]
          %v4291 = vld [vmem:[%s3923 + $0x14] sm:$0x1]
          %v4292 = vld [vmem:[%s3923 + $0x18] sm:$0xf]
          %v4293 = vld [vmem:[%s3923 + $0x1c] sm:$0xf]
          %v4294 = vld [vmem:[%s3923 + $0x20] sm:$0x1]
          %v4295 = vld [vmem:[%s3923 + $0x24] sm:$0xf]
          %v4296 = vld [vmem:[%s3923 + $0x28] sm:$0xf]
          %v4297 = vld [vmem:[%s3923 + $0x2c] sm:$0x1]
          %v4298 = vld [vmem:[%s3923 + $0x30] sm:$0xf]
          %v4299 = vld [vmem:[%s3923 + $0x34] sm:$0xf]
          %v4300 = vld [vmem:[%s3923 + $0x38] sm:$0x1]
          %v4301 = vld [vmem:[%s3923 + $0x3c] sm:$0xf]
          %v4302 = vld [vmem:[%s3923 + $0x40] sm:$0xf]
          %v4303 = vld [vmem:[%s3923 + $0x44] sm:$0x1]
          %v4304 = vld [vmem:[%s3923 + $0x48] sm:$0xf]
          %v4305 = vld [vmem:[%s3923 + $0x4c] sm:$0xf]
          %v4306 = vld [vmem:[%s3923 + $0x50] sm:$0x1]
          %v4307 = vld [vmem:[%s3923 + $0x54] sm:$0xf]
          %v4308 = vld [vmem:[%s3923 + $0x58] sm:$0xf]
          %v4309 = vld [vmem:[%s3923 + $0x5c] sm:$0x1]
          %v4310 = vld [vmem:[%s3923 + $0x60] sm:$0xf]
          %v4311 = vld [vmem:[%s3923 + $0x64] sm:$0xf]
          %v4312 = vld [vmem:[%s3923 + $0x68] sm:$0x1]
          %v4313 = vld [vmem:[%s3923 + $0x6c] sm:$0xf]
          %v4314 = vld [vmem:[%s3923 + $0x70] sm:$0xf]
          %v4315 = vld [vmem:[%s3923 + $0x74] sm:$0x1]
          %v4316 = vld [vmem:[%s3923 + $0x78] sm:$0xf]
          %v4317 = vld [vmem:[%s3923 + $0x7c] sm:$0xf]
          %v4318 = vld [vmem:[%s3923 + $0x80] sm:$0x1]
          %v4319 = vld [vmem:[%s3923 + $0x84] sm:$0xf]
          %v4320 = vld [vmem:[%s3923 + $0x88] sm:$0xf]
          %v4321 = vld [vmem:[%s3923 + $0x8c] sm:$0x1]
          %v4322 = vld [vmem:[%s3923 + $0x90] sm:$0xf]
          %v4323 = vld [vmem:[%s3923 + $0x94] sm:$0xf]
          %v4324 = vld [vmem:[%s3923 + $0x98] sm:$0x1]
          %v4325 = vld [vmem:[%s3923 + $0x9c] sm:$0xf]
          %v4326 = vld [vmem:[%s3923 + $0xa0] sm:$0xf]
          %v4327 = vld [vmem:[%s3923 + $0xa4] sm:$0x1]
          %v4328 = vld [vmem:[%s3923 + $0xa8] sm:$0xf]
          %v4329 = vld [vmem:[%s3923 + $0xac] sm:$0xf]
          %v4330 = vld [vmem:[%s3923 + $0xb0] sm:$0x1]
          %v4331 = vld [vmem:[%s3923 + $0xb4] sm:$0xf]
          %v4332 = vld [vmem:[%s3923 + $0xb8] sm:$0xf]
          %v4333 = vld [vmem:[%s3923 + $0xbc] sm:$0x1]
          %v4335 = vshrl.u32 %v4286, 16
          %v4337 = vrot.slane %v4335, 4
          %v4338 = vshll.u32 %v4286, 16
          %v4340 = vrot.slane %v4338, 5
          %v4341 = vor.u32 %v4337, %v4340
          %v4342 = vrot.slane %v4341, 4
          %v4344 = vshll.u32 %v4287, 16
          %v4346 = vrot.slane %v4344, 5
          %v4347 = vsel %vm949, %v4342, %v4346
          %v4348 = vshrl.u32 %v4287, 16
          %v4350 = vrot.slane %v4348, 4
          %v4351 = vor.u32 %v4350, %v4346
          %v4352 = vrot.slane %v4351, 4
          %v4354 = vshll.u32 %v4288, 16
          %v4356 = vrot.slane %v4354, 5
          %v4357 = vsel %vm949, %v4352, %v4356
          %v4359 = vshrl.u32 %v4289, 16
          %v4361 = vrot.slane %v4359, 4
          %v4362 = vshll.u32 %v4289, 16
          %v4364 = vrot.slane %v4362, 5
          %v4365 = vor.u32 %v4361, %v4364
          %v4366 = vrot.slane %v4365, 4
          %v4368 = vshll.u32 %v4290, 16
          %v4370 = vrot.slane %v4368, 5
          %v4371 = vsel %vm949, %v4366, %v4370
          %v4372 = vshrl.u32 %v4290, 16
          %v4374 = vrot.slane %v4372, 4
          %v4375 = vor.u32 %v4374, %v4370
          %v4376 = vrot.slane %v4375, 4
          %v4378 = vshll.u32 %v4291, 16
          %v4380 = vrot.slane %v4378, 5
          %v4381 = vsel %vm949, %v4376, %v4380
          %v4383 = vshrl.u32 %v4292, 16
          %v4385 = vrot.slane %v4383, 4
          %v4386 = vshll.u32 %v4292, 16
          %v4388 = vrot.slane %v4386, 5
          %v4389 = vor.u32 %v4385, %v4388
          %v4390 = vrot.slane %v4389, 4
          %v4392 = vshll.u32 %v4293, 16
          %v4394 = vrot.slane %v4392, 5
          %v4395 = vsel %vm949, %v4390, %v4394
          %v4396 = vshrl.u32 %v4293, 16
          %v4398 = vrot.slane %v4396, 4
          %v4399 = vor.u32 %v4398, %v4394
          %v4400 = vrot.slane %v4399, 4
          %v4402 = vshll.u32 %v4294, 16
          %v4404 = vrot.slane %v4402, 5
          %v4405 = vsel %vm949, %v4400, %v4404
          %v4407 = vshrl.u32 %v4295, 16
          %v4409 = vrot.slane %v4407, 4
          %v4410 = vshll.u32 %v4295, 16
          %v4412 = vrot.slane %v4410, 5
          %v4413 = vor.u32 %v4409, %v4412
          %v4414 = vrot.slane %v4413, 4
          %v4416 = vshll.u32 %v4296, 16
          %v4418 = vrot.slane %v4416, 5
          %v4419 = vsel %vm949, %v4414, %v4418
          %v4420 = vshrl.u32 %v4296, 16
          %v4422 = vrot.slane %v4420, 4
          %v4423 = vor.u32 %v4422, %v4418
          %v4424 = vrot.slane %v4423, 4
          %v4426 = vshll.u32 %v4297, 16
          %v4428 = vrot.slane %v4426, 5
          %v4429 = vsel %vm949, %v4424, %v4428
          %v4431 = vshrl.u32 %v4298, 16
          %v4433 = vrot.slane %v4431, 4
          %v4434 = vshll.u32 %v4298, 16
          %v4436 = vrot.slane %v4434, 5
          %v4437 = vor.u32 %v4433, %v4436
          %v4438 = vrot.slane %v4437, 4
          %v4440 = vshll.u32 %v4299, 16
          %v4442 = vrot.slane %v4440, 5
          %v4443 = vsel %vm949, %v4438, %v4442
          %v4444 = vshrl.u32 %v4299, 16
          %v4446 = vrot.slane %v4444, 4
          %v4447 = vor.u32 %v4446, %v4442
          %v4448 = vrot.slane %v4447, 4
          %v4450 = vshll.u32 %v4300, 16
          %v4452 = vrot.slane %v4450, 5
          %v4453 = vsel %vm949, %v4448, %v4452
          %v4455 = vshrl.u32 %v4301, 16
          %v4457 = vrot.slane %v4455, 4
          %v4458 = vshll.u32 %v4301, 16
          %v4460 = vrot.slane %v4458, 5
          %v4461 = vor.u32 %v4457, %v4460
          %v4462 = vrot.slane %v4461, 4
          %v4464 = vshll.u32 %v4302, 16
          %v4466 = vrot.slane %v4464, 5
          %v4467 = vsel %vm949, %v4462, %v4466
          %v4468 = vshrl.u32 %v4302, 16
          %v4470 = vrot.slane %v4468, 4
          %v4471 = vor.u32 %v4470, %v4466
          %v4472 = vrot.slane %v4471, 4
          %v4474 = vshll.u32 %v4303, 16
          %v4476 = vrot.slane %v4474, 5
          %v4477 = vsel %vm949, %v4472, %v4476
          %v4479 = vshrl.u32 %v4304, 16
          %v4481 = vrot.slane %v4479, 4
          %v4482 = vshll.u32 %v4304, 16
          %v4484 = vrot.slane %v4482, 5
          %v4485 = vor.u32 %v4481, %v4484
          %v4486 = vrot.slane %v4485, 4
          %v4488 = vshll.u32 %v4305, 16
          %v4490 = vrot.slane %v4488, 5
          %v4491 = vsel %vm949, %v4486, %v4490
          %v4492 = vshrl.u32 %v4305, 16
          %v4494 = vrot.slane %v4492, 4
          %v4495 = vor.u32 %v4494, %v4490
          %v4496 = vrot.slane %v4495, 4
          %v4498 = vshll.u32 %v4306, 16
          %v4500 = vrot.slane %v4498, 5
          %v4501 = vsel %vm949, %v4496, %v4500
          %v4503 = vshrl.u32 %v4307, 16
          %v4505 = vrot.slane %v4503, 4
          %v4506 = vshll.u32 %v4307, 16
          %v4508 = vrot.slane %v4506, 5
          %v4509 = vor.u32 %v4505, %v4508
          %v4510 = vrot.slane %v4509, 4
          %v4512 = vshll.u32 %v4308, 16
          %v4514 = vrot.slane %v4512, 5
          %v4515 = vsel %vm949, %v4510, %v4514
          %v4516 = vshrl.u32 %v4308, 16
          %v4518 = vrot.slane %v4516, 4
          %v4519 = vor.u32 %v4518, %v4514
          %v4520 = vrot.slane %v4519, 4
          %v4522 = vshll.u32 %v4309, 16
          %v4524 = vrot.slane %v4522, 5
          %v4525 = vsel %vm949, %v4520, %v4524
          %v4527 = vshrl.u32 %v4310, 16
          %v4529 = vrot.slane %v4527, 4
          %v4530 = vshll.u32 %v4310, 16
          %v4532 = vrot.slane %v4530, 5
          %v4533 = vor.u32 %v4529, %v4532
          %v4534 = vrot.slane %v4533, 4
          %v4536 = vshll.u32 %v4311, 16
          %v4538 = vrot.slane %v4536, 5
          %v4539 = vsel %vm949, %v4534, %v4538
          %v4540 = vshrl.u32 %v4311, 16
          %v4542 = vrot.slane %v4540, 4
          %v4543 = vor.u32 %v4542, %v4538
          %v4544 = vrot.slane %v4543, 4
          %v4546 = vshll.u32 %v4312, 16
          %v4548 = vrot.slane %v4546, 5
          %v4549 = vsel %vm949, %v4544, %v4548
          %v4551 = vshrl.u32 %v4313, 16
          %v4553 = vrot.slane %v4551, 4
          %v4554 = vshll.u32 %v4313, 16
          %v4556 = vrot.slane %v4554, 5
          %v4557 = vor.u32 %v4553, %v4556
          %v4558 = vrot.slane %v4557, 4
          %v4560 = vshll.u32 %v4314, 16
          %v4562 = vrot.slane %v4560, 5
          %v4563 = vsel %vm949, %v4558, %v4562
          %v4564 = vshrl.u32 %v4314, 16
          %v4566 = vrot.slane %v4564, 4
          %v4567 = vor.u32 %v4566, %v4562
          %v4568 = vrot.slane %v4567, 4
          %v4570 = vshll.u32 %v4315, 16
          %v4572 = vrot.slane %v4570, 5
          %v4573 = vsel %vm949, %v4568, %v4572
          %v4575 = vshrl.u32 %v4316, 16
          %v4577 = vrot.slane %v4575, 4
          %v4578 = vshll.u32 %v4316, 16
          %v4580 = vrot.slane %v4578, 5
          %v4581 = vor.u32 %v4577, %v4580
          %v4582 = vrot.slane %v4581, 4
          %v4584 = vshll.u32 %v4317, 16
          %v4586 = vrot.slane %v4584, 5
          %v4587 = vsel %vm949, %v4582, %v4586
          %v4588 = vshrl.u32 %v4317, 16
          %v4590 = vrot.slane %v4588, 4
          %v4591 = vor.u32 %v4590, %v4586
          %v4592 = vrot.slane %v4591, 4
          %v4594 = vshll.u32 %v4318, 16
          %v4596 = vrot.slane %v4594, 5
          %v4597 = vsel %vm949, %v4592, %v4596
          %v4599 = vshrl.u32 %v4319, 16
          %v4601 = vrot.slane %v4599, 4
          %v4602 = vshll.u32 %v4319, 16
          %v4604 = vrot.slane %v4602, 5
          %v4605 = vor.u32 %v4601, %v4604
          %v4606 = vrot.slane %v4605, 4
          %v4608 = vshll.u32 %v4320, 16
          %v4610 = vrot.slane %v4608, 5
          %v4611 = vsel %vm949, %v4606, %v4610
          %v4612 = vshrl.u32 %v4320, 16
          %v4614 = vrot.slane %v4612, 4
          %v4615 = vor.u32 %v4614, %v4610
          %v4616 = vrot.slane %v4615, 4
          %v4618 = vshll.u32 %v4321, 16
          %v4620 = vrot.slane %v4618, 5
          %v4621 = vsel %vm949, %v4616, %v4620
          %v4623 = vshrl.u32 %v4322, 16
          %v4625 = vrot.slane %v4623, 4
          %v4626 = vshll.u32 %v4322, 16
          %v4628 = vrot.slane %v4626, 5
          %v4629 = vor.u32 %v4625, %v4628
          %v4630 = vrot.slane %v4629, 4
          %v4632 = vshll.u32 %v4323, 16
          %v4634 = vrot.slane %v4632, 5
          %v4635 = vsel %vm949, %v4630, %v4634
          %v4636 = vshrl.u32 %v4323, 16
          %v4638 = vrot.slane %v4636, 4
          %v4639 = vor.u32 %v4638, %v4634
          %v4640 = vrot.slane %v4639, 4
          %v4642 = vshll.u32 %v4324, 16
          %v4644 = vrot.slane %v4642, 5
          %v4645 = vsel %vm949, %v4640, %v4644
          %v4647 = vshrl.u32 %v4325, 16
          %v4649 = vrot.slane %v4647, 4
          %v4650 = vshll.u32 %v4325, 16
          %v4652 = vrot.slane %v4650, 5
          %v4653 = vor.u32 %v4649, %v4652
          %v4654 = vrot.slane %v4653, 4
          %v4656 = vshll.u32 %v4326, 16
          %v4658 = vrot.slane %v4656, 5
          %v4659 = vsel %vm949, %v4654, %v4658
          %v4660 = vshrl.u32 %v4326, 16
          %v4662 = vrot.slane %v4660, 4
          %v4663 = vor.u32 %v4662, %v4658
          %v4664 = vrot.slane %v4663, 4
          %v4666 = vshll.u32 %v4327, 16
          %v4668 = vrot.slane %v4666, 5
          %v4669 = vsel %vm949, %v4664, %v4668
          %v4671 = vshrl.u32 %v4328, 16
          %v4673 = vrot.slane %v4671, 4
          %v4674 = vshll.u32 %v4328, 16
          %v4676 = vrot.slane %v4674, 5
          %v4677 = vor.u32 %v4673, %v4676
          %v4678 = vrot.slane %v4677, 4
          %v4680 = vshll.u32 %v4329, 16
          %v4682 = vrot.slane %v4680, 5
          %v4683 = vsel %vm949, %v4678, %v4682
          %v4684 = vshrl.u32 %v4329, 16
          %v4686 = vrot.slane %v4684, 4
          %v4687 = vor.u32 %v4686, %v4682
          %v4688 = vrot.slane %v4687, 4
          %v4690 = vshll.u32 %v4330, 16
          %v4692 = vrot.slane %v4690, 5
          %v4693 = vsel %vm949, %v4688, %v4692
          %v4695 = vshrl.u32 %v4331, 16
          %v4697 = vrot.slane %v4695, 4
          %v4698 = vshll.u32 %v4331, 16
          %v4700 = vrot.slane %v4698, 5
          %v4701 = vor.u32 %v4697, %v4700
          %v4702 = vrot.slane %v4701, 4
          %v4704 = vshll.u32 %v4332, 16
          %v4706 = vrot.slane %v4704, 5
          %v4707 = vsel %vm949, %v4702, %v4706
          %v4708 = vshrl.u32 %v4332, 16
          %v4710 = vrot.slane %v4708, 4
          %v4711 = vor.u32 %v4710, %v4706
          %v4712 = vrot.slane %v4711, 4
          %v4714 = vshll.u32 %v4333, 16
          %v4716 = vrot.slane %v4714, 5
          %v4717 = vsel %vm949, %v4712, %v4716
          %s4718 = scalar_lea.vmem %s1, 56
          %v4719 = vld [vmem:[%s4718] sm:$0xf]
          %v4720 = vld [vmem:[%s4718 + $0x4] sm:$0xf]
          %v4721 = vunpack.c.l.b16 %v4347
          %v4722 = vunpack.c.l.b16 %v4357
          %v4723 = vunpack.c.l.b16 %v4371
          %v4724 = vunpack.c.l.b16 %v4381
          %v4725 = vunpack.c.l.b16 %v4395
          %v4726 = vunpack.c.l.b16 %v4405
          %v4727 = vunpack.c.l.b16 %v4419
          %v4728 = vunpack.c.l.b16 %v4429
          %v4729 = vunpack.c.l.b16 %v4443
          %v4730 = vunpack.c.l.b16 %v4453
          %v4731 = vunpack.c.l.b16 %v4467
          %v4732 = vunpack.c.l.b16 %v4477
          %v4733 = vunpack.c.l.b16 %v4491
          %v4734 = vunpack.c.l.b16 %v4501
          %v4735 = vunpack.c.l.b16 %v4515
          %v4736 = vunpack.c.l.b16 %v4525
          %v4737 = vunpack.c.l.b16 %v4539
          %v4738 = vunpack.c.l.b16 %v4549
          %v4739 = vunpack.c.l.b16 %v4563
          %v4740 = vunpack.c.l.b16 %v4573
          %v4741 = vunpack.c.l.b16 %v4587
          %v4742 = vunpack.c.l.b16 %v4597
          %v4743 = vunpack.c.l.b16 %v4611
          %v4744 = vunpack.c.l.b16 %v4621
          %v4745 = vunpack.c.l.b16 %v4635
          %v4746 = vunpack.c.l.b16 %v4645
          %v4747 = vunpack.c.l.b16 %v4659
          %v4748 = vunpack.c.l.b16 %v4669
          %v4749 = vunpack.c.l.b16 %v4683
          %v4750 = vunpack.c.l.b16 %v4693
          %v4751 = vunpack.c.l.b16 %v4707
          %v4752 = vunpack.c.l.b16 %v4717
          %v4753 = vpack.c.b16 %v4722, %v4721
          %v4754 = vpack.c.b16 %v4724, %v4723
          %v4755 = vpack.c.b16 %v4726, %v4725
          %v4756 = vpack.c.b16 %v4728, %v4727
          %v4757 = vpack.c.b16 %v4730, %v4729
          %v4758 = vpack.c.b16 %v4732, %v4731
          %v4759 = vpack.c.b16 %v4734, %v4733
          %v4760 = vpack.c.b16 %v4736, %v4735
          %v4761 = vpack.c.b16 %v4738, %v4737
          %v4762 = vpack.c.b16 %v4740, %v4739
          %v4763 = vpack.c.b16 %v4742, %v4741
          %v4764 = vpack.c.b16 %v4744, %v4743
          %v4765 = vpack.c.b16 %v4746, %v4745
          %v4766 = vpack.c.b16 %v4748, %v4747
          %v4767 = vpack.c.b16 %v4750, %v4749
          %v4768 = vpack.c.b16 %v4752, %v4751
          %v4771 = vunpack.c.l.b16 %v4719
          %v4772 = vunpack.c.l.b16 %v4720
          %v4773 = vpack.c.b16 %v4772, %v4771
          %v4776 = vsel %vm1391, %v4753, 0
          %v4779 = vsel %vm1391, %v4754, 0
          %v4782 = vsel %vm1391, %v4755, 0
          %v4785 = vsel %vm1391, %v4756, 0
          %v4788 = vsel %vm1391, %v4757, 0
          %v4791 = vsel %vm1391, %v4758, 0
          %v4794 = vsel %vm1391, %v4759, 0
          %v4797 = vsel %vm1391, %v4760, 0
          %v4800 = vsel %vm1391, %v4761, 0
          %v4803 = vsel %vm1391, %v4762, 0
          %v4806 = vsel %vm1391, %v4763, 0
          %v4809 = vsel %vm1391, %v4764, 0
          %v4812 = vsel %vm1391, %v4765, 0
          %v4815 = vsel %vm1391, %v4766, 0
          %v4818 = vsel %vm1391, %v4767, 0
          %v4821 = vsel %vm1391, %v4768, 0
          %4823 = vmatprep.subr.bf16.mxu0 0
          %4824 = vmatpush1.bf16.msra.mxu0 %v4773
          %4825 = vmatprep.subr.bf16.mxu0 0
          %4826 = vmatpush1.bf16.msra.mxu0 0
          %4827 = vmatprep.subr.bf16.mxu0 0
          %4828 = vmatpush1.bf16.msra.mxu0 0
          %4829 = vmatprep.subr.bf16.mxu0 0
          %4830 = vmatpush1.bf16.msra.mxu0 0
          %4831 = vmatprep.subr.bf16.mxu0 0
          %4832 = vmatpush1.bf16.msra.mxu0 0
          %4833 = vmatprep.subr.bf16.mxu0 0
          %4834 = vmatpush1.bf16.msra.mxu0 0
          %4835 = vmatprep.subr.bf16.mxu0 0
          %4836 = vmatpush1.bf16.msra.mxu0 0
          %4837 = vmatprep.subr.bf16.mxu0 0
          %4838 = vmatpush1.bf16.msra.mxu0 0
          %4839 = vmatprep.subr.bf16.mxu0 0
          %4840 = vmatpush1.bf16.msra.mxu0 0
          %4841 = vmatprep.subr.bf16.mxu0 0
          %4842 = vmatpush1.bf16.msra.mxu0 0
          %4843 = vmatprep.subr.bf16.mxu0 0
          %4844 = vmatpush1.bf16.msra.mxu0 0
          %4845 = vmatprep.subr.bf16.mxu0 0
          %4846 = vmatpush1.bf16.msra.mxu0 0
          %4847 = vmatprep.subr.bf16.mxu0 0
          %4848 = vmatpush1.bf16.msra.mxu0 0
          %4849 = vmatprep.subr.bf16.mxu0 0
          %4850 = vmatpush1.bf16.msra.mxu0 0
          %4851 = vmatprep.subr.bf16.mxu0 0
          %4852 = vmatpush1.bf16.msra.mxu0 0
          %4853 = vmatprep.subr.bf16.mxu0 0
          %4854 = vmatpush1.bf16.msra.mxu0 0
          %4855 = vmatprep.mubr.bf16.mxu0 0
          %4856 = vmatmul.mubr.bf16.gmra.mrb[0].mxu0 %v4776
          %v4857 = vpop.f32.mrb[0].mxu0
          %v4858 = vadd.f32 0.0, %v4857
          %v4859 = vpop.f32.mrb[0].mxu0
          %v4860 = vpop.f32.mrb[0].mxu0
          %v4861 = vadd.f32 0.0, %v4860
          %v4862 = vpop.f32.mrb[0].mxu0
          %4863 = vmatprep.mubr.bf16.mxu0 0
          %4864 = vmatmul.mubr.bf16.gmra.mrb[0].mxu0 %v4779
          %v4865 = vpop.f32.mrb[0].mxu0
          %v4866 = vadd.f32 0.0, %v4865
          %v4867 = vpop.f32.mrb[0].mxu0
          %v4868 = vpop.f32.mrb[0].mxu0
          %v4869 = vadd.f32 0.0, %v4868
          %v4870 = vpop.f32.mrb[0].mxu0
          %4871 = vmatprep.mubr.bf16.mxu0 0
          %4872 = vmatmul.mubr.bf16.gmra.mrb[0].mxu0 %v4782
          %v4873 = vpop.f32.mrb[0].mxu0
          %v4874 = vadd.f32 0.0, %v4873
          %v4875 = vpop.f32.mrb[0].mxu0
          %v4876 = vpop.f32.mrb[0].mxu0
          %v4877 = vadd.f32 0.0, %v4876
          %v4878 = vpop.f32.mrb[0].mxu0
          %4879 = vmatprep.mubr.bf16.mxu0 0
          %4880 = vmatmul.mubr.bf16.gmra.mrb[0].mxu0 %v4785
          %v4881 = vpop.f32.mrb[0].mxu0
          %v4882 = vadd.f32 0.0, %v4881
          %v4883 = vpop.f32.mrb[0].mxu0
          %v4884 = vpop.f32.mrb[0].mxu0
          %v4885 = vadd.f32 0.0, %v4884
          %v4886 = vpop.f32.mrb[0].mxu0
          %4887 = vmatprep.mubr.bf16.mxu0 0
          %4888 = vmatmul.mubr.bf16.gmra.mrb[0].mxu0 %v4788
          %v4889 = vpop.f32.mrb[0].mxu0
          %v4890 = vadd.f32 0.0, %v4889
          %v4891 = vpop.f32.mrb[0].mxu0
          %v4892 = vpop.f32.mrb[0].mxu0
          %v4893 = vadd.f32 0.0, %v4892
          %v4894 = vpop.f32.mrb[0].mxu0
          %4895 = vmatprep.mubr.bf16.mxu0 0
          %4896 = vmatmul.mubr.bf16.gmra.mrb[0].mxu0 %v4791
          %v4897 = vpop.f32.mrb[0].mxu0
          %v4898 = vadd.f32 0.0, %v4897
          %v4899 = vpop.f32.mrb[0].mxu0
          %v4900 = vpop.f32.mrb[0].mxu0
          %v4901 = vadd.f32 0.0, %v4900
          %v4902 = vpop.f32.mrb[0].mxu0
          %4903 = vmatprep.mubr.bf16.mxu0 0
          %4904 = vmatmul.mubr.bf16.gmra.mrb[0].mxu0 %v4794
          %v4905 = vpop.f32.mrb[0].mxu0
          %v4906 = vadd.f32 0.0, %v4905
          %v4907 = vpop.f32.mrb[0].mxu0
          %v4908 = vpop.f32.mrb[0].mxu0
          %v4909 = vadd.f32 0.0, %v4908
          %v4910 = vpop.f32.mrb[0].mxu0
          %4911 = vmatprep.mubr.bf16.mxu0 0
          %4912 = vmatmul.mubr.bf16.gmra.mrb[0].mxu0 %v4797
          %v4913 = vpop.f32.mrb[0].mxu0
          %v4914 = vadd.f32 0.0, %v4913
          %v4915 = vpop.f32.mrb[0].mxu0
          %v4916 = vpop.f32.mrb[0].mxu0
          %v4917 = vadd.f32 0.0, %v4916
          %v4918 = vpop.f32.mrb[0].mxu0
          %4919 = vmatprep.mubr.bf16.mxu0 0
          %4920 = vmatmul.mubr.bf16.gmra.mrb[0].mxu0 %v4800
          %v4921 = vpop.f32.mrb[0].mxu0
          %v4922 = vadd.f32 0.0, %v4921
          %v4923 = vpop.f32.mrb[0].mxu0
          %v4924 = vpop.f32.mrb[0].mxu0
          %v4925 = vadd.f32 0.0, %v4924
          %v4926 = vpop.f32.mrb[0].mxu0
          %4927 = vmatprep.mubr.bf16.mxu0 0
          %4928 = vmatmul.mubr.bf16.gmra.mrb[0].mxu0 %v4803
          %v4929 = vpop.f32.mrb[0].mxu0
          %v4930 = vadd.f32 0.0, %v4929
          %v4931 = vpop.f32.mrb[0].mxu0
          %v4932 = vpop.f32.mrb[0].mxu0
          %v4933 = vadd.f32 0.0, %v4932
          %v4934 = vpop.f32.mrb[0].mxu0
          %4935 = vmatprep.mubr.bf16.mxu0 0
          %4936 = vmatmul.mubr.bf16.gmra.mrb[0].mxu0 %v4806
          %v4937 = vpop.f32.mrb[0].mxu0
          %v4938 = vadd.f32 0.0, %v4937
          %v4939 = vpop.f32.mrb[0].mxu0
          %v4940 = vpop.f32.mrb[0].mxu0
          %v4941 = vadd.f32 0.0, %v4940
          %v4942 = vpop.f32.mrb[0].mxu0
          %4943 = vmatprep.mubr.bf16.mxu0 0
          %4944 = vmatmul.mubr.bf16.gmra.mrb[0].mxu0 %v4809
          %v4945 = vpop.f32.mrb[0].mxu0
          %v4946 = vadd.f32 0.0, %v4945
          %v4947 = vpop.f32.mrb[0].mxu0
          %v4948 = vpop.f32.mrb[0].mxu0
          %v4949 = vadd.f32 0.0, %v4948
          %v4950 = vpop.f32.mrb[0].mxu0
          %4951 = vmatprep.mubr.bf16.mxu0 0
          %4952 = vmatmul.mubr.bf16.gmra.mrb[0].mxu0 %v4812
          %v4953 = vpop.f32.mrb[0].mxu0
          %v4954 = vadd.f32 0.0, %v4953
          %v4955 = vpop.f32.mrb[0].mxu0
          %v4956 = vpop.f32.mrb[0].mxu0
          %v4957 = vadd.f32 0.0, %v4956
          %v4958 = vpop.f32.mrb[0].mxu0
          %4959 = vmatprep.mubr.bf16.mxu0 0
          %4960 = vmatmul.mubr.bf16.gmra.mrb[0].mxu0 %v4815
          %v4961 = vpop.f32.mrb[0].mxu0
          %v4962 = vadd.f32 0.0, %v4961
          %v4963 = vpop.f32.mrb[0].mxu0
          %v4964 = vpop.f32.mrb[0].mxu0
          %v4965 = vadd.f32 0.0, %v4964
          %v4966 = vpop.f32.mrb[0].mxu0
          %4967 = vmatprep.mubr.bf16.mxu0 0
          %4968 = vmatmul.mubr.bf16.gmra.mrb[0].mxu0 %v4818
          %v4969 = vpop.f32.mrb[0].mxu0
          %v4970 = vadd.f32 0.0, %v4969
          %v4971 = vpop.f32.mrb[0].mxu0
          %v4972 = vpop.f32.mrb[0].mxu0
          %v4973 = vadd.f32 0.0, %v4972
          %v4974 = vpop.f32.mrb[0].mxu0
          %4975 = vmatprep.mubr.bf16.mxu0 0
          %4976 = vmatmul.mubr.bf16.gmra.mrb[0].mxu0 %v4821
          %v4977 = vpop.f32.mrb[0].mxu0
          %v4978 = vadd.f32 0.0, %v4977
          %v4979 = vpop.f32.mrb[0].mxu0
          %v4980 = vpop.f32.mrb[0].mxu0
          %v4981 = vadd.f32 0.0, %v4980
          %v4982 = vpop.f32.mrb[0].mxu0
          %4983 = vdwg.mxu0
          %v4984 = vadd.f32 %v4254, %v4858
          %v4985 = vadd.f32 %v4255, %v4861
          %v4986 = vadd.f32 %v4256, %v4866
          %v4987 = vadd.f32 %v4257, %v4869
          %v4988 = vadd.f32 %v4258, %v4874
          %v4989 = vadd.f32 %v4259, %v4877
          %v4990 = vadd.f32 %v4260, %v4882
          %v4991 = vadd.f32 %v4261, %v4885
          %v4992 = vadd.f32 %v4262, %v4890
          %v4993 = vadd.f32 %v4263, %v4893
          %v4994 = vadd.f32 %v4264, %v4898
          %v4995 = vadd.f32 %v4265, %v4901
          %v4996 = vadd.f32 %v4266, %v4906
          %v4997 = vadd.f32 %v4267, %v4909
          %v4998 = vadd.f32 %v4268, %v4914
          %v4999 = vadd.f32 %v4269, %v4917
          %v5000 = vadd.f32 %v4270, %v4922
          %v5001 = vadd.f32 %v4271, %v4925
          %v5002 = vadd.f32 %v4272, %v4930
          %v5003 = vadd.f32 %v4273, %v4933
          %v5004 = vadd.f32 %v4274, %v4938
          %v5005 = vadd.f32 %v4275, %v4941
          %v5006 = vadd.f32 %v4276, %v4946
          %v5007 = vadd.f32 %v4277, %v4949
          %v5008 = vadd.f32 %v4278, %v4954
          %v5009 = vadd.f32 %v4279, %v4957
          %v5010 = vadd.f32 %v4280, %v4962
          %v5011 = vadd.f32 %v4281, %v4965
          %v5012 = vadd.f32 %v4282, %v4970
          %v5013 = vadd.f32 %v4283, %v4973
          %v5014 = vadd.f32 %v4284, %v4978
          %v5015 = vadd.f32 %v4285, %v4981
          %v5016 = vld [vmem:[%s3923] sm:$0xe]
          %v5017 = vld [vmem:[%s3923 + $0xc] sm:$0xe]
          %v5018 = vld [vmem:[%s3923 + $0x18] sm:$0xe]
          %v5019 = vld [vmem:[%s3923 + $0x24] sm:$0xe]
          %v5020 = vld [vmem:[%s3923 + $0x30] sm:$0xe]
          %v5021 = vld [vmem:[%s3923 + $0x3c] sm:$0xe]
          %v5022 = vld [vmem:[%s3923 + $0x48] sm:$0xe]
          %v5023 = vld [vmem:[%s3923 + $0x54] sm:$0xe]
          %v5024 = vld [vmem:[%s3923 + $0x60] sm:$0xe]
          %v5025 = vld [vmem:[%s3923 + $0x6c] sm:$0xe]
          %v5026 = vld [vmem:[%s3923 + $0x78] sm:$0xe]
          %v5027 = vld [vmem:[%s3923 + $0x84] sm:$0xe]
          %v5028 = vld [vmem:[%s3923 + $0x90] sm:$0xe]
          %v5029 = vld [vmem:[%s3923 + $0x9c] sm:$0xe]
          %v5030 = vld [vmem:[%s3923 + $0xa8] sm:$0xe]
          %v5031 = vld [vmem:[%s3923 + $0xb4] sm:$0xe]
          %v5080 = vrot.slane %v5016, 5
          %v5081 = vrot.slane %v5080, 4
          %v5082 = vrot.slane %v4287, 5
          %v5083 = vsel %vm1946, %v5081, %v5082
          %v5084 = vrot.slane %v5082, 4
          %v5085 = vrot.slane %v4288, 5
          %v5086 = vsel %vm1946, %v5084, %v5085
          %v5087 = vrot.slane %v5017, 5
          %v5088 = vrot.slane %v5087, 4
          %v5089 = vrot.slane %v4290, 5
          %v5090 = vsel %vm1946, %v5088, %v5089
          %v5091 = vrot.slane %v5089, 4
          %v5092 = vrot.slane %v4291, 5
          %v5093 = vsel %vm1946, %v5091, %v5092
          %v5094 = vrot.slane %v5018, 5
          %v5095 = vrot.slane %v5094, 4
          %v5096 = vrot.slane %v4293, 5
          %v5097 = vsel %vm1946, %v5095, %v5096
          %v5098 = vrot.slane %v5096, 4
          %v5099 = vrot.slane %v4294, 5
          %v5100 = vsel %vm1946, %v5098, %v5099
          %v5101 = vrot.slane %v5019, 5
          %v5102 = vrot.slane %v5101, 4
          %v5103 = vrot.slane %v4296, 5
          %v5104 = vsel %vm1946, %v5102, %v5103
          %v5105 = vrot.slane %v5103, 4
          %v5106 = vrot.slane %v4297, 5
          %v5107 = vsel %vm1946, %v5105, %v5106
          %v5108 = vrot.slane %v5020, 5
          %v5109 = vrot.slane %v5108, 4
          %v5110 = vrot.slane %v4299, 5
          %v5111 = vsel %vm1946, %v5109, %v5110
          %v5112 = vrot.slane %v5110, 4
          %v5113 = vrot.slane %v4300, 5
          %v5114 = vsel %vm1946, %v5112, %v5113
          %v5115 = vrot.slane %v5021, 5
          %v5116 = vrot.slane %v5115, 4
          %v5117 = vrot.slane %v4302, 5
          %v5118 = vsel %vm1946, %v5116, %v5117
          %v5119 = vrot.slane %v5117, 4
          %v5120 = vrot.slane %v4303, 5
          %v5121 = vsel %vm1946, %v5119, %v5120
          %v5122 = vrot.slane %v5022, 5
          %v5123 = vrot.slane %v5122, 4
          %v5124 = vrot.slane %v4305, 5
          %v5125 = vsel %vm1946, %v5123, %v5124
          %v5126 = vrot.slane %v5124, 4
          %v5127 = vrot.slane %v4306, 5
          %v5128 = vsel %vm1946, %v5126, %v5127
          %v5129 = vrot.slane %v5023, 5
          %v5130 = vrot.slane %v5129, 4
          %v5131 = vrot.slane %v4308, 5
          %v5132 = vsel %vm1946, %v5130, %v5131
          %v5133 = vrot.slane %v5131, 4
          %v5134 = vrot.slane %v4309, 5
          %v5135 = vsel %vm1946, %v5133, %v5134
          %v5136 = vrot.slane %v5024, 5
          %v5137 = vrot.slane %v5136, 4
          %v5138 = vrot.slane %v4311, 5
          %v5139 = vsel %vm1946, %v5137, %v5138
          %v5140 = vrot.slane %v5138, 4
          %v5141 = vrot.slane %v4312, 5
          %v5142 = vsel %vm1946, %v5140, %v5141
          %v5143 = vrot.slane %v5025, 5
          %v5144 = vrot.slane %v5143, 4
          %v5145 = vrot.slane %v4314, 5
          %v5146 = vsel %vm1946, %v5144, %v5145
          %v5147 = vrot.slane %v5145, 4
          %v5148 = vrot.slane %v4315, 5
          %v5149 = vsel %vm1946, %v5147, %v5148
          %v5150 = vrot.slane %v5026, 5
          %v5151 = vrot.slane %v5150, 4
          %v5152 = vrot.slane %v4317, 5
          %v5153 = vsel %vm1946, %v5151, %v5152
          %v5154 = vrot.slane %v5152, 4
          %v5155 = vrot.slane %v4318, 5
          %v5156 = vsel %vm1946, %v5154, %v5155
          %v5157 = vrot.slane %v5027, 5
          %v5158 = vrot.slane %v5157, 4
          %v5159 = vrot.slane %v4320, 5
          %v5160 = vsel %vm1946, %v5158, %v5159
          %v5161 = vrot.slane %v5159, 4
          %v5162 = vrot.slane %v4321, 5
          %v5163 = vsel %vm1946, %v5161, %v5162
          %v5164 = vrot.slane %v5028, 5
          %v5165 = vrot.slane %v5164, 4
          %v5166 = vrot.slane %v4323, 5
          %v5167 = vsel %vm1946, %v5165, %v5166
          %v5168 = vrot.slane %v5166, 4
          %v5169 = vrot.slane %v4324, 5
          %v5170 = vsel %vm1946, %v5168, %v5169
          %v5171 = vrot.slane %v5029, 5
          %v5172 = vrot.slane %v5171, 4
          %v5173 = vrot.slane %v4326, 5
          %v5174 = vsel %vm1946, %v5172, %v5173
          %v5175 = vrot.slane %v5173, 4
          %v5176 = vrot.slane %v4327, 5
          %v5177 = vsel %vm1946, %v5175, %v5176
          %v5178 = vrot.slane %v5030, 5
          %v5179 = vrot.slane %v5178, 4
          %v5180 = vrot.slane %v4329, 5
          %v5181 = vsel %vm1946, %v5179, %v5180
          %v5182 = vrot.slane %v5180, 4
          %v5183 = vrot.slane %v4330, 5
          %v5184 = vsel %vm1946, %v5182, %v5183
          %v5185 = vrot.slane %v5031, 5
          %v5186 = vrot.slane %v5185, 4
          %v5187 = vrot.slane %v4332, 5
          %v5188 = vsel %vm1946, %v5186, %v5187
          %v5189 = vrot.slane %v5187, 4
          %v5190 = vrot.slane %v4333, 5
          %v5191 = vsel %vm1946, %v5189, %v5190
          %s5192 = scalar_lea.vmem %s1, 64
          %v5193 = vld [vmem:[%s5192] sm:$0xf]
          %v5194 = vld [vmem:[%s5192 + $0x4] sm:$0xf]
          %v5195 = vunpack.c.l.b16 %v5083
          %v5196 = vunpack.c.l.b16 %v5086
          %v5197 = vunpack.c.l.b16 %v5090
          %v5198 = vunpack.c.l.b16 %v5093
          %v5199 = vunpack.c.l.b16 %v5097
          %v5200 = vunpack.c.l.b16 %v5100
          %v5201 = vunpack.c.l.b16 %v5104
          %v5202 = vunpack.c.l.b16 %v5107
          %v5203 = vunpack.c.l.b16 %v5111
          %v5204 = vunpack.c.l.b16 %v5114
          %v5205 = vunpack.c.l.b16 %v5118
          %v5206 = vunpack.c.l.b16 %v5121
          %v5207 = vunpack.c.l.b16 %v5125
          %v5208 = vunpack.c.l.b16 %v5128
          %v5209 = vunpack.c.l.b16 %v5132
          %v5210 = vunpack.c.l.b16 %v5135
          %v5211 = vunpack.c.l.b16 %v5139
          %v5212 = vunpack.c.l.b16 %v5142
          %v5213 = vunpack.c.l.b16 %v5146
          %v5214 = vunpack.c.l.b16 %v5149
          %v5215 = vunpack.c.l.b16 %v5153
          %v5216 = vunpack.c.l.b16 %v5156
          %v5217 = vunpack.c.l.b16 %v5160
          %v5218 = vunpack.c.l.b16 %v5163
          %v5219 = vunpack.c.l.b16 %v5167
          %v5220 = vunpack.c.l.b16 %v5170
          %v5221 = vunpack.c.l.b16 %v5174
          %v5222 = vunpack.c.l.b16 %v5177
          %v5223 = vunpack.c.l.b16 %v5181
          %v5224 = vunpack.c.l.b16 %v5184
          %v5225 = vunpack.c.l.b16 %v5188
          %v5226 = vunpack.c.l.b16 %v5191
          %v5227 = vpack.c.b16 %v5196, %v5195
          %v5228 = vpack.c.b16 %v5198, %v5197
          %v5229 = vpack.c.b16 %v5200, %v5199
          %v5230 = vpack.c.b16 %v5202, %v5201
          %v5231 = vpack.c.b16 %v5204, %v5203
          %v5232 = vpack.c.b16 %v5206, %v5205
          %v5233 = vpack.c.b16 %v5208, %v5207
          %v5234 = vpack.c.b16 %v5210, %v5209
          %v5235 = vpack.c.b16 %v5212, %v5211
          %v5236 = vpack.c.b16 %v5214, %v5213
          %v5237 = vpack.c.b16 %v5216, %v5215
          %v5238 = vpack.c.b16 %v5218, %v5217
          %v5239 = vpack.c.b16 %v5220, %v5219
          %v5240 = vpack.c.b16 %v5222, %v5221
          %v5241 = vpack.c.b16 %v5224, %v5223
          %v5242 = vpack.c.b16 %v5226, %v5225
          %v5245 = vunpack.c.l.b16 %v5193
          %v5246 = vunpack.c.l.b16 %v5194
          %v5247 = vpack.c.b16 %v5246, %v5245
          %v5250 = vsel %vm1391, %v5227, 0
          %v5253 = vsel %vm1391, %v5228, 0
          %v5256 = vsel %vm1391, %v5229, 0
          %v5259 = vsel %vm1391, %v5230, 0
          %v5262 = vsel %vm1391, %v5231, 0
          %v5265 = vsel %vm1391, %v5232, 0
          %v5268 = vsel %vm1391, %v5233, 0
          %v5271 = vsel %vm1391, %v5234, 0
          %v5274 = vsel %vm1391, %v5235, 0
          %v5277 = vsel %vm1391, %v5236, 0
          %v5280 = vsel %vm1391, %v5237, 0
          %v5283 = vsel %vm1391, %v5238, 0
          %v5286 = vsel %vm1391, %v5239, 0
          %v5289 = vsel %vm1391, %v5240, 0
          %v5292 = vsel %vm1391, %v5241, 0
          %v5295 = vsel %vm1391, %v5242, 0
          %5297 = vmatprep.subr.bf16.mxu0 0
          %5298 = vmatpush1.bf16.msra.mxu0 %v5247
          %5299 = vmatprep.subr.bf16.mxu0 0
          %5300 = vmatpush1.bf16.msra.mxu0 0
          %5301 = vmatprep.subr.bf16.mxu0 0
          %5302 = vmatpush1.bf16.msra.mxu0 0
          %5303 = vmatprep.subr.bf16.mxu0 0
          %5304 = vmatpush1.bf16.msra.mxu0 0
          %5305 = vmatprep.subr.bf16.mxu0 0
          %5306 = vmatpush1.bf16.msra.mxu0 0
          %5307 = vmatprep.subr.bf16.mxu0 0
          %5308 = vmatpush1.bf16.msra.mxu0 0
          %5309 = vmatprep.subr.bf16.mxu0 0
          %5310 = vmatpush1.bf16.msra.mxu0 0
          %5311 = vmatprep.subr.bf16.mxu0 0
          %5312 = vmatpush1.bf16.msra.mxu0 0
          %5313 = vmatprep.subr.bf16.mxu0 0
          %5314 = vmatpush1.bf16.msra.mxu0 0
          %5315 = vmatprep.subr.bf16.mxu0 0
          %5316 = vmatpush1.bf16.msra.mxu0 0
          %5317 = vmatprep.subr.bf16.mxu0 0
          %5318 = vmatpush1.bf16.msra.mxu0 0
          %5319 = vmatprep.subr.bf16.mxu0 0
          %5320 = vmatpush1.bf16.msra.mxu0 0
          %5321 = vmatprep.subr.bf16.mxu0 0
          %5322 = vmatpush1.bf16.msra.mxu0 0
          %5323 = vmatprep.subr.bf16.mxu0 0
          %5324 = vmatpush1.bf16.msra.mxu0 0
          %5325 = vmatprep.subr.bf16.mxu0 0
          %5326 = vmatpush1.bf16.msra.mxu0 0
          %5327 = vmatprep.subr.bf16.mxu0 0
          %5328 = vmatpush1.bf16.msra.mxu0 0
          %5329 = vmatprep.mubr.bf16.mxu0 0
          %5330 = vmatmul.mubr.bf16.gmra.mrb[0].mxu0 %v5250
          %v5331 = vpop.f32.mrb[0].mxu0
          %v5332 = vadd.f32 0.0, %v5331
          %v5333 = vpop.f32.mrb[0].mxu0
          %v5334 = vpop.f32.mrb[0].mxu0
          %v5335 = vadd.f32 0.0, %v5334
          %v5336 = vpop.f32.mrb[0].mxu0
          %5337 = vmatprep.mubr.bf16.mxu0 0
          %5338 = vmatmul.mubr.bf16.gmra.mrb[0].mxu0 %v5253
          %v5339 = vpop.f32.mrb[0].mxu0
          %v5340 = vadd.f32 0.0, %v5339
          %v5341 = vpop.f32.mrb[0].mxu0
          %v5342 = vpop.f32.mrb[0].mxu0
          %v5343 = vadd.f32 0.0, %v5342
          %v5344 = vpop.f32.mrb[0].mxu0
          %5345 = vmatprep.mubr.bf16.mxu0 0
          %5346 = vmatmul.mubr.bf16.gmra.mrb[0].mxu0 %v5256
          %v5347 = vpop.f32.mrb[0].mxu0
          %v5348 = vadd.f32 0.0, %v5347
          %v5349 = vpop.f32.mrb[0].mxu0
          %v5350 = vpop.f32.mrb[0].mxu0
          %v5351 = vadd.f32 0.0, %v5350
          %v5352 = vpop.f32.mrb[0].mxu0
          %5353 = vmatprep.mubr.bf16.mxu0 0
          %5354 = vmatmul.mubr.bf16.gmra.mrb[0].mxu0 %v5259
          %v5355 = vpop.f32.mrb[0].mxu0
          %v5356 = vadd.f32 0.0, %v5355
          %v5357 = vpop.f32.mrb[0].mxu0
          %v5358 = vpop.f32.mrb[0].mxu0
          %v5359 = vadd.f32 0.0, %v5358
          %v5360 = vpop.f32.mrb[0].mxu0
          %5361 = vmatprep.mubr.bf16.mxu0 0
          %5362 = vmatmul.mubr.bf16.gmra.mrb[0].mxu0 %v5262
          %v5363 = vpop.f32.mrb[0].mxu0
          %v5364 = vadd.f32 0.0, %v5363
          %v5365 = vpop.f32.mrb[0].mxu0
          %v5366 = vpop.f32.mrb[0].mxu0
          %v5367 = vadd.f32 0.0, %v5366
          %v5368 = vpop.f32.mrb[0].mxu0
          %5369 = vmatprep.mubr.bf16.mxu0 0
          %5370 = vmatmul.mubr.bf16.gmra.mrb[0].mxu0 %v5265
          %v5371 = vpop.f32.mrb[0].mxu0
          %v5372 = vadd.f32 0.0, %v5371
          %v5373 = vpop.f32.mrb[0].mxu0
          %v5374 = vpop.f32.mrb[0].mxu0
          %v5375 = vadd.f32 0.0, %v5374
          %v5376 = vpop.f32.mrb[0].mxu0
          %5377 = vmatprep.mubr.bf16.mxu0 0
          %5378 = vmatmul.mubr.bf16.gmra.mrb[0].mxu0 %v5268
          %v5379 = vpop.f32.mrb[0].mxu0
          %v5380 = vadd.f32 0.0, %v5379
          %v5381 = vpop.f32.mrb[0].mxu0
          %v5382 = vpop.f32.mrb[0].mxu0
          %v5383 = vadd.f32 0.0, %v5382
          %v5384 = vpop.f32.mrb[0].mxu0
          %5385 = vmatprep.mubr.bf16.mxu0 0
          %5386 = vmatmul.mubr.bf16.gmra.mrb[0].mxu0 %v5271
          %v5387 = vpop.f32.mrb[0].mxu0
          %v5388 = vadd.f32 0.0, %v5387
          %v5389 = vpop.f32.mrb[0].mxu0
          %v5390 = vpop.f32.mrb[0].mxu0
          %v5391 = vadd.f32 0.0, %v5390
          %v5392 = vpop.f32.mrb[0].mxu0
          %5393 = vmatprep.mubr.bf16.mxu0 0
          %5394 = vmatmul.mubr.bf16.gmra.mrb[0].mxu0 %v5274
          %v5395 = vpop.f32.mrb[0].mxu0
          %v5396 = vadd.f32 0.0, %v5395
          %v5397 = vpop.f32.mrb[0].mxu0
          %v5398 = vpop.f32.mrb[0].mxu0
          %v5399 = vadd.f32 0.0, %v5398
          %v5400 = vpop.f32.mrb[0].mxu0
          %5401 = vmatprep.mubr.bf16.mxu0 0
          %5402 = vmatmul.mubr.bf16.gmra.mrb[0].mxu0 %v5277
          %v5403 = vpop.f32.mrb[0].mxu0
          %v5404 = vadd.f32 0.0, %v5403
          %v5405 = vpop.f32.mrb[0].mxu0
          %v5406 = vpop.f32.mrb[0].mxu0
          %v5407 = vadd.f32 0.0, %v5406
          %v5408 = vpop.f32.mrb[0].mxu0
          %5409 = vmatprep.mubr.bf16.mxu0 0
          %5410 = vmatmul.mubr.bf16.gmra.mrb[0].mxu0 %v5280
          %v5411 = vpop.f32.mrb[0].mxu0
          %v5412 = vadd.f32 0.0, %v5411
          %v5413 = vpop.f32.mrb[0].mxu0
          %v5414 = vpop.f32.mrb[0].mxu0
          %v5415 = vadd.f32 0.0, %v5414
          %v5416 = vpop.f32.mrb[0].mxu0
          %5417 = vmatprep.mubr.bf16.mxu0 0
          %5418 = vmatmul.mubr.bf16.gmra.mrb[0].mxu0 %v5283
          %v5419 = vpop.f32.mrb[0].mxu0
          %v5420 = vadd.f32 0.0, %v5419
          %v5421 = vpop.f32.mrb[0].mxu0
          %v5422 = vpop.f32.mrb[0].mxu0
          %v5423 = vadd.f32 0.0, %v5422
          %v5424 = vpop.f32.mrb[0].mxu0
          %5425 = vmatprep.mubr.bf16.mxu0 0
          %5426 = vmatmul.mubr.bf16.gmra.mrb[0].mxu0 %v5286
          %v5427 = vpop.f32.mrb[0].mxu0
          %v5428 = vadd.f32 0.0, %v5427
          %v5429 = vpop.f32.mrb[0].mxu0
          %v5430 = vpop.f32.mrb[0].mxu0
          %v5431 = vadd.f32 0.0, %v5430
          %v5432 = vpop.f32.mrb[0].mxu0
          %5433 = vmatprep.mubr.bf16.mxu0 0
          %5434 = vmatmul.mubr.bf16.gmra.mrb[0].mxu0 %v5289
          %v5435 = vpop.f32.mrb[0].mxu0
          %v5436 = vadd.f32 0.0, %v5435
          %v5437 = vpop.f32.mrb[0].mxu0
          %v5438 = vpop.f32.mrb[0].mxu0
          %v5439 = vadd.f32 0.0, %v5438
          %v5440 = vpop.f32.mrb[0].mxu0
          %5441 = vmatprep.mubr.bf16.mxu0 0
          %5442 = vmatmul.mubr.bf16.gmra.mrb[0].mxu0 %v5292
          %v5443 = vpop.f32.mrb[0].mxu0
          %v5444 = vadd.f32 0.0, %v5443
          %v5445 = vpop.f32.mrb[0].mxu0
          %v5446 = vpop.f32.mrb[0].mxu0
          %v5447 = vadd.f32 0.0, %v5446
          %v5448 = vpop.f32.mrb[0].mxu0
          %5449 = vmatprep.mubr.bf16.mxu0 0
          %5450 = vmatmul.mubr.bf16.gmra.mrb[0].mxu0 %v5295
          %v5451 = vpop.f32.mrb[0].mxu0
          %v5452 = vadd.f32 0.0, %v5451
          %v5453 = vpop.f32.mrb[0].mxu0
          %v5454 = vpop.f32.mrb[0].mxu0
          %v5455 = vadd.f32 0.0, %v5454
          %v5456 = vpop.f32.mrb[0].mxu0
          %5457 = vdwg.mxu0
          %v5458 = vadd.f32 %v4984, %v5332
          %v5459 = vadd.f32 %v4985, %v5335
          %v5460 = vadd.f32 %v4986, %v5340
          %v5461 = vadd.f32 %v4987, %v5343
          %v5462 = vadd.f32 %v4988, %v5348
          %v5463 = vadd.f32 %v4989, %v5351
          %v5464 = vadd.f32 %v4990, %v5356
          %v5465 = vadd.f32 %v4991, %v5359
          %v5466 = vadd.f32 %v4992, %v5364
          %v5467 = vadd.f32 %v4993, %v5367
          %v5468 = vadd.f32 %v4994, %v5372
          %v5469 = vadd.f32 %v4995, %v5375
          %v5470 = vadd.f32 %v4996, %v5380
          %v5471 = vadd.f32 %v4997, %v5383
          %v5472 = vadd.f32 %v4998, %v5388
          %v5473 = vadd.f32 %v4999, %v5391
          %v5474 = vadd.f32 %v5000, %v5396
          %v5475 = vadd.f32 %v5001, %v5399
          %v5476 = vadd.f32 %v5002, %v5404
          %v5477 = vadd.f32 %v5003, %v5407
          %v5478 = vadd.f32 %v5004, %v5412
          %v5479 = vadd.f32 %v5005, %v5415
          %v5480 = vadd.f32 %v5006, %v5420
          %v5481 = vadd.f32 %v5007, %v5423
          %v5482 = vadd.f32 %v5008, %v5428
          %v5483 = vadd.f32 %v5009, %v5431
          %v5484 = vadd.f32 %v5010, %v5436
          %v5485 = vadd.f32 %v5011, %v5439
          %v5486 = vadd.f32 %v5012, %v5444
          %v5487 = vadd.f32 %v5013, %v5447
          %v5488 = vadd.f32 %v5014, %v5452
          %v5489 = vadd.f32 %v5015, %v5455
          %vm5490 = vcmask 523264
          %5491 = vst.msk [vmem:[#allocation3] sm:$0xff] %vm5490, %v5458
          %5492 = vst.msk [vmem:[#allocation3 + $0x8] sm:$0xff] %vm5490, %v5459
          %5493 = vst.msk [vmem:[#allocation3 + $0x10] sm:$0xff] %vm5490, %v5460
          %5494 = vst.msk [vmem:[#allocation3 + $0x18] sm:$0xff] %vm5490, %v5461
          %5495 = vst.msk [vmem:[#allocation3 + $0x20] sm:$0xff] %vm5490, %v5462
          %5496 = vst.msk [vmem:[#allocation3 + $0x28] sm:$0xff] %vm5490, %v5463
          %5497 = vst.msk [vmem:[#allocation3 + $0x30] sm:$0xff] %vm5490, %v5464
          %5498 = vst.msk [vmem:[#allocation3 + $0x38] sm:$0xff] %vm5490, %v5465
          %5499 = vst.msk [vmem:[#allocation3 + $0x40] sm:$0xff] %vm5490, %v5466
          %5500 = vst.msk [vmem:[#allocation3 + $0x48] sm:$0xff] %vm5490, %v5467
          %5501 = vst.msk [vmem:[#allocation3 + $0x50] sm:$0xff] %vm5490, %v5468
          %5502 = vst.msk [vmem:[#allocation3 + $0x58] sm:$0xff] %vm5490, %v5469
          %5503 = vst.msk [vmem:[#allocation3 + $0x60] sm:$0xff] %vm5490, %v5470
          %5504 = vst.msk [vmem:[#allocation3 + $0x68] sm:$0xff] %vm5490, %v5471
          %5505 = vst.msk [vmem:[#allocation3 + $0x70] sm:$0xff] %vm5490, %v5472
          %5506 = vst.msk [vmem:[#allocation3 + $0x78] sm:$0xff] %vm5490, %v5473
          %5507 = vst.msk [vmem:[#allocation3 + $0x80] sm:$0xff] %vm5490, %v5474
          %5508 = vst.msk [vmem:[#allocation3 + $0x88] sm:$0xff] %vm5490, %v5475
          %5509 = vst.msk [vmem:[#allocation3 + $0x90] sm:$0xff] %vm5490, %v5476
          %5510 = vst.msk [vmem:[#allocation3 + $0x98] sm:$0xff] %vm5490, %v5477
          %5511 = vst.msk [vmem:[#allocation3 + $0xa0] sm:$0xff] %vm5490, %v5478
          %5512 = vst.msk [vmem:[#allocation3 + $0xa8] sm:$0xff] %vm5490, %v5479
          %5513 = vst.msk [vmem:[#allocation3 + $0xb0] sm:$0xff] %vm5490, %v5480
          %5514 = vst.msk [vmem:[#allocation3 + $0xb8] sm:$0xff] %vm5490, %v5481
          %5515 = vst.msk [vmem:[#allocation3 + $0xc0] sm:$0xff] %vm5490, %v5482
          %5516 = vst.msk [vmem:[#allocation3 + $0xc8] sm:$0xff] %vm5490, %v5483
          %5517 = vst.msk [vmem:[#allocation3 + $0xd0] sm:$0xff] %vm5490, %v5484
          %5518 = vst.msk [vmem:[#allocation3 + $0xd8] sm:$0xff] %vm5490, %v5485
          %5519 = vst.msk [vmem:[#allocation3 + $0xe0] sm:$0xff] %vm5490, %v5486
          %5520 = vst.msk [vmem:[#allocation3 + $0xe8] sm:$0xff] %vm5490, %v5487
          %5521 = vst.msk [vmem:[#allocation3 + $0xf0] sm:$0xff] %vm5490, %v5488
          %5522 = vst.msk [vmem:[#allocation3 + $0xf8] sm:$0xff] %vm5490, %v5489
        $region44: #{tpu_custom_call.1} parent=35 // pred_fallthru
          _
        %p5523 = scmp.gt.s32.totalorder %s31, 0
        // Predicated region
        $region45: #{tpu_custom_call.1} parent=35 // pred_check
          %p5524 = pneg %p5523
        $region46: #{tpu_custom_call.1} parent=35 // pred_check_branch
          %5526 = sbr.rel (%p5524) target = $region48
        $region47: #{tpu_custom_call.1} parent=35 // pred_region
          %s5527 = ssub.s32 %s31, 1
          %v5528 = vld [vmem:[#allocation2] sm:$0xf]
          %v5529 = vld [vmem:[#allocation2 + $0x4] sm:$0xf]
          %v5530 = vld [vmem:[#allocation2 + $0x8] sm:$0x1]
          %v5531 = vld [vmem:[#allocation2 + $0xc] sm:$0xf]
          %v5532 = vld [vmem:[#allocation2 + $0x10] sm:$0xf]
          %v5533 = vld [vmem:[#allocation2 + $0x14] sm:$0x1]
          %v5534 = vld [vmem:[#allocation2 + $0x18] sm:$0xf]
          %v5535 = vld [vmem:[#allocation2 + $0x1c] sm:$0xf]
          %v5536 = vld [vmem:[#allocation2 + $0x20] sm:$0x1]
          %v5537 = vld [vmem:[#allocation2 + $0x24] sm:$0xf]
          %v5538 = vld [vmem:[#allocation2 + $0x28] sm:$0xf]
          %v5539 = vld [vmem:[#allocation2 + $0x2c] sm:$0x1]
          %v5540 = vld [vmem:[#allocation2 + $0x30] sm:$0xf]
          %v5541 = vld [vmem:[#allocation2 + $0x34] sm:$0xf]
          %v5542 = vld [vmem:[#allocation2 + $0x38] sm:$0x1]
          %v5543 = vld [vmem:[#allocation2 + $0x3c] sm:$0xf]
          %v5544 = vld [vmem:[#allocation2 + $0x40] sm:$0xf]
          %v5545 = vld [vmem:[#allocation2 + $0x44] sm:$0x1]
          %v5546 = vld [vmem:[#allocation2 + $0x48] sm:$0xf]
          %v5547 = vld [vmem:[#allocation2 + $0x4c] sm:$0xf]
          %v5548 = vld [vmem:[#allocation2 + $0x50] sm:$0x1]
          %v5549 = vld [vmem:[#allocation2 + $0x54] sm:$0xf]
          %v5550 = vld [vmem:[#allocation2 + $0x58] sm:$0xf]
          %v5551 = vld [vmem:[#allocation2 + $0x5c] sm:$0x1]
          %v5552 = vld [vmem:[#allocation2 + $0x60] sm:$0xf]
          %v5553 = vld [vmem:[#allocation2 + $0x64] sm:$0xf]
          %v5554 = vld [vmem:[#allocation2 + $0x68] sm:$0x1]
          %v5555 = vld [vmem:[#allocation2 + $0x6c] sm:$0xf]
          %v5556 = vld [vmem:[#allocation2 + $0x70] sm:$0xf]
          %v5557 = vld [vmem:[#allocation2 + $0x74] sm:$0x1]
          %v5558 = vld [vmem:[#allocation2 + $0x78] sm:$0xf]
          %v5559 = vld [vmem:[#allocation2 + $0x7c] sm:$0xf]
          %v5560 = vld [vmem:[#allocation2 + $0x80] sm:$0x1]
          %v5561 = vld [vmem:[#allocation2 + $0x84] sm:$0xf]
          %v5562 = vld [vmem:[#allocation2 + $0x88] sm:$0xf]
          %v5563 = vld [vmem:[#allocation2 + $0x8c] sm:$0x1]
          %v5564 = vld [vmem:[#allocation2 + $0x90] sm:$0xf]
          %v5565 = vld [vmem:[#allocation2 + $0x94] sm:$0xf]
          %v5566 = vld [vmem:[#allocation2 + $0x98] sm:$0x1]
          %v5567 = vld [vmem:[#allocation2 + $0x9c] sm:$0xf]
          %v5568 = vld [vmem:[#allocation2 + $0xa0] sm:$0xf]
          %v5569 = vld [vmem:[#allocation2 + $0xa4] sm:$0x1]
          %v5570 = vld [vmem:[#allocation2 + $0xa8] sm:$0xf]
          %v5571 = vld [vmem:[#allocation2 + $0xac] sm:$0xf]
          %v5572 = vld [vmem:[#allocation2 + $0xb0] sm:$0x1]
          %v5573 = vld [vmem:[#allocation2 + $0xb4] sm:$0xf]
          %v5574 = vld [vmem:[#allocation2 + $0xb8] sm:$0xf]
          %v5575 = vld [vmem:[#allocation2 + $0xbc] sm:$0x1]
          %s5576 = scalar_lea.vmem [#allocation2], 12
          %v5577 = vld [vmem:[%s5576] sm:$0xf]
          %v5578 = vld [vmem:[%s5576 + $0x4] sm:$0xf]
          %v5579 = vld [vmem:[%s5576 + $0x8] sm:$0x1]
          %v5580 = vld [vmem:[%s5576 + $0xc] sm:$0xf]
          %v5581 = vld [vmem:[%s5576 + $0x10] sm:$0xf]
          %v5582 = vld [vmem:[%s5576 + $0x14] sm:$0x1]
          %v5583 = vld [vmem:[%s5576 + $0x18] sm:$0xf]
          %v5584 = vld [vmem:[%s5576 + $0x1c] sm:$0xf]
          %v5585 = vld [vmem:[%s5576 + $0x20] sm:$0x1]
          %v5586 = vld [vmem:[%s5576 + $0x24] sm:$0xf]
          %v5587 = vld [vmem:[%s5576 + $0x28] sm:$0xf]
          %v5588 = vld [vmem:[%s5576 + $0x2c] sm:$0x1]
          %v5589 = vld [vmem:[%s5576 + $0x30] sm:$0xf]
          %v5590 = vld [vmem:[%s5576 + $0x34] sm:$0xf]
          %v5591 = vld [vmem:[%s5576 + $0x38] sm:$0x1]
          %v5592 = vld [vmem:[%s5576 + $0x3c] sm:$0xf]
          %v5593 = vld [vmem:[%s5576 + $0x40] sm:$0xf]
          %v5594 = vld [vmem:[%s5576 + $0x44] sm:$0x1]
          %v5595 = vld [vmem:[%s5576 + $0x48] sm:$0xf]
          %v5596 = vld [vmem:[%s5576 + $0x4c] sm:$0xf]
          %v5597 = vld [vmem:[%s5576 + $0x50] sm:$0x1]
          %v5598 = vld [vmem:[%s5576 + $0x54] sm:$0xf]
          %v5599 = vld [vmem:[%s5576 + $0x58] sm:$0xf]
          %v5600 = vld [vmem:[%s5576 + $0x5c] sm:$0x1]
          %v5601 = vld [vmem:[%s5576 + $0x60] sm:$0xf]
          %v5602 = vld [vmem:[%s5576 + $0x64] sm:$0xf]
          %v5603 = vld [vmem:[%s5576 + $0x68] sm:$0x1]
          %v5604 = vld [vmem:[%s5576 + $0x6c] sm:$0xf]
          %v5605 = vld [vmem:[%s5576 + $0x70] sm:$0xf]
          %v5606 = vld [vmem:[%s5576 + $0x74] sm:$0x1]
          %v5607 = vld [vmem:[%s5576 + $0x78] sm:$0xf]
          %v5608 = vld [vmem:[%s5576 + $0x7c] sm:$0xf]
          %v5609 = vld [vmem:[%s5576 + $0x80] sm:$0x1]
          %v5610 = vld [vmem:[%s5576 + $0x84] sm:$0xf]
          %v5611 = vld [vmem:[%s5576 + $0x88] sm:$0xf]
          %v5612 = vld [vmem:[%s5576 + $0x8c] sm:$0x1]
          %v5613 = vld [vmem:[%s5576 + $0x90] sm:$0xf]
          %v5614 = vld [vmem:[%s5576 + $0x94] sm:$0xf]
          %v5615 = vld [vmem:[%s5576 + $0x98] sm:$0x1]
          %v5616 = vld [vmem:[%s5576 + $0x9c] sm:$0xf]
          %v5617 = vld [vmem:[%s5576 + $0xa0] sm:$0xf]
          %v5618 = vld [vmem:[%s5576 + $0xa4] sm:$0x1]
          %v5619 = vld [vmem:[%s5576 + $0xa8] sm:$0xf]
          %v5620 = vld [vmem:[%s5576 + $0xac] sm:$0xf]
          %v5621 = vld [vmem:[%s5576 + $0xb0] sm:$0x1]
          %v5622 = vld [vmem:[%s5576 + $0xb4] sm:$0xf]
          %v5623 = vld [vmem:[%s5576 + $0xb8] sm:$0xf]
          %v5624 = vld [vmem:[%s5576 + $0xbc] sm:$0x1]
          %s5625 = scalar_lea.vmem [#allocation2], 24
          %v5626 = vld [vmem:[%s5625] sm:$0xf]
          %v5627 = vld [vmem:[%s5625 + $0x4] sm:$0xf]
          %v5628 = vld [vmem:[%s5625 + $0x8] sm:$0x1]
          %v5629 = vld [vmem:[%s5625 + $0xc] sm:$0xf]
          %v5630 = vld [vmem:[%s5625 + $0x10] sm:$0xf]
          %v5631 = vld [vmem:[%s5625 + $0x14] sm:$0x1]
          %v5632 = vld [vmem:[%s5625 + $0x18] sm:$0xf]
          %v5633 = vld [vmem:[%s5625 + $0x1c] sm:$0xf]
          %v5634 = vld [vmem:[%s5625 + $0x20] sm:$0x1]
          %v5635 = vld [vmem:[%s5625 + $0x24] sm:$0xf]
          %v5636 = vld [vmem:[%s5625 + $0x28] sm:$0xf]
          %v5637 = vld [vmem:[%s5625 + $0x2c] sm:$0x1]
          %v5638 = vld [vmem:[%s5625 + $0x30] sm:$0xf]
          %v5639 = vld [vmem:[%s5625 + $0x34] sm:$0xf]
          %v5640 = vld [vmem:[%s5625 + $0x38] sm:$0x1]
          %v5641 = vld [vmem:[%s5625 + $0x3c] sm:$0xf]
          %v5642 = vld [vmem:[%s5625 + $0x40] sm:$0xf]
          %v5643 = vld [vmem:[%s5625 + $0x44] sm:$0x1]
          %v5644 = vld [vmem:[%s5625 + $0x48] sm:$0xf]
          %v5645 = vld [vmem:[%s5625 + $0x4c] sm:$0xf]
          %v5646 = vld [vmem:[%s5625 + $0x50] sm:$0x1]
          %v5647 = vld [vmem:[%s5625 + $0x54] sm:$0xf]
          %v5648 = vld [vmem:[%s5625 + $0x58] sm:$0xf]
          %v5649 = vld [vmem:[%s5625 + $0x5c] sm:$0x1]
          %v5650 = vld [vmem:[%s5625 + $0x60] sm:$0xf]
          %v5651 = vld [vmem:[%s5625 + $0x64] sm:$0xf]
          %v5652 = vld [vmem:[%s5625 + $0x68] sm:$0x1]
          %v5653 = vld [vmem:[%s5625 + $0x6c] sm:$0xf]
          %v5654 = vld [vmem:[%s5625 + $0x70] sm:$0xf]
          %v5655 = vld [vmem:[%s5625 + $0x74] sm:$0x1]
          %v5656 = vld [vmem:[%s5625 + $0x78] sm:$0xf]
          %v5657 = vld [vmem:[%s5625 + $0x7c] sm:$0xf]
          %v5658 = vld [vmem:[%s5625 + $0x80] sm:$0x1]
          %v5659 = vld [vmem:[%s5625 + $0x84] sm:$0xf]
          %v5660 = vld [vmem:[%s5625 + $0x88] sm:$0xf]
          %v5661 = vld [vmem:[%s5625 + $0x8c] sm:$0x1]
          %v5662 = vld [vmem:[%s5625 + $0x90] sm:$0xf]
          %v5663 = vld [vmem:[%s5625 + $0x94] sm:$0xf]
          %v5664 = vld [vmem:[%s5625 + $0x98] sm:$0x1]
          %v5665 = vld [vmem:[%s5625 + $0x9c] sm:$0xf]
          %v5666 = vld [vmem:[%s5625 + $0xa0] sm:$0xf]
          %v5667 = vld [vmem:[%s5625 + $0xa4] sm:$0x1]
          %v5668 = vld [vmem:[%s5625 + $0xa8] sm:$0xf]
          %v5669 = vld [vmem:[%s5625 + $0xac] sm:$0xf]
          %v5670 = vld [vmem:[%s5625 + $0xb0] sm:$0x1]
          %v5671 = vld [vmem:[%s5625 + $0xb4] sm:$0xf]
          %v5672 = vld [vmem:[%s5625 + $0xb8] sm:$0xf]
          %v5673 = vld [vmem:[%s5625 + $0xbc] sm:$0x1]
          %v5722 = vunpack.c.l.b16 %v5528
          %v5723 = vunpack.c.l.b16 %v5529
          %v5724 = vunpack.c.l.b16 %v5530
          %v5725 = vunpack.c.l.b16 %v5531
          %v5726 = vunpack.c.l.b16 %v5532
          %v5727 = vunpack.c.l.b16 %v5533
          %v5728 = vunpack.c.l.b16 %v5534
          %v5729 = vunpack.c.l.b16 %v5535
          %v5730 = vunpack.c.l.b16 %v5536
          %v5731 = vunpack.c.l.b16 %v5537
          %v5732 = vunpack.c.l.b16 %v5538
          %v5733 = vunpack.c.l.b16 %v5539
          %v5734 = vunpack.c.l.b16 %v5540
          %v5735 = vunpack.c.l.b16 %v5541
          %v5736 = vunpack.c.l.b16 %v5542
          %v5737 = vunpack.c.l.b16 %v5543
          %v5738 = vunpack.c.l.b16 %v5544
          %v5739 = vunpack.c.l.b16 %v5545
          %v5740 = vunpack.c.l.b16 %v5546
          %v5741 = vunpack.c.l.b16 %v5547
          %v5742 = vunpack.c.l.b16 %v5548
          %v5743 = vunpack.c.l.b16 %v5549
          %v5744 = vunpack.c.l.b16 %v5550
          %v5745 = vunpack.c.l.b16 %v5551
          %v5746 = vunpack.c.l.b16 %v5552
          %v5747 = vunpack.c.l.b16 %v5553
          %v5748 = vunpack.c.l.b16 %v5554
          %v5749 = vunpack.c.l.b16 %v5555
          %v5750 = vunpack.c.l.b16 %v5556
          %v5751 = vunpack.c.l.b16 %v5557
          %v5752 = vunpack.c.l.b16 %v5558
          %v5753 = vunpack.c.l.b16 %v5559
          %v5754 = vunpack.c.l.b16 %v5560
          %v5755 = vunpack.c.l.b16 %v5561
          %v5756 = vunpack.c.l.b16 %v5562
          %v5757 = vunpack.c.l.b16 %v5563
          %v5758 = vunpack.c.l.b16 %v5564
          %v5759 = vunpack.c.l.b16 %v5565
          %v5760 = vunpack.c.l.b16 %v5566
          %v5761 = vunpack.c.l.b16 %v5567
          %v5762 = vunpack.c.l.b16 %v5568
          %v5763 = vunpack.c.l.b16 %v5569
          %v5764 = vunpack.c.l.b16 %v5570
          %v5765 = vunpack.c.l.b16 %v5571
          %v5766 = vunpack.c.l.b16 %v5572
          %v5767 = vunpack.c.l.b16 %v5573
          %v5768 = vunpack.c.l.b16 %v5574
          %v5769 = vunpack.c.l.b16 %v5575
          %v5770 = vpack.c.b16 %v5723, %v5722
          %v5771 = vpack.c.b16 %v5724, %v5724
          %v5772 = vpack.c.b16 %v5726, %v5725
          %v5773 = vpack.c.b16 %v5727, %v5727
          %v5774 = vpack.c.b16 %v5729, %v5728
          %v5775 = vpack.c.b16 %v5730, %v5730
          %v5776 = vpack.c.b16 %v5732, %v5731
          %v5777 = vpack.c.b16 %v5733, %v5733
          %v5778 = vpack.c.b16 %v5735, %v5734
          %v5779 = vpack.c.b16 %v5736, %v5736
          %v5780 = vpack.c.b16 %v5738, %v5737
          %v5781 = vpack.c.b16 %v5739, %v5739
          %v5782 = vpack.c.b16 %v5741, %v5740
          %v5783 = vpack.c.b16 %v5742, %v5742
          %v5784 = vpack.c.b16 %v5744, %v5743
          %v5785 = vpack.c.b16 %v5745, %v5745
          %v5786 = vpack.c.b16 %v5747, %v5746
          %v5787 = vpack.c.b16 %v5748, %v5748
          %v5788 = vpack.c.b16 %v5750, %v5749
          %v5789 = vpack.c.b16 %v5751, %v5751
          %v5790 = vpack.c.b16 %v5753, %v5752
          %v5791 = vpack.c.b16 %v5754, %v5754
          %v5792 = vpack.c.b16 %v5756, %v5755
          %v5793 = vpack.c.b16 %v5757, %v5757
          %v5794 = vpack.c.b16 %v5759, %v5758
          %v5795 = vpack.c.b16 %v5760, %v5760
          %v5796 = vpack.c.b16 %v5762, %v5761
          %v5797 = vpack.c.b16 %v5763, %v5763
          %v5798 = vpack.c.b16 %v5765, %v5764
          %v5799 = vpack.c.b16 %v5766, %v5766
          %v5800 = vpack.c.b16 %v5768, %v5767
          %v5801 = vpack.c.b16 %v5769, %v5769
          %v5850 = vunpack.c.l.b16 %v5577
          %v5851 = vunpack.c.l.b16 %v5578
          %v5852 = vunpack.c.l.b16 %v5579
          %v5853 = vunpack.c.l.b16 %v5580
          %v5854 = vunpack.c.l.b16 %v5581
          %v5855 = vunpack.c.l.b16 %v5582
          %v5856 = vunpack.c.l.b16 %v5583
          %v5857 = vunpack.c.l.b16 %v5584
          %v5858 = vunpack.c.l.b16 %v5585
          %v5859 = vunpack.c.l.b16 %v5586
          %v5860 = vunpack.c.l.b16 %v5587
          %v5861 = vunpack.c.l.b16 %v5588
          %v5862 = vunpack.c.l.b16 %v5589
          %v5863 = vunpack.c.l.b16 %v5590
          %v5864 = vunpack.c.l.b16 %v5591
          %v5865 = vunpack.c.l.b16 %v5592
          %v5866 = vunpack.c.l.b16 %v5593
          %v5867 = vunpack.c.l.b16 %v5594
          %v5868 = vunpack.c.l.b16 %v5595
          %v5869 = vunpack.c.l.b16 %v5596
          %v5870 = vunpack.c.l.b16 %v5597
          %v5871 = vunpack.c.l.b16 %v5598
          %v5872 = vunpack.c.l.b16 %v5599
          %v5873 = vunpack.c.l.b16 %v5600
          %v5874 = vunpack.c.l.b16 %v5601
          %v5875 = vunpack.c.l.b16 %v5602
          %v5876 = vunpack.c.l.b16 %v5603
          %v5877 = vunpack.c.l.b16 %v5604
          %v5878 = vunpack.c.l.b16 %v5605
          %v5879 = vunpack.c.l.b16 %v5606
          %v5880 = vunpack.c.l.b16 %v5607
          %v5881 = vunpack.c.l.b16 %v5608
          %v5882 = vunpack.c.l.b16 %v5609
          %v5883 = vunpack.c.l.b16 %v5610
          %v5884 = vunpack.c.l.b16 %v5611
          %v5885 = vunpack.c.l.b16 %v5612
          %v5886 = vunpack.c.l.b16 %v5613
          %v5887 = vunpack.c.l.b16 %v5614
          %v5888 = vunpack.c.l.b16 %v5615
          %v5889 = vunpack.c.l.b16 %v5616
          %v5890 = vunpack.c.l.b16 %v5617
          %v5891 = vunpack.c.l.b16 %v5618
          %v5892 = vunpack.c.l.b16 %v5619
          %v5893 = vunpack.c.l.b16 %v5620
          %v5894 = vunpack.c.l.b16 %v5621
          %v5895 = vunpack.c.l.b16 %v5622
          %v5896 = vunpack.c.l.b16 %v5623
          %v5897 = vunpack.c.l.b16 %v5624
          %v5898 = vpack.c.b16 %v5851, %v5850
          %v5899 = vpack.c.b16 %v5852, %v5852
          %v5900 = vpack.c.b16 %v5854, %v5853
          %v5901 = vpack.c.b16 %v5855, %v5855
          %v5902 = vpack.c.b16 %v5857, %v5856
          %v5903 = vpack.c.b16 %v5858, %v5858
          %v5904 = vpack.c.b16 %v5860, %v5859
          %v5905 = vpack.c.b16 %v5861, %v5861
          %v5906 = vpack.c.b16 %v5863, %v5862
          %v5907 = vpack.c.b16 %v5864, %v5864
          %v5908 = vpack.c.b16 %v5866, %v5865
          %v5909 = vpack.c.b16 %v5867, %v5867
          %v5910 = vpack.c.b16 %v5869, %v5868
          %v5911 = vpack.c.b16 %v5870, %v5870
          %v5912 = vpack.c.b16 %v5872, %v5871
          %v5913 = vpack.c.b16 %v5873, %v5873
          %v5914 = vpack.c.b16 %v5875, %v5874
          %v5915 = vpack.c.b16 %v5876, %v5876
          %v5916 = vpack.c.b16 %v5878, %v5877
          %v5917 = vpack.c.b16 %v5879, %v5879
          %v5918 = vpack.c.b16 %v5881, %v5880
          %v5919 = vpack.c.b16 %v5882, %v5882
          %v5920 = vpack.c.b16 %v5884, %v5883
          %v5921 = vpack.c.b16 %v5885, %v5885
          %v5922 = vpack.c.b16 %v5887, %v5886
          %v5923 = vpack.c.b16 %v5888, %v5888
          %v5924 = vpack.c.b16 %v5890, %v5889
          %v5925 = vpack.c.b16 %v5891, %v5891
          %v5926 = vpack.c.b16 %v5893, %v5892
          %v5927 = vpack.c.b16 %v5894, %v5894
          %v5928 = vpack.c.b16 %v5896, %v5895
          %v5929 = vpack.c.b16 %v5897, %v5897
          %5930 = vrot.lane.b32.xlu0 %v5898, 64
          %v5931 = vpop.permute.xlu0 %5930
          %5932 = vrot.lane.b32.xlu0 %v5899, 64
          %v5933 = vpop.permute.xlu0 %5932
          %5934 = vrot.lane.b32.xlu0 %v5900, 64
          %v5935 = vpop.permute.xlu0 %5934
          %5936 = vrot.lane.b32.xlu0 %v5901, 64
          %v5937 = vpop.permute.xlu0 %5936
          %5938 = vrot.lane.b32.xlu0 %v5902, 64
          %v5939 = vpop.permute.xlu0 %5938
          %5940 = vrot.lane.b32.xlu0 %v5903, 64
          %v5941 = vpop.permute.xlu0 %5940
          %5942 = vrot.lane.b32.xlu0 %v5904, 64
          %v5943 = vpop.permute.xlu0 %5942
          %5944 = vrot.lane.b32.xlu0 %v5905, 64
          %v5945 = vpop.permute.xlu0 %5944
          %5946 = vrot.lane.b32.xlu0 %v5906, 64
          %v5947 = vpop.permute.xlu0 %5946
          %5948 = vrot.lane.b32.xlu0 %v5907, 64
          %v5949 = vpop.permute.xlu0 %5948
          %5950 = vrot.lane.b32.xlu0 %v5908, 64
          %v5951 = vpop.permute.xlu0 %5950
          %5952 = vrot.lane.b32.xlu0 %v5909, 64
          %v5953 = vpop.permute.xlu0 %5952
          %5954 = vrot.lane.b32.xlu0 %v5910, 64
          %v5955 = vpop.permute.xlu0 %5954
          %5956 = vrot.lane.b32.xlu0 %v5911, 64
          %v5957 = vpop.permute.xlu0 %5956
          %5958 = vrot.lane.b32.xlu0 %v5912, 64
          %v5959 = vpop.permute.xlu0 %5958
          %5960 = vrot.lane.b32.xlu0 %v5913, 64
          %v5961 = vpop.permute.xlu0 %5960
          %5962 = vrot.lane.b32.xlu0 %v5914, 64
          %v5963 = vpop.permute.xlu0 %5962
          %5964 = vrot.lane.b32.xlu0 %v5915, 64
          %v5965 = vpop.permute.xlu0 %5964
          %5966 = vrot.lane.b32.xlu0 %v5916, 64
          %v5967 = vpop.permute.xlu0 %5966
          %5968 = vrot.lane.b32.xlu0 %v5917, 64
          %v5969 = vpop.permute.xlu0 %5968
          %5970 = vrot.lane.b32.xlu0 %v5918, 64
          %v5971 = vpop.permute.xlu0 %5970
          %5972 = vrot.lane.b32.xlu0 %v5919, 64
          %v5973 = vpop.permute.xlu0 %5972
          %5974 = vrot.lane.b32.xlu0 %v5920, 64
          %v5975 = vpop.permute.xlu0 %5974
          %5976 = vrot.lane.b32.xlu0 %v5921, 64
          %v5977 = vpop.permute.xlu0 %5976
          %5978 = vrot.lane.b32.xlu0 %v5922, 64
          %v5979 = vpop.permute.xlu0 %5978
          %5980 = vrot.lane.b32.xlu0 %v5923, 64
          %v5981 = vpop.permute.xlu0 %5980
          %5982 = vrot.lane.b32.xlu0 %v5924, 64
          %v5983 = vpop.permute.xlu0 %5982
          %5984 = vrot.lane.b32.xlu0 %v5925, 64
          %v5985 = vpop.permute.xlu0 %5984
          %5986 = vrot.lane.b32.xlu0 %v5926, 64
          %v5987 = vpop.permute.xlu0 %5986
          %5988 = vrot.lane.b32.xlu0 %v5927, 64
          %v5989 = vpop.permute.xlu0 %5988
          %5990 = vrot.lane.b32.xlu0 %v5928, 64
          %v5991 = vpop.permute.xlu0 %5990
          %5992 = vrot.lane.b32.xlu0 %v5929, 64
          %v5993 = vpop.permute.xlu0 %5992
          %v6042 = vunpack.c.l.b16 %v5626
          %v6043 = vunpack.c.l.b16 %v5627
          %v6044 = vunpack.c.l.b16 %v5628
          %v6045 = vunpack.c.l.b16 %v5629
          %v6046 = vunpack.c.l.b16 %v5630
          %v6047 = vunpack.c.l.b16 %v5631
          %v6048 = vunpack.c.l.b16 %v5632
          %v6049 = vunpack.c.l.b16 %v5633
          %v6050 = vunpack.c.l.b16 %v5634
          %v6051 = vunpack.c.l.b16 %v5635
          %v6052 = vunpack.c.l.b16 %v5636
          %v6053 = vunpack.c.l.b16 %v5637
          %v6054 = vunpack.c.l.b16 %v5638
          %v6055 = vunpack.c.l.b16 %v5639
          %v6056 = vunpack.c.l.b16 %v5640
          %v6057 = vunpack.c.l.b16 %v5641
          %v6058 = vunpack.c.l.b16 %v5642
          %v6059 = vunpack.c.l.b16 %v5643
          %v6060 = vunpack.c.l.b16 %v5644
          %v6061 = vunpack.c.l.b16 %v5645
          %v6062 = vunpack.c.l.b16 %v5646
          %v6063 = vunpack.c.l.b16 %v5647
          %v6064 = vunpack.c.l.b16 %v5648
          %v6065 = vunpack.c.l.b16 %v5649
          %v6066 = vunpack.c.l.b16 %v5650
          %v6067 = vunpack.c.l.b16 %v5651
          %v6068 = vunpack.c.l.b16 %v5652
          %v6069 = vunpack.c.l.b16 %v5653
          %v6070 = vunpack.c.l.b16 %v5654
          %v6071 = vunpack.c.l.b16 %v5655
          %v6072 = vunpack.c.l.b16 %v5656
          %v6073 = vunpack.c.l.b16 %v5657
          %v6074 = vunpack.c.l.b16 %v5658
          %v6075 = vunpack.c.l.b16 %v5659
          %v6076 = vunpack.c.l.b16 %v5660
          %v6077 = vunpack.c.l.b16 %v5661
          %v6078 = vunpack.c.l.b16 %v5662
          %v6079 = vunpack.c.l.b16 %v5663
          %v6080 = vunpack.c.l.b16 %v5664
          %v6081 = vunpack.c.l.b16 %v5665
          %v6082 = vunpack.c.l.b16 %v5666
          %v6083 = vunpack.c.l.b16 %v5667
          %v6084 = vunpack.c.l.b16 %v5668
          %v6085 = vunpack.c.l.b16 %v5669
          %v6086 = vunpack.c.l.b16 %v5670
          %v6087 = vunpack.c.l.b16 %v5671
          %v6088 = vunpack.c.l.b16 %v5672
          %v6089 = vunpack.c.l.b16 %v5673
          %v6090 = vpack.c.b16 %v6043, %v6042
          %v6091 = vpack.c.b16 %v6044, %v6044
          %v6092 = vpack.c.b16 %v6046, %v6045
          %v6093 = vpack.c.b16 %v6047, %v6047
          %v6094 = vpack.c.b16 %v6049, %v6048
          %v6095 = vpack.c.b16 %v6050, %v6050
          %v6096 = vpack.c.b16 %v6052, %v6051
          %v6097 = vpack.c.b16 %v6053, %v6053
          %v6098 = vpack.c.b16 %v6055, %v6054
          %v6099 = vpack.c.b16 %v6056, %v6056
          %v6100 = vpack.c.b16 %v6058, %v6057
          %v6101 = vpack.c.b16 %v6059, %v6059
          %v6102 = vpack.c.b16 %v6061, %v6060
          %v6103 = vpack.c.b16 %v6062, %v6062
          %v6104 = vpack.c.b16 %v6064, %v6063
          %v6105 = vpack.c.b16 %v6065, %v6065
          %v6106 = vpack.c.b16 %v6067, %v6066
          %v6107 = vpack.c.b16 %v6068, %v6068
          %v6108 = vpack.c.b16 %v6070, %v6069
          %v6109 = vpack.c.b16 %v6071, %v6071
          %v6110 = vpack.c.b16 %v6073, %v6072
          %v6111 = vpack.c.b16 %v6074, %v6074
          %v6112 = vpack.c.b16 %v6076, %v6075
          %v6113 = vpack.c.b16 %v6077, %v6077
          %v6114 = vpack.c.b16 %v6079, %v6078
          %v6115 = vpack.c.b16 %v6080, %v6080
          %v6116 = vpack.c.b16 %v6082, %v6081
          %v6117 = vpack.c.b16 %v6083, %v6083
          %v6118 = vpack.c.b16 %v6085, %v6084
          %v6119 = vpack.c.b16 %v6086, %v6086
          %v6120 = vpack.c.b16 %v6088, %v6087
          %v6121 = vpack.c.b16 %v6089, %v6089
          %vm6122 = vcmask 523264
          %v6125 = vsel %vm6122, %v5770, %v5931
          %v6129 = vsel %vm6122, %v5771, %v5933
          %v6132 = vsel %vm6122, %v5772, %v5935
          %v6136 = vsel %vm6122, %v5773, %v5937
          %v6139 = vsel %vm6122, %v5774, %v5939
          %v6143 = vsel %vm6122, %v5775, %v5941
          %v6146 = vsel %vm6122, %v5776, %v5943
          %v6150 = vsel %vm6122, %v5777, %v5945
          %v6153 = vsel %vm6122, %v5778, %v5947
          %v6157 = vsel %vm6122, %v5779, %v5949
          %v6160 = vsel %vm6122, %v5780, %v5951
          %v6164 = vsel %vm6122, %v5781, %v5953
          %v6167 = vsel %vm6122, %v5782, %v5955
          %v6171 = vsel %vm6122, %v5783, %v5957
          %v6174 = vsel %vm6122, %v5784, %v5959
          %v6178 = vsel %vm6122, %v5785, %v5961
          %v6181 = vsel %vm6122, %v5786, %v5963
          %v6185 = vsel %vm6122, %v5787, %v5965
          %v6188 = vsel %vm6122, %v5788, %v5967
          %v6192 = vsel %vm6122, %v5789, %v5969
          %v6195 = vsel %vm6122, %v5790, %v5971
          %v6199 = vsel %vm6122, %v5791, %v5973
          %v6202 = vsel %vm6122, %v5792, %v5975
          %v6206 = vsel %vm6122, %v5793, %v5977
          %v6209 = vsel %vm6122, %v5794, %v5979
          %v6213 = vsel %vm6122, %v5795, %v5981
          %v6216 = vsel %vm6122, %v5796, %v5983
          %v6220 = vsel %vm6122, %v5797, %v5985
          %v6223 = vsel %vm6122, %v5798, %v5987
          %v6227 = vsel %vm6122, %v5799, %v5989
          %v6230 = vsel %vm6122, %v5800, %v5991
          %v6234 = vsel %vm6122, %v5801, %v5993
          %s6235 = smul.u32 %s5527, 72
          %s6236 = smul.addr %s6235, 4
          %s6237 = scalar_lea.vmem %s2, %s6236
          %v6238 = vld [vmem:[%s6237] sm:$0xf]
          %v6239 = vld [vmem:[%s6237 + $0x4] sm:$0xf]
          %v6240 = vld [vmem:[%s6237 + $0x8] sm:$0xf]
          %v6241 = vld [vmem:[%s6237 + $0xc] sm:$0xf]
          %v6242 = vld [vmem:[%s6237 + $0x10] sm:$0xf]
          %v6243 = vld [vmem:[%s6237 + $0x14] sm:$0xf]
          %v6244 = vld [vmem:[%s6237 + $0x18] sm:$0xf]
          %v6245 = vld [vmem:[%s6237 + $0x1c] sm:$0xf]
          %v6246 = vld [vmem:[%s6237 + $0x20] sm:$0xf]
          %v6247 = vld [vmem:[%s6237 + $0x24] sm:$0xf]
          %v6248 = vld [vmem:[%s6237 + $0x28] sm:$0xf]
          %v6249 = vld [vmem:[%s6237 + $0x2c] sm:$0xf]
          %v6250 = vld [vmem:[%s6237 + $0x30] sm:$0xf]
          %v6251 = vld [vmem:[%s6237 + $0x34] sm:$0xf]
          %v6252 = vld [vmem:[%s6237 + $0x38] sm:$0xf]
          %v6253 = vld [vmem:[%s6237 + $0x3c] sm:$0xf]
          %v6254 = vld [vmem:[%s6237 + $0x40] sm:$0xf]
          %v6255 = vld [vmem:[%s6237 + $0x44] sm:$0xf]
          %v6256 = vld [vmem:[%s6237 + $0x48] sm:$0xf]
          %v6257 = vld [vmem:[%s6237 + $0x4c] sm:$0xf]
          %v6258 = vld [vmem:[%s6237 + $0x50] sm:$0xf]
          %v6259 = vld [vmem:[%s6237 + $0x54] sm:$0xf]
          %v6260 = vld [vmem:[%s6237 + $0x58] sm:$0xf]
          %v6261 = vld [vmem:[%s6237 + $0x5c] sm:$0xf]
          %vm6262 = vsmask.f32 7424
          %v6263 = vshrl.u32 %v6125, 16
          %v6265 = vshll.u32 %v6125, 16
          %v6267 = vrot.slane %v6265, 1
          %v6268 = vor.u32 %v6263, %v6267
          %v6269 = vshll.u32 %v6129, 16
          %v6271 = vrot.slane %v6269, 1
          %v6272 = vsel %vm6262, %v6268, %v6271
          %v6274 = vshrl.u32 %v6090, 16
          %v6276 = vshll.u32 %v6090, 16
          %v6278 = vrot.slane %v6276, 1
          %v6279 = vor.u32 %v6274, %v6278
          %v6281 = vshll.u32 %v6091, 16
          %v6283 = vrot.slane %v6281, 1
          %v6284 = vsel %vm6262, %v6279, %v6283
          %v6285 = vshrl.u32 %v6132, 16
          %v6287 = vshll.u32 %v6132, 16
          %v6289 = vrot.slane %v6287, 1
          %v6290 = vor.u32 %v6285, %v6289
          %v6291 = vshll.u32 %v6136, 16
          %v6293 = vrot.slane %v6291, 1
          %v6294 = vsel %vm6262, %v6290, %v6293
          %v6296 = vshrl.u32 %v6092, 16
          %v6298 = vshll.u32 %v6092, 16
          %v6300 = vrot.slane %v6298, 1
          %v6301 = vor.u32 %v6296, %v6300
          %v6303 = vshll.u32 %v6093, 16
          %v6305 = vrot.slane %v6303, 1
          %v6306 = vsel %vm6262, %v6301, %v6305
          %v6307 = vshrl.u32 %v6139, 16
          %v6309 = vshll.u32 %v6139, 16
          %v6311 = vrot.slane %v6309, 1
          %v6312 = vor.u32 %v6307, %v6311
          %v6313 = vshll.u32 %v6143, 16
          %v6315 = vrot.slane %v6313, 1
          %v6316 = vsel %vm6262, %v6312, %v6315
          %v6318 = vshrl.u32 %v6094, 16
          %v6320 = vshll.u32 %v6094, 16
          %v6322 = vrot.slane %v6320, 1
          %v6323 = vor.u32 %v6318, %v6322
          %v6325 = vshll.u32 %v6095, 16
          %v6327 = vrot.slane %v6325, 1
          %v6328 = vsel %vm6262, %v6323, %v6327
          %v6329 = vshrl.u32 %v6146, 16
          %v6331 = vshll.u32 %v6146, 16
          %v6333 = vrot.slane %v6331, 1
          %v6334 = vor.u32 %v6329, %v6333
          %v6335 = vshll.u32 %v6150, 16
          %v6337 = vrot.slane %v6335, 1
          %v6338 = vsel %vm6262, %v6334, %v6337
          %v6340 = vshrl.u32 %v6096, 16
          %v6342 = vshll.u32 %v6096, 16
          %v6344 = vrot.slane %v6342, 1
          %v6345 = vor.u32 %v6340, %v6344
          %v6347 = vshll.u32 %v6097, 16
          %v6349 = vrot.slane %v6347, 1
          %v6350 = vsel %vm6262, %v6345, %v6349
          %v6351 = vshrl.u32 %v6153, 16
          %v6353 = vshll.u32 %v6153, 16
          %v6355 = vrot.slane %v6353, 1
          %v6356 = vor.u32 %v6351, %v6355
          %v6357 = vshll.u32 %v6157, 16
          %v6359 = vrot.slane %v6357, 1
          %v6360 = vsel %vm6262, %v6356, %v6359
          %v6362 = vshrl.u32 %v6098, 16
          %v6364 = vshll.u32 %v6098, 16
          %v6366 = vrot.slane %v6364, 1
          %v6367 = vor.u32 %v6362, %v6366
          %v6369 = vshll.u32 %v6099, 16
          %v6371 = vrot.slane %v6369, 1
          %v6372 = vsel %vm6262, %v6367, %v6371
          %v6373 = vshrl.u32 %v6160, 16
          %v6375 = vshll.u32 %v6160, 16
          %v6377 = vrot.slane %v6375, 1
          %v6378 = vor.u32 %v6373, %v6377
          %v6379 = vshll.u32 %v6164, 16
          %v6381 = vrot.slane %v6379, 1
          %v6382 = vsel %vm6262, %v6378, %v6381
          %v6384 = vshrl.u32 %v6100, 16
          %v6386 = vshll.u32 %v6100, 16
          %v6388 = vrot.slane %v6386, 1
          %v6389 = vor.u32 %v6384, %v6388
          %v6391 = vshll.u32 %v6101, 16
          %v6393 = vrot.slane %v6391, 1
          %v6394 = vsel %vm6262, %v6389, %v6393
          %v6395 = vshrl.u32 %v6167, 16
          %v6397 = vshll.u32 %v6167, 16
          %v6399 = vrot.slane %v6397, 1
          %v6400 = vor.u32 %v6395, %v6399
          %v6401 = vshll.u32 %v6171, 16
          %v6403 = vrot.slane %v6401, 1
          %v6404 = vsel %vm6262, %v6400, %v6403
          %v6406 = vshrl.u32 %v6102, 16
          %v6408 = vshll.u32 %v6102, 16
          %v6410 = vrot.slane %v6408, 1
          %v6411 = vor.u32 %v6406, %v6410
          %v6413 = vshll.u32 %v6103, 16
          %v6415 = vrot.slane %v6413, 1
          %v6416 = vsel %vm6262, %v6411, %v6415
          %v6417 = vshrl.u32 %v6174, 16
          %v6419 = vshll.u32 %v6174, 16
          %v6421 = vrot.slane %v6419, 1
          %v6422 = vor.u32 %v6417, %v6421
          %v6423 = vshll.u32 %v6178, 16
          %v6425 = vrot.slane %v6423, 1
          %v6426 = vsel %vm6262, %v6422, %v6425
          %v6428 = vshrl.u32 %v6104, 16
          %v6430 = vshll.u32 %v6104, 16
          %v6432 = vrot.slane %v6430, 1
          %v6433 = vor.u32 %v6428, %v6432
          %v6435 = vshll.u32 %v6105, 16
          %v6437 = vrot.slane %v6435, 1
          %v6438 = vsel %vm6262, %v6433, %v6437
          %v6439 = vshrl.u32 %v6181, 16
          %v6441 = vshll.u32 %v6181, 16
          %v6443 = vrot.slane %v6441, 1
          %v6444 = vor.u32 %v6439, %v6443
          %v6445 = vshll.u32 %v6185, 16
          %v6447 = vrot.slane %v6445, 1
          %v6448 = vsel %vm6262, %v6444, %v6447
          %v6450 = vshrl.u32 %v6106, 16
          %v6452 = vshll.u32 %v6106, 16
          %v6454 = vrot.slane %v6452, 1
          %v6455 = vor.u32 %v6450, %v6454
          %v6457 = vshll.u32 %v6107, 16
          %v6459 = vrot.slane %v6457, 1
          %v6460 = vsel %vm6262, %v6455, %v6459
          %v6461 = vshrl.u32 %v6188, 16
          %v6463 = vshll.u32 %v6188, 16
          %v6465 = vrot.slane %v6463, 1
          %v6466 = vor.u32 %v6461, %v6465
          %v6467 = vshll.u32 %v6192, 16
          %v6469 = vrot.slane %v6467, 1
          %v6470 = vsel %vm6262, %v6466, %v6469
          %v6472 = vshrl.u32 %v6108, 16
          %v6474 = vshll.u32 %v6108, 16
          %v6476 = vrot.slane %v6474, 1
          %v6477 = vor.u32 %v6472, %v6476
          %v6479 = vshll.u32 %v6109, 16
          %v6481 = vrot.slane %v6479, 1
          %v6482 = vsel %vm6262, %v6477, %v6481
          %v6483 = vshrl.u32 %v6195, 16
          %v6485 = vshll.u32 %v6195, 16
          %v6487 = vrot.slane %v6485, 1
          %v6488 = vor.u32 %v6483, %v6487
          %v6489 = vshll.u32 %v6199, 16
          %v6491 = vrot.slane %v6489, 1
          %v6492 = vsel %vm6262, %v6488, %v6491
          %v6494 = vshrl.u32 %v6110, 16
          %v6496 = vshll.u32 %v6110, 16
          %v6498 = vrot.slane %v6496, 1
          %v6499 = vor.u32 %v6494, %v6498
          %v6501 = vshll.u32 %v6111, 16
          %v6503 = vrot.slane %v6501, 1
          %v6504 = vsel %vm6262, %v6499, %v6503
          %v6505 = vshrl.u32 %v6202, 16
          %v6507 = vshll.u32 %v6202, 16
          %v6509 = vrot.slane %v6507, 1
          %v6510 = vor.u32 %v6505, %v6509
          %v6511 = vshll.u32 %v6206, 16
          %v6513 = vrot.slane %v6511, 1
          %v6514 = vsel %vm6262, %v6510, %v6513
          %v6516 = vshrl.u32 %v6112, 16
          %v6518 = vshll.u32 %v6112, 16
          %v6520 = vrot.slane %v6518, 1
          %v6521 = vor.u32 %v6516, %v6520
          %v6523 = vshll.u32 %v6113, 16
          %v6525 = vrot.slane %v6523, 1
          %v6526 = vsel %vm6262, %v6521, %v6525
          %v6527 = vshrl.u32 %v6209, 16
          %v6529 = vshll.u32 %v6209, 16
          %v6531 = vrot.slane %v6529, 1
          %v6532 = vor.u32 %v6527, %v6531
          %v6533 = vshll.u32 %v6213, 16
          %v6535 = vrot.slane %v6533, 1
          %v6536 = vsel %vm6262, %v6532, %v6535
          %v6538 = vshrl.u32 %v6114, 16
          %v6540 = vshll.u32 %v6114, 16
          %v6542 = vrot.slane %v6540, 1
          %v6543 = vor.u32 %v6538, %v6542
          %v6545 = vshll.u32 %v6115, 16
          %v6547 = vrot.slane %v6545, 1
          %v6548 = vsel %vm6262, %v6543, %v6547
          %v6549 = vshrl.u32 %v6216, 16
          %v6551 = vshll.u32 %v6216, 16
          %v6553 = vrot.slane %v6551, 1
          %v6554 = vor.u32 %v6549, %v6553
          %v6555 = vshll.u32 %v6220, 16
          %v6557 = vrot.slane %v6555, 1
          %v6558 = vsel %vm6262, %v6554, %v6557
          %v6560 = vshrl.u32 %v6116, 16
          %v6562 = vshll.u32 %v6116, 16
          %v6564 = vrot.slane %v6562, 1
          %v6565 = vor.u32 %v6560, %v6564
          %v6567 = vshll.u32 %v6117, 16
          %v6569 = vrot.slane %v6567, 1
          %v6570 = vsel %vm6262, %v6565, %v6569
          %v6571 = vshrl.u32 %v6223, 16
          %v6573 = vshll.u32 %v6223, 16
          %v6575 = vrot.slane %v6573, 1
          %v6576 = vor.u32 %v6571, %v6575
          %v6577 = vshll.u32 %v6227, 16
          %v6579 = vrot.slane %v6577, 1
          %v6580 = vsel %vm6262, %v6576, %v6579
          %v6582 = vshrl.u32 %v6118, 16
          %v6584 = vshll.u32 %v6118, 16
          %v6586 = vrot.slane %v6584, 1
          %v6587 = vor.u32 %v6582, %v6586
          %v6589 = vshll.u32 %v6119, 16
          %v6591 = vrot.slane %v6589, 1
          %v6592 = vsel %vm6262, %v6587, %v6591
          %v6593 = vshrl.u32 %v6230, 16
          %v6595 = vshll.u32 %v6230, 16
          %v6597 = vrot.slane %v6595, 1
          %v6598 = vor.u32 %v6593, %v6597
          %v6599 = vshll.u32 %v6234, 16
          %v6601 = vrot.slane %v6599, 1
          %v6602 = vsel %vm6262, %v6598, %v6601
          %v6604 = vshrl.u32 %v6120, 16
          %v6606 = vshll.u32 %v6120, 16
          %v6608 = vrot.slane %v6606, 1
          %v6609 = vor.u32 %v6604, %v6608
          %v6611 = vshll.u32 %v6121, 16
          %v6613 = vrot.slane %v6611, 1
          %v6614 = vsel %vm6262, %v6609, %v6613
          %s6631 = sadd.s32 24, %s6235
          %s6632 = smul.addr %s6631, 4
          %s6633 = scalar_lea.vmem %s2, %s6632
          %v6634 = vld [vmem:[%s6633] sm:$0xf]
          %v6635 = vld [vmem:[%s6633 + $0x4] sm:$0xf]
          %v6636 = vld [vmem:[%s6633 + $0x8] sm:$0xf]
          %v6637 = vld [vmem:[%s6633 + $0xc] sm:$0xf]
          %v6638 = vld [vmem:[%s6633 + $0x10] sm:$0xf]
          %v6639 = vld [vmem:[%s6633 + $0x14] sm:$0xf]
          %v6640 = vld [vmem:[%s6633 + $0x18] sm:$0xf]
          %v6641 = vld [vmem:[%s6633 + $0x1c] sm:$0xf]
          %v6642 = vld [vmem:[%s6633 + $0x20] sm:$0xf]
          %v6643 = vld [vmem:[%s6633 + $0x24] sm:$0xf]
          %v6644 = vld [vmem:[%s6633 + $0x28] sm:$0xf]
          %v6645 = vld [vmem:[%s6633 + $0x2c] sm:$0xf]
          %v6646 = vld [vmem:[%s6633 + $0x30] sm:$0xf]
          %v6647 = vld [vmem:[%s6633 + $0x34] sm:$0xf]
          %v6648 = vld [vmem:[%s6633 + $0x38] sm:$0xf]
          %v6649 = vld [vmem:[%s6633 + $0x3c] sm:$0xf]
          %v6650 = vld [vmem:[%s6633 + $0x40] sm:$0xf]
          %v6651 = vld [vmem:[%s6633 + $0x44] sm:$0xf]
          %v6652 = vld [vmem:[%s6633 + $0x48] sm:$0xf]
          %v6653 = vld [vmem:[%s6633 + $0x4c] sm:$0xf]
          %v6654 = vld [vmem:[%s6633 + $0x50] sm:$0xf]
          %v6655 = vld [vmem:[%s6633 + $0x54] sm:$0xf]
          %v6656 = vld [vmem:[%s6633 + $0x58] sm:$0xf]
          %v6657 = vld [vmem:[%s6633 + $0x5c] sm:$0xf]
          %v6682 = vunpack.c.l.b16 %v6634
          %v6683 = vunpack.c.l.b16 %v6635
          %v6684 = vunpack.c.l.b16 %v6636
          %v6685 = vunpack.c.l.b16 %v6637
          %v6686 = vunpack.c.l.b16 %v6638
          %v6687 = vunpack.c.l.b16 %v6639
          %v6688 = vunpack.c.l.b16 %v6640
          %v6689 = vunpack.c.l.b16 %v6641
          %v6690 = vunpack.c.l.b16 %v6642
          %v6691 = vunpack.c.l.b16 %v6643
          %v6692 = vunpack.c.l.b16 %v6644
          %v6693 = vunpack.c.l.b16 %v6645
          %v6694 = vunpack.c.l.b16 %v6646
          %v6695 = vunpack.c.l.b16 %v6647
          %v6696 = vunpack.c.l.b16 %v6648
          %v6697 = vunpack.c.l.b16 %v6649
          %v6698 = vunpack.c.l.b16 %v6650
          %v6699 = vunpack.c.l.b16 %v6651
          %v6700 = vunpack.c.l.b16 %v6652
          %v6701 = vunpack.c.l.b16 %v6653
          %v6702 = vunpack.c.l.b16 %v6654
          %v6703 = vunpack.c.l.b16 %v6655
          %v6704 = vunpack.c.l.b16 %v6656
          %v6705 = vunpack.c.l.b16 %v6657
          %v6706 = vpack.c.b16 %v6683, %v6682
          %v6707 = vpack.c.b16 %v6685, %v6684
          %v6708 = vpack.c.b16 %v6687, %v6686
          %v6709 = vpack.c.b16 %v6689, %v6688
          %v6710 = vpack.c.b16 %v6691, %v6690
          %v6711 = vpack.c.b16 %v6693, %v6692
          %v6712 = vpack.c.b16 %v6695, %v6694
          %v6713 = vpack.c.b16 %v6697, %v6696
          %v6714 = vpack.c.b16 %v6699, %v6698
          %v6715 = vpack.c.b16 %v6701, %v6700
          %v6716 = vpack.c.b16 %v6703, %v6702
          %v6717 = vpack.c.b16 %v6705, %v6704
          %v6731 = vsel %vm6122, %v6284, 0
          %v6734 = vsel %vm6122, %v6306, 0
          %v6737 = vsel %vm6122, %v6328, 0
          %v6740 = vsel %vm6122, %v6350, 0
          %v6743 = vsel %vm6122, %v6372, 0
          %v6746 = vsel %vm6122, %v6394, 0
          %v6749 = vsel %vm6122, %v6416, 0
          %v6752 = vsel %vm6122, %v6438, 0
          %v6755 = vsel %vm6122, %v6460, 0
          %v6758 = vsel %vm6122, %v6482, 0
          %v6761 = vsel %vm6122, %v6504, 0
          %v6764 = vsel %vm6122, %v6526, 0
          %v6767 = vsel %vm6122, %v6548, 0
          %v6770 = vsel %vm6122, %v6570, 0
          %v6773 = vsel %vm6122, %v6592, 0
          %v6776 = vsel %vm6122, %v6614, 0
          %6778 = vmatprep.subr.bf16.mxu0 0
          %6779 = vmatpush1.bf16.msra.mxu0 %v6706
          %6780 = vmatprep.subr.bf16.mxu0 0
          %6781 = vmatpush1.bf16.msra.mxu0 %v6707
          %6782 = vmatprep.subr.bf16.mxu0 0
          %6783 = vmatpush1.bf16.msra.mxu0 %v6708
          %6784 = vmatprep.subr.bf16.mxu0 0
          %6785 = vmatpush1.bf16.msra.mxu0 %v6709
          %6786 = vmatprep.subr.bf16.mxu0 0
          %6787 = vmatpush1.bf16.msra.mxu0 %v6710
          %6788 = vmatprep.subr.bf16.mxu0 0
          %6789 = vmatpush1.bf16.msra.mxu0 %v6711
          %6790 = vmatprep.subr.bf16.mxu0 0
          %6791 = vmatpush1.bf16.msra.mxu0 %v6712
          %6792 = vmatprep.subr.bf16.mxu0 0
          %6793 = vmatpush1.bf16.msra.mxu0 %v6713
          %6794 = vmatprep.subr.bf16.mxu0 0
          %6795 = vmatpush1.bf16.msra.mxu0 %v6714
          %6796 = vmatprep.subr.bf16.mxu0 0
          %6797 = vmatpush1.bf16.msra.mxu0 %v6715
          %6798 = vmatprep.subr.bf16.mxu0 0
          %6799 = vmatpush1.bf16.msra.mxu0 %v6716
          %6800 = vmatprep.subr.bf16.mxu0 0
          %6801 = vmatpush1.bf16.msra.mxu0 %v6717
          %6802 = vmatprep.subr.bf16.mxu0 0
          %6803 = vmatpush1.bf16.msra.mxu0 0
          %6804 = vmatprep.subr.bf16.mxu0 0
          %6805 = vmatpush1.bf16.msra.mxu0 0
          %6806 = vmatprep.subr.bf16.mxu0 0
          %6807 = vmatpush1.bf16.msra.mxu0 0
          %6808 = vmatprep.subr.bf16.mxu0 0
          %6809 = vmatpush1.bf16.msra.mxu0 0
          %6810 = vmatprep.mubr.bf16.mxu0 %v6731
          %6811 = vmatmul.mubr.bf16.gmra.mrb[0].mxu0 %v6272
          %v6812 = vpop.f32.mrb[0].mxu0
          %v6813 = vadd.f32 0.0, %v6812
          %v6814 = vpop.f32.mrb[0].mxu0
          %v6815 = vpop.f32.mrb[0].mxu0
          %v6816 = vadd.f32 0.0, %v6815
          %v6817 = vpop.f32.mrb[0].mxu0
          %6818 = vmatprep.mubr.bf16.mxu0 %v6734
          %6819 = vmatmul.mubr.bf16.gmra.mrb[0].mxu0 %v6294
          %v6820 = vpop.f32.mrb[0].mxu0
          %v6821 = vadd.f32 0.0, %v6820
          %v6822 = vpop.f32.mrb[0].mxu0
          %v6823 = vpop.f32.mrb[0].mxu0
          %v6824 = vadd.f32 0.0, %v6823
          %v6825 = vpop.f32.mrb[0].mxu0
          %6826 = vmatprep.mubr.bf16.mxu0 %v6737
          %6827 = vmatmul.mubr.bf16.gmra.mrb[0].mxu0 %v6316
          %v6828 = vpop.f32.mrb[0].mxu0
          %v6829 = vadd.f32 0.0, %v6828
          %v6830 = vpop.f32.mrb[0].mxu0
          %v6831 = vpop.f32.mrb[0].mxu0
          %v6832 = vadd.f32 0.0, %v6831
          %v6833 = vpop.f32.mrb[0].mxu0
          %6834 = vmatprep.mubr.bf16.mxu0 %v6740
          %6835 = vmatmul.mubr.bf16.gmra.mrb[0].mxu0 %v6338
          %v6836 = vpop.f32.mrb[0].mxu0
          %v6837 = vadd.f32 0.0, %v6836
          %v6838 = vpop.f32.mrb[0].mxu0
          %v6839 = vpop.f32.mrb[0].mxu0
          %v6840 = vadd.f32 0.0, %v6839
          %v6841 = vpop.f32.mrb[0].mxu0
          %6842 = vmatprep.mubr.bf16.mxu0 %v6743
          %6843 = vmatmul.mubr.bf16.gmra.mrb[0].mxu0 %v6360
          %v6844 = vpop.f32.mrb[0].mxu0
          %v6845 = vadd.f32 0.0, %v6844
          %v6846 = vpop.f32.mrb[0].mxu0
          %v6847 = vpop.f32.mrb[0].mxu0
          %v6848 = vadd.f32 0.0, %v6847
          %v6849 = vpop.f32.mrb[0].mxu0
          %6850 = vmatprep.mubr.bf16.mxu0 %v6746
          %6851 = vmatmul.mubr.bf16.gmra.mrb[0].mxu0 %v6382
          %v6852 = vpop.f32.mrb[0].mxu0
          %v6853 = vadd.f32 0.0, %v6852
          %v6854 = vpop.f32.mrb[0].mxu0
          %v6855 = vpop.f32.mrb[0].mxu0
          %v6856 = vadd.f32 0.0, %v6855
          %v6857 = vpop.f32.mrb[0].mxu0
          %6858 = vmatprep.mubr.bf16.mxu0 %v6749
          %6859 = vmatmul.mubr.bf16.gmra.mrb[0].mxu0 %v6404
          %v6860 = vpop.f32.mrb[0].mxu0
          %v6861 = vadd.f32 0.0, %v6860
          %v6862 = vpop.f32.mrb[0].mxu0
          %v6863 = vpop.f32.mrb[0].mxu0
          %v6864 = vadd.f32 0.0, %v6863
          %v6865 = vpop.f32.mrb[0].mxu0
          %6866 = vmatprep.mubr.bf16.mxu0 %v6752
          %6867 = vmatmul.mubr.bf16.gmra.mrb[0].mxu0 %v6426
          %v6868 = vpop.f32.mrb[0].mxu0
          %v6869 = vadd.f32 0.0, %v6868
          %v6870 = vpop.f32.mrb[0].mxu0
          %v6871 = vpop.f32.mrb[0].mxu0
          %v6872 = vadd.f32 0.0, %v6871
          %v6873 = vpop.f32.mrb[0].mxu0
          %6874 = vmatprep.mubr.bf16.mxu0 %v6755
          %6875 = vmatmul.mubr.bf16.gmra.mrb[0].mxu0 %v6448
          %v6876 = vpop.f32.mrb[0].mxu0
          %v6877 = vadd.f32 0.0, %v6876
          %v6878 = vpop.f32.mrb[0].mxu0
          %v6879 = vpop.f32.mrb[0].mxu0
          %v6880 = vadd.f32 0.0, %v6879
          %v6881 = vpop.f32.mrb[0].mxu0
          %6882 = vmatprep.mubr.bf16.mxu0 %v6758
          %6883 = vmatmul.mubr.bf16.gmra.mrb[0].mxu0 %v6470
          %v6884 = vpop.f32.mrb[0].mxu0
          %v6885 = vadd.f32 0.0, %v6884
          %v6886 = vpop.f32.mrb[0].mxu0
          %v6887 = vpop.f32.mrb[0].mxu0
          %v6888 = vadd.f32 0.0, %v6887
          %v6889 = vpop.f32.mrb[0].mxu0
          %6890 = vmatprep.mubr.bf16.mxu0 %v6761
          %6891 = vmatmul.mubr.bf16.gmra.mrb[0].mxu0 %v6492
          %v6892 = vpop.f32.mrb[0].mxu0
          %v6893 = vadd.f32 0.0, %v6892
          %v6894 = vpop.f32.mrb[0].mxu0
          %v6895 = vpop.f32.mrb[0].mxu0
          %v6896 = vadd.f32 0.0, %v6895
          %v6897 = vpop.f32.mrb[0].mxu0
          %6898 = vmatprep.mubr.bf16.mxu0 %v6764
          %6899 = vmatmul.mubr.bf16.gmra.mrb[0].mxu0 %v6514
          %v6900 = vpop.f32.mrb[0].mxu0
          %v6901 = vadd.f32 0.0, %v6900
          %v6902 = vpop.f32.mrb[0].mxu0
          %v6903 = vpop.f32.mrb[0].mxu0
          %v6904 = vadd.f32 0.0, %v6903
          %v6905 = vpop.f32.mrb[0].mxu0
          %6906 = vmatprep.mubr.bf16.mxu0 %v6767
          %6907 = vmatmul.mubr.bf16.gmra.mrb[0].mxu0 %v6536
          %v6908 = vpop.f32.mrb[0].mxu0
          %v6909 = vadd.f32 0.0, %v6908
          %v6910 = vpop.f32.mrb[0].mxu0
          %v6911 = vpop.f32.mrb[0].mxu0
          %v6912 = vadd.f32 0.0, %v6911
          %v6913 = vpop.f32.mrb[0].mxu0
          %6914 = vmatprep.mubr.bf16.mxu0 %v6770
          %6915 = vmatmul.mubr.bf16.gmra.mrb[0].mxu0 %v6558
          %v6916 = vpop.f32.mrb[0].mxu0
          %v6917 = vadd.f32 0.0, %v6916
          %v6918 = vpop.f32.mrb[0].mxu0
          %v6919 = vpop.f32.mrb[0].mxu0
          %v6920 = vadd.f32 0.0, %v6919
          %v6921 = vpop.f32.mrb[0].mxu0
          %6922 = vmatprep.mubr.bf16.mxu0 %v6773
          %6923 = vmatmul.mubr.bf16.gmra.mrb[0].mxu0 %v6580
          %v6924 = vpop.f32.mrb[0].mxu0
          %v6925 = vadd.f32 0.0, %v6924
          %v6926 = vpop.f32.mrb[0].mxu0
          %v6927 = vpop.f32.mrb[0].mxu0
          %v6928 = vadd.f32 0.0, %v6927
          %v6929 = vpop.f32.mrb[0].mxu0
          %6930 = vmatprep.mubr.bf16.mxu0 %v6776
          %6931 = vmatmul.mubr.bf16.gmra.mrb[0].mxu0 %v6602
          %v6932 = vpop.f32.mrb[0].mxu0
          %v6933 = vadd.f32 0.0, %v6932
          %v6934 = vpop.f32.mrb[0].mxu0
          %v6935 = vpop.f32.mrb[0].mxu0
          %v6936 = vadd.f32 0.0, %v6935
          %v6937 = vpop.f32.mrb[0].mxu0
          %6938 = vdwg.mxu0
          %v6963 = vunpack.c.l.b16 %v6238
          %v6964 = vunpack.c.l.b16 %v6239
          %v6965 = vunpack.c.l.b16 %v6240
          %v6966 = vunpack.c.l.b16 %v6241
          %v6967 = vunpack.c.l.b16 %v6242
          %v6968 = vunpack.c.l.b16 %v6243
          %v6969 = vunpack.c.l.b16 %v6244
          %v6970 = vunpack.c.l.b16 %v6245
          %v6971 = vunpack.c.l.b16 %v6246
          %v6972 = vunpack.c.l.b16 %v6247
          %v6973 = vunpack.c.l.b16 %v6248
          %v6974 = vunpack.c.l.b16 %v6249
          %v6975 = vunpack.c.l.b16 %v6250
          %v6976 = vunpack.c.l.b16 %v6251
          %v6977 = vunpack.c.l.b16 %v6252
          %v6978 = vunpack.c.l.b16 %v6253
          %v6979 = vunpack.c.l.b16 %v6254
          %v6980 = vunpack.c.l.b16 %v6255
          %v6981 = vunpack.c.l.b16 %v6256
          %v6982 = vunpack.c.l.b16 %v6257
          %v6983 = vunpack.c.l.b16 %v6258
          %v6984 = vunpack.c.l.b16 %v6259
          %v6985 = vunpack.c.l.b16 %v6260
          %v6986 = vunpack.c.l.b16 %v6261
          %v6987 = vpack.c.b16 %v6964, %v6963
          %v6988 = vpack.c.b16 %v6966, %v6965
          %v6989 = vpack.c.b16 %v6968, %v6967
          %v6990 = vpack.c.b16 %v6970, %v6969
          %v6991 = vpack.c.b16 %v6972, %v6971
          %v6992 = vpack.c.b16 %v6974, %v6973
          %v6993 = vpack.c.b16 %v6976, %v6975
          %v6994 = vpack.c.b16 %v6978, %v6977
          %v6995 = vpack.c.b16 %v6980, %v6979
          %v6996 = vpack.c.b16 %v6982, %v6981
          %v6997 = vpack.c.b16 %v6984, %v6983
          %v6998 = vpack.c.b16 %v6986, %v6985
          %v7011 = vsel %vm6122, %v6090, 0
          %v7013 = vsel %vm6122, %v6092, 0
          %v7015 = vsel %vm6122, %v6094, 0
          %v7017 = vsel %vm6122, %v6096, 0
          %v7019 = vsel %vm6122, %v6098, 0
          %v7021 = vsel %vm6122, %v6100, 0
          %v7023 = vsel %vm6122, %v6102, 0
          %v7025 = vsel %vm6122, %v6104, 0
          %v7027 = vsel %vm6122, %v6106, 0
          %v7029 = vsel %vm6122, %v6108, 0
          %v7031 = vsel %vm6122, %v6110, 0
          %v7033 = vsel %vm6122, %v6112, 0
          %v7035 = vsel %vm6122, %v6114, 0
          %v7037 = vsel %vm6122, %v6116, 0
          %v7039 = vsel %vm6122, %v6118, 0
          %v7041 = vsel %vm6122, %v6120, 0
          %7043 = vmatprep.subr.bf16.mxu0 0
          %7044 = vmatpush1.bf16.msra.mxu0 %v6987
          %7045 = vmatprep.subr.bf16.mxu0 0
          %7046 = vmatpush1.bf16.msra.mxu0 %v6988
          %7047 = vmatprep.subr.bf16.mxu0 0
          %7048 = vmatpush1.bf16.msra.mxu0 %v6989
          %7049 = vmatprep.subr.bf16.mxu0 0
          %7050 = vmatpush1.bf16.msra.mxu0 %v6990
          %7051 = vmatprep.subr.bf16.mxu0 0
          %7052 = vmatpush1.bf16.msra.mxu0 %v6991
          %7053 = vmatprep.subr.bf16.mxu0 0
          %7054 = vmatpush1.bf16.msra.mxu0 %v6992
          %7055 = vmatprep.subr.bf16.mxu0 0
          %7056 = vmatpush1.bf16.msra.mxu0 %v6993
          %7057 = vmatprep.subr.bf16.mxu0 0
          %7058 = vmatpush1.bf16.msra.mxu0 %v6994
          %7059 = vmatprep.subr.bf16.mxu0 0
          %7060 = vmatpush1.bf16.msra.mxu0 %v6995
          %7061 = vmatprep.subr.bf16.mxu0 0
          %7062 = vmatpush1.bf16.msra.mxu0 %v6996
          %7063 = vmatprep.subr.bf16.mxu0 0
          %7064 = vmatpush1.bf16.msra.mxu0 %v6997
          %7065 = vmatprep.subr.bf16.mxu0 0
          %7066 = vmatpush1.bf16.msra.mxu0 %v6998
          %7067 = vmatprep.subr.bf16.mxu0 0
          %7068 = vmatpush1.bf16.msra.mxu0 0
          %7069 = vmatprep.subr.bf16.mxu0 0
          %7070 = vmatpush1.bf16.msra.mxu0 0
          %7071 = vmatprep.subr.bf16.mxu0 0
          %7072 = vmatpush1.bf16.msra.mxu0 0
          %7073 = vmatprep.subr.bf16.mxu0 0
          %7074 = vmatpush1.bf16.msra.mxu0 0
          %7075 = vmatprep.mubr.bf16.mxu0 %v7011
          %7076 = vmatmul.mubr.bf16.gmra.mrb[0].mxu0 %v6125
          %v7077 = vpop.f32.mrb[0].mxu0
          %v7078 = vadd.f32 %v6813, %v7077
          %v7079 = vpop.f32.mrb[0].mxu0
          %v7080 = vpop.f32.mrb[0].mxu0
          %v7081 = vadd.f32 %v6816, %v7080
          %v7082 = vpop.f32.mrb[0].mxu0
          %7083 = vmatprep.mubr.bf16.mxu0 %v7013
          %7084 = vmatmul.mubr.bf16.gmra.mrb[0].mxu0 %v6132
          %v7085 = vpop.f32.mrb[0].mxu0
          %v7086 = vadd.f32 %v6821, %v7085
          %v7087 = vpop.f32.mrb[0].mxu0
          %v7088 = vpop.f32.mrb[0].mxu0
          %v7089 = vadd.f32 %v6824, %v7088
          %v7090 = vpop.f32.mrb[0].mxu0
          %7091 = vmatprep.mubr.bf16.mxu0 %v7015
          %7092 = vmatmul.mubr.bf16.gmra.mrb[0].mxu0 %v6139
          %v7093 = vpop.f32.mrb[0].mxu0
          %v7094 = vadd.f32 %v6829, %v7093
          %v7095 = vpop.f32.mrb[0].mxu0
          %v7096 = vpop.f32.mrb[0].mxu0
          %v7097 = vadd.f32 %v6832, %v7096
          %v7098 = vpop.f32.mrb[0].mxu0
          %7099 = vmatprep.mubr.bf16.mxu0 %v7017
          %7100 = vmatmul.mubr.bf16.gmra.mrb[0].mxu0 %v6146
          %v7101 = vpop.f32.mrb[0].mxu0
          %v7102 = vadd.f32 %v6837, %v7101
          %v7103 = vpop.f32.mrb[0].mxu0
          %v7104 = vpop.f32.mrb[0].mxu0
          %v7105 = vadd.f32 %v6840, %v7104
          %v7106 = vpop.f32.mrb[0].mxu0
          %7107 = vmatprep.mubr.bf16.mxu0 %v7019
          %7108 = vmatmul.mubr.bf16.gmra.mrb[0].mxu0 %v6153
          %v7109 = vpop.f32.mrb[0].mxu0
          %v7110 = vadd.f32 %v6845, %v7109
          %v7111 = vpop.f32.mrb[0].mxu0
          %v7112 = vpop.f32.mrb[0].mxu0
          %v7113 = vadd.f32 %v6848, %v7112
          %v7114 = vpop.f32.mrb[0].mxu0
          %7115 = vmatprep.mubr.bf16.mxu0 %v7021
          %7116 = vmatmul.mubr.bf16.gmra.mrb[0].mxu0 %v6160
          %v7117 = vpop.f32.mrb[0].mxu0
          %v7118 = vadd.f32 %v6853, %v7117
          %v7119 = vpop.f32.mrb[0].mxu0
          %v7120 = vpop.f32.mrb[0].mxu0
          %v7121 = vadd.f32 %v6856, %v7120
          %v7122 = vpop.f32.mrb[0].mxu0
          %7123 = vmatprep.mubr.bf16.mxu0 %v7023
          %7124 = vmatmul.mubr.bf16.gmra.mrb[0].mxu0 %v6167
          %v7125 = vpop.f32.mrb[0].mxu0
          %v7126 = vadd.f32 %v6861, %v7125
          %v7127 = vpop.f32.mrb[0].mxu0
          %v7128 = vpop.f32.mrb[0].mxu0
          %v7129 = vadd.f32 %v6864, %v7128
          %v7130 = vpop.f32.mrb[0].mxu0
          %7131 = vmatprep.mubr.bf16.mxu0 %v7025
          %7132 = vmatmul.mubr.bf16.gmra.mrb[0].mxu0 %v6174
          %v7133 = vpop.f32.mrb[0].mxu0
          %v7134 = vadd.f32 %v6869, %v7133
          %v7135 = vpop.f32.mrb[0].mxu0
          %v7136 = vpop.f32.mrb[0].mxu0
          %v7137 = vadd.f32 %v6872, %v7136
          %v7138 = vpop.f32.mrb[0].mxu0
          %7139 = vmatprep.mubr.bf16.mxu0 %v7027
          %7140 = vmatmul.mubr.bf16.gmra.mrb[0].mxu0 %v6181
          %v7141 = vpop.f32.mrb[0].mxu0
          %v7142 = vadd.f32 %v6877, %v7141
          %v7143 = vpop.f32.mrb[0].mxu0
          %v7144 = vpop.f32.mrb[0].mxu0
          %v7145 = vadd.f32 %v6880, %v7144
          %v7146 = vpop.f32.mrb[0].mxu0
          %7147 = vmatprep.mubr.bf16.mxu0 %v7029
          %7148 = vmatmul.mubr.bf16.gmra.mrb[0].mxu0 %v6188
          %v7149 = vpop.f32.mrb[0].mxu0
          %v7150 = vadd.f32 %v6885, %v7149
          %v7151 = vpop.f32.mrb[0].mxu0
          %v7152 = vpop.f32.mrb[0].mxu0
          %v7153 = vadd.f32 %v6888, %v7152
          %v7154 = vpop.f32.mrb[0].mxu0
          %7155 = vmatprep.mubr.bf16.mxu0 %v7031
          %7156 = vmatmul.mubr.bf16.gmra.mrb[0].mxu0 %v6195
          %v7157 = vpop.f32.mrb[0].mxu0
          %v7158 = vadd.f32 %v6893, %v7157
          %v7159 = vpop.f32.mrb[0].mxu0
          %v7160 = vpop.f32.mrb[0].mxu0
          %v7161 = vadd.f32 %v6896, %v7160
          %v7162 = vpop.f32.mrb[0].mxu0
          %7163 = vmatprep.mubr.bf16.mxu0 %v7033
          %7164 = vmatmul.mubr.bf16.gmra.mrb[0].mxu0 %v6202
          %v7165 = vpop.f32.mrb[0].mxu0
          %v7166 = vadd.f32 %v6901, %v7165
          %v7167 = vpop.f32.mrb[0].mxu0
          %v7168 = vpop.f32.mrb[0].mxu0
          %v7169 = vadd.f32 %v6904, %v7168
          %v7170 = vpop.f32.mrb[0].mxu0
          %7171 = vmatprep.mubr.bf16.mxu0 %v7035
          %7172 = vmatmul.mubr.bf16.gmra.mrb[0].mxu0 %v6209
          %v7173 = vpop.f32.mrb[0].mxu0
          %v7174 = vadd.f32 %v6909, %v7173
          %v7175 = vpop.f32.mrb[0].mxu0
          %v7176 = vpop.f32.mrb[0].mxu0
          %v7177 = vadd.f32 %v6912, %v7176
          %v7178 = vpop.f32.mrb[0].mxu0
          %7179 = vmatprep.mubr.bf16.mxu0 %v7037
          %7180 = vmatmul.mubr.bf16.gmra.mrb[0].mxu0 %v6216
          %v7181 = vpop.f32.mrb[0].mxu0
          %v7182 = vadd.f32 %v6917, %v7181
          %v7183 = vpop.f32.mrb[0].mxu0
          %v7184 = vpop.f32.mrb[0].mxu0
          %v7185 = vadd.f32 %v6920, %v7184
          %v7186 = vpop.f32.mrb[0].mxu0
          %7187 = vmatprep.mubr.bf16.mxu0 %v7039
          %7188 = vmatmul.mubr.bf16.gmra.mrb[0].mxu0 %v6223
          %v7189 = vpop.f32.mrb[0].mxu0
          %v7190 = vadd.f32 %v6925, %v7189
          %v7191 = vpop.f32.mrb[0].mxu0
          %v7192 = vpop.f32.mrb[0].mxu0
          %v7193 = vadd.f32 %v6928, %v7192
          %v7194 = vpop.f32.mrb[0].mxu0
          %7195 = vmatprep.mubr.bf16.mxu0 %v7041
          %7196 = vmatmul.mubr.bf16.gmra.mrb[0].mxu0 %v6230
          %v7197 = vpop.f32.mrb[0].mxu0
          %v7198 = vadd.f32 %v6933, %v7197
          %v7199 = vpop.f32.mrb[0].mxu0
          %v7200 = vpop.f32.mrb[0].mxu0
          %v7201 = vadd.f32 %v6936, %v7200
          %v7202 = vpop.f32.mrb[0].mxu0
          %7203 = vdwg.mxu0
          %vm7236 = vcmask 1046528
          %v7237 = vrot.slane %v6125, 1
          %v7238 = vrot.slane %v6129, 1
          %v7239 = vsel %vm7236, %v7237, %v7238
          %v7240 = vrot.slane %v6090, 1
          %v7241 = vrot.slane %v6091, 1
          %v7242 = vsel %vm7236, %v7240, %v7241
          %v7243 = vrot.slane %v6132, 1
          %v7244 = vrot.slane %v6136, 1
          %v7245 = vsel %vm7236, %v7243, %v7244
          %v7246 = vrot.slane %v6092, 1
          %v7247 = vrot.slane %v6093, 1
          %v7248 = vsel %vm7236, %v7246, %v7247
          %v7249 = vrot.slane %v6139, 1
          %v7250 = vrot.slane %v6143, 1
          %v7251 = vsel %vm7236, %v7249, %v7250
          %v7252 = vrot.slane %v6094, 1
          %v7253 = vrot.slane %v6095, 1
          %v7254 = vsel %vm7236, %v7252, %v7253
          %v7255 = vrot.slane %v6146, 1
          %v7256 = vrot.slane %v6150, 1
          %v7257 = vsel %vm7236, %v7255, %v7256
          %v7258 = vrot.slane %v6096, 1
          %v7259 = vrot.slane %v6097, 1
          %v7260 = vsel %vm7236, %v7258, %v7259
          %v7261 = vrot.slane %v6153, 1
          %v7262 = vrot.slane %v6157, 1
          %v7263 = vsel %vm7236, %v7261, %v7262
          %v7264 = vrot.slane %v6098, 1
          %v7265 = vrot.slane %v6099, 1
          %v7266 = vsel %vm7236, %v7264, %v7265
          %v7267 = vrot.slane %v6160, 1
          %v7268 = vrot.slane %v6164, 1
          %v7269 = vsel %vm7236, %v7267, %v7268
          %v7270 = vrot.slane %v6100, 1
          %v7271 = vrot.slane %v6101, 1
          %v7272 = vsel %vm7236, %v7270, %v7271
          %v7273 = vrot.slane %v6167, 1
          %v7274 = vrot.slane %v6171, 1
          %v7275 = vsel %vm7236, %v7273, %v7274
          %v7276 = vrot.slane %v6102, 1
          %v7277 = vrot.slane %v6103, 1
          %v7278 = vsel %vm7236, %v7276, %v7277
          %v7279 = vrot.slane %v6174, 1
          %v7280 = vrot.slane %v6178, 1
          %v7281 = vsel %vm7236, %v7279, %v7280
          %v7282 = vrot.slane %v6104, 1
          %v7283 = vrot.slane %v6105, 1
          %v7284 = vsel %vm7236, %v7282, %v7283
          %v7285 = vrot.slane %v6181, 1
          %v7286 = vrot.slane %v6185, 1
          %v7287 = vsel %vm7236, %v7285, %v7286
          %v7288 = vrot.slane %v6106, 1
          %v7289 = vrot.slane %v6107, 1
          %v7290 = vsel %vm7236, %v7288, %v7289
          %v7291 = vrot.slane %v6188, 1
          %v7292 = vrot.slane %v6192, 1
          %v7293 = vsel %vm7236, %v7291, %v7292
          %v7294 = vrot.slane %v6108, 1
          %v7295 = vrot.slane %v6109, 1
          %v7296 = vsel %vm7236, %v7294, %v7295
          %v7297 = vrot.slane %v6195, 1
          %v7298 = vrot.slane %v6199, 1
          %v7299 = vsel %vm7236, %v7297, %v7298
          %v7300 = vrot.slane %v6110, 1
          %v7301 = vrot.slane %v6111, 1
          %v7302 = vsel %vm7236, %v7300, %v7301
          %v7303 = vrot.slane %v6202, 1
          %v7304 = vrot.slane %v6206, 1
          %v7305 = vsel %vm7236, %v7303, %v7304
          %v7306 = vrot.slane %v6112, 1
          %v7307 = vrot.slane %v6113, 1
          %v7308 = vsel %vm7236, %v7306, %v7307
          %v7309 = vrot.slane %v6209, 1
          %v7310 = vrot.slane %v6213, 1
          %v7311 = vsel %vm7236, %v7309, %v7310
          %v7312 = vrot.slane %v6114, 1
          %v7313 = vrot.slane %v6115, 1
          %v7314 = vsel %vm7236, %v7312, %v7313
          %v7315 = vrot.slane %v6216, 1
          %v7316 = vrot.slane %v6220, 1
          %v7317 = vsel %vm7236, %v7315, %v7316
          %v7318 = vrot.slane %v6116, 1
          %v7319 = vrot.slane %v6117, 1
          %v7320 = vsel %vm7236, %v7318, %v7319
          %v7321 = vrot.slane %v6223, 1
          %v7322 = vrot.slane %v6227, 1
          %v7323 = vsel %vm7236, %v7321, %v7322
          %v7324 = vrot.slane %v6118, 1
          %v7325 = vrot.slane %v6119, 1
          %v7326 = vsel %vm7236, %v7324, %v7325
          %v7327 = vrot.slane %v6230, 1
          %v7328 = vrot.slane %v6234, 1
          %v7329 = vsel %vm7236, %v7327, %v7328
          %v7330 = vrot.slane %v6120, 1
          %v7331 = vrot.slane %v6121, 1
          %v7332 = vsel %vm7236, %v7330, %v7331
          %s7349 = sadd.s32 48, %s6235
          %s7350 = smul.addr %s7349, 4
          %s7351 = scalar_lea.vmem %s2, %s7350
          %v7352 = vld [vmem:[%s7351] sm:$0xf]
          %v7353 = vld [vmem:[%s7351 + $0x4] sm:$0xf]
          %v7354 = vld [vmem:[%s7351 + $0x8] sm:$0xf]
          %v7355 = vld [vmem:[%s7351 + $0xc] sm:$0xf]
          %v7356 = vld [vmem:[%s7351 + $0x10] sm:$0xf]
          %v7357 = vld [vmem:[%s7351 + $0x14] sm:$0xf]
          %v7358 = vld [vmem:[%s7351 + $0x18] sm:$0xf]
          %v7359 = vld [vmem:[%s7351 + $0x1c] sm:$0xf]
          %v7360 = vld [vmem:[%s7351 + $0x20] sm:$0xf]
          %v7361 = vld [vmem:[%s7351 + $0x24] sm:$0xf]
          %v7362 = vld [vmem:[%s7351 + $0x28] sm:$0xf]
          %v7363 = vld [vmem:[%s7351 + $0x2c] sm:$0xf]
          %v7364 = vld [vmem:[%s7351 + $0x30] sm:$0xf]
          %v7365 = vld [vmem:[%s7351 + $0x34] sm:$0xf]
          %v7366 = vld [vmem:[%s7351 + $0x38] sm:$0xf]
          %v7367 = vld [vmem:[%s7351 + $0x3c] sm:$0xf]
          %v7368 = vld [vmem:[%s7351 + $0x40] sm:$0xf]
          %v7369 = vld [vmem:[%s7351 + $0x44] sm:$0xf]
          %v7370 = vld [vmem:[%s7351 + $0x48] sm:$0xf]
          %v7371 = vld [vmem:[%s7351 + $0x4c] sm:$0xf]
          %v7372 = vld [vmem:[%s7351 + $0x50] sm:$0xf]
          %v7373 = vld [vmem:[%s7351 + $0x54] sm:$0xf]
          %v7374 = vld [vmem:[%s7351 + $0x58] sm:$0xf]
          %v7375 = vld [vmem:[%s7351 + $0x5c] sm:$0xf]
          %v7400 = vunpack.c.l.b16 %v7352
          %v7401 = vunpack.c.l.b16 %v7353
          %v7402 = vunpack.c.l.b16 %v7354
          %v7403 = vunpack.c.l.b16 %v7355
          %v7404 = vunpack.c.l.b16 %v7356
          %v7405 = vunpack.c.l.b16 %v7357
          %v7406 = vunpack.c.l.b16 %v7358
          %v7407 = vunpack.c.l.b16 %v7359
          %v7408 = vunpack.c.l.b16 %v7360
          %v7409 = vunpack.c.l.b16 %v7361
          %v7410 = vunpack.c.l.b16 %v7362
          %v7411 = vunpack.c.l.b16 %v7363
          %v7412 = vunpack.c.l.b16 %v7364
          %v7413 = vunpack.c.l.b16 %v7365
          %v7414 = vunpack.c.l.b16 %v7366
          %v7415 = vunpack.c.l.b16 %v7367
          %v7416 = vunpack.c.l.b16 %v7368
          %v7417 = vunpack.c.l.b16 %v7369
          %v7418 = vunpack.c.l.b16 %v7370
          %v7419 = vunpack.c.l.b16 %v7371
          %v7420 = vunpack.c.l.b16 %v7372
          %v7421 = vunpack.c.l.b16 %v7373
          %v7422 = vunpack.c.l.b16 %v7374
          %v7423 = vunpack.c.l.b16 %v7375
          %v7424 = vpack.c.b16 %v7401, %v7400
          %v7425 = vpack.c.b16 %v7403, %v7402
          %v7426 = vpack.c.b16 %v7405, %v7404
          %v7427 = vpack.c.b16 %v7407, %v7406
          %v7428 = vpack.c.b16 %v7409, %v7408
          %v7429 = vpack.c.b16 %v7411, %v7410
          %v7430 = vpack.c.b16 %v7413, %v7412
          %v7431 = vpack.c.b16 %v7415, %v7414
          %v7432 = vpack.c.b16 %v7417, %v7416
          %v7433 = vpack.c.b16 %v7419, %v7418
          %v7434 = vpack.c.b16 %v7421, %v7420
          %v7435 = vpack.c.b16 %v7423, %v7422
          %v7449 = vsel %vm6122, %v7242, 0
          %v7452 = vsel %vm6122, %v7248, 0
          %v7455 = vsel %vm6122, %v7254, 0
          %v7458 = vsel %vm6122, %v7260, 0
          %v7461 = vsel %vm6122, %v7266, 0
          %v7464 = vsel %vm6122, %v7272, 0
          %v7467 = vsel %vm6122, %v7278, 0
          %v7470 = vsel %vm6122, %v7284, 0
          %v7473 = vsel %vm6122, %v7290, 0
          %v7476 = vsel %vm6122, %v7296, 0
          %v7479 = vsel %vm6122, %v7302, 0
          %v7482 = vsel %vm6122, %v7308, 0
          %v7485 = vsel %vm6122, %v7314, 0
          %v7488 = vsel %vm6122, %v7320, 0
          %v7491 = vsel %vm6122, %v7326, 0
          %v7494 = vsel %vm6122, %v7332, 0
          %7496 = vmatprep.subr.bf16.mxu0 0
          %7497 = vmatpush1.bf16.msra.mxu0 %v7424
          %7498 = vmatprep.subr.bf16.mxu0 0
          %7499 = vmatpush1.bf16.msra.mxu0 %v7425
          %7500 = vmatprep.subr.bf16.mxu0 0
          %7501 = vmatpush1.bf16.msra.mxu0 %v7426
          %7502 = vmatprep.subr.bf16.mxu0 0
          %7503 = vmatpush1.bf16.msra.mxu0 %v7427
          %7504 = vmatprep.subr.bf16.mxu0 0
          %7505 = vmatpush1.bf16.msra.mxu0 %v7428
          %7506 = vmatprep.subr.bf16.mxu0 0
          %7507 = vmatpush1.bf16.msra.mxu0 %v7429
          %7508 = vmatprep.subr.bf16.mxu0 0
          %7509 = vmatpush1.bf16.msra.mxu0 %v7430
          %7510 = vmatprep.subr.bf16.mxu0 0
          %7511 = vmatpush1.bf16.msra.mxu0 %v7431
          %7512 = vmatprep.subr.bf16.mxu0 0
          %7513 = vmatpush1.bf16.msra.mxu0 %v7432
          %7514 = vmatprep.subr.bf16.mxu0 0
          %7515 = vmatpush1.bf16.msra.mxu0 %v7433
          %7516 = vmatprep.subr.bf16.mxu0 0
          %7517 = vmatpush1.bf16.msra.mxu0 %v7434
          %7518 = vmatprep.subr.bf16.mxu0 0
          %7519 = vmatpush1.bf16.msra.mxu0 %v7435
          %7520 = vmatprep.subr.bf16.mxu0 0
          %7521 = vmatpush1.bf16.msra.mxu0 0
          %7522 = vmatprep.subr.bf16.mxu0 0
          %7523 = vmatpush1.bf16.msra.mxu0 0
          %7524 = vmatprep.subr.bf16.mxu0 0
          %7525 = vmatpush1.bf16.msra.mxu0 0
          %7526 = vmatprep.subr.bf16.mxu0 0
          %7527 = vmatpush1.bf16.msra.mxu0 0
          %7528 = vmatprep.mubr.bf16.mxu0 %v7449
          %7529 = vmatmul.mubr.bf16.gmra.mrb[0].mxu0 %v7239
          %v7530 = vpop.f32.mrb[0].mxu0
          %v7531 = vadd.f32 0.0, %v7530
          %v7532 = vpop.f32.mrb[0].mxu0
          %v7533 = vpop.f32.mrb[0].mxu0
          %v7534 = vadd.f32 0.0, %v7533
          %v7535 = vpop.f32.mrb[0].mxu0
          %7536 = vmatprep.mubr.bf16.mxu0 %v7452
          %7537 = vmatmul.mubr.bf16.gmra.mrb[0].mxu0 %v7245
          %v7538 = vpop.f32.mrb[0].mxu0
          %v7539 = vadd.f32 0.0, %v7538
          %v7540 = vpop.f32.mrb[0].mxu0
          %v7541 = vpop.f32.mrb[0].mxu0
          %v7542 = vadd.f32 0.0, %v7541
          %v7543 = vpop.f32.mrb[0].mxu0
          %7544 = vmatprep.mubr.bf16.mxu0 %v7455
          %7545 = vmatmul.mubr.bf16.gmra.mrb[0].mxu0 %v7251
          %v7546 = vpop.f32.mrb[0].mxu0
          %v7547 = vadd.f32 0.0, %v7546
          %v7548 = vpop.f32.mrb[0].mxu0
          %v7549 = vpop.f32.mrb[0].mxu0
          %v7550 = vadd.f32 0.0, %v7549
          %v7551 = vpop.f32.mrb[0].mxu0
          %7552 = vmatprep.mubr.bf16.mxu0 %v7458
          %7553 = vmatmul.mubr.bf16.gmra.mrb[0].mxu0 %v7257
          %v7554 = vpop.f32.mrb[0].mxu0
          %v7555 = vadd.f32 0.0, %v7554
          %v7556 = vpop.f32.mrb[0].mxu0
          %v7557 = vpop.f32.mrb[0].mxu0
          %v7558 = vadd.f32 0.0, %v7557
          %v7559 = vpop.f32.mrb[0].mxu0
          %7560 = vmatprep.mubr.bf16.mxu0 %v7461
          %7561 = vmatmul.mubr.bf16.gmra.mrb[0].mxu0 %v7263
          %v7562 = vpop.f32.mrb[0].mxu0
          %v7563 = vadd.f32 0.0, %v7562
          %v7564 = vpop.f32.mrb[0].mxu0
          %v7565 = vpop.f32.mrb[0].mxu0
          %v7566 = vadd.f32 0.0, %v7565
          %v7567 = vpop.f32.mrb[0].mxu0
          %7568 = vmatprep.mubr.bf16.mxu0 %v7464
          %7569 = vmatmul.mubr.bf16.gmra.mrb[0].mxu0 %v7269
          %v7570 = vpop.f32.mrb[0].mxu0
          %v7571 = vadd.f32 0.0, %v7570
          %v7572 = vpop.f32.mrb[0].mxu0
          %v7573 = vpop.f32.mrb[0].mxu0
          %v7574 = vadd.f32 0.0, %v7573
          %v7575 = vpop.f32.mrb[0].mxu0
          %7576 = vmatprep.mubr.bf16.mxu0 %v7467
          %7577 = vmatmul.mubr.bf16.gmra.mrb[0].mxu0 %v7275
          %v7578 = vpop.f32.mrb[0].mxu0
          %v7579 = vadd.f32 0.0, %v7578
          %v7580 = vpop.f32.mrb[0].mxu0
          %v7581 = vpop.f32.mrb[0].mxu0
          %v7582 = vadd.f32 0.0, %v7581
          %v7583 = vpop.f32.mrb[0].mxu0
          %7584 = vmatprep.mubr.bf16.mxu0 %v7470
          %7585 = vmatmul.mubr.bf16.gmra.mrb[0].mxu0 %v7281
          %v7586 = vpop.f32.mrb[0].mxu0
          %v7587 = vadd.f32 0.0, %v7586
          %v7588 = vpop.f32.mrb[0].mxu0
          %v7589 = vpop.f32.mrb[0].mxu0
          %v7590 = vadd.f32 0.0, %v7589
          %v7591 = vpop.f32.mrb[0].mxu0
          %7592 = vmatprep.mubr.bf16.mxu0 %v7473
          %7593 = vmatmul.mubr.bf16.gmra.mrb[0].mxu0 %v7287
          %v7594 = vpop.f32.mrb[0].mxu0
          %v7595 = vadd.f32 0.0, %v7594
          %v7596 = vpop.f32.mrb[0].mxu0
          %v7597 = vpop.f32.mrb[0].mxu0
          %v7598 = vadd.f32 0.0, %v7597
          %v7599 = vpop.f32.mrb[0].mxu0
          %7600 = vmatprep.mubr.bf16.mxu0 %v7476
          %7601 = vmatmul.mubr.bf16.gmra.mrb[0].mxu0 %v7293
          %v7602 = vpop.f32.mrb[0].mxu0
          %v7603 = vadd.f32 0.0, %v7602
          %v7604 = vpop.f32.mrb[0].mxu0
          %v7605 = vpop.f32.mrb[0].mxu0
          %v7606 = vadd.f32 0.0, %v7605
          %v7607 = vpop.f32.mrb[0].mxu0
          %7608 = vmatprep.mubr.bf16.mxu0 %v7479
          %7609 = vmatmul.mubr.bf16.gmra.mrb[0].mxu0 %v7299
          %v7610 = vpop.f32.mrb[0].mxu0
          %v7611 = vadd.f32 0.0, %v7610
          %v7612 = vpop.f32.mrb[0].mxu0
          %v7613 = vpop.f32.mrb[0].mxu0
          %v7614 = vadd.f32 0.0, %v7613
          %v7615 = vpop.f32.mrb[0].mxu0
          %7616 = vmatprep.mubr.bf16.mxu0 %v7482
          %7617 = vmatmul.mubr.bf16.gmra.mrb[0].mxu0 %v7305
          %v7618 = vpop.f32.mrb[0].mxu0
          %v7619 = vadd.f32 0.0, %v7618
          %v7620 = vpop.f32.mrb[0].mxu0
          %v7621 = vpop.f32.mrb[0].mxu0
          %v7622 = vadd.f32 0.0, %v7621
          %v7623 = vpop.f32.mrb[0].mxu0
          %7624 = vmatprep.mubr.bf16.mxu0 %v7485
          %7625 = vmatmul.mubr.bf16.gmra.mrb[0].mxu0 %v7311
          %v7626 = vpop.f32.mrb[0].mxu0
          %v7627 = vadd.f32 0.0, %v7626
          %v7628 = vpop.f32.mrb[0].mxu0
          %v7629 = vpop.f32.mrb[0].mxu0
          %v7630 = vadd.f32 0.0, %v7629
          %v7631 = vpop.f32.mrb[0].mxu0
          %7632 = vmatprep.mubr.bf16.mxu0 %v7488
          %7633 = vmatmul.mubr.bf16.gmra.mrb[0].mxu0 %v7317
          %v7634 = vpop.f32.mrb[0].mxu0
          %v7635 = vadd.f32 0.0, %v7634
          %v7636 = vpop.f32.mrb[0].mxu0
          %v7637 = vpop.f32.mrb[0].mxu0
          %v7638 = vadd.f32 0.0, %v7637
          %v7639 = vpop.f32.mrb[0].mxu0
          %7640 = vmatprep.mubr.bf16.mxu0 %v7491
          %7641 = vmatmul.mubr.bf16.gmra.mrb[0].mxu0 %v7323
          %v7642 = vpop.f32.mrb[0].mxu0
          %v7643 = vadd.f32 0.0, %v7642
          %v7644 = vpop.f32.mrb[0].mxu0
          %v7645 = vpop.f32.mrb[0].mxu0
          %v7646 = vadd.f32 0.0, %v7645
          %v7647 = vpop.f32.mrb[0].mxu0
          %7648 = vmatprep.mubr.bf16.mxu0 %v7494
          %7649 = vmatmul.mubr.bf16.gmra.mrb[0].mxu0 %v7329
          %v7650 = vpop.f32.mrb[0].mxu0
          %v7651 = vadd.f32 0.0, %v7650
          %v7652 = vpop.f32.mrb[0].mxu0
          %v7653 = vpop.f32.mrb[0].mxu0
          %v7654 = vadd.f32 0.0, %v7653
          %v7655 = vpop.f32.mrb[0].mxu0
          %7656 = vdwg.mxu0
          %v7657 = vadd.f32 %v7078, %v7531
          %v7658 = vadd.f32 %v7081, %v7534
          %v7659 = vadd.f32 %v7086, %v7539
          %v7660 = vadd.f32 %v7089, %v7542
          %v7661 = vadd.f32 %v7094, %v7547
          %v7662 = vadd.f32 %v7097, %v7550
          %v7663 = vadd.f32 %v7102, %v7555
          %v7664 = vadd.f32 %v7105, %v7558
          %v7665 = vadd.f32 %v7110, %v7563
          %v7666 = vadd.f32 %v7113, %v7566
          %v7667 = vadd.f32 %v7118, %v7571
          %v7668 = vadd.f32 %v7121, %v7574
          %v7669 = vadd.f32 %v7126, %v7579
          %v7670 = vadd.f32 %v7129, %v7582
          %v7671 = vadd.f32 %v7134, %v7587
          %v7672 = vadd.f32 %v7137, %v7590
          %v7673 = vadd.f32 %v7142, %v7595
          %v7674 = vadd.f32 %v7145, %v7598
          %v7675 = vadd.f32 %v7150, %v7603
          %v7676 = vadd.f32 %v7153, %v7606
          %v7677 = vadd.f32 %v7158, %v7611
          %v7678 = vadd.f32 %v7161, %v7614
          %v7679 = vadd.f32 %v7166, %v7619
          %v7680 = vadd.f32 %v7169, %v7622
          %v7681 = vadd.f32 %v7174, %v7627
          %v7682 = vadd.f32 %v7177, %v7630
          %v7683 = vadd.f32 %v7182, %v7635
          %v7684 = vadd.f32 %v7185, %v7638
          %v7685 = vadd.f32 %v7190, %v7643
          %v7686 = vadd.f32 %v7193, %v7646
          %v7687 = vadd.f32 %v7198, %v7651
          %v7688 = vadd.f32 %v7201, %v7654
          %7689 = vst.msk [vmem:[#allocation3] sm:$0xff] %vm6122, %v7657
          %7690 = vst.msk [vmem:[#allocation3 + $0x8] sm:$0xff] %vm6122, %v7658
          %7691 = vst.msk [vmem:[#allocation3 + $0x10] sm:$0xff] %vm6122, %v7659
          %7692 = vst.msk [vmem:[#allocation3 + $0x18] sm:$0xff] %vm6122, %v7660
          %7693 = vst.msk [vmem:[#allocation3 + $0x20] sm:$0xff] %vm6122, %v7661
          %7694 = vst.msk [vmem:[#allocation3 + $0x28] sm:$0xff] %vm6122, %v7662
          %7695 = vst.msk [vmem:[#allocation3 + $0x30] sm:$0xff] %vm6122, %v7663
          %7696 = vst.msk [vmem:[#allocation3 + $0x38] sm:$0xff] %vm6122, %v7664
          %7697 = vst.msk [vmem:[#allocation3 + $0x40] sm:$0xff] %vm6122, %v7665
          %7698 = vst.msk [vmem:[#allocation3 + $0x48] sm:$0xff] %vm6122, %v7666
          %7699 = vst.msk [vmem:[#allocation3 + $0x50] sm:$0xff] %vm6122, %v7667
          %7700 = vst.msk [vmem:[#allocation3 + $0x58] sm:$0xff] %vm6122, %v7668
          %7701 = vst.msk [vmem:[#allocation3 + $0x60] sm:$0xff] %vm6122, %v7669
          %7702 = vst.msk [vmem:[#allocation3 + $0x68] sm:$0xff] %vm6122, %v7670
          %7703 = vst.msk [vmem:[#allocation3 + $0x70] sm:$0xff] %vm6122, %v7671
          %7704 = vst.msk [vmem:[#allocation3 + $0x78] sm:$0xff] %vm6122, %v7672
          %7705 = vst.msk [vmem:[#allocation3 + $0x80] sm:$0xff] %vm6122, %v7673
          %7706 = vst.msk [vmem:[#allocation3 + $0x88] sm:$0xff] %vm6122, %v7674
          %7707 = vst.msk [vmem:[#allocation3 + $0x90] sm:$0xff] %vm6122, %v7675
          %7708 = vst.msk [vmem:[#allocation3 + $0x98] sm:$0xff] %vm6122, %v7676
          %7709 = vst.msk [vmem:[#allocation3 + $0xa0] sm:$0xff] %vm6122, %v7677
          %7710 = vst.msk [vmem:[#allocation3 + $0xa8] sm:$0xff] %vm6122, %v7678
          %7711 = vst.msk [vmem:[#allocation3 + $0xb0] sm:$0xff] %vm6122, %v7679
          %7712 = vst.msk [vmem:[#allocation3 + $0xb8] sm:$0xff] %vm6122, %v7680
          %7713 = vst.msk [vmem:[#allocation3 + $0xc0] sm:$0xff] %vm6122, %v7681
          %7714 = vst.msk [vmem:[#allocation3 + $0xc8] sm:$0xff] %vm6122, %v7682
          %7715 = vst.msk [vmem:[#allocation3 + $0xd0] sm:$0xff] %vm6122, %v7683
          %7716 = vst.msk [vmem:[#allocation3 + $0xd8] sm:$0xff] %vm6122, %v7684
          %7717 = vst.msk [vmem:[#allocation3 + $0xe0] sm:$0xff] %vm6122, %v7685
          %7718 = vst.msk [vmem:[#allocation3 + $0xe8] sm:$0xff] %vm6122, %v7686
          %7719 = vst.msk [vmem:[#allocation3 + $0xf0] sm:$0xff] %vm6122, %v7687
          %7720 = vst.msk [vmem:[#allocation3 + $0xf8] sm:$0xff] %vm6122, %v7688
        $region48: #{tpu_custom_call.1} parent=35 // pred_fallthru
          _
        %v7721 = vld [vmem:[#allocation3] sm:$0xff]
        %v7722 = vld [vmem:[#allocation3 + $0x8] sm:$0xff]
        %v7723 = vld [vmem:[#allocation3 + $0x10] sm:$0xff]
        %v7724 = vld [vmem:[#allocation3 + $0x18] sm:$0xff]
        %v7725 = vld [vmem:[#allocation3 + $0x20] sm:$0xff]
        %v7726 = vld [vmem:[#allocation3 + $0x28] sm:$0xff]
        %v7727 = vld [vmem:[#allocation3 + $0x30] sm:$0xff]
        %v7728 = vld [vmem:[#allocation3 + $0x38] sm:$0xff]
        %v7729 = vld [vmem:[#allocation3 + $0x40] sm:$0xff]
        %v7730 = vld [vmem:[#allocation3 + $0x48] sm:$0xff]
        %v7731 = vld [vmem:[#allocation3 + $0x50] sm:$0xff]
        %v7732 = vld [vmem:[#allocation3 + $0x58] sm:$0xff]
        %v7733 = vld [vmem:[#allocation3 + $0x60] sm:$0xff]
        %v7734 = vld [vmem:[#allocation3 + $0x68] sm:$0xff]
        %v7735 = vld [vmem:[#allocation3 + $0x70] sm:$0xff]
        %v7736 = vld [vmem:[#allocation3 + $0x78] sm:$0xff]
        %v7737 = vld [vmem:[#allocation3 + $0x80] sm:$0xff]
        %v7738 = vld [vmem:[#allocation3 + $0x88] sm:$0xff]
        %v7739 = vld [vmem:[#allocation3 + $0x90] sm:$0xff]
        %v7740 = vld [vmem:[#allocation3 + $0x98] sm:$0xff]
        %v7741 = vld [vmem:[#allocation3 + $0xa0] sm:$0xff]
        %v7742 = vld [vmem:[#allocation3 + $0xa8] sm:$0xff]
        %v7743 = vld [vmem:[#allocation3 + $0xb0] sm:$0xff]
        %v7744 = vld [vmem:[#allocation3 + $0xb8] sm:$0xff]
        %v7745 = vld [vmem:[#allocation3 + $0xc0] sm:$0xff]
        %v7746 = vld [vmem:[#allocation3 + $0xc8] sm:$0xff]
        %v7747 = vld [vmem:[#allocation3 + $0xd0] sm:$0xff]
        %v7748 = vld [vmem:[#allocation3 + $0xd8] sm:$0xff]
        %v7749 = vld [vmem:[#allocation3 + $0xe0] sm:$0xff]
        %v7750 = vld [vmem:[#allocation3 + $0xe8] sm:$0xff]
        %v7751 = vld [vmem:[#allocation3 + $0xf0] sm:$0xff]
        %v7752 = vld [vmem:[#allocation3 + $0xf8] sm:$0xff]
        %s7753 = scalar_lea.vmem %s3, %s31
        %v7754 = vld [vmem:[%s7753] sm:$0x1]
        %v7756 = vlaneseq
        %v7757 = vshrl.u32 %v7756, 7
        %v7758 = vsub.s32 0, %v7757
        %v7759 = vrot.slane %v7754, %v7758
        %v7761 = vadd.f32 %v7721, %v7759
        %v7762 = vadd.f32 %v7722, %v7759
        %v7763 = vadd.f32 %v7723, %v7759
        %v7764 = vadd.f32 %v7724, %v7759
        %v7765 = vadd.f32 %v7725, %v7759
        %v7766 = vadd.f32 %v7726, %v7759
        %v7767 = vadd.f32 %v7727, %v7759
        %v7768 = vadd.f32 %v7728, %v7759
        %v7769 = vadd.f32 %v7729, %v7759
        %v7770 = vadd.f32 %v7730, %v7759
        %v7771 = vadd.f32 %v7731, %v7759
        %v7772 = vadd.f32 %v7732, %v7759
        %v7773 = vadd.f32 %v7733, %v7759
        %v7774 = vadd.f32 %v7734, %v7759
        %v7775 = vadd.f32 %v7735, %v7759
        %v7776 = vadd.f32 %v7736, %v7759
        %v7777 = vadd.f32 %v7737, %v7759
        %v7778 = vadd.f32 %v7738, %v7759
        %v7779 = vadd.f32 %v7739, %v7759
        %v7780 = vadd.f32 %v7740, %v7759
        %v7781 = vadd.f32 %v7741, %v7759
        %v7782 = vadd.f32 %v7742, %v7759
        %v7783 = vadd.f32 %v7743, %v7759
        %v7784 = vadd.f32 %v7744, %v7759
        %v7785 = vadd.f32 %v7745, %v7759
        %v7786 = vadd.f32 %v7746, %v7759
        %v7787 = vadd.f32 %v7747, %v7759
        %v7788 = vadd.f32 %v7748, %v7759
        %v7789 = vadd.f32 %v7749, %v7759
        %v7790 = vadd.f32 %v7750, %v7759
        %v7791 = vadd.f32 %v7751, %v7759
        %v7792 = vadd.f32 %v7752, %v7759
        %v7793 = vmax.f32 %v7761, 0.0
        %v7794 = vmax.f32 %v7762, 0.0
        %v7795 = vmax.f32 %v7763, 0.0
        %v7796 = vmax.f32 %v7764, 0.0
        %v7797 = vmax.f32 %v7765, 0.0
        %v7798 = vmax.f32 %v7766, 0.0
        %v7799 = vmax.f32 %v7767, 0.0
        %v7800 = vmax.f32 %v7768, 0.0
        %v7801 = vmax.f32 %v7769, 0.0
        %v7802 = vmax.f32 %v7770, 0.0
        %v7803 = vmax.f32 %v7771, 0.0
        %v7804 = vmax.f32 %v7772, 0.0
        %v7805 = vmax.f32 %v7773, 0.0
        %v7806 = vmax.f32 %v7774, 0.0
        %v7807 = vmax.f32 %v7775, 0.0
        %v7808 = vmax.f32 %v7776, 0.0
        %v7809 = vmax.f32 %v7777, 0.0
        %v7810 = vmax.f32 %v7778, 0.0
        %v7811 = vmax.f32 %v7779, 0.0
        %v7812 = vmax.f32 %v7780, 0.0
        %v7813 = vmax.f32 %v7781, 0.0
        %v7814 = vmax.f32 %v7782, 0.0
        %v7815 = vmax.f32 %v7783, 0.0
        %v7816 = vmax.f32 %v7784, 0.0
        %v7817 = vmax.f32 %v7785, 0.0
        %v7818 = vmax.f32 %v7786, 0.0
        %v7819 = vmax.f32 %v7787, 0.0
        %v7820 = vmax.f32 %v7788, 0.0
        %v7821 = vmax.f32 %v7789, 0.0
        %v7822 = vmax.f32 %v7790, 0.0
        %v7823 = vmax.f32 %v7791, 0.0
        %v7824 = vmax.f32 %v7792, 0.0
        %p7825 = scmp.lt.s32.totalorder %s31, 1
        // Predicated region
        $region49: #{tpu_custom_call.1} parent=35 // pred_check
          %p7826 = pneg %p7825
        $region50: #{tpu_custom_call.1} parent=35 // pred_check_branch
          %7828 = sbr.rel (%p7826) target = $region52
        $region51: #{tpu_custom_call.1} parent=35 // pred_region
          %v7829 = vpack.c.bf16 %v7794, %v7793
          %v7830 = vpack.c.bf16 %v7796, %v7795
          %v7831 = vpack.c.bf16 %v7798, %v7797
          %v7832 = vpack.c.bf16 %v7800, %v7799
          %v7833 = vpack.c.bf16 %v7802, %v7801
          %v7834 = vpack.c.bf16 %v7804, %v7803
          %v7835 = vpack.c.bf16 %v7806, %v7805
          %v7836 = vpack.c.bf16 %v7808, %v7807
          %v7837 = vpack.c.bf16 %v7810, %v7809
          %v7838 = vpack.c.bf16 %v7812, %v7811
          %v7839 = vpack.c.bf16 %v7814, %v7813
          %v7840 = vpack.c.bf16 %v7816, %v7815
          %v7841 = vpack.c.bf16 %v7818, %v7817
          %v7842 = vpack.c.bf16 %v7820, %v7819
          %v7843 = vpack.c.bf16 %v7822, %v7821
          %v7844 = vpack.c.bf16 %v7824, %v7823
          %v7861 = vunpack.c.l.b16 %v7829
          %v7862 = vunpack.c.h.b16 %v7829
          %v7863 = vunpack.c.l.b16 %v7830
          %v7864 = vunpack.c.h.b16 %v7830
          %v7865 = vunpack.c.l.b16 %v7831
          %v7866 = vunpack.c.h.b16 %v7831
          %v7867 = vunpack.c.l.b16 %v7832
          %v7868 = vunpack.c.h.b16 %v7832
          %v7869 = vunpack.c.l.b16 %v7833
          %v7870 = vunpack.c.h.b16 %v7833
          %v7871 = vunpack.c.l.b16 %v7834
          %v7872 = vunpack.c.h.b16 %v7834
          %v7873 = vunpack.c.l.b16 %v7835
          %v7874 = vunpack.c.h.b16 %v7835
          %v7875 = vunpack.c.l.b16 %v7836
          %v7876 = vunpack.c.h.b16 %v7836
          %v7877 = vunpack.c.l.b16 %v7837
          %v7878 = vunpack.c.h.b16 %v7837
          %v7879 = vunpack.c.l.b16 %v7838
          %v7880 = vunpack.c.h.b16 %v7838
          %v7881 = vunpack.c.l.b16 %v7839
          %v7882 = vunpack.c.h.b16 %v7839
          %v7883 = vunpack.c.l.b16 %v7840
          %v7884 = vunpack.c.h.b16 %v7840
          %v7885 = vunpack.c.l.b16 %v7841
          %v7886 = vunpack.c.h.b16 %v7841
          %v7887 = vunpack.c.l.b16 %v7842
          %v7888 = vunpack.c.h.b16 %v7842
          %v7889 = vunpack.c.l.b16 %v7843
          %v7890 = vunpack.c.h.b16 %v7843
          %v7891 = vunpack.c.l.b16 %v7844
          %v7892 = vunpack.c.h.b16 %v7844
          %v7893 = vpack.c.b16 %v7861, %v7861
          %v7894 = vpack.c.b16 %v7862, %v7862
          %v7895 = vpack.c.b16 %v7863, %v7863
          %v7896 = vpack.c.b16 %v7864, %v7864
          %v7897 = vpack.c.b16 %v7865, %v7865
          %v7898 = vpack.c.b16 %v7866, %v7866
          %v7899 = vpack.c.b16 %v7867, %v7867
          %v7900 = vpack.c.b16 %v7868, %v7868
          %v7901 = vpack.c.b16 %v7869, %v7869
          %v7902 = vpack.c.b16 %v7870, %v7870
          %v7903 = vpack.c.b16 %v7871, %v7871
          %v7904 = vpack.c.b16 %v7872, %v7872
          %v7905 = vpack.c.b16 %v7873, %v7873
          %v7906 = vpack.c.b16 %v7874, %v7874
          %v7907 = vpack.c.b16 %v7875, %v7875
          %v7908 = vpack.c.b16 %v7876, %v7876
          %v7909 = vpack.c.b16 %v7877, %v7877
          %v7910 = vpack.c.b16 %v7878, %v7878
          %v7911 = vpack.c.b16 %v7879, %v7879
          %v7912 = vpack.c.b16 %v7880, %v7880
          %v7913 = vpack.c.b16 %v7881, %v7881
          %v7914 = vpack.c.b16 %v7882, %v7882
          %v7915 = vpack.c.b16 %v7883, %v7883
          %v7916 = vpack.c.b16 %v7884, %v7884
          %v7917 = vpack.c.b16 %v7885, %v7885
          %v7918 = vpack.c.b16 %v7886, %v7886
          %v7919 = vpack.c.b16 %v7887, %v7887
          %v7920 = vpack.c.b16 %v7888, %v7888
          %v7921 = vpack.c.b16 %v7889, %v7889
          %v7922 = vpack.c.b16 %v7890, %v7890
          %v7923 = vpack.c.b16 %v7891, %v7891
          %v7924 = vpack.c.b16 %v7892, %v7892
          %vm7925 = vsmask.f32 256
          %vm7926 = vsmask.f32 4368
          %vm7927 = vmor %vm7925, %vm7926
          %v7929 = vshrl.u32 %v7893, 16
          %v7931 = vrot.slane %v7929, 7
          %v7932 = vshll.u32 %v7893, 16
          %v7934 = vor.u32 %v7931, %v7932
          %v7935 = vrot.slane %v7931, 4
          %v7937 = vshrl.u32 %v7894, 16
          %v7939 = vrot.slane %v7937, 7
          %v7940 = vshll.u32 %v7894, 16
          %v7942 = vor.u32 %v7939, %v7940
          %v7943 = vsel %vm7927, %v7935, %v7942
          %v7944 = vrot.slane %v7939, 4
          %v7946 = vshrl.u32 %v7895, 16
          %v7948 = vrot.slane %v7946, 7
          %v7949 = vshll.u32 %v7895, 16
          %v7951 = vor.u32 %v7948, %v7949
          %v7952 = vrot.slane %v7948, 4
          %v7954 = vshrl.u32 %v7896, 16
          %v7956 = vrot.slane %v7954, 7
          %v7957 = vshll.u32 %v7896, 16
          %v7959 = vor.u32 %v7956, %v7957
          %v7960 = vsel %vm7927, %v7952, %v7959
          %v7961 = vrot.slane %v7956, 4
          %v7963 = vshrl.u32 %v7897, 16
          %v7965 = vrot.slane %v7963, 7
          %v7966 = vshll.u32 %v7897, 16
          %v7968 = vor.u32 %v7965, %v7966
          %v7969 = vrot.slane %v7965, 4
          %v7971 = vshrl.u32 %v7898, 16
          %v7973 = vrot.slane %v7971, 7
          %v7974 = vshll.u32 %v7898, 16
          %v7976 = vor.u32 %v7973, %v7974
          %v7977 = vsel %vm7927, %v7969, %v7976
          %v7978 = vrot.slane %v7973, 4
          %v7980 = vshrl.u32 %v7899, 16
          %v7982 = vrot.slane %v7980, 7
          %v7983 = vshll.u32 %v7899, 16
          %v7985 = vor.u32 %v7982, %v7983
          %v7986 = vrot.slane %v7982, 4
          %v7988 = vshrl.u32 %v7900, 16
          %v7990 = vrot.slane %v7988, 7
          %v7991 = vshll.u32 %v7900, 16
          %v7993 = vor.u32 %v7990, %v7991
          %v7994 = vsel %vm7927, %v7986, %v7993
          %v7995 = vrot.slane %v7990, 4
          %v7997 = vshrl.u32 %v7901, 16
          %v7999 = vrot.slane %v7997, 7
          %v8000 = vshll.u32 %v7901, 16
          %v8002 = vor.u32 %v7999, %v8000
          %v8003 = vrot.slane %v7999, 4
          %v8005 = vshrl.u32 %v7902, 16
          %v8007 = vrot.slane %v8005, 7
          %v8008 = vshll.u32 %v7902, 16
          %v8010 = vor.u32 %v8007, %v8008
          %v8011 = vsel %vm7927, %v8003, %v8010
          %v8012 = vrot.slane %v8007, 4
          %v8014 = vshrl.u32 %v7903, 16
          %v8016 = vrot.slane %v8014, 7
          %v8017 = vshll.u32 %v7903, 16
          %v8019 = vor.u32 %v8016, %v8017
          %v8020 = vrot.slane %v8016, 4
          %v8022 = vshrl.u32 %v7904, 16
          %v8024 = vrot.slane %v8022, 7
          %v8025 = vshll.u32 %v7904, 16
          %v8027 = vor.u32 %v8024, %v8025
          %v8028 = vsel %vm7927, %v8020, %v8027
          %v8029 = vrot.slane %v8024, 4
          %v8031 = vshrl.u32 %v7905, 16
          %v8033 = vrot.slane %v8031, 7
          %v8034 = vshll.u32 %v7905, 16
          %v8036 = vor.u32 %v8033, %v8034
          %v8037 = vrot.slane %v8033, 4
          %v8039 = vshrl.u32 %v7906, 16
          %v8041 = vrot.slane %v8039, 7
          %v8042 = vshll.u32 %v7906, 16
          %v8044 = vor.u32 %v8041, %v8042
          %v8045 = vsel %vm7927, %v8037, %v8044
          %v8046 = vrot.slane %v8041, 4
          %v8048 = vshrl.u32 %v7907, 16
          %v8050 = vrot.slane %v8048, 7
          %v8051 = vshll.u32 %v7907, 16
          %v8053 = vor.u32 %v8050, %v8051
          %v8054 = vrot.slane %v8050, 4
          %v8056 = vshrl.u32 %v7908, 16
          %v8058 = vrot.slane %v8056, 7
          %v8059 = vshll.u32 %v7908, 16
          %v8061 = vor.u32 %v8058, %v8059
          %v8062 = vsel %vm7927, %v8054, %v8061
          %v8063 = vrot.slane %v8058, 4
          %v8065 = vshrl.u32 %v7909, 16
          %v8067 = vrot.slane %v8065, 7
          %v8068 = vshll.u32 %v7909, 16
          %v8070 = vor.u32 %v8067, %v8068
          %v8071 = vrot.slane %v8067, 4
          %v8073 = vshrl.u32 %v7910, 16
          %v8075 = vrot.slane %v8073, 7
          %v8076 = vshll.u32 %v7910, 16
          %v8078 = vor.u32 %v8075, %v8076
          %v8079 = vsel %vm7927, %v8071, %v8078
          %v8080 = vrot.slane %v8075, 4
          %v8082 = vshrl.u32 %v7911, 16
          %v8084 = vrot.slane %v8082, 7
          %v8085 = vshll.u32 %v7911, 16
          %v8087 = vor.u32 %v8084, %v8085
          %v8088 = vrot.slane %v8084, 4
          %v8090 = vshrl.u32 %v7912, 16
          %v8092 = vrot.slane %v8090, 7
          %v8093 = vshll.u32 %v7912, 16
          %v8095 = vor.u32 %v8092, %v8093
          %v8096 = vsel %vm7927, %v8088, %v8095
          %v8097 = vrot.slane %v8092, 4
          %v8099 = vshrl.u32 %v7913, 16
          %v8101 = vrot.slane %v8099, 7
          %v8102 = vshll.u32 %v7913, 16
          %v8104 = vor.u32 %v8101, %v8102
          %v8105 = vrot.slane %v8101, 4
          %v8107 = vshrl.u32 %v7914, 16
          %v8109 = vrot.slane %v8107, 7
          %v8110 = vshll.u32 %v7914, 16
          %v8112 = vor.u32 %v8109, %v8110
          %v8113 = vsel %vm7927, %v8105, %v8112
          %v8114 = vrot.slane %v8109, 4
          %v8116 = vshrl.u32 %v7915, 16
          %v8118 = vrot.slane %v8116, 7
          %v8119 = vshll.u32 %v7915, 16
          %v8121 = vor.u32 %v8118, %v8119
          %v8122 = vrot.slane %v8118, 4
          %v8124 = vshrl.u32 %v7916, 16
          %v8126 = vrot.slane %v8124, 7
          %v8127 = vshll.u32 %v7916, 16
          %v8129 = vor.u32 %v8126, %v8127
          %v8130 = vsel %vm7927, %v8122, %v8129
          %v8131 = vrot.slane %v8126, 4
          %v8133 = vshrl.u32 %v7917, 16
          %v8135 = vrot.slane %v8133, 7
          %v8136 = vshll.u32 %v7917, 16
          %v8138 = vor.u32 %v8135, %v8136
          %v8139 = vrot.slane %v8135, 4
          %v8141 = vshrl.u32 %v7918, 16
          %v8143 = vrot.slane %v8141, 7
          %v8144 = vshll.u32 %v7918, 16
          %v8146 = vor.u32 %v8143, %v8144
          %v8147 = vsel %vm7927, %v8139, %v8146
          %v8148 = vrot.slane %v8143, 4
          %v8150 = vshrl.u32 %v7919, 16
          %v8152 = vrot.slane %v8150, 7
          %v8153 = vshll.u32 %v7919, 16
          %v8155 = vor.u32 %v8152, %v8153
          %v8156 = vrot.slane %v8152, 4
          %v8158 = vshrl.u32 %v7920, 16
          %v8160 = vrot.slane %v8158, 7
          %v8161 = vshll.u32 %v7920, 16
          %v8163 = vor.u32 %v8160, %v8161
          %v8164 = vsel %vm7927, %v8156, %v8163
          %v8165 = vrot.slane %v8160, 4
          %v8167 = vshrl.u32 %v7921, 16
          %v8169 = vrot.slane %v8167, 7
          %v8170 = vshll.u32 %v7921, 16
          %v8172 = vor.u32 %v8169, %v8170
          %v8173 = vrot.slane %v8169, 4
          %v8175 = vshrl.u32 %v7922, 16
          %v8177 = vrot.slane %v8175, 7
          %v8178 = vshll.u32 %v7922, 16
          %v8180 = vor.u32 %v8177, %v8178
          %v8181 = vsel %vm7927, %v8173, %v8180
          %v8182 = vrot.slane %v8177, 4
          %v8184 = vshrl.u32 %v7923, 16
          %v8186 = vrot.slane %v8184, 7
          %v8187 = vshll.u32 %v7923, 16
          %v8189 = vor.u32 %v8186, %v8187
          %v8190 = vrot.slane %v8186, 4
          %v8192 = vshrl.u32 %v7924, 16
          %v8194 = vrot.slane %v8192, 7
          %v8195 = vshll.u32 %v7924, 16
          %v8197 = vor.u32 %v8194, %v8195
          %v8198 = vsel %vm7927, %v8190, %v8197
          %v8199 = vrot.slane %v8194, 4
          %s8248 = scalar_lea.vmem [#allocation2], 12
          %vm8249 = vcmask 519168
          %vm8250 = vsmask.f32 7938
          %vm8251 = vmand %vm8249, %vm8250
          %v8252 = vld [vmem:[%s8248] sm:$0xf]
          %v8253 = vsel %vm8251, %v7934, %v8252
          %8254 = vst [vmem:[%s8248] sm:$0xf] %v8253
          %vm8255 = vcmask 519168
          %8256 = vst.msk [vmem:[%s8248 + $0x4] sm:$0xf] %vm8255, %v7943
          %vm8257 = vcmask 516096
          %vm8258 = vmand %vm8257, %vm7925
          %v8259 = vld [vmem:[%s8248 + $0x8] sm:$0x1]
          %v8260 = vsel %vm8258, %v7944, %v8259
          %8261 = vst [vmem:[%s8248 + $0x8] sm:$0x1] %v8260
          %v8262 = vld [vmem:[%s8248 + $0xc] sm:$0xf]
          %v8263 = vsel %vm8251, %v7951, %v8262
          %8264 = vst [vmem:[%s8248 + $0xc] sm:$0xf] %v8263
          %8265 = vst.msk [vmem:[%s8248 + $0x10] sm:$0xf] %vm8255, %v7960
          %v8266 = vld [vmem:[%s8248 + $0x14] sm:$0x1]
          %v8267 = vsel %vm8258, %v7961, %v8266
          %8268 = vst [vmem:[%s8248 + $0x14] sm:$0x1] %v8267
          %v8269 = vld [vmem:[%s8248 + $0x18] sm:$0xf]
          %v8270 = vsel %vm8251, %v7968, %v8269
          %8271 = vst [vmem:[%s8248 + $0x18] sm:$0xf] %v8270
          %8272 = vst.msk [vmem:[%s8248 + $0x1c] sm:$0xf] %vm8255, %v7977
          %v8273 = vld [vmem:[%s8248 + $0x20] sm:$0x1]
          %v8274 = vsel %vm8258, %v7978, %v8273
          %8275 = vst [vmem:[%s8248 + $0x20] sm:$0x1] %v8274
          %v8276 = vld [vmem:[%s8248 + $0x24] sm:$0xf]
          %v8277 = vsel %vm8251, %v7985, %v8276
          %8278 = vst [vmem:[%s8248 + $0x24] sm:$0xf] %v8277
          %8279 = vst.msk [vmem:[%s8248 + $0x28] sm:$0xf] %vm8255, %v7994
          %v8280 = vld [vmem:[%s8248 + $0x2c] sm:$0x1]
          %v8281 = vsel %vm8258, %v7995, %v8280
          %8282 = vst [vmem:[%s8248 + $0x2c] sm:$0x1] %v8281
          %v8283 = vld [vmem:[%s8248 + $0x30] sm:$0xf]
          %v8284 = vsel %vm8251, %v8002, %v8283
          %8285 = vst [vmem:[%s8248 + $0x30] sm:$0xf] %v8284
          %8286 = vst.msk [vmem:[%s8248 + $0x34] sm:$0xf] %vm8255, %v8011
          %v8287 = vld [vmem:[%s8248 + $0x38] sm:$0x1]
          %v8288 = vsel %vm8258, %v8012, %v8287
          %8289 = vst [vmem:[%s8248 + $0x38] sm:$0x1] %v8288
          %v8290 = vld [vmem:[%s8248 + $0x3c] sm:$0xf]
          %v8291 = vsel %vm8251, %v8019, %v8290
          %8292 = vst [vmem:[%s8248 + $0x3c] sm:$0xf] %v8291
          %8293 = vst.msk [vmem:[%s8248 + $0x40] sm:$0xf] %vm8255, %v8028
          %v8294 = vld [vmem:[%s8248 + $0x44] sm:$0x1]
          %v8295 = vsel %vm8258, %v8029, %v8294
          %8296 = vst [vmem:[%s8248 + $0x44] sm:$0x1] %v8295
          %v8297 = vld [vmem:[%s8248 + $0x48] sm:$0xf]
          %v8298 = vsel %vm8251, %v8036, %v8297
          %8299 = vst [vmem:[%s8248 + $0x48] sm:$0xf] %v8298
          %8300 = vst.msk [vmem:[%s8248 + $0x4c] sm:$0xf] %vm8255, %v8045
          %v8301 = vld [vmem:[%s8248 + $0x50] sm:$0x1]
          %v8302 = vsel %vm8258, %v8046, %v8301
          %8303 = vst [vmem:[%s8248 + $0x50] sm:$0x1] %v8302
          %v8304 = vld [vmem:[%s8248 + $0x54] sm:$0xf]
          %v8305 = vsel %vm8251, %v8053, %v8304
          %8306 = vst [vmem:[%s8248 + $0x54] sm:$0xf] %v8305
          %8307 = vst.msk [vmem:[%s8248 + $0x58] sm:$0xf] %vm8255, %v8062
          %v8308 = vld [vmem:[%s8248 + $0x5c] sm:$0x1]
          %v8309 = vsel %vm8258, %v8063, %v8308
          %8310 = vst [vmem:[%s8248 + $0x5c] sm:$0x1] %v8309
          %v8311 = vld [vmem:[%s8248 + $0x60] sm:$0xf]
          %v8312 = vsel %vm8251, %v8070, %v8311
          %8313 = vst [vmem:[%s8248 + $0x60] sm:$0xf] %v8312
          %8314 = vst.msk [vmem:[%s8248 + $0x64] sm:$0xf] %vm8255, %v8079
          %v8315 = vld [vmem:[%s8248 + $0x68] sm:$0x1]
          %v8316 = vsel %vm8258, %v8080, %v8315
          %8317 = vst [vmem:[%s8248 + $0x68] sm:$0x1] %v8316
          %v8318 = vld [vmem:[%s8248 + $0x6c] sm:$0xf]
          %v8319 = vsel %vm8251, %v8087, %v8318
          %8320 = vst [vmem:[%s8248 + $0x6c] sm:$0xf] %v8319
          %8321 = vst.msk [vmem:[%s8248 + $0x70] sm:$0xf] %vm8255, %v8096
          %v8322 = vld [vmem:[%s8248 + $0x74] sm:$0x1]
          %v8323 = vsel %vm8258, %v8097, %v8322
          %8324 = vst [vmem:[%s8248 + $0x74] sm:$0x1] %v8323
          %v8325 = vld [vmem:[%s8248 + $0x78] sm:$0xf]
          %v8326 = vsel %vm8251, %v8104, %v8325
          %8327 = vst [vmem:[%s8248 + $0x78] sm:$0xf] %v8326
          %8328 = vst.msk [vmem:[%s8248 + $0x7c] sm:$0xf] %vm8255, %v8113
          %v8329 = vld [vmem:[%s8248 + $0x80] sm:$0x1]
          %v8330 = vsel %vm8258, %v8114, %v8329
          %8331 = vst [vmem:[%s8248 + $0x80] sm:$0x1] %v8330
          %v8332 = vld [vmem:[%s8248 + $0x84] sm:$0xf]
          %v8333 = vsel %vm8251, %v8121, %v8332
          %8334 = vst [vmem:[%s8248 + $0x84] sm:$0xf] %v8333
          %8335 = vst.msk [vmem:[%s8248 + $0x88] sm:$0xf] %vm8255, %v8130
          %v8336 = vld [vmem:[%s8248 + $0x8c] sm:$0x1]
          %v8337 = vsel %vm8258, %v8131, %v8336
          %8338 = vst [vmem:[%s8248 + $0x8c] sm:$0x1] %v8337
          %v8339 = vld [vmem:[%s8248 + $0x90] sm:$0xf]
          %v8340 = vsel %vm8251, %v8138, %v8339
          %8341 = vst [vmem:[%s8248 + $0x90] sm:$0xf] %v8340
          %8342 = vst.msk [vmem:[%s8248 + $0x94] sm:$0xf] %vm8255, %v8147
          %v8343 = vld [vmem:[%s8248 + $0x98] sm:$0x1]
          %v8344 = vsel %vm8258, %v8148, %v8343
          %8345 = vst [vmem:[%s8248 + $0x98] sm:$0x1] %v8344
          %v8346 = vld [vmem:[%s8248 + $0x9c] sm:$0xf]
          %v8347 = vsel %vm8251, %v8155, %v8346
          %8348 = vst [vmem:[%s8248 + $0x9c] sm:$0xf] %v8347
          %8349 = vst.msk [vmem:[%s8248 + $0xa0] sm:$0xf] %vm8255, %v8164
          %v8350 = vld [vmem:[%s8248 + $0xa4] sm:$0x1]
          %v8351 = vsel %vm8258, %v8165, %v8350
          %8352 = vst [vmem:[%s8248 + $0xa4] sm:$0x1] %v8351
          %v8353 = vld [vmem:[%s8248 + $0xa8] sm:$0xf]
          %v8354 = vsel %vm8251, %v8172, %v8353
          %8355 = vst [vmem:[%s8248 + $0xa8] sm:$0xf] %v8354
          %8356 = vst.msk [vmem:[%s8248 + $0xac] sm:$0xf] %vm8255, %v8181
          %v8357 = vld [vmem:[%s8248 + $0xb0] sm:$0x1]
          %v8358 = vsel %vm8258, %v8182, %v8357
          %8359 = vst [vmem:[%s8248 + $0xb0] sm:$0x1] %v8358
          %v8360 = vld [vmem:[%s8248 + $0xb4] sm:$0xf]
          %v8361 = vsel %vm8251, %v8189, %v8360
          %8362 = vst [vmem:[%s8248 + $0xb4] sm:$0xf] %v8361
          %8363 = vst.msk [vmem:[%s8248 + $0xb8] sm:$0xf] %vm8255, %v8198
          %v8364 = vld [vmem:[%s8248 + $0xbc] sm:$0x1]
          %v8365 = vsel %vm8258, %v8199, %v8364
          %8366 = vst [vmem:[%s8248 + $0xbc] sm:$0x1] %v8365
        $region52: #{tpu_custom_call.1} parent=35 // pred_fallthru
          _
        %p8367 = scmp.eq.s32.totalorder %s31, 1
        // Predicated region
        $region53: #{tpu_custom_call.1} parent=35 // pred_check
          %p8368 = pneg %p8367
        $region54: #{tpu_custom_call.1} parent=35 // pred_check_branch
          %8370 = sbr.rel (%p8368) target = $region56
        $region55: #{tpu_custom_call.1} parent=35 // pred_region
          %v8403 = vcombine.high %v7793, %v7793
          %v8405 = vunpack.c.l.s4 1983009808
          %v8406 = vunpack.c.0.s8 %v8405
          %v8407 = vlaneseq
          %v8408 = vshrl.u32 %v8407, 7
          %v8409 = vsub.s32 %v8406, %v8408
          %v8410 = vrot.slane %v7793, %v8409
          %v8412 = vunpack.c.l.s4 1983009808
          %v8413 = vunpack.c.0.s8 %v8412
          %v8414 = vlaneseq
          %v8415 = vshrl.u32 %v8414, 7
          %v8416 = vsub.s32 %v8413, %v8415
          %v8417 = vrot.slane %v8403, %v8416
          %v8418 = vcombine.high %v8410, %v8410
          %v8419 = vcombine.high %v8417, %v8417
          %v8420 = vcombine.high %v7794, %v7794
          %v8422 = vunpack.c.l.s4 1983009808
          %v8423 = vunpack.c.0.s8 %v8422
          %v8424 = vlaneseq
          %v8425 = vshrl.u32 %v8424, 7
          %v8426 = vsub.s32 %v8423, %v8425
          %v8427 = vrot.slane %v7794, %v8426
          %v8429 = vunpack.c.l.s4 1983009808
          %v8430 = vunpack.c.0.s8 %v8429
          %v8431 = vlaneseq
          %v8432 = vshrl.u32 %v8431, 7
          %v8433 = vsub.s32 %v8430, %v8432
          %v8434 = vrot.slane %v8420, %v8433
          %v8435 = vcombine.high %v8427, %v8427
          %v8436 = vcombine.high %v8434, %v8434
          %v8437 = vcombine.high %v7795, %v7795
          %v8439 = vunpack.c.l.s4 1983009808
          %v8440 = vunpack.c.0.s8 %v8439
          %v8441 = vlaneseq
          %v8442 = vshrl.u32 %v8441, 7
          %v8443 = vsub.s32 %v8440, %v8442
          %v8444 = vrot.slane %v7795, %v8443
          %v8446 = vunpack.c.l.s4 1983009808
          %v8447 = vunpack.c.0.s8 %v8446
          %v8448 = vlaneseq
          %v8449 = vshrl.u32 %v8448, 7
          %v8450 = vsub.s32 %v8447, %v8449
          %v8451 = vrot.slane %v8437, %v8450
          %v8452 = vcombine.high %v8444, %v8444
          %v8453 = vcombine.high %v8451, %v8451
          %v8454 = vcombine.high %v7796, %v7796
          %v8456 = vunpack.c.l.s4 1983009808
          %v8457 = vunpack.c.0.s8 %v8456
          %v8458 = vlaneseq
          %v8459 = vshrl.u32 %v8458, 7
          %v8460 = vsub.s32 %v8457, %v8459
          %v8461 = vrot.slane %v7796, %v8460
          %v8463 = vunpack.c.l.s4 1983009808
          %v8464 = vunpack.c.0.s8 %v8463
          %v8465 = vlaneseq
          %v8466 = vshrl.u32 %v8465, 7
          %v8467 = vsub.s32 %v8464, %v8466
          %v8468 = vrot.slane %v8454, %v8467
          %v8469 = vcombine.high %v8461, %v8461
          %v8470 = vcombine.high %v8468, %v8468
          %v8471 = vcombine.high %v7797, %v7797
          %v8473 = vunpack.c.l.s4 1983009808
          %v8474 = vunpack.c.0.s8 %v8473
          %v8475 = vlaneseq
          %v8476 = vshrl.u32 %v8475, 7
          %v8477 = vsub.s32 %v8474, %v8476
          %v8478 = vrot.slane %v7797, %v8477
          %v8480 = vunpack.c.l.s4 1983009808
          %v8481 = vunpack.c.0.s8 %v8480
          %v8482 = vlaneseq
          %v8483 = vshrl.u32 %v8482, 7
          %v8484 = vsub.s32 %v8481, %v8483
          %v8485 = vrot.slane %v8471, %v8484
          %v8486 = vcombine.high %v8478, %v8478
          %v8487 = vcombine.high %v8485, %v8485
          %v8488 = vcombine.high %v7798, %v7798
          %v8490 = vunpack.c.l.s4 1983009808
          %v8491 = vunpack.c.0.s8 %v8490
          %v8492 = vlaneseq
          %v8493 = vshrl.u32 %v8492, 7
          %v8494 = vsub.s32 %v8491, %v8493
          %v8495 = vrot.slane %v7798, %v8494
          %v8497 = vunpack.c.l.s4 1983009808
          %v8498 = vunpack.c.0.s8 %v8497
          %v8499 = vlaneseq
          %v8500 = vshrl.u32 %v8499, 7
          %v8501 = vsub.s32 %v8498, %v8500
          %v8502 = vrot.slane %v8488, %v8501
          %v8503 = vcombine.high %v8495, %v8495
          %v8504 = vcombine.high %v8502, %v8502
          %v8505 = vcombine.high %v7799, %v7799
          %v8507 = vunpack.c.l.s4 1983009808
          %v8508 = vunpack.c.0.s8 %v8507
          %v8509 = vlaneseq
          %v8510 = vshrl.u32 %v8509, 7
          %v8511 = vsub.s32 %v8508, %v8510
          %v8512 = vrot.slane %v7799, %v8511
          %v8514 = vunpack.c.l.s4 1983009808
          %v8515 = vunpack.c.0.s8 %v8514
          %v8516 = vlaneseq
          %v8517 = vshrl.u32 %v8516, 7
          %v8518 = vsub.s32 %v8515, %v8517
          %v8519 = vrot.slane %v8505, %v8518
          %v8520 = vcombine.high %v8512, %v8512
          %v8521 = vcombine.high %v8519, %v8519
          %v8522 = vcombine.high %v7800, %v7800
          %v8524 = vunpack.c.l.s4 1983009808
          %v8525 = vunpack.c.0.s8 %v8524
          %v8526 = vlaneseq
          %v8527 = vshrl.u32 %v8526, 7
          %v8528 = vsub.s32 %v8525, %v8527
          %v8529 = vrot.slane %v7800, %v8528
          %v8531 = vunpack.c.l.s4 1983009808
          %v8532 = vunpack.c.0.s8 %v8531
          %v8533 = vlaneseq
          %v8534 = vshrl.u32 %v8533, 7
          %v8535 = vsub.s32 %v8532, %v8534
          %v8536 = vrot.slane %v8522, %v8535
          %v8537 = vcombine.high %v8529, %v8529
          %v8538 = vcombine.high %v8536, %v8536
          %v8539 = vcombine.high %v7801, %v7801
          %v8541 = vunpack.c.l.s4 1983009808
          %v8542 = vunpack.c.0.s8 %v8541
          %v8543 = vlaneseq
          %v8544 = vshrl.u32 %v8543, 7
          %v8545 = vsub.s32 %v8542, %v8544
          %v8546 = vrot.slane %v7801, %v8545
          %v8548 = vunpack.c.l.s4 1983009808
          %v8549 = vunpack.c.0.s8 %v8548
          %v8550 = vlaneseq
          %v8551 = vshrl.u32 %v8550, 7
          %v8552 = vsub.s32 %v8549, %v8551
          %v8553 = vrot.slane %v8539, %v8552
          %v8554 = vcombine.high %v8546, %v8546
          %v8555 = vcombine.high %v8553, %v8553
          %v8556 = vcombine.high %v7802, %v7802
          %v8558 = vunpack.c.l.s4 1983009808
          %v8559 = vunpack.c.0.s8 %v8558
          %v8560 = vlaneseq
          %v8561 = vshrl.u32 %v8560, 7
          %v8562 = vsub.s32 %v8559, %v8561
          %v8563 = vrot.slane %v7802, %v8562
          %v8565 = vunpack.c.l.s4 1983009808
          %v8566 = vunpack.c.0.s8 %v8565
          %v8567 = vlaneseq
          %v8568 = vshrl.u32 %v8567, 7
          %v8569 = vsub.s32 %v8566, %v8568
          %v8570 = vrot.slane %v8556, %v8569
          %v8571 = vcombine.high %v8563, %v8563
          %v8572 = vcombine.high %v8570, %v8570
          %v8573 = vcombine.high %v7803, %v7803
          %v8575 = vunpack.c.l.s4 1983009808
          %v8576 = vunpack.c.0.s8 %v8575
          %v8577 = vlaneseq
          %v8578 = vshrl.u32 %v8577, 7
          %v8579 = vsub.s32 %v8576, %v8578
          %v8580 = vrot.slane %v7803, %v8579
          %v8582 = vunpack.c.l.s4 1983009808
          %v8583 = vunpack.c.0.s8 %v8582
          %v8584 = vlaneseq
          %v8585 = vshrl.u32 %v8584, 7
          %v8586 = vsub.s32 %v8583, %v8585
          %v8587 = vrot.slane %v8573, %v8586
          %v8588 = vcombine.high %v8580, %v8580
          %v8589 = vcombine.high %v8587, %v8587
          %v8590 = vcombine.high %v7804, %v7804
          %v8592 = vunpack.c.l.s4 1983009808
          %v8593 = vunpack.c.0.s8 %v8592
          %v8594 = vlaneseq
          %v8595 = vshrl.u32 %v8594, 7
          %v8596 = vsub.s32 %v8593, %v8595
          %v8597 = vrot.slane %v7804, %v8596
          %v8599 = vunpack.c.l.s4 1983009808
          %v8600 = vunpack.c.0.s8 %v8599
          %v8601 = vlaneseq
          %v8602 = vshrl.u32 %v8601, 7
          %v8603 = vsub.s32 %v8600, %v8602
          %v8604 = vrot.slane %v8590, %v8603
          %v8605 = vcombine.high %v8597, %v8597
          %v8606 = vcombine.high %v8604, %v8604
          %v8607 = vcombine.high %v7805, %v7805
          %v8609 = vunpack.c.l.s4 1983009808
          %v8610 = vunpack.c.0.s8 %v8609
          %v8611 = vlaneseq
          %v8612 = vshrl.u32 %v8611, 7
          %v8613 = vsub.s32 %v8610, %v8612
          %v8614 = vrot.slane %v7805, %v8613
          %v8616 = vunpack.c.l.s4 1983009808
          %v8617 = vunpack.c.0.s8 %v8616
          %v8618 = vlaneseq
          %v8619 = vshrl.u32 %v8618, 7
          %v8620 = vsub.s32 %v8617, %v8619
          %v8621 = vrot.slane %v8607, %v8620
          %v8622 = vcombine.high %v8614, %v8614
          %v8623 = vcombine.high %v8621, %v8621
          %v8624 = vcombine.high %v7806, %v7806
          %v8626 = vunpack.c.l.s4 1983009808
          %v8627 = vunpack.c.0.s8 %v8626
          %v8628 = vlaneseq
          %v8629 = vshrl.u32 %v8628, 7
          %v8630 = vsub.s32 %v8627, %v8629
          %v8631 = vrot.slane %v7806, %v8630
          %v8633 = vunpack.c.l.s4 1983009808
          %v8634 = vunpack.c.0.s8 %v8633
          %v8635 = vlaneseq
          %v8636 = vshrl.u32 %v8635, 7
          %v8637 = vsub.s32 %v8634, %v8636
          %v8638 = vrot.slane %v8624, %v8637
          %v8639 = vcombine.high %v8631, %v8631
          %v8640 = vcombine.high %v8638, %v8638
          %v8641 = vcombine.high %v7807, %v7807
          %v8643 = vunpack.c.l.s4 1983009808
          %v8644 = vunpack.c.0.s8 %v8643
          %v8645 = vlaneseq
          %v8646 = vshrl.u32 %v8645, 7
          %v8647 = vsub.s32 %v8644, %v8646
          %v8648 = vrot.slane %v7807, %v8647
          %v8650 = vunpack.c.l.s4 1983009808
          %v8651 = vunpack.c.0.s8 %v8650
          %v8652 = vlaneseq
          %v8653 = vshrl.u32 %v8652, 7
          %v8654 = vsub.s32 %v8651, %v8653
          %v8655 = vrot.slane %v8641, %v8654
          %v8656 = vcombine.high %v8648, %v8648
          %v8657 = vcombine.high %v8655, %v8655
          %v8658 = vcombine.high %v7808, %v7808
          %v8660 = vunpack.c.l.s4 1983009808
          %v8661 = vunpack.c.0.s8 %v8660
          %v8662 = vlaneseq
          %v8663 = vshrl.u32 %v8662, 7
          %v8664 = vsub.s32 %v8661, %v8663
          %v8665 = vrot.slane %v7808, %v8664
          %v8667 = vunpack.c.l.s4 1983009808
          %v8668 = vunpack.c.0.s8 %v8667
          %v8669 = vlaneseq
          %v8670 = vshrl.u32 %v8669, 7
          %v8671 = vsub.s32 %v8668, %v8670
          %v8672 = vrot.slane %v8658, %v8671
          %v8673 = vcombine.high %v8665, %v8665
          %v8674 = vcombine.high %v8672, %v8672
          %v8675 = vcombine.high %v7809, %v7809
          %v8677 = vunpack.c.l.s4 1983009808
          %v8678 = vunpack.c.0.s8 %v8677
          %v8679 = vlaneseq
          %v8680 = vshrl.u32 %v8679, 7
          %v8681 = vsub.s32 %v8678, %v8680
          %v8682 = vrot.slane %v7809, %v8681
          %v8684 = vunpack.c.l.s4 1983009808
          %v8685 = vunpack.c.0.s8 %v8684
          %v8686 = vlaneseq
          %v8687 = vshrl.u32 %v8686, 7
          %v8688 = vsub.s32 %v8685, %v8687
          %v8689 = vrot.slane %v8675, %v8688
          %v8690 = vcombine.high %v8682, %v8682
          %v8691 = vcombine.high %v8689, %v8689
          %v8692 = vcombine.high %v7810, %v7810
          %v8694 = vunpack.c.l.s4 1983009808
          %v8695 = vunpack.c.0.s8 %v8694
          %v8696 = vlaneseq
          %v8697 = vshrl.u32 %v8696, 7
          %v8698 = vsub.s32 %v8695, %v8697
          %v8699 = vrot.slane %v7810, %v8698
          %v8701 = vunpack.c.l.s4 1983009808
          %v8702 = vunpack.c.0.s8 %v8701
          %v8703 = vlaneseq
          %v8704 = vshrl.u32 %v8703, 7
          %v8705 = vsub.s32 %v8702, %v8704
          %v8706 = vrot.slane %v8692, %v8705
          %v8707 = vcombine.high %v8699, %v8699
          %v8708 = vcombine.high %v8706, %v8706
          %v8709 = vcombine.high %v7811, %v7811
          %v8711 = vunpack.c.l.s4 1983009808
          %v8712 = vunpack.c.0.s8 %v8711
          %v8713 = vlaneseq
          %v8714 = vshrl.u32 %v8713, 7
          %v8715 = vsub.s32 %v8712, %v8714
          %v8716 = vrot.slane %v7811, %v8715
          %v8718 = vunpack.c.l.s4 1983009808
          %v8719 = vunpack.c.0.s8 %v8718
          %v8720 = vlaneseq
          %v8721 = vshrl.u32 %v8720, 7
          %v8722 = vsub.s32 %v8719, %v8721
          %v8723 = vrot.slane %v8709, %v8722
          %v8724 = vcombine.high %v8716, %v8716
          %v8725 = vcombine.high %v8723, %v8723
          %v8726 = vcombine.high %v7812, %v7812
          %v8728 = vunpack.c.l.s4 1983009808
          %v8729 = vunpack.c.0.s8 %v8728
          %v8730 = vlaneseq
          %v8731 = vshrl.u32 %v8730, 7
          %v8732 = vsub.s32 %v8729, %v8731
          %v8733 = vrot.slane %v7812, %v8732
          %v8735 = vunpack.c.l.s4 1983009808
          %v8736 = vunpack.c.0.s8 %v8735
          %v8737 = vlaneseq
          %v8738 = vshrl.u32 %v8737, 7
          %v8739 = vsub.s32 %v8736, %v8738
          %v8740 = vrot.slane %v8726, %v8739
          %v8741 = vcombine.high %v8733, %v8733
          %v8742 = vcombine.high %v8740, %v8740
          %v8743 = vcombine.high %v7813, %v7813
          %v8745 = vunpack.c.l.s4 1983009808
          %v8746 = vunpack.c.0.s8 %v8745
          %v8747 = vlaneseq
          %v8748 = vshrl.u32 %v8747, 7
          %v8749 = vsub.s32 %v8746, %v8748
          %v8750 = vrot.slane %v7813, %v8749
          %v8752 = vunpack.c.l.s4 1983009808
          %v8753 = vunpack.c.0.s8 %v8752
          %v8754 = vlaneseq
          %v8755 = vshrl.u32 %v8754, 7
          %v8756 = vsub.s32 %v8753, %v8755
          %v8757 = vrot.slane %v8743, %v8756
          %v8758 = vcombine.high %v8750, %v8750
          %v8759 = vcombine.high %v8757, %v8757
          %v8760 = vcombine.high %v7814, %v7814
          %v8762 = vunpack.c.l.s4 1983009808
          %v8763 = vunpack.c.0.s8 %v8762
          %v8764 = vlaneseq
          %v8765 = vshrl.u32 %v8764, 7
          %v8766 = vsub.s32 %v8763, %v8765
          %v8767 = vrot.slane %v7814, %v8766
          %v8769 = vunpack.c.l.s4 1983009808
          %v8770 = vunpack.c.0.s8 %v8769
          %v8771 = vlaneseq
          %v8772 = vshrl.u32 %v8771, 7
          %v8773 = vsub.s32 %v8770, %v8772
          %v8774 = vrot.slane %v8760, %v8773
          %v8775 = vcombine.high %v8767, %v8767
          %v8776 = vcombine.high %v8774, %v8774
          %v8777 = vcombine.high %v7815, %v7815
          %v8779 = vunpack.c.l.s4 1983009808
          %v8780 = vunpack.c.0.s8 %v8779
          %v8781 = vlaneseq
          %v8782 = vshrl.u32 %v8781, 7
          %v8783 = vsub.s32 %v8780, %v8782
          %v8784 = vrot.slane %v7815, %v8783
          %v8786 = vunpack.c.l.s4 1983009808
          %v8787 = vunpack.c.0.s8 %v8786
          %v8788 = vlaneseq
          %v8789 = vshrl.u32 %v8788, 7
          %v8790 = vsub.s32 %v8787, %v8789
          %v8791 = vrot.slane %v8777, %v8790
          %v8792 = vcombine.high %v8784, %v8784
          %v8793 = vcombine.high %v8791, %v8791
          %v8794 = vcombine.high %v7816, %v7816
          %v8796 = vunpack.c.l.s4 1983009808
          %v8797 = vunpack.c.0.s8 %v8796
          %v8798 = vlaneseq
          %v8799 = vshrl.u32 %v8798, 7
          %v8800 = vsub.s32 %v8797, %v8799
          %v8801 = vrot.slane %v7816, %v8800
          %v8803 = vunpack.c.l.s4 1983009808
          %v8804 = vunpack.c.0.s8 %v8803
          %v8805 = vlaneseq
          %v8806 = vshrl.u32 %v8805, 7
          %v8807 = vsub.s32 %v8804, %v8806
          %v8808 = vrot.slane %v8794, %v8807
          %v8809 = vcombine.high %v8801, %v8801
          %v8810 = vcombine.high %v8808, %v8808
          %v8811 = vcombine.high %v7817, %v7817
          %v8813 = vunpack.c.l.s4 1983009808
          %v8814 = vunpack.c.0.s8 %v8813
          %v8815 = vlaneseq
          %v8816 = vshrl.u32 %v8815, 7
          %v8817 = vsub.s32 %v8814, %v8816
          %v8818 = vrot.slane %v7817, %v8817
          %v8820 = vunpack.c.l.s4 1983009808
          %v8821 = vunpack.c.0.s8 %v8820
          %v8822 = vlaneseq
          %v8823 = vshrl.u32 %v8822, 7
          %v8824 = vsub.s32 %v8821, %v8823
          %v8825 = vrot.slane %v8811, %v8824
          %v8826 = vcombine.high %v8818, %v8818
          %v8827 = vcombine.high %v8825, %v8825
          %v8828 = vcombine.high %v7818, %v7818
          %v8830 = vunpack.c.l.s4 1983009808
          %v8831 = vunpack.c.0.s8 %v8830
          %v8832 = vlaneseq
          %v8833 = vshrl.u32 %v8832, 7
          %v8834 = vsub.s32 %v8831, %v8833
          %v8835 = vrot.slane %v7818, %v8834
          %v8837 = vunpack.c.l.s4 1983009808
          %v8838 = vunpack.c.0.s8 %v8837
          %v8839 = vlaneseq
          %v8840 = vshrl.u32 %v8839, 7
          %v8841 = vsub.s32 %v8838, %v8840
          %v8842 = vrot.slane %v8828, %v8841
          %v8843 = vcombine.high %v8835, %v8835
          %v8844 = vcombine.high %v8842, %v8842
          %v8845 = vcombine.high %v7819, %v7819
          %v8847 = vunpack.c.l.s4 1983009808
          %v8848 = vunpack.c.0.s8 %v8847
          %v8849 = vlaneseq
          %v8850 = vshrl.u32 %v8849, 7
          %v8851 = vsub.s32 %v8848, %v8850
          %v8852 = vrot.slane %v7819, %v8851
          %v8854 = vunpack.c.l.s4 1983009808
          %v8855 = vunpack.c.0.s8 %v8854
          %v8856 = vlaneseq
          %v8857 = vshrl.u32 %v8856, 7
          %v8858 = vsub.s32 %v8855, %v8857
          %v8859 = vrot.slane %v8845, %v8858
          %v8860 = vcombine.high %v8852, %v8852
          %v8861 = vcombine.high %v8859, %v8859
          %v8862 = vcombine.high %v7820, %v7820
          %v8864 = vunpack.c.l.s4 1983009808
          %v8865 = vunpack.c.0.s8 %v8864
          %v8866 = vlaneseq
          %v8867 = vshrl.u32 %v8866, 7
          %v8868 = vsub.s32 %v8865, %v8867
          %v8869 = vrot.slane %v7820, %v8868
          %v8871 = vunpack.c.l.s4 1983009808
          %v8872 = vunpack.c.0.s8 %v8871
          %v8873 = vlaneseq
          %v8874 = vshrl.u32 %v8873, 7
          %v8875 = vsub.s32 %v8872, %v8874
          %v8876 = vrot.slane %v8862, %v8875
          %v8877 = vcombine.high %v8869, %v8869
          %v8878 = vcombine.high %v8876, %v8876
          %v8879 = vcombine.high %v7821, %v7821
          %v8881 = vunpack.c.l.s4 1983009808
          %v8882 = vunpack.c.0.s8 %v8881
          %v8883 = vlaneseq
          %v8884 = vshrl.u32 %v8883, 7
          %v8885 = vsub.s32 %v8882, %v8884
          %v8886 = vrot.slane %v7821, %v8885
          %v8888 = vunpack.c.l.s4 1983009808
          %v8889 = vunpack.c.0.s8 %v8888
          %v8890 = vlaneseq
          %v8891 = vshrl.u32 %v8890, 7
          %v8892 = vsub.s32 %v8889, %v8891
          %v8893 = vrot.slane %v8879, %v8892
          %v8894 = vcombine.high %v8886, %v8886
          %v8895 = vcombine.high %v8893, %v8893
          %v8896 = vcombine.high %v7822, %v7822
          %v8898 = vunpack.c.l.s4 1983009808
          %v8899 = vunpack.c.0.s8 %v8898
          %v8900 = vlaneseq
          %v8901 = vshrl.u32 %v8900, 7
          %v8902 = vsub.s32 %v8899, %v8901
          %v8903 = vrot.slane %v7822, %v8902
          %v8905 = vunpack.c.l.s4 1983009808
          %v8906 = vunpack.c.0.s8 %v8905
          %v8907 = vlaneseq
          %v8908 = vshrl.u32 %v8907, 7
          %v8909 = vsub.s32 %v8906, %v8908
          %v8910 = vrot.slane %v8896, %v8909
          %v8911 = vcombine.high %v8903, %v8903
          %v8912 = vcombine.high %v8910, %v8910
          %v8913 = vcombine.high %v7823, %v7823
          %v8915 = vunpack.c.l.s4 1983009808
          %v8916 = vunpack.c.0.s8 %v8915
          %v8917 = vlaneseq
          %v8918 = vshrl.u32 %v8917, 7
          %v8919 = vsub.s32 %v8916, %v8918
          %v8920 = vrot.slane %v7823, %v8919
          %v8922 = vunpack.c.l.s4 1983009808
          %v8923 = vunpack.c.0.s8 %v8922
          %v8924 = vlaneseq
          %v8925 = vshrl.u32 %v8924, 7
          %v8926 = vsub.s32 %v8923, %v8925
          %v8927 = vrot.slane %v8913, %v8926
          %v8928 = vcombine.high %v8920, %v8920
          %v8929 = vcombine.high %v8927, %v8927
          %v8930 = vcombine.high %v7824, %v7824
          %v8932 = vunpack.c.l.s4 1983009808
          %v8933 = vunpack.c.0.s8 %v8932
          %v8934 = vlaneseq
          %v8935 = vshrl.u32 %v8934, 7
          %v8936 = vsub.s32 %v8933, %v8935
          %v8937 = vrot.slane %v7824, %v8936
          %v8939 = vunpack.c.l.s4 1983009808
          %v8940 = vunpack.c.0.s8 %v8939
          %v8941 = vlaneseq
          %v8942 = vshrl.u32 %v8941, 7
          %v8943 = vsub.s32 %v8940, %v8942
          %v8944 = vrot.slane %v8930, %v8943
          %v8945 = vcombine.high %v8937, %v8937
          %v8946 = vcombine.high %v8944, %v8944
          %v9075 = vlaneseq
          %v9076 = vshrl.u32 %v9075, 7
          %v9077 = vmul.u32 %v9076, 2
          %v9078 = vadd.s32 %v9077, 32
          %v9079 = vadd.s32 %v9077, 64
          %v9080 = vadd.s32 %v9077, 96
          %v9081 = vadd.s32 %v9077, 128
          %v9082 = vadd.s32 %v9077, 160
          %v9083 = vadd.s32 %v9077, 192
          %v9084 = vadd.s32 %v9077, 224
          %v9085 = vrot.slane %v8410, 7
          %v9086 = vrot.slane %v9085, 2
          %v9087 = vrot.slane %v8418, 7
          %v9088 = vrot.slane %v9087, 2
          %v9089 = vrot.slane %v8417, 7
          %v9090 = vrot.slane %v9089, 2
          %v9091 = vrot.slane %v8419, 7
          %v9092 = vrot.slane %v9091, 2
          %v9093 = vrot.slane %v8427, 7
          %v9094 = vrot.slane %v9093, 2
          %v9095 = vrot.slane %v8435, 7
          %v9096 = vrot.slane %v9095, 2
          %v9097 = vrot.slane %v8434, 7
          %v9098 = vrot.slane %v9097, 2
          %v9099 = vrot.slane %v8436, 7
          %v9100 = vrot.slane %v9099, 2
          %v9101 = vrot.slane %v8478, 7
          %v9102 = vrot.slane %v9101, 2
          %v9103 = vrot.slane %v8486, 7
          %v9104 = vrot.slane %v9103, 2
          %v9105 = vrot.slane %v8485, 7
          %v9106 = vrot.slane %v9105, 2
          %v9107 = vrot.slane %v8487, 7
          %v9108 = vrot.slane %v9107, 2
          %v9109 = vrot.slane %v8495, 7
          %v9110 = vrot.slane %v9109, 2
          %v9111 = vrot.slane %v8503, 7
          %v9112 = vrot.slane %v9111, 2
          %v9113 = vrot.slane %v8502, 7
          %v9114 = vrot.slane %v9113, 2
          %v9115 = vrot.slane %v8504, 7
          %v9116 = vrot.slane %v9115, 2
          %v9117 = vrot.slane %v8546, 7
          %v9118 = vrot.slane %v9117, 2
          %v9119 = vrot.slane %v8554, 7
          %v9120 = vrot.slane %v9119, 2
          %v9121 = vrot.slane %v8553, 7
          %v9122 = vrot.slane %v9121, 2
          %v9123 = vrot.slane %v8555, 7
          %v9124 = vrot.slane %v9123, 2
          %v9125 = vrot.slane %v8563, 7
          %v9126 = vrot.slane %v9125, 2
          %v9127 = vrot.slane %v8571, 7
          %v9128 = vrot.slane %v9127, 2
          %v9129 = vrot.slane %v8570, 7
          %v9130 = vrot.slane %v9129, 2
          %v9131 = vrot.slane %v8572, 7
          %v9132 = vrot.slane %v9131, 2
          %v9133 = vrot.slane %v8614, 7
          %v9134 = vrot.slane %v9133, 2
          %v9135 = vrot.slane %v8622, 7
          %v9136 = vrot.slane %v9135, 2
          %v9137 = vrot.slane %v8621, 7
          %v9138 = vrot.slane %v9137, 2
          %v9139 = vrot.slane %v8623, 7
          %v9140 = vrot.slane %v9139, 2
          %v9141 = vrot.slane %v8631, 7
          %v9142 = vrot.slane %v9141, 2
          %v9143 = vrot.slane %v8639, 7
          %v9144 = vrot.slane %v9143, 2
          %v9145 = vrot.slane %v8638, 7
          %v9146 = vrot.slane %v9145, 2
          %v9147 = vrot.slane %v8640, 7
          %v9148 = vrot.slane %v9147, 2
          %v9149 = vrot.slane %v8682, 7
          %v9150 = vrot.slane %v9149, 2
          %v9151 = vrot.slane %v8690, 7
          %v9152 = vrot.slane %v9151, 2
          %v9153 = vrot.slane %v8689, 7
          %v9154 = vrot.slane %v9153, 2
          %v9155 = vrot.slane %v8691, 7
          %v9156 = vrot.slane %v9155, 2
          %v9157 = vrot.slane %v8699, 7
          %v9158 = vrot.slane %v9157, 2
          %v9159 = vrot.slane %v8707, 7
          %v9160 = vrot.slane %v9159, 2
          %v9161 = vrot.slane %v8706, 7
          %v9162 = vrot.slane %v9161, 2
          %v9163 = vrot.slane %v8708, 7
          %v9164 = vrot.slane %v9163, 2
          %v9165 = vrot.slane %v8750, 7
          %v9166 = vrot.slane %v9165, 2
          %v9167 = vrot.slane %v8758, 7
          %v9168 = vrot.slane %v9167, 2
          %v9169 = vrot.slane %v8757, 7
          %v9170 = vrot.slane %v9169, 2
          %v9171 = vrot.slane %v8759, 7
          %v9172 = vrot.slane %v9171, 2
          %v9173 = vrot.slane %v8767, 7
          %v9174 = vrot.slane %v9173, 2
          %v9175 = vrot.slane %v8775, 7
          %v9176 = vrot.slane %v9175, 2
          %v9177 = vrot.slane %v8774, 7
          %v9178 = vrot.slane %v9177, 2
          %v9179 = vrot.slane %v8776, 7
          %v9180 = vrot.slane %v9179, 2
          %v9181 = vrot.slane %v8818, 7
          %v9182 = vrot.slane %v9181, 2
          %v9183 = vrot.slane %v8826, 7
          %v9184 = vrot.slane %v9183, 2
          %v9185 = vrot.slane %v8825, 7
          %v9186 = vrot.slane %v9185, 2
          %v9187 = vrot.slane %v8827, 7
          %v9188 = vrot.slane %v9187, 2
          %v9189 = vrot.slane %v8835, 7
          %v9190 = vrot.slane %v9189, 2
          %v9191 = vrot.slane %v8843, 7
          %v9192 = vrot.slane %v9191, 2
          %v9193 = vrot.slane %v8842, 7
          %v9194 = vrot.slane %v9193, 2
          %v9195 = vrot.slane %v8844, 7
          %v9196 = vrot.slane %v9195, 2
          %v9197 = vrot.slane %v8886, 7
          %v9198 = vrot.slane %v9197, 2
          %v9199 = vrot.slane %v8894, 7
          %v9200 = vrot.slane %v9199, 2
          %v9201 = vrot.slane %v8893, 7
          %v9202 = vrot.slane %v9201, 2
          %v9203 = vrot.slane %v8895, 7
          %v9204 = vrot.slane %v9203, 2
          %v9205 = vrot.slane %v8903, 7
          %v9206 = vrot.slane %v9205, 2
          %v9207 = vrot.slane %v8911, 7
          %v9208 = vrot.slane %v9207, 2
          %v9209 = vrot.slane %v8910, 7
          %v9210 = vrot.slane %v9209, 2
          %v9211 = vrot.slane %v8912, 7
          %v9212 = vrot.slane %v9211, 2
          %v9277 = vmax.f32 %v8410, %v9086
          %v9278 = vmax.f32 %v8418, %v9088
          %v9279 = vmax.f32 %v8417, %v9090
          %v9280 = vmax.f32 %v8419, %v9092
          %v9281 = vmax.f32 %v8427, %v9094
          %v9282 = vmax.f32 %v8435, %v9096
          %v9283 = vmax.f32 %v8434, %v9098
          %v9284 = vmax.f32 %v8436, %v9100
          %v9285 = vmax.f32 %v8478, %v9102
          %v9286 = vmax.f32 %v8486, %v9104
          %v9287 = vmax.f32 %v8485, %v9106
          %v9288 = vmax.f32 %v8487, %v9108
          %v9289 = vmax.f32 %v8495, %v9110
          %v9290 = vmax.f32 %v8503, %v9112
          %v9291 = vmax.f32 %v8502, %v9114
          %v9292 = vmax.f32 %v8504, %v9116
          %v9293 = vmax.f32 %v8546, %v9118
          %v9294 = vmax.f32 %v8554, %v9120
          %v9295 = vmax.f32 %v8553, %v9122
          %v9296 = vmax.f32 %v8555, %v9124
          %v9297 = vmax.f32 %v8563, %v9126
          %v9298 = vmax.f32 %v8571, %v9128
          %v9299 = vmax.f32 %v8570, %v9130
          %v9300 = vmax.f32 %v8572, %v9132
          %v9301 = vmax.f32 %v8614, %v9134
          %v9302 = vmax.f32 %v8622, %v9136
          %v9303 = vmax.f32 %v8621, %v9138
          %v9304 = vmax.f32 %v8623, %v9140
          %v9305 = vmax.f32 %v8631, %v9142
          %v9306 = vmax.f32 %v8639, %v9144
          %v9307 = vmax.f32 %v8638, %v9146
          %v9308 = vmax.f32 %v8640, %v9148
          %v9309 = vmax.f32 %v8682, %v9150
          %v9310 = vmax.f32 %v8690, %v9152
          %v9311 = vmax.f32 %v8689, %v9154
          %v9312 = vmax.f32 %v8691, %v9156
          %v9313 = vmax.f32 %v8699, %v9158
          %v9314 = vmax.f32 %v8707, %v9160
          %v9315 = vmax.f32 %v8706, %v9162
          %v9316 = vmax.f32 %v8708, %v9164
          %v9317 = vmax.f32 %v8750, %v9166
          %v9318 = vmax.f32 %v8758, %v9168
          %v9319 = vmax.f32 %v8757, %v9170
          %v9320 = vmax.f32 %v8759, %v9172
          %v9321 = vmax.f32 %v8767, %v9174
          %v9322 = vmax.f32 %v8775, %v9176
          %v9323 = vmax.f32 %v8774, %v9178
          %v9324 = vmax.f32 %v8776, %v9180
          %v9325 = vmax.f32 %v8818, %v9182
          %v9326 = vmax.f32 %v8826, %v9184
          %v9327 = vmax.f32 %v8825, %v9186
          %v9328 = vmax.f32 %v8827, %v9188
          %v9329 = vmax.f32 %v8835, %v9190
          %v9330 = vmax.f32 %v8843, %v9192
          %v9331 = vmax.f32 %v8842, %v9194
          %v9332 = vmax.f32 %v8844, %v9196
          %v9333 = vmax.f32 %v8886, %v9198
          %v9334 = vmax.f32 %v8894, %v9200
          %v9335 = vmax.f32 %v8893, %v9202
          %v9336 = vmax.f32 %v8895, %v9204
          %v9337 = vmax.f32 %v8903, %v9206
          %v9338 = vmax.f32 %v8911, %v9208
          %v9339 = vmax.f32 %v8910, %v9210
          %v9340 = vmax.f32 %v8912, %v9212
          %vm9341 = vcmp.ge.f32.partialorder %v8410, %v9086
          %vm9342 = vcmp.ge.f32.partialorder %v8418, %v9088
          %vm9343 = vcmp.ge.f32.partialorder %v8417, %v9090
          %vm9344 = vcmp.ge.f32.partialorder %v8419, %v9092
          %vm9345 = vcmp.ge.f32.partialorder %v8427, %v9094
          %vm9346 = vcmp.ge.f32.partialorder %v8435, %v9096
          %vm9347 = vcmp.ge.f32.partialorder %v8434, %v9098
          %vm9348 = vcmp.ge.f32.partialorder %v8436, %v9100
          %vm9349 = vcmp.ge.f32.partialorder %v8478, %v9102
          %vm9350 = vcmp.ge.f32.partialorder %v8486, %v9104
          %vm9351 = vcmp.ge.f32.partialorder %v8485, %v9106
          %vm9352 = vcmp.ge.f32.partialorder %v8487, %v9108
          %vm9353 = vcmp.ge.f32.partialorder %v8495, %v9110
          %vm9354 = vcmp.ge.f32.partialorder %v8503, %v9112
          %vm9355 = vcmp.ge.f32.partialorder %v8502, %v9114
          %vm9356 = vcmp.ge.f32.partialorder %v8504, %v9116
          %vm9357 = vcmp.ge.f32.partialorder %v8546, %v9118
          %vm9358 = vcmp.ge.f32.partialorder %v8554, %v9120
          %vm9359 = vcmp.ge.f32.partialorder %v8553, %v9122
          %vm9360 = vcmp.ge.f32.partialorder %v8555, %v9124
          %vm9361 = vcmp.ge.f32.partialorder %v8563, %v9126
          %vm9362 = vcmp.ge.f32.partialorder %v8571, %v9128
          %vm9363 = vcmp.ge.f32.partialorder %v8570, %v9130
          %vm9364 = vcmp.ge.f32.partialorder %v8572, %v9132
          %vm9365 = vcmp.ge.f32.partialorder %v8614, %v9134
          %vm9366 = vcmp.ge.f32.partialorder %v8622, %v9136
          %vm9367 = vcmp.ge.f32.partialorder %v8621, %v9138
          %vm9368 = vcmp.ge.f32.partialorder %v8623, %v9140
          %vm9369 = vcmp.ge.f32.partialorder %v8631, %v9142
          %vm9370 = vcmp.ge.f32.partialorder %v8639, %v9144
          %vm9371 = vcmp.ge.f32.partialorder %v8638, %v9146
          %vm9372 = vcmp.ge.f32.partialorder %v8640, %v9148
          %vm9373 = vcmp.ge.f32.partialorder %v8682, %v9150
          %vm9374 = vcmp.ge.f32.partialorder %v8690, %v9152
          %vm9375 = vcmp.ge.f32.partialorder %v8689, %v9154
          %vm9376 = vcmp.ge.f32.partialorder %v8691, %v9156
          %vm9377 = vcmp.ge.f32.partialorder %v8699, %v9158
          %vm9378 = vcmp.ge.f32.partialorder %v8707, %v9160
          %vm9379 = vcmp.ge.f32.partialorder %v8706, %v9162
          %vm9380 = vcmp.ge.f32.partialorder %v8708, %v9164
          %vm9381 = vcmp.ge.f32.partialorder %v8750, %v9166
          %vm9382 = vcmp.ge.f32.partialorder %v8758, %v9168
          %vm9383 = vcmp.ge.f32.partialorder %v8757, %v9170
          %vm9384 = vcmp.ge.f32.partialorder %v8759, %v9172
          %vm9385 = vcmp.ge.f32.partialorder %v8767, %v9174
          %vm9386 = vcmp.ge.f32.partialorder %v8775, %v9176
          %vm9387 = vcmp.ge.f32.partialorder %v8774, %v9178
          %vm9388 = vcmp.ge.f32.partialorder %v8776, %v9180
          %vm9389 = vcmp.ge.f32.partialorder %v8818, %v9182
          %vm9390 = vcmp.ge.f32.partialorder %v8826, %v9184
          %vm9391 = vcmp.ge.f32.partialorder %v8825, %v9186
          %vm9392 = vcmp.ge.f32.partialorder %v8827, %v9188
          %vm9393 = vcmp.ge.f32.partialorder %v8835, %v9190
          %vm9394 = vcmp.ge.f32.partialorder %v8843, %v9192
          %vm9395 = vcmp.ge.f32.partialorder %v8842, %v9194
          %vm9396 = vcmp.ge.f32.partialorder %v8844, %v9196
          %vm9397 = vcmp.ge.f32.partialorder %v8886, %v9198
          %vm9398 = vcmp.ge.f32.partialorder %v8894, %v9200
          %vm9399 = vcmp.ge.f32.partialorder %v8893, %v9202
          %vm9400 = vcmp.ge.f32.partialorder %v8895, %v9204
          %vm9401 = vcmp.ge.f32.partialorder %v8903, %v9206
          %vm9402 = vcmp.ge.f32.partialorder %v8911, %v9208
          %vm9403 = vcmp.ge.f32.partialorder %v8910, %v9210
          %vm9404 = vcmp.ge.f32.partialorder %v8912, %v9212
          %v9405 = vadd.s32 %v9077, 1
          %v9406 = vadd.s32 %v9078, 1
          %v9407 = vadd.s32 %v9079, 1
          %v9408 = vadd.s32 %v9080, 1
          %v9409 = vadd.s32 %v9081, 1
          %v9410 = vadd.s32 %v9082, 1
          %v9411 = vadd.s32 %v9083, 1
          %v9412 = vadd.s32 %v9084, 1
          %v9414 = vunpack.c.l.s4 269488144
          %v9415 = vunpack.c.0.s8 %v9414
          %v9416 = vlaneseq
          %v9417 = vshrl.u32 %v9416, 7
          %v9418 = vsub.s32 %v9415, %v9417
          %v9419 = vrot.slane %v9077, %v9418
          %v9421 = vunpack.c.l.s4 842150450
          %v9422 = vunpack.c.0.s8 %v9421
          %v9423 = vlaneseq
          %v9424 = vshrl.u32 %v9423, 7
          %v9425 = vsub.s32 %v9422, %v9424
          %v9426 = vrot.slane %v9077, %v9425
          %v9428 = vunpack.c.l.s4 1414812756
          %v9429 = vunpack.c.0.s8 %v9428
          %v9430 = vlaneseq
          %v9431 = vshrl.u32 %v9430, 7
          %v9432 = vsub.s32 %v9429, %v9431
          %v9433 = vrot.slane %v9077, %v9432
          %v9435 = vunpack.c.l.s4 1987475062
          %v9436 = vunpack.c.0.s8 %v9435
          %v9437 = vlaneseq
          %v9438 = vshrl.u32 %v9437, 7
          %v9439 = vsub.s32 %v9436, %v9438
          %v9440 = vrot.slane %v9077, %v9439
          %v9442 = vunpack.c.l.s4 269488144
          %v9443 = vunpack.c.0.s8 %v9442
          %v9444 = vlaneseq
          %v9445 = vshrl.u32 %v9444, 7
          %v9446 = vsub.s32 %v9443, %v9445
          %v9447 = vrot.slane %v9078, %v9446
          %v9449 = vunpack.c.l.s4 842150450
          %v9450 = vunpack.c.0.s8 %v9449
          %v9451 = vlaneseq
          %v9452 = vshrl.u32 %v9451, 7
          %v9453 = vsub.s32 %v9450, %v9452
          %v9454 = vrot.slane %v9078, %v9453
          %v9456 = vunpack.c.l.s4 1414812756
          %v9457 = vunpack.c.0.s8 %v9456
          %v9458 = vlaneseq
          %v9459 = vshrl.u32 %v9458, 7
          %v9460 = vsub.s32 %v9457, %v9459
          %v9461 = vrot.slane %v9078, %v9460
          %v9463 = vunpack.c.l.s4 1987475062
          %v9464 = vunpack.c.0.s8 %v9463
          %v9465 = vlaneseq
          %v9466 = vshrl.u32 %v9465, 7
          %v9467 = vsub.s32 %v9464, %v9466
          %v9468 = vrot.slane %v9078, %v9467
          %v9470 = vunpack.c.l.s4 269488144
          %v9471 = vunpack.c.0.s8 %v9470
          %v9472 = vlaneseq
          %v9473 = vshrl.u32 %v9472, 7
          %v9474 = vsub.s32 %v9471, %v9473
          %v9475 = vrot.slane %v9079, %v9474
          %v9477 = vunpack.c.l.s4 842150450
          %v9478 = vunpack.c.0.s8 %v9477
          %v9479 = vlaneseq
          %v9480 = vshrl.u32 %v9479, 7
          %v9481 = vsub.s32 %v9478, %v9480
          %v9482 = vrot.slane %v9079, %v9481
          %v9484 = vunpack.c.l.s4 1414812756
          %v9485 = vunpack.c.0.s8 %v9484
          %v9486 = vlaneseq
          %v9487 = vshrl.u32 %v9486, 7
          %v9488 = vsub.s32 %v9485, %v9487
          %v9489 = vrot.slane %v9079, %v9488
          %v9491 = vunpack.c.l.s4 1987475062
          %v9492 = vunpack.c.0.s8 %v9491
          %v9493 = vlaneseq
          %v9494 = vshrl.u32 %v9493, 7
          %v9495 = vsub.s32 %v9492, %v9494
          %v9496 = vrot.slane %v9079, %v9495
          %v9498 = vunpack.c.l.s4 269488144
          %v9499 = vunpack.c.0.s8 %v9498
          %v9500 = vlaneseq
          %v9501 = vshrl.u32 %v9500, 7
          %v9502 = vsub.s32 %v9499, %v9501
          %v9503 = vrot.slane %v9080, %v9502
          %v9505 = vunpack.c.l.s4 842150450
          %v9506 = vunpack.c.0.s8 %v9505
          %v9507 = vlaneseq
          %v9508 = vshrl.u32 %v9507, 7
          %v9509 = vsub.s32 %v9506, %v9508
          %v9510 = vrot.slane %v9080, %v9509
          %v9512 = vunpack.c.l.s4 1414812756
          %v9513 = vunpack.c.0.s8 %v9512
          %v9514 = vlaneseq
          %v9515 = vshrl.u32 %v9514, 7
          %v9516 = vsub.s32 %v9513, %v9515
          %v9517 = vrot.slane %v9080, %v9516
          %v9519 = vunpack.c.l.s4 1987475062
          %v9520 = vunpack.c.0.s8 %v9519
          %v9521 = vlaneseq
          %v9522 = vshrl.u32 %v9521, 7
          %v9523 = vsub.s32 %v9520, %v9522
          %v9524 = vrot.slane %v9080, %v9523
          %v9526 = vunpack.c.l.s4 269488144
          %v9527 = vunpack.c.0.s8 %v9526
          %v9528 = vlaneseq
          %v9529 = vshrl.u32 %v9528, 7
          %v9530 = vsub.s32 %v9527, %v9529
          %v9531 = vrot.slane %v9081, %v9530
          %v9533 = vunpack.c.l.s4 842150450
          %v9534 = vunpack.c.0.s8 %v9533
          %v9535 = vlaneseq
          %v9536 = vshrl.u32 %v9535, 7
          %v9537 = vsub.s32 %v9534, %v9536
          %v9538 = vrot.slane %v9081, %v9537
          %v9540 = vunpack.c.l.s4 1414812756
          %v9541 = vunpack.c.0.s8 %v9540
          %v9542 = vlaneseq
          %v9543 = vshrl.u32 %v9542, 7
          %v9544 = vsub.s32 %v9541, %v9543
          %v9545 = vrot.slane %v9081, %v9544
          %v9547 = vunpack.c.l.s4 1987475062
          %v9548 = vunpack.c.0.s8 %v9547
          %v9549 = vlaneseq
          %v9550 = vshrl.u32 %v9549, 7
          %v9551 = vsub.s32 %v9548, %v9550
          %v9552 = vrot.slane %v9081, %v9551
          %v9554 = vunpack.c.l.s4 269488144
          %v9555 = vunpack.c.0.s8 %v9554
          %v9556 = vlaneseq
          %v9557 = vshrl.u32 %v9556, 7
          %v9558 = vsub.s32 %v9555, %v9557
          %v9559 = vrot.slane %v9082, %v9558
          %v9561 = vunpack.c.l.s4 842150450
          %v9562 = vunpack.c.0.s8 %v9561
          %v9563 = vlaneseq
          %v9564 = vshrl.u32 %v9563, 7
          %v9565 = vsub.s32 %v9562, %v9564
          %v9566 = vrot.slane %v9082, %v9565
          %v9568 = vunpack.c.l.s4 1414812756
          %v9569 = vunpack.c.0.s8 %v9568
          %v9570 = vlaneseq
          %v9571 = vshrl.u32 %v9570, 7
          %v9572 = vsub.s32 %v9569, %v9571
          %v9573 = vrot.slane %v9082, %v9572
          %v9575 = vunpack.c.l.s4 1987475062
          %v9576 = vunpack.c.0.s8 %v9575
          %v9577 = vlaneseq
          %v9578 = vshrl.u32 %v9577, 7
          %v9579 = vsub.s32 %v9576, %v9578
          %v9580 = vrot.slane %v9082, %v9579
          %v9582 = vunpack.c.l.s4 269488144
          %v9583 = vunpack.c.0.s8 %v9582
          %v9584 = vlaneseq
          %v9585 = vshrl.u32 %v9584, 7
          %v9586 = vsub.s32 %v9583, %v9585
          %v9587 = vrot.slane %v9083, %v9586
          %v9589 = vunpack.c.l.s4 842150450
          %v9590 = vunpack.c.0.s8 %v9589
          %v9591 = vlaneseq
          %v9592 = vshrl.u32 %v9591, 7
          %v9593 = vsub.s32 %v9590, %v9592
          %v9594 = vrot.slane %v9083, %v9593
          %v9596 = vunpack.c.l.s4 1414812756
          %v9597 = vunpack.c.0.s8 %v9596
          %v9598 = vlaneseq
          %v9599 = vshrl.u32 %v9598, 7
          %v9600 = vsub.s32 %v9597, %v9599
          %v9601 = vrot.slane %v9083, %v9600
          %v9603 = vunpack.c.l.s4 1987475062
          %v9604 = vunpack.c.0.s8 %v9603
          %v9605 = vlaneseq
          %v9606 = vshrl.u32 %v9605, 7
          %v9607 = vsub.s32 %v9604, %v9606
          %v9608 = vrot.slane %v9083, %v9607
          %v9610 = vunpack.c.l.s4 269488144
          %v9611 = vunpack.c.0.s8 %v9610
          %v9612 = vlaneseq
          %v9613 = vshrl.u32 %v9612, 7
          %v9614 = vsub.s32 %v9611, %v9613
          %v9615 = vrot.slane %v9084, %v9614
          %v9617 = vunpack.c.l.s4 842150450
          %v9618 = vunpack.c.0.s8 %v9617
          %v9619 = vlaneseq
          %v9620 = vshrl.u32 %v9619, 7
          %v9621 = vsub.s32 %v9618, %v9620
          %v9622 = vrot.slane %v9084, %v9621
          %v9624 = vunpack.c.l.s4 1414812756
          %v9625 = vunpack.c.0.s8 %v9624
          %v9626 = vlaneseq
          %v9627 = vshrl.u32 %v9626, 7
          %v9628 = vsub.s32 %v9625, %v9627
          %v9629 = vrot.slane %v9084, %v9628
          %v9631 = vunpack.c.l.s4 1987475062
          %v9632 = vunpack.c.0.s8 %v9631
          %v9633 = vlaneseq
          %v9634 = vshrl.u32 %v9633, 7
          %v9635 = vsub.s32 %v9632, %v9634
          %v9636 = vrot.slane %v9084, %v9635
          %v9637 = vrot.slane %v9419, 1
          %v9638 = vrot.slane %v9426, 1
          %v9639 = vrot.slane %v9433, 1
          %v9640 = vrot.slane %v9440, 1
          %v9641 = vrot.slane %v9447, 1
          %v9642 = vrot.slane %v9454, 1
          %v9643 = vrot.slane %v9461, 1
          %v9644 = vrot.slane %v9468, 1
          %v9645 = vrot.slane %v9475, 1
          %v9646 = vrot.slane %v9482, 1
          %v9647 = vrot.slane %v9489, 1
          %v9648 = vrot.slane %v9496, 1
          %v9649 = vrot.slane %v9503, 1
          %v9650 = vrot.slane %v9510, 1
          %v9651 = vrot.slane %v9517, 1
          %v9652 = vrot.slane %v9524, 1
          %v9653 = vrot.slane %v9531, 1
          %v9654 = vrot.slane %v9538, 1
          %v9655 = vrot.slane %v9545, 1
          %v9656 = vrot.slane %v9552, 1
          %v9657 = vrot.slane %v9559, 1
          %v9658 = vrot.slane %v9566, 1
          %v9659 = vrot.slane %v9573, 1
          %v9660 = vrot.slane %v9580, 1
          %v9661 = vrot.slane %v9587, 1
          %v9662 = vrot.slane %v9594, 1
          %v9663 = vrot.slane %v9601, 1
          %v9664 = vrot.slane %v9608, 1
          %v9665 = vrot.slane %v9615, 1
          %v9666 = vrot.slane %v9622, 1
          %v9667 = vrot.slane %v9629, 1
          %v9668 = vrot.slane %v9636, 1
          %v9670 = vunpack.c.l.s4 269488144
          %v9671 = vunpack.c.0.s8 %v9670
          %v9672 = vlaneseq
          %v9673 = vshrl.u32 %v9672, 7
          %v9674 = vsub.s32 %v9671, %v9673
          %v9675 = vrot.slane %v9405, %v9674
          %v9677 = vunpack.c.l.s4 842150450
          %v9678 = vunpack.c.0.s8 %v9677
          %v9679 = vlaneseq
          %v9680 = vshrl.u32 %v9679, 7
          %v9681 = vsub.s32 %v9678, %v9680
          %v9682 = vrot.slane %v9405, %v9681
          %v9684 = vunpack.c.l.s4 1414812756
          %v9685 = vunpack.c.0.s8 %v9684
          %v9686 = vlaneseq
          %v9687 = vshrl.u32 %v9686, 7
          %v9688 = vsub.s32 %v9685, %v9687
          %v9689 = vrot.slane %v9405, %v9688
          %v9691 = vunpack.c.l.s4 1987475062
          %v9692 = vunpack.c.0.s8 %v9691
          %v9693 = vlaneseq
          %v9694 = vshrl.u32 %v9693, 7
          %v9695 = vsub.s32 %v9692, %v9694
          %v9696 = vrot.slane %v9405, %v9695
          %v9698 = vunpack.c.l.s4 269488144
          %v9699 = vunpack.c.0.s8 %v9698
          %v9700 = vlaneseq
          %v9701 = vshrl.u32 %v9700, 7
          %v9702 = vsub.s32 %v9699, %v9701
          %v9703 = vrot.slane %v9406, %v9702
          %v9705 = vunpack.c.l.s4 842150450
          %v9706 = vunpack.c.0.s8 %v9705
          %v9707 = vlaneseq
          %v9708 = vshrl.u32 %v9707, 7
          %v9709 = vsub.s32 %v9706, %v9708
          %v9710 = vrot.slane %v9406, %v9709
          %v9712 = vunpack.c.l.s4 1414812756
          %v9713 = vunpack.c.0.s8 %v9712
          %v9714 = vlaneseq
          %v9715 = vshrl.u32 %v9714, 7
          %v9716 = vsub.s32 %v9713, %v9715
          %v9717 = vrot.slane %v9406, %v9716
          %v9719 = vunpack.c.l.s4 1987475062
          %v9720 = vunpack.c.0.s8 %v9719
          %v9721 = vlaneseq
          %v9722 = vshrl.u32 %v9721, 7
          %v9723 = vsub.s32 %v9720, %v9722
          %v9724 = vrot.slane %v9406, %v9723
          %v9726 = vunpack.c.l.s4 269488144
          %v9727 = vunpack.c.0.s8 %v9726
          %v9728 = vlaneseq
          %v9729 = vshrl.u32 %v9728, 7
          %v9730 = vsub.s32 %v9727, %v9729
          %v9731 = vrot.slane %v9407, %v9730
          %v9733 = vunpack.c.l.s4 842150450
          %v9734 = vunpack.c.0.s8 %v9733
          %v9735 = vlaneseq
          %v9736 = vshrl.u32 %v9735, 7
          %v9737 = vsub.s32 %v9734, %v9736
          %v9738 = vrot.slane %v9407, %v9737
          %v9740 = vunpack.c.l.s4 1414812756
          %v9741 = vunpack.c.0.s8 %v9740
          %v9742 = vlaneseq
          %v9743 = vshrl.u32 %v9742, 7
          %v9744 = vsub.s32 %v9741, %v9743
          %v9745 = vrot.slane %v9407, %v9744
          %v9747 = vunpack.c.l.s4 1987475062
          %v9748 = vunpack.c.0.s8 %v9747
          %v9749 = vlaneseq
          %v9750 = vshrl.u32 %v9749, 7
          %v9751 = vsub.s32 %v9748, %v9750
          %v9752 = vrot.slane %v9407, %v9751
          %v9754 = vunpack.c.l.s4 269488144
          %v9755 = vunpack.c.0.s8 %v9754
          %v9756 = vlaneseq
          %v9757 = vshrl.u32 %v9756, 7
          %v9758 = vsub.s32 %v9755, %v9757
          %v9759 = vrot.slane %v9408, %v9758
          %v9761 = vunpack.c.l.s4 842150450
          %v9762 = vunpack.c.0.s8 %v9761
          %v9763 = vlaneseq
          %v9764 = vshrl.u32 %v9763, 7
          %v9765 = vsub.s32 %v9762, %v9764
          %v9766 = vrot.slane %v9408, %v9765
          %v9768 = vunpack.c.l.s4 1414812756
          %v9769 = vunpack.c.0.s8 %v9768
          %v9770 = vlaneseq
          %v9771 = vshrl.u32 %v9770, 7
          %v9772 = vsub.s32 %v9769, %v9771
          %v9773 = vrot.slane %v9408, %v9772
          %v9775 = vunpack.c.l.s4 1987475062
          %v9776 = vunpack.c.0.s8 %v9775
          %v9777 = vlaneseq
          %v9778 = vshrl.u32 %v9777, 7
          %v9779 = vsub.s32 %v9776, %v9778
          %v9780 = vrot.slane %v9408, %v9779
          %v9782 = vunpack.c.l.s4 269488144
          %v9783 = vunpack.c.0.s8 %v9782
          %v9784 = vlaneseq
          %v9785 = vshrl.u32 %v9784, 7
          %v9786 = vsub.s32 %v9783, %v9785
          %v9787 = vrot.slane %v9409, %v9786
          %v9789 = vunpack.c.l.s4 842150450
          %v9790 = vunpack.c.0.s8 %v9789
          %v9791 = vlaneseq
          %v9792 = vshrl.u32 %v9791, 7
          %v9793 = vsub.s32 %v9790, %v9792
          %v9794 = vrot.slane %v9409, %v9793
          %v9796 = vunpack.c.l.s4 1414812756
          %v9797 = vunpack.c.0.s8 %v9796
          %v9798 = vlaneseq
          %v9799 = vshrl.u32 %v9798, 7
          %v9800 = vsub.s32 %v9797, %v9799
          %v9801 = vrot.slane %v9409, %v9800
          %v9803 = vunpack.c.l.s4 1987475062
          %v9804 = vunpack.c.0.s8 %v9803
          %v9805 = vlaneseq
          %v9806 = vshrl.u32 %v9805, 7
          %v9807 = vsub.s32 %v9804, %v9806
          %v9808 = vrot.slane %v9409, %v9807
          %v9810 = vunpack.c.l.s4 269488144
          %v9811 = vunpack.c.0.s8 %v9810
          %v9812 = vlaneseq
          %v9813 = vshrl.u32 %v9812, 7
          %v9814 = vsub.s32 %v9811, %v9813
          %v9815 = vrot.slane %v9410, %v9814
          %v9817 = vunpack.c.l.s4 842150450
          %v9818 = vunpack.c.0.s8 %v9817
          %v9819 = vlaneseq
          %v9820 = vshrl.u32 %v9819, 7
          %v9821 = vsub.s32 %v9818, %v9820
          %v9822 = vrot.slane %v9410, %v9821
          %v9824 = vunpack.c.l.s4 1414812756
          %v9825 = vunpack.c.0.s8 %v9824
          %v9826 = vlaneseq
          %v9827 = vshrl.u32 %v9826, 7
          %v9828 = vsub.s32 %v9825, %v9827
          %v9829 = vrot.slane %v9410, %v9828
          %v9831 = vunpack.c.l.s4 1987475062
          %v9832 = vunpack.c.0.s8 %v9831
          %v9833 = vlaneseq
          %v9834 = vshrl.u32 %v9833, 7
          %v9835 = vsub.s32 %v9832, %v9834
          %v9836 = vrot.slane %v9410, %v9835
          %v9838 = vunpack.c.l.s4 269488144
          %v9839 = vunpack.c.0.s8 %v9838
          %v9840 = vlaneseq
          %v9841 = vshrl.u32 %v9840, 7
          %v9842 = vsub.s32 %v9839, %v9841
          %v9843 = vrot.slane %v9411, %v9842
          %v9845 = vunpack.c.l.s4 842150450
          %v9846 = vunpack.c.0.s8 %v9845
          %v9847 = vlaneseq
          %v9848 = vshrl.u32 %v9847, 7
          %v9849 = vsub.s32 %v9846, %v9848
          %v9850 = vrot.slane %v9411, %v9849
          %v9852 = vunpack.c.l.s4 1414812756
          %v9853 = vunpack.c.0.s8 %v9852
          %v9854 = vlaneseq
          %v9855 = vshrl.u32 %v9854, 7
          %v9856 = vsub.s32 %v9853, %v9855
          %v9857 = vrot.slane %v9411, %v9856
          %v9859 = vunpack.c.l.s4 1987475062
          %v9860 = vunpack.c.0.s8 %v9859
          %v9861 = vlaneseq
          %v9862 = vshrl.u32 %v9861, 7
          %v9863 = vsub.s32 %v9860, %v9862
          %v9864 = vrot.slane %v9411, %v9863
          %v9866 = vunpack.c.l.s4 269488144
          %v9867 = vunpack.c.0.s8 %v9866
          %v9868 = vlaneseq
          %v9869 = vshrl.u32 %v9868, 7
          %v9870 = vsub.s32 %v9867, %v9869
          %v9871 = vrot.slane %v9412, %v9870
          %v9873 = vunpack.c.l.s4 842150450
          %v9874 = vunpack.c.0.s8 %v9873
          %v9875 = vlaneseq
          %v9876 = vshrl.u32 %v9875, 7
          %v9877 = vsub.s32 %v9874, %v9876
          %v9878 = vrot.slane %v9412, %v9877
          %v9880 = vunpack.c.l.s4 1414812756
          %v9881 = vunpack.c.0.s8 %v9880
          %v9882 = vlaneseq
          %v9883 = vshrl.u32 %v9882, 7
          %v9884 = vsub.s32 %v9881, %v9883
          %v9885 = vrot.slane %v9412, %v9884
          %v9887 = vunpack.c.l.s4 1987475062
          %v9888 = vunpack.c.0.s8 %v9887
          %v9889 = vlaneseq
          %v9890 = vshrl.u32 %v9889, 7
          %v9891 = vsub.s32 %v9888, %v9890
          %v9892 = vrot.slane %v9412, %v9891
          %v9893 = vrot.slane %v9675, 1
          %v9894 = vrot.slane %v9682, 1
          %v9895 = vrot.slane %v9689, 1
          %v9896 = vrot.slane %v9696, 1
          %v9897 = vrot.slane %v9703, 1
          %v9898 = vrot.slane %v9710, 1
          %v9899 = vrot.slane %v9717, 1
          %v9900 = vrot.slane %v9724, 1
          %v9901 = vrot.slane %v9731, 1
          %v9902 = vrot.slane %v9738, 1
          %v9903 = vrot.slane %v9745, 1
          %v9904 = vrot.slane %v9752, 1
          %v9905 = vrot.slane %v9759, 1
          %v9906 = vrot.slane %v9766, 1
          %v9907 = vrot.slane %v9773, 1
          %v9908 = vrot.slane %v9780, 1
          %v9909 = vrot.slane %v9787, 1
          %v9910 = vrot.slane %v9794, 1
          %v9911 = vrot.slane %v9801, 1
          %v9912 = vrot.slane %v9808, 1
          %v9913 = vrot.slane %v9815, 1
          %v9914 = vrot.slane %v9822, 1
          %v9915 = vrot.slane %v9829, 1
          %v9916 = vrot.slane %v9836, 1
          %v9917 = vrot.slane %v9843, 1
          %v9918 = vrot.slane %v9850, 1
          %v9919 = vrot.slane %v9857, 1
          %v9920 = vrot.slane %v9864, 1
          %v9921 = vrot.slane %v9871, 1
          %v9922 = vrot.slane %v9878, 1
          %v9923 = vrot.slane %v9885, 1
          %v9924 = vrot.slane %v9892, 1
          %v9925 = vsel %vm9341, %v9419, %v9675
          %v9926 = vsel %vm9342, %v9637, %v9893
          %v9927 = vsel %vm9343, %v9426, %v9682
          %v9928 = vsel %vm9344, %v9638, %v9894
          %v9929 = vsel %vm9345, %v9433, %v9689
          %v9930 = vsel %vm9346, %v9639, %v9895
          %v9931 = vsel %vm9347, %v9440, %v9696
          %v9932 = vsel %vm9348, %v9640, %v9896
          %v9933 = vsel %vm9349, %v9447, %v9703
          %v9934 = vsel %vm9350, %v9641, %v9897
          %v9935 = vsel %vm9351, %v9454, %v9710
          %v9936 = vsel %vm9352, %v9642, %v9898
          %v9937 = vsel %vm9353, %v9461, %v9717
          %v9938 = vsel %vm9354, %v9643, %v9899
          %v9939 = vsel %vm9355, %v9468, %v9724
          %v9940 = vsel %vm9356, %v9644, %v9900
          %v9941 = vsel %vm9357, %v9475, %v9731
          %v9942 = vsel %vm9358, %v9645, %v9901
          %v9943 = vsel %vm9359, %v9482, %v9738
          %v9944 = vsel %vm9360, %v9646, %v9902
          %v9945 = vsel %vm9361, %v9489, %v9745
          %v9946 = vsel %vm9362, %v9647, %v9903
          %v9947 = vsel %vm9363, %v9496, %v9752
          %v9948 = vsel %vm9364, %v9648, %v9904
          %v9949 = vsel %vm9365, %v9503, %v9759
          %v9950 = vsel %vm9366, %v9649, %v9905
          %v9951 = vsel %vm9367, %v9510, %v9766
          %v9952 = vsel %vm9368, %v9650, %v9906
          %v9953 = vsel %vm9369, %v9517, %v9773
          %v9954 = vsel %vm9370, %v9651, %v9907
          %v9955 = vsel %vm9371, %v9524, %v9780
          %v9956 = vsel %vm9372, %v9652, %v9908
          %v9957 = vsel %vm9373, %v9531, %v9787
          %v9958 = vsel %vm9374, %v9653, %v9909
          %v9959 = vsel %vm9375, %v9538, %v9794
          %v9960 = vsel %vm9376, %v9654, %v9910
          %v9961 = vsel %vm9377, %v9545, %v9801
          %v9962 = vsel %vm9378, %v9655, %v9911
          %v9963 = vsel %vm9379, %v9552, %v9808
          %v9964 = vsel %vm9380, %v9656, %v9912
          %v9965 = vsel %vm9381, %v9559, %v9815
          %v9966 = vsel %vm9382, %v9657, %v9913
          %v9967 = vsel %vm9383, %v9566, %v9822
          %v9968 = vsel %vm9384, %v9658, %v9914
          %v9969 = vsel %vm9385, %v9573, %v9829
          %v9970 = vsel %vm9386, %v9659, %v9915
          %v9971 = vsel %vm9387, %v9580, %v9836
          %v9972 = vsel %vm9388, %v9660, %v9916
          %v9973 = vsel %vm9389, %v9587, %v9843
          %v9974 = vsel %vm9390, %v9661, %v9917
          %v9975 = vsel %vm9391, %v9594, %v9850
          %v9976 = vsel %vm9392, %v9662, %v9918
          %v9977 = vsel %vm9393, %v9601, %v9857
          %v9978 = vsel %vm9394, %v9663, %v9919
          %v9979 = vsel %vm9395, %v9608, %v9864
          %v9980 = vsel %vm9396, %v9664, %v9920
          %v9981 = vsel %vm9397, %v9615, %v9871
          %v9982 = vsel %vm9398, %v9665, %v9921
          %v9983 = vsel %vm9399, %v9622, %v9878
          %v9984 = vsel %vm9400, %v9666, %v9922
          %v9985 = vsel %vm9401, %v9629, %v9885
          %v9986 = vsel %vm9402, %v9667, %v9923
          %v9987 = vsel %vm9403, %v9636, %v9892
          %v9988 = vsel %vm9404, %v9668, %v9924
          %v9989 = vrot.slane %v8444, 7
          %v9990 = vrot.slane %v9989, 2
          %v9991 = vrot.slane %v8452, 7
          %v9992 = vrot.slane %v9991, 2
          %v9993 = vrot.slane %v8451, 7
          %v9994 = vrot.slane %v9993, 2
          %v9995 = vrot.slane %v8453, 7
          %v9996 = vrot.slane %v9995, 2
          %v9997 = vrot.slane %v8461, 7
          %v9998 = vrot.slane %v9997, 2
          %v9999 = vrot.slane %v8469, 7
          %v10000 = vrot.slane %v9999, 2
          %v10001 = vrot.slane %v8468, 7
          %v10002 = vrot.slane %v10001, 2
          %v10003 = vrot.slane %v8470, 7
          %v10004 = vrot.slane %v10003, 2
          %v10005 = vrot.slane %v8512, 7
          %v10006 = vrot.slane %v10005, 2
          %v10007 = vrot.slane %v8520, 7
          %v10008 = vrot.slane %v10007, 2
          %v10009 = vrot.slane %v8519, 7
          %v10010 = vrot.slane %v10009, 2
          %v10011 = vrot.slane %v8521, 7
          %v10012 = vrot.slane %v10011, 2
          %v10013 = vrot.slane %v8529, 7
          %v10014 = vrot.slane %v10013, 2
          %v10015 = vrot.slane %v8537, 7
          %v10016 = vrot.slane %v10015, 2
          %v10017 = vrot.slane %v8536, 7
          %v10018 = vrot.slane %v10017, 2
          %v10019 = vrot.slane %v8538, 7
          %v10020 = vrot.slane %v10019, 2
          %v10021 = vrot.slane %v8580, 7
          %v10022 = vrot.slane %v10021, 2
          %v10023 = vrot.slane %v8588, 7
          %v10024 = vrot.slane %v10023, 2
          %v10025 = vrot.slane %v8587, 7
          %v10026 = vrot.slane %v10025, 2
          %v10027 = vrot.slane %v8589, 7
          %v10028 = vrot.slane %v10027, 2
          %v10029 = vrot.slane %v8597, 7
          %v10030 = vrot.slane %v10029, 2
          %v10031 = vrot.slane %v8605, 7
          %v10032 = vrot.slane %v10031, 2
          %v10033 = vrot.slane %v8604, 7
          %v10034 = vrot.slane %v10033, 2
          %v10035 = vrot.slane %v8606, 7
          %v10036 = vrot.slane %v10035, 2
          %v10037 = vrot.slane %v8648, 7
          %v10038 = vrot.slane %v10037, 2
          %v10039 = vrot.slane %v8656, 7
          %v10040 = vrot.slane %v10039, 2
          %v10041 = vrot.slane %v8655, 7
          %v10042 = vrot.slane %v10041, 2
          %v10043 = vrot.slane %v8657, 7
          %v10044 = vrot.slane %v10043, 2
          %v10045 = vrot.slane %v8665, 7
          %v10046 = vrot.slane %v10045, 2
          %v10047 = vrot.slane %v8673, 7
          %v10048 = vrot.slane %v10047, 2
          %v10049 = vrot.slane %v8672, 7
          %v10050 = vrot.slane %v10049, 2
          %v10051 = vrot.slane %v8674, 7
          %v10052 = vrot.slane %v10051, 2
          %v10053 = vrot.slane %v8716, 7
          %v10054 = vrot.slane %v10053, 2
          %v10055 = vrot.slane %v8724, 7
          %v10056 = vrot.slane %v10055, 2
          %v10057 = vrot.slane %v8723, 7
          %v10058 = vrot.slane %v10057, 2
          %v10059 = vrot.slane %v8725, 7
          %v10060 = vrot.slane %v10059, 2
          %v10061 = vrot.slane %v8733, 7
          %v10062 = vrot.slane %v10061, 2
          %v10063 = vrot.slane %v8741, 7
          %v10064 = vrot.slane %v10063, 2
          %v10065 = vrot.slane %v8740, 7
          %v10066 = vrot.slane %v10065, 2
          %v10067 = vrot.slane %v8742, 7
          %v10068 = vrot.slane %v10067, 2
          %v10069 = vrot.slane %v8784, 7
          %v10070 = vrot.slane %v10069, 2
          %v10071 = vrot.slane %v8792, 7
          %v10072 = vrot.slane %v10071, 2
          %v10073 = vrot.slane %v8791, 7
          %v10074 = vrot.slane %v10073, 2
          %v10075 = vrot.slane %v8793, 7
          %v10076 = vrot.slane %v10075, 2
          %v10077 = vrot.slane %v8801, 7
          %v10078 = vrot.slane %v10077, 2
          %v10079 = vrot.slane %v8809, 7
          %v10080 = vrot.slane %v10079, 2
          %v10081 = vrot.slane %v8808, 7
          %v10082 = vrot.slane %v10081, 2
          %v10083 = vrot.slane %v8810, 7
          %v10084 = vrot.slane %v10083, 2
          %v10085 = vrot.slane %v8852, 7
          %v10086 = vrot.slane %v10085, 2
          %v10087 = vrot.slane %v8860, 7
          %v10088 = vrot.slane %v10087, 2
          %v10089 = vrot.slane %v8859, 7
          %v10090 = vrot.slane %v10089, 2
          %v10091 = vrot.slane %v8861, 7
          %v10092 = vrot.slane %v10091, 2
          %v10093 = vrot.slane %v8869, 7
          %v10094 = vrot.slane %v10093, 2
          %v10095 = vrot.slane %v8877, 7
          %v10096 = vrot.slane %v10095, 2
          %v10097 = vrot.slane %v8876, 7
          %v10098 = vrot.slane %v10097, 2
          %v10099 = vrot.slane %v8878, 7
          %v10100 = vrot.slane %v10099, 2
          %v10101 = vrot.slane %v8920, 7
          %v10102 = vrot.slane %v10101, 2
          %v10103 = vrot.slane %v8928, 7
          %v10104 = vrot.slane %v10103, 2
          %v10105 = vrot.slane %v8927, 7
          %v10106 = vrot.slane %v10105, 2
          %v10107 = vrot.slane %v8929, 7
          %v10108 = vrot.slane %v10107, 2
          %v10109 = vrot.slane %v8937, 7
          %v10110 = vrot.slane %v10109, 2
          %v10111 = vrot.slane %v8945, 7
          %v10112 = vrot.slane %v10111, 2
          %v10113 = vrot.slane %v8944, 7
          %v10114 = vrot.slane %v10113, 2
          %v10115 = vrot.slane %v8946, 7
          %v10116 = vrot.slane %v10115, 2
          %v10181 = vmax.f32 %v8444, %v9990
          %v10182 = vmax.f32 %v8452, %v9992
          %v10183 = vmax.f32 %v8451, %v9994
          %v10184 = vmax.f32 %v8453, %v9996
          %v10185 = vmax.f32 %v8461, %v9998
          %v10186 = vmax.f32 %v8469, %v10000
          %v10187 = vmax.f32 %v8468, %v10002
          %v10188 = vmax.f32 %v8470, %v10004
          %v10189 = vmax.f32 %v8512, %v10006
          %v10190 = vmax.f32 %v8520, %v10008
          %v10191 = vmax.f32 %v8519, %v10010
          %v10192 = vmax.f32 %v8521, %v10012
          %v10193 = vmax.f32 %v8529, %v10014
          %v10194 = vmax.f32 %v8537, %v10016
          %v10195 = vmax.f32 %v8536, %v10018
          %v10196 = vmax.f32 %v8538, %v10020
          %v10197 = vmax.f32 %v8580, %v10022
          %v10198 = vmax.f32 %v8588, %v10024
          %v10199 = vmax.f32 %v8587, %v10026
          %v10200 = vmax.f32 %v8589, %v10028
          %v10201 = vmax.f32 %v8597, %v10030
          %v10202 = vmax.f32 %v8605, %v10032
          %v10203 = vmax.f32 %v8604, %v10034
          %v10204 = vmax.f32 %v8606, %v10036
          %v10205 = vmax.f32 %v8648, %v10038
          %v10206 = vmax.f32 %v8656, %v10040
          %v10207 = vmax.f32 %v8655, %v10042
          %v10208 = vmax.f32 %v8657, %v10044
          %v10209 = vmax.f32 %v8665, %v10046
          %v10210 = vmax.f32 %v8673, %v10048
          %v10211 = vmax.f32 %v8672, %v10050
          %v10212 = vmax.f32 %v8674, %v10052
          %v10213 = vmax.f32 %v8716, %v10054
          %v10214 = vmax.f32 %v8724, %v10056
          %v10215 = vmax.f32 %v8723, %v10058
          %v10216 = vmax.f32 %v8725, %v10060
          %v10217 = vmax.f32 %v8733, %v10062
          %v10218 = vmax.f32 %v8741, %v10064
          %v10219 = vmax.f32 %v8740, %v10066
          %v10220 = vmax.f32 %v8742, %v10068
          %v10221 = vmax.f32 %v8784, %v10070
          %v10222 = vmax.f32 %v8792, %v10072
          %v10223 = vmax.f32 %v8791, %v10074
          %v10224 = vmax.f32 %v8793, %v10076
          %v10225 = vmax.f32 %v8801, %v10078
          %v10226 = vmax.f32 %v8809, %v10080
          %v10227 = vmax.f32 %v8808, %v10082
          %v10228 = vmax.f32 %v8810, %v10084
          %v10229 = vmax.f32 %v8852, %v10086
          %v10230 = vmax.f32 %v8860, %v10088
          %v10231 = vmax.f32 %v8859, %v10090
          %v10232 = vmax.f32 %v8861, %v10092
          %v10233 = vmax.f32 %v8869, %v10094
          %v10234 = vmax.f32 %v8877, %v10096
          %v10235 = vmax.f32 %v8876, %v10098
          %v10236 = vmax.f32 %v8878, %v10100
          %v10237 = vmax.f32 %v8920, %v10102
          %v10238 = vmax.f32 %v8928, %v10104
          %v10239 = vmax.f32 %v8927, %v10106
          %v10240 = vmax.f32 %v8929, %v10108
          %v10241 = vmax.f32 %v8937, %v10110
          %v10242 = vmax.f32 %v8945, %v10112
          %v10243 = vmax.f32 %v8944, %v10114
          %v10244 = vmax.f32 %v8946, %v10116
          %vm10245 = vcmp.ge.f32.partialorder %v8444, %v9990
          %vm10246 = vcmp.ge.f32.partialorder %v8452, %v9992
          %vm10247 = vcmp.ge.f32.partialorder %v8451, %v9994
          %vm10248 = vcmp.ge.f32.partialorder %v8453, %v9996
          %vm10249 = vcmp.ge.f32.partialorder %v8461, %v9998
          %vm10250 = vcmp.ge.f32.partialorder %v8469, %v10000
          %vm10251 = vcmp.ge.f32.partialorder %v8468, %v10002
          %vm10252 = vcmp.ge.f32.partialorder %v8470, %v10004
          %vm10253 = vcmp.ge.f32.partialorder %v8512, %v10006
          %vm10254 = vcmp.ge.f32.partialorder %v8520, %v10008
          %vm10255 = vcmp.ge.f32.partialorder %v8519, %v10010
          %vm10256 = vcmp.ge.f32.partialorder %v8521, %v10012
          %vm10257 = vcmp.ge.f32.partialorder %v8529, %v10014
          %vm10258 = vcmp.ge.f32.partialorder %v8537, %v10016
          %vm10259 = vcmp.ge.f32.partialorder %v8536, %v10018
          %vm10260 = vcmp.ge.f32.partialorder %v8538, %v10020
          %vm10261 = vcmp.ge.f32.partialorder %v8580, %v10022
          %vm10262 = vcmp.ge.f32.partialorder %v8588, %v10024
          %vm10263 = vcmp.ge.f32.partialorder %v8587, %v10026
          %vm10264 = vcmp.ge.f32.partialorder %v8589, %v10028
          %vm10265 = vcmp.ge.f32.partialorder %v8597, %v10030
          %vm10266 = vcmp.ge.f32.partialorder %v8605, %v10032
          %vm10267 = vcmp.ge.f32.partialorder %v8604, %v10034
          %vm10268 = vcmp.ge.f32.partialorder %v8606, %v10036
          %vm10269 = vcmp.ge.f32.partialorder %v8648, %v10038
          %vm10270 = vcmp.ge.f32.partialorder %v8656, %v10040
          %vm10271 = vcmp.ge.f32.partialorder %v8655, %v10042
          %vm10272 = vcmp.ge.f32.partialorder %v8657, %v10044
          %vm10273 = vcmp.ge.f32.partialorder %v8665, %v10046
          %vm10274 = vcmp.ge.f32.partialorder %v8673, %v10048
          %vm10275 = vcmp.ge.f32.partialorder %v8672, %v10050
          %vm10276 = vcmp.ge.f32.partialorder %v8674, %v10052
          %vm10277 = vcmp.ge.f32.partialorder %v8716, %v10054
          %vm10278 = vcmp.ge.f32.partialorder %v8724, %v10056
          %vm10279 = vcmp.ge.f32.partialorder %v8723, %v10058
          %vm10280 = vcmp.ge.f32.partialorder %v8725, %v10060
          %vm10281 = vcmp.ge.f32.partialorder %v8733, %v10062
          %vm10282 = vcmp.ge.f32.partialorder %v8741, %v10064
          %vm10283 = vcmp.ge.f32.partialorder %v8740, %v10066
          %vm10284 = vcmp.ge.f32.partialorder %v8742, %v10068
          %vm10285 = vcmp.ge.f32.partialorder %v8784, %v10070
          %vm10286 = vcmp.ge.f32.partialorder %v8792, %v10072
          %vm10287 = vcmp.ge.f32.partialorder %v8791, %v10074
          %vm10288 = vcmp.ge.f32.partialorder %v8793, %v10076
          %vm10289 = vcmp.ge.f32.partialorder %v8801, %v10078
          %vm10290 = vcmp.ge.f32.partialorder %v8809, %v10080
          %vm10291 = vcmp.ge.f32.partialorder %v8808, %v10082
          %vm10292 = vcmp.ge.f32.partialorder %v8810, %v10084
          %vm10293 = vcmp.ge.f32.partialorder %v8852, %v10086
          %vm10294 = vcmp.ge.f32.partialorder %v8860, %v10088
          %vm10295 = vcmp.ge.f32.partialorder %v8859, %v10090
          %vm10296 = vcmp.ge.f32.partialorder %v8861, %v10092
          %vm10297 = vcmp.ge.f32.partialorder %v8869, %v10094
          %vm10298 = vcmp.ge.f32.partialorder %v8877, %v10096
          %vm10299 = vcmp.ge.f32.partialorder %v8876, %v10098
          %vm10300 = vcmp.ge.f32.partialorder %v8878, %v10100
          %vm10301 = vcmp.ge.f32.partialorder %v8920, %v10102
          %vm10302 = vcmp.ge.f32.partialorder %v8928, %v10104
          %vm10303 = vcmp.ge.f32.partialorder %v8927, %v10106
          %vm10304 = vcmp.ge.f32.partialorder %v8929, %v10108
          %vm10305 = vcmp.ge.f32.partialorder %v8937, %v10110
          %vm10306 = vcmp.ge.f32.partialorder %v8945, %v10112
          %vm10307 = vcmp.ge.f32.partialorder %v8944, %v10114
          %vm10308 = vcmp.ge.f32.partialorder %v8946, %v10116
          %v10309 = vadd.s32 %v9077, 16
          %v10310 = vadd.s32 %v9078, 16
          %v10311 = vadd.s32 %v9079, 16
          %v10312 = vadd.s32 %v9080, 16
          %v10313 = vadd.s32 %v9081, 16
          %v10314 = vadd.s32 %v9082, 16
          %v10315 = vadd.s32 %v9083, 16
          %v10316 = vadd.s32 %v9084, 16
          %v10317 = vadd.s32 %v10309, 1
          %v10318 = vadd.s32 %v10310, 1
          %v10319 = vadd.s32 %v10311, 1
          %v10320 = vadd.s32 %v10312, 1
          %v10321 = vadd.s32 %v10313, 1
          %v10322 = vadd.s32 %v10314, 1
          %v10323 = vadd.s32 %v10315, 1
          %v10324 = vadd.s32 %v10316, 1
          %v10326 = vunpack.c.l.s4 269488144
          %v10327 = vunpack.c.0.s8 %v10326
          %v10328 = vlaneseq
          %v10329 = vshrl.u32 %v10328, 7
          %v10330 = vsub.s32 %v10327, %v10329
          %v10331 = vrot.slane %v10309, %v10330
          %v10333 = vunpack.c.l.s4 842150450
          %v10334 = vunpack.c.0.s8 %v10333
          %v10335 = vlaneseq
          %v10336 = vshrl.u32 %v10335, 7
          %v10337 = vsub.s32 %v10334, %v10336
          %v10338 = vrot.slane %v10309, %v10337
          %v10340 = vunpack.c.l.s4 1414812756
          %v10341 = vunpack.c.0.s8 %v10340
          %v10342 = vlaneseq
          %v10343 = vshrl.u32 %v10342, 7
          %v10344 = vsub.s32 %v10341, %v10343
          %v10345 = vrot.slane %v10309, %v10344
          %v10347 = vunpack.c.l.s4 1987475062
          %v10348 = vunpack.c.0.s8 %v10347
          %v10349 = vlaneseq
          %v10350 = vshrl.u32 %v10349, 7
          %v10351 = vsub.s32 %v10348, %v10350
          %v10352 = vrot.slane %v10309, %v10351
          %v10354 = vunpack.c.l.s4 269488144
          %v10355 = vunpack.c.0.s8 %v10354
          %v10356 = vlaneseq
          %v10357 = vshrl.u32 %v10356, 7
          %v10358 = vsub.s32 %v10355, %v10357
          %v10359 = vrot.slane %v10310, %v10358
          %v10361 = vunpack.c.l.s4 842150450
          %v10362 = vunpack.c.0.s8 %v10361
          %v10363 = vlaneseq
          %v10364 = vshrl.u32 %v10363, 7
          %v10365 = vsub.s32 %v10362, %v10364
          %v10366 = vrot.slane %v10310, %v10365
          %v10368 = vunpack.c.l.s4 1414812756
          %v10369 = vunpack.c.0.s8 %v10368
          %v10370 = vlaneseq
          %v10371 = vshrl.u32 %v10370, 7
          %v10372 = vsub.s32 %v10369, %v10371
          %v10373 = vrot.slane %v10310, %v10372
          %v10375 = vunpack.c.l.s4 1987475062
          %v10376 = vunpack.c.0.s8 %v10375
          %v10377 = vlaneseq
          %v10378 = vshrl.u32 %v10377, 7
          %v10379 = vsub.s32 %v10376, %v10378
          %v10380 = vrot.slane %v10310, %v10379
          %v10382 = vunpack.c.l.s4 269488144
          %v10383 = vunpack.c.0.s8 %v10382
          %v10384 = vlaneseq
          %v10385 = vshrl.u32 %v10384, 7
          %v10386 = vsub.s32 %v10383, %v10385
          %v10387 = vrot.slane %v10311, %v10386
          %v10389 = vunpack.c.l.s4 842150450
          %v10390 = vunpack.c.0.s8 %v10389
          %v10391 = vlaneseq
          %v10392 = vshrl.u32 %v10391, 7
          %v10393 = vsub.s32 %v10390, %v10392
          %v10394 = vrot.slane %v10311, %v10393
          %v10396 = vunpack.c.l.s4 1414812756
          %v10397 = vunpack.c.0.s8 %v10396
          %v10398 = vlaneseq
          %v10399 = vshrl.u32 %v10398, 7
          %v10400 = vsub.s32 %v10397, %v10399
          %v10401 = vrot.slane %v10311, %v10400
          %v10403 = vunpack.c.l.s4 1987475062
          %v10404 = vunpack.c.0.s8 %v10403
          %v10405 = vlaneseq
          %v10406 = vshrl.u32 %v10405, 7
          %v10407 = vsub.s32 %v10404, %v10406
          %v10408 = vrot.slane %v10311, %v10407
          %v10410 = vunpack.c.l.s4 269488144
          %v10411 = vunpack.c.0.s8 %v10410
          %v10412 = vlaneseq
          %v10413 = vshrl.u32 %v10412, 7
          %v10414 = vsub.s32 %v10411, %v10413
          %v10415 = vrot.slane %v10312, %v10414
          %v10417 = vunpack.c.l.s4 842150450
          %v10418 = vunpack.c.0.s8 %v10417
          %v10419 = vlaneseq
          %v10420 = vshrl.u32 %v10419, 7
          %v10421 = vsub.s32 %v10418, %v10420
          %v10422 = vrot.slane %v10312, %v10421
          %v10424 = vunpack.c.l.s4 1414812756
          %v10425 = vunpack.c.0.s8 %v10424
          %v10426 = vlaneseq
          %v10427 = vshrl.u32 %v10426, 7
          %v10428 = vsub.s32 %v10425, %v10427
          %v10429 = vrot.slane %v10312, %v10428
          %v10431 = vunpack.c.l.s4 1987475062
          %v10432 = vunpack.c.0.s8 %v10431
          %v10433 = vlaneseq
          %v10434 = vshrl.u32 %v10433, 7
          %v10435 = vsub.s32 %v10432, %v10434
          %v10436 = vrot.slane %v10312, %v10435
          %v10438 = vunpack.c.l.s4 269488144
          %v10439 = vunpack.c.0.s8 %v10438
          %v10440 = vlaneseq
          %v10441 = vshrl.u32 %v10440, 7
          %v10442 = vsub.s32 %v10439, %v10441
          %v10443 = vrot.slane %v10313, %v10442
          %v10445 = vunpack.c.l.s4 842150450
          %v10446 = vunpack.c.0.s8 %v10445
          %v10447 = vlaneseq
          %v10448 = vshrl.u32 %v10447, 7
          %v10449 = vsub.s32 %v10446, %v10448
          %v10450 = vrot.slane %v10313, %v10449
          %v10452 = vunpack.c.l.s4 1414812756
          %v10453 = vunpack.c.0.s8 %v10452
          %v10454 = vlaneseq
          %v10455 = vshrl.u32 %v10454, 7
          %v10456 = vsub.s32 %v10453, %v10455
          %v10457 = vrot.slane %v10313, %v10456
          %v10459 = vunpack.c.l.s4 1987475062
          %v10460 = vunpack.c.0.s8 %v10459
          %v10461 = vlaneseq
          %v10462 = vshrl.u32 %v10461, 7
          %v10463 = vsub.s32 %v10460, %v10462
          %v10464 = vrot.slane %v10313, %v10463
          %v10466 = vunpack.c.l.s4 269488144
          %v10467 = vunpack.c.0.s8 %v10466
          %v10468 = vlaneseq
          %v10469 = vshrl.u32 %v10468, 7
          %v10470 = vsub.s32 %v10467, %v10469
          %v10471 = vrot.slane %v10314, %v10470
          %v10473 = vunpack.c.l.s4 842150450
          %v10474 = vunpack.c.0.s8 %v10473
          %v10475 = vlaneseq
          %v10476 = vshrl.u32 %v10475, 7
          %v10477 = vsub.s32 %v10474, %v10476
          %v10478 = vrot.slane %v10314, %v10477
          %v10480 = vunpack.c.l.s4 1414812756
          %v10481 = vunpack.c.0.s8 %v10480
          %v10482 = vlaneseq
          %v10483 = vshrl.u32 %v10482, 7
          %v10484 = vsub.s32 %v10481, %v10483
          %v10485 = vrot.slane %v10314, %v10484
          %v10487 = vunpack.c.l.s4 1987475062
          %v10488 = vunpack.c.0.s8 %v10487
          %v10489 = vlaneseq
          %v10490 = vshrl.u32 %v10489, 7
          %v10491 = vsub.s32 %v10488, %v10490
          %v10492 = vrot.slane %v10314, %v10491
          %v10494 = vunpack.c.l.s4 269488144
          %v10495 = vunpack.c.0.s8 %v10494
          %v10496 = vlaneseq
          %v10497 = vshrl.u32 %v10496, 7
          %v10498 = vsub.s32 %v10495, %v10497
          %v10499 = vrot.slane %v10315, %v10498
          %v10501 = vunpack.c.l.s4 842150450
          %v10502 = vunpack.c.0.s8 %v10501
          %v10503 = vlaneseq
          %v10504 = vshrl.u32 %v10503, 7
          %v10505 = vsub.s32 %v10502, %v10504
          %v10506 = vrot.slane %v10315, %v10505
          %v10508 = vunpack.c.l.s4 1414812756
          %v10509 = vunpack.c.0.s8 %v10508
          %v10510 = vlaneseq
          %v10511 = vshrl.u32 %v10510, 7
          %v10512 = vsub.s32 %v10509, %v10511
          %v10513 = vrot.slane %v10315, %v10512
          %v10515 = vunpack.c.l.s4 1987475062
          %v10516 = vunpack.c.0.s8 %v10515
          %v10517 = vlaneseq
          %v10518 = vshrl.u32 %v10517, 7
          %v10519 = vsub.s32 %v10516, %v10518
          %v10520 = vrot.slane %v10315, %v10519
          %v10522 = vunpack.c.l.s4 269488144
          %v10523 = vunpack.c.0.s8 %v10522
          %v10524 = vlaneseq
          %v10525 = vshrl.u32 %v10524, 7
          %v10526 = vsub.s32 %v10523, %v10525
          %v10527 = vrot.slane %v10316, %v10526
          %v10529 = vunpack.c.l.s4 842150450
          %v10530 = vunpack.c.0.s8 %v10529
          %v10531 = vlaneseq
          %v10532 = vshrl.u32 %v10531, 7
          %v10533 = vsub.s32 %v10530, %v10532
          %v10534 = vrot.slane %v10316, %v10533
          %v10536 = vunpack.c.l.s4 1414812756
          %v10537 = vunpack.c.0.s8 %v10536
          %v10538 = vlaneseq
          %v10539 = vshrl.u32 %v10538, 7
          %v10540 = vsub.s32 %v10537, %v10539
          %v10541 = vrot.slane %v10316, %v10540
          %v10543 = vunpack.c.l.s4 1987475062
          %v10544 = vunpack.c.0.s8 %v10543
          %v10545 = vlaneseq
          %v10546 = vshrl.u32 %v10545, 7
          %v10547 = vsub.s32 %v10544, %v10546
          %v10548 = vrot.slane %v10316, %v10547
          %v10549 = vrot.slane %v10331, 1
          %v10550 = vrot.slane %v10338, 1
          %v10551 = vrot.slane %v10345, 1
          %v10552 = vrot.slane %v10352, 1
          %v10553 = vrot.slane %v10359, 1
          %v10554 = vrot.slane %v10366, 1
          %v10555 = vrot.slane %v10373, 1
          %v10556 = vrot.slane %v10380, 1
          %v10557 = vrot.slane %v10387, 1
          %v10558 = vrot.slane %v10394, 1
          %v10559 = vrot.slane %v10401, 1
          %v10560 = vrot.slane %v10408, 1
          %v10561 = vrot.slane %v10415, 1
          %v10562 = vrot.slane %v10422, 1
          %v10563 = vrot.slane %v10429, 1
          %v10564 = vrot.slane %v10436, 1
          %v10565 = vrot.slane %v10443, 1
          %v10566 = vrot.slane %v10450, 1
          %v10567 = vrot.slane %v10457, 1
          %v10568 = vrot.slane %v10464, 1
          %v10569 = vrot.slane %v10471, 1
          %v10570 = vrot.slane %v10478, 1
          %v10571 = vrot.slane %v10485, 1
          %v10572 = vrot.slane %v10492, 1
          %v10573 = vrot.slane %v10499, 1
          %v10574 = vrot.slane %v10506, 1
          %v10575 = vrot.slane %v10513, 1
          %v10576 = vrot.slane %v10520, 1
          %v10577 = vrot.slane %v10527, 1
          %v10578 = vrot.slane %v10534, 1
          %v10579 = vrot.slane %v10541, 1
          %v10580 = vrot.slane %v10548, 1
          %v10582 = vunpack.c.l.s4 269488144
          %v10583 = vunpack.c.0.s8 %v10582
          %v10584 = vlaneseq
          %v10585 = vshrl.u32 %v10584, 7
          %v10586 = vsub.s32 %v10583, %v10585
          %v10587 = vrot.slane %v10317, %v10586
          %v10589 = vunpack.c.l.s4 842150450
          %v10590 = vunpack.c.0.s8 %v10589
          %v10591 = vlaneseq
          %v10592 = vshrl.u32 %v10591, 7
          %v10593 = vsub.s32 %v10590, %v10592
          %v10594 = vrot.slane %v10317, %v10593
          %v10596 = vunpack.c.l.s4 1414812756
          %v10597 = vunpack.c.0.s8 %v10596
          %v10598 = vlaneseq
          %v10599 = vshrl.u32 %v10598, 7
          %v10600 = vsub.s32 %v10597, %v10599
          %v10601 = vrot.slane %v10317, %v10600
          %v10603 = vunpack.c.l.s4 1987475062
          %v10604 = vunpack.c.0.s8 %v10603
          %v10605 = vlaneseq
          %v10606 = vshrl.u32 %v10605, 7
          %v10607 = vsub.s32 %v10604, %v10606
          %v10608 = vrot.slane %v10317, %v10607
          %v10610 = vunpack.c.l.s4 269488144
          %v10611 = vunpack.c.0.s8 %v10610
          %v10612 = vlaneseq
          %v10613 = vshrl.u32 %v10612, 7
          %v10614 = vsub.s32 %v10611, %v10613
          %v10615 = vrot.slane %v10318, %v10614
          %v10617 = vunpack.c.l.s4 842150450
          %v10618 = vunpack.c.0.s8 %v10617
          %v10619 = vlaneseq
          %v10620 = vshrl.u32 %v10619, 7
          %v10621 = vsub.s32 %v10618, %v10620
          %v10622 = vrot.slane %v10318, %v10621
          %v10624 = vunpack.c.l.s4 1414812756
          %v10625 = vunpack.c.0.s8 %v10624
          %v10626 = vlaneseq
          %v10627 = vshrl.u32 %v10626, 7
          %v10628 = vsub.s32 %v10625, %v10627
          %v10629 = vrot.slane %v10318, %v10628
          %v10631 = vunpack.c.l.s4 1987475062
          %v10632 = vunpack.c.0.s8 %v10631
          %v10633 = vlaneseq
          %v10634 = vshrl.u32 %v10633, 7
          %v10635 = vsub.s32 %v10632, %v10634
          %v10636 = vrot.slane %v10318, %v10635
          %v10638 = vunpack.c.l.s4 269488144
          %v10639 = vunpack.c.0.s8 %v10638
          %v10640 = vlaneseq
          %v10641 = vshrl.u32 %v10640, 7
          %v10642 = vsub.s32 %v10639, %v10641
          %v10643 = vrot.slane %v10319, %v10642
          %v10645 = vunpack.c.l.s4 842150450
          %v10646 = vunpack.c.0.s8 %v10645
          %v10647 = vlaneseq
          %v10648 = vshrl.u32 %v10647, 7
          %v10649 = vsub.s32 %v10646, %v10648
          %v10650 = vrot.slane %v10319, %v10649
          %v10652 = vunpack.c.l.s4 1414812756
          %v10653 = vunpack.c.0.s8 %v10652
          %v10654 = vlaneseq
          %v10655 = vshrl.u32 %v10654, 7
          %v10656 = vsub.s32 %v10653, %v10655
          %v10657 = vrot.slane %v10319, %v10656
          %v10659 = vunpack.c.l.s4 1987475062
          %v10660 = vunpack.c.0.s8 %v10659
          %v10661 = vlaneseq
          %v10662 = vshrl.u32 %v10661, 7
          %v10663 = vsub.s32 %v10660, %v10662
          %v10664 = vrot.slane %v10319, %v10663
          %v10666 = vunpack.c.l.s4 269488144
          %v10667 = vunpack.c.0.s8 %v10666
          %v10668 = vlaneseq
          %v10669 = vshrl.u32 %v10668, 7
          %v10670 = vsub.s32 %v10667, %v10669
          %v10671 = vrot.slane %v10320, %v10670
          %v10673 = vunpack.c.l.s4 842150450
          %v10674 = vunpack.c.0.s8 %v10673
          %v10675 = vlaneseq
          %v10676 = vshrl.u32 %v10675, 7
          %v10677 = vsub.s32 %v10674, %v10676
          %v10678 = vrot.slane %v10320, %v10677
          %v10680 = vunpack.c.l.s4 1414812756
          %v10681 = vunpack.c.0.s8 %v10680
          %v10682 = vlaneseq
          %v10683 = vshrl.u32 %v10682, 7
          %v10684 = vsub.s32 %v10681, %v10683
          %v10685 = vrot.slane %v10320, %v10684
          %v10687 = vunpack.c.l.s4 1987475062
          %v10688 = vunpack.c.0.s8 %v10687
          %v10689 = vlaneseq
          %v10690 = vshrl.u32 %v10689, 7
          %v10691 = vsub.s32 %v10688, %v10690
          %v10692 = vrot.slane %v10320, %v10691
          %v10694 = vunpack.c.l.s4 269488144
          %v10695 = vunpack.c.0.s8 %v10694
          %v10696 = vlaneseq
          %v10697 = vshrl.u32 %v10696, 7
          %v10698 = vsub.s32 %v10695, %v10697
          %v10699 = vrot.slane %v10321, %v10698
          %v10701 = vunpack.c.l.s4 842150450
          %v10702 = vunpack.c.0.s8 %v10701
          %v10703 = vlaneseq
          %v10704 = vshrl.u32 %v10703, 7
          %v10705 = vsub.s32 %v10702, %v10704
          %v10706 = vrot.slane %v10321, %v10705
          %v10708 = vunpack.c.l.s4 1414812756
          %v10709 = vunpack.c.0.s8 %v10708
          %v10710 = vlaneseq
          %v10711 = vshrl.u32 %v10710, 7
          %v10712 = vsub.s32 %v10709, %v10711
          %v10713 = vrot.slane %v10321, %v10712
          %v10715 = vunpack.c.l.s4 1987475062
          %v10716 = vunpack.c.0.s8 %v10715
          %v10717 = vlaneseq
          %v10718 = vshrl.u32 %v10717, 7
          %v10719 = vsub.s32 %v10716, %v10718
          %v10720 = vrot.slane %v10321, %v10719
          %v10722 = vunpack.c.l.s4 269488144
          %v10723 = vunpack.c.0.s8 %v10722
          %v10724 = vlaneseq
          %v10725 = vshrl.u32 %v10724, 7
          %v10726 = vsub.s32 %v10723, %v10725
          %v10727 = vrot.slane %v10322, %v10726
          %v10729 = vunpack.c.l.s4 842150450
          %v10730 = vunpack.c.0.s8 %v10729
          %v10731 = vlaneseq
          %v10732 = vshrl.u32 %v10731, 7
          %v10733 = vsub.s32 %v10730, %v10732
          %v10734 = vrot.slane %v10322, %v10733
          %v10736 = vunpack.c.l.s4 1414812756
          %v10737 = vunpack.c.0.s8 %v10736
          %v10738 = vlaneseq
          %v10739 = vshrl.u32 %v10738, 7
          %v10740 = vsub.s32 %v10737, %v10739
          %v10741 = vrot.slane %v10322, %v10740
          %v10743 = vunpack.c.l.s4 1987475062
          %v10744 = vunpack.c.0.s8 %v10743
          %v10745 = vlaneseq
          %v10746 = vshrl.u32 %v10745, 7
          %v10747 = vsub.s32 %v10744, %v10746
          %v10748 = vrot.slane %v10322, %v10747
          %v10750 = vunpack.c.l.s4 269488144
          %v10751 = vunpack.c.0.s8 %v10750
          %v10752 = vlaneseq
          %v10753 = vshrl.u32 %v10752, 7
          %v10754 = vsub.s32 %v10751, %v10753
          %v10755 = vrot.slane %v10323, %v10754
          %v10757 = vunpack.c.l.s4 842150450
          %v10758 = vunpack.c.0.s8 %v10757
          %v10759 = vlaneseq
          %v10760 = vshrl.u32 %v10759, 7
          %v10761 = vsub.s32 %v10758, %v10760
          %v10762 = vrot.slane %v10323, %v10761
          %v10764 = vunpack.c.l.s4 1414812756
          %v10765 = vunpack.c.0.s8 %v10764
          %v10766 = vlaneseq
          %v10767 = vshrl.u32 %v10766, 7
          %v10768 = vsub.s32 %v10765, %v10767
          %v10769 = vrot.slane %v10323, %v10768
          %v10771 = vunpack.c.l.s4 1987475062
          %v10772 = vunpack.c.0.s8 %v10771
          %v10773 = vlaneseq
          %v10774 = vshrl.u32 %v10773, 7
          %v10775 = vsub.s32 %v10772, %v10774
          %v10776 = vrot.slane %v10323, %v10775
          %v10778 = vunpack.c.l.s4 269488144
          %v10779 = vunpack.c.0.s8 %v10778
          %v10780 = vlaneseq
          %v10781 = vshrl.u32 %v10780, 7
          %v10782 = vsub.s32 %v10779, %v10781
          %v10783 = vrot.slane %v10324, %v10782
          %v10785 = vunpack.c.l.s4 842150450
          %v10786 = vunpack.c.0.s8 %v10785
          %v10787 = vlaneseq
          %v10788 = vshrl.u32 %v10787, 7
          %v10789 = vsub.s32 %v10786, %v10788
          %v10790 = vrot.slane %v10324, %v10789
          %v10792 = vunpack.c.l.s4 1414812756
          %v10793 = vunpack.c.0.s8 %v10792
          %v10794 = vlaneseq
          %v10795 = vshrl.u32 %v10794, 7
          %v10796 = vsub.s32 %v10793, %v10795
          %v10797 = vrot.slane %v10324, %v10796
          %v10799 = vunpack.c.l.s4 1987475062
          %v10800 = vunpack.c.0.s8 %v10799
          %v10801 = vlaneseq
          %v10802 = vshrl.u32 %v10801, 7
          %v10803 = vsub.s32 %v10800, %v10802
          %v10804 = vrot.slane %v10324, %v10803
          %v10805 = vrot.slane %v10587, 1
          %v10806 = vrot.slane %v10594, 1
          %v10807 = vrot.slane %v10601, 1
          %v10808 = vrot.slane %v10608, 1
          %v10809 = vrot.slane %v10615, 1
          %v10810 = vrot.slane %v10622, 1
          %v10811 = vrot.slane %v10629, 1
          %v10812 = vrot.slane %v10636, 1
          %v10813 = vrot.slane %v10643, 1
          %v10814 = vrot.slane %v10650, 1
          %v10815 = vrot.slane %v10657, 1
          %v10816 = vrot.slane %v10664, 1
          %v10817 = vrot.slane %v10671, 1
          %v10818 = vrot.slane %v10678, 1
          %v10819 = vrot.slane %v10685, 1
          %v10820 = vrot.slane %v10692, 1
          %v10821 = vrot.slane %v10699, 1
          %v10822 = vrot.slane %v10706, 1
          %v10823 = vrot.slane %v10713, 1
          %v10824 = vrot.slane %v10720, 1
          %v10825 = vrot.slane %v10727, 1
          %v10826 = vrot.slane %v10734, 1
          %v10827 = vrot.slane %v10741, 1
          %v10828 = vrot.slane %v10748, 1
          %v10829 = vrot.slane %v10755, 1
          %v10830 = vrot.slane %v10762, 1
          %v10831 = vrot.slane %v10769, 1
          %v10832 = vrot.slane %v10776, 1
          %v10833 = vrot.slane %v10783, 1
          %v10834 = vrot.slane %v10790, 1
          %v10835 = vrot.slane %v10797, 1
          %v10836 = vrot.slane %v10804, 1
          %v10837 = vsel %vm10245, %v10331, %v10587
          %v10838 = vsel %vm10246, %v10549, %v10805
          %v10839 = vsel %vm10247, %v10338, %v10594
          %v10840 = vsel %vm10248, %v10550, %v10806
          %v10841 = vsel %vm10249, %v10345, %v10601
          %v10842 = vsel %vm10250, %v10551, %v10807
          %v10843 = vsel %vm10251, %v10352, %v10608
          %v10844 = vsel %vm10252, %v10552, %v10808
          %v10845 = vsel %vm10253, %v10359, %v10615
          %v10846 = vsel %vm10254, %v10553, %v10809
          %v10847 = vsel %vm10255, %v10366, %v10622
          %v10848 = vsel %vm10256, %v10554, %v10810
          %v10849 = vsel %vm10257, %v10373, %v10629
          %v10850 = vsel %vm10258, %v10555, %v10811
          %v10851 = vsel %vm10259, %v10380, %v10636
          %v10852 = vsel %vm10260, %v10556, %v10812
          %v10853 = vsel %vm10261, %v10387, %v10643
          %v10854 = vsel %vm10262, %v10557, %v10813
          %v10855 = vsel %vm10263, %v10394, %v10650
          %v10856 = vsel %vm10264, %v10558, %v10814
          %v10857 = vsel %vm10265, %v10401, %v10657
          %v10858 = vsel %vm10266, %v10559, %v10815
          %v10859 = vsel %vm10267, %v10408, %v10664
          %v10860 = vsel %vm10268, %v10560, %v10816
          %v10861 = vsel %vm10269, %v10415, %v10671
          %v10862 = vsel %vm10270, %v10561, %v10817
          %v10863 = vsel %vm10271, %v10422, %v10678
          %v10864 = vsel %vm10272, %v10562, %v10818
          %v10865 = vsel %vm10273, %v10429, %v10685
          %v10866 = vsel %vm10274, %v10563, %v10819
          %v10867 = vsel %vm10275, %v10436, %v10692
          %v10868 = vsel %vm10276, %v10564, %v10820
          %v10869 = vsel %vm10277, %v10443, %v10699
          %v10870 = vsel %vm10278, %v10565, %v10821
          %v10871 = vsel %vm10279, %v10450, %v10706
          %v10872 = vsel %vm10280, %v10566, %v10822
          %v10873 = vsel %vm10281, %v10457, %v10713
          %v10874 = vsel %vm10282, %v10567, %v10823
          %v10875 = vsel %vm10283, %v10464, %v10720
          %v10876 = vsel %vm10284, %v10568, %v10824
          %v10877 = vsel %vm10285, %v10471, %v10727
          %v10878 = vsel %vm10286, %v10569, %v10825
          %v10879 = vsel %vm10287, %v10478, %v10734
          %v10880 = vsel %vm10288, %v10570, %v10826
          %v10881 = vsel %vm10289, %v10485, %v10741
          %v10882 = vsel %vm10290, %v10571, %v10827
          %v10883 = vsel %vm10291, %v10492, %v10748
          %v10884 = vsel %vm10292, %v10572, %v10828
          %v10885 = vsel %vm10293, %v10499, %v10755
          %v10886 = vsel %vm10294, %v10573, %v10829
          %v10887 = vsel %vm10295, %v10506, %v10762
          %v10888 = vsel %vm10296, %v10574, %v10830
          %v10889 = vsel %vm10297, %v10513, %v10769
          %v10890 = vsel %vm10298, %v10575, %v10831
          %v10891 = vsel %vm10299, %v10520, %v10776
          %v10892 = vsel %vm10300, %v10576, %v10832
          %v10893 = vsel %vm10301, %v10527, %v10783
          %v10894 = vsel %vm10302, %v10577, %v10833
          %v10895 = vsel %vm10303, %v10534, %v10790
          %v10896 = vsel %vm10304, %v10578, %v10834
          %v10897 = vsel %vm10305, %v10541, %v10797
          %v10898 = vsel %vm10306, %v10579, %v10835
          %v10899 = vsel %vm10307, %v10548, %v10804
          %v10900 = vsel %vm10308, %v10580, %v10836
          %v10901 = vmax.f32 %v9277, %v10181
          %v10902 = vmax.f32 %v9278, %v10182
          %v10903 = vmax.f32 %v9279, %v10183
          %v10904 = vmax.f32 %v9280, %v10184
          %v10905 = vmax.f32 %v9281, %v10185
          %v10906 = vmax.f32 %v9282, %v10186
          %v10907 = vmax.f32 %v9283, %v10187
          %v10908 = vmax.f32 %v9284, %v10188
          %v10909 = vmax.f32 %v9285, %v10189
          %v10910 = vmax.f32 %v9286, %v10190
          %v10911 = vmax.f32 %v9287, %v10191
          %v10912 = vmax.f32 %v9288, %v10192
          %v10913 = vmax.f32 %v9289, %v10193
          %v10914 = vmax.f32 %v9290, %v10194
          %v10915 = vmax.f32 %v9291, %v10195
          %v10916 = vmax.f32 %v9292, %v10196
          %v10917 = vmax.f32 %v9293, %v10197
          %v10918 = vmax.f32 %v9294, %v10198
          %v10919 = vmax.f32 %v9295, %v10199
          %v10920 = vmax.f32 %v9296, %v10200
          %v10921 = vmax.f32 %v9297, %v10201
          %v10922 = vmax.f32 %v9298, %v10202
          %v10923 = vmax.f32 %v9299, %v10203
          %v10924 = vmax.f32 %v9300, %v10204
          %v10925 = vmax.f32 %v9301, %v10205
          %v10926 = vmax.f32 %v9302, %v10206
          %v10927 = vmax.f32 %v9303, %v10207
          %v10928 = vmax.f32 %v9304, %v10208
          %v10929 = vmax.f32 %v9305, %v10209
          %v10930 = vmax.f32 %v9306, %v10210
          %v10931 = vmax.f32 %v9307, %v10211
          %v10932 = vmax.f32 %v9308, %v10212
          %v10933 = vmax.f32 %v9309, %v10213
          %v10934 = vmax.f32 %v9310, %v10214
          %v10935 = vmax.f32 %v9311, %v10215
          %v10936 = vmax.f32 %v9312, %v10216
          %v10937 = vmax.f32 %v9313, %v10217
          %v10938 = vmax.f32 %v9314, %v10218
          %v10939 = vmax.f32 %v9315, %v10219
          %v10940 = vmax.f32 %v9316, %v10220
          %v10941 = vmax.f32 %v9317, %v10221
          %v10942 = vmax.f32 %v9318, %v10222
          %v10943 = vmax.f32 %v9319, %v10223
          %v10944 = vmax.f32 %v9320, %v10224
          %v10945 = vmax.f32 %v9321, %v10225
          %v10946 = vmax.f32 %v9322, %v10226
          %v10947 = vmax.f32 %v9323, %v10227
          %v10948 = vmax.f32 %v9324, %v10228
          %v10949 = vmax.f32 %v9325, %v10229
          %v10950 = vmax.f32 %v9326, %v10230
          %v10951 = vmax.f32 %v9327, %v10231
          %v10952 = vmax.f32 %v9328, %v10232
          %v10953 = vmax.f32 %v9329, %v10233
          %v10954 = vmax.f32 %v9330, %v10234
          %v10955 = vmax.f32 %v9331, %v10235
          %v10956 = vmax.f32 %v9332, %v10236
          %v10957 = vmax.f32 %v9333, %v10237
          %v10958 = vmax.f32 %v9334, %v10238
          %v10959 = vmax.f32 %v9335, %v10239
          %v10960 = vmax.f32 %v9336, %v10240
          %v10961 = vmax.f32 %v9337, %v10241
          %v10962 = vmax.f32 %v9338, %v10242
          %v10963 = vmax.f32 %v9339, %v10243
          %v10964 = vmax.f32 %v9340, %v10244
          %v11029 = vlaneseq
          %v11030 = vshrl.u32 %v11029, 7
          %v11031 = vsub.s32 0, %v11030
          %v11032 = vrot.slane %v10901, %v11031
          %v11033 = vlaneseq
          %v11034 = vshrl.u32 %v11033, 7
          %v11035 = vsub.s32 0, %v11034
          %v11036 = vrot.slane %v10902, %v11035
          %v11037 = vlaneseq
          %v11038 = vshrl.u32 %v11037, 7
          %v11039 = vsub.s32 0, %v11038
          %v11040 = vrot.slane %v10903, %v11039
          %v11041 = vlaneseq
          %v11042 = vshrl.u32 %v11041, 7
          %v11043 = vsub.s32 0, %v11042
          %v11044 = vrot.slane %v10904, %v11043
          %v11045 = vlaneseq
          %v11046 = vshrl.u32 %v11045, 7
          %v11047 = vsub.s32 0, %v11046
          %v11048 = vrot.slane %v10905, %v11047
          %v11049 = vlaneseq
          %v11050 = vshrl.u32 %v11049, 7
          %v11051 = vsub.s32 0, %v11050
          %v11052 = vrot.slane %v10906, %v11051
          %v11053 = vlaneseq
          %v11054 = vshrl.u32 %v11053, 7
          %v11055 = vsub.s32 0, %v11054
          %v11056 = vrot.slane %v10907, %v11055
          %v11057 = vlaneseq
          %v11058 = vshrl.u32 %v11057, 7
          %v11059 = vsub.s32 0, %v11058
          %v11060 = vrot.slane %v10908, %v11059
          %v11061 = vlaneseq
          %v11062 = vshrl.u32 %v11061, 7
          %v11063 = vsub.s32 0, %v11062
          %v11064 = vrot.slane %v10909, %v11063
          %v11065 = vlaneseq
          %v11066 = vshrl.u32 %v11065, 7
          %v11067 = vsub.s32 0, %v11066
          %v11068 = vrot.slane %v10910, %v11067
          %v11069 = vlaneseq
          %v11070 = vshrl.u32 %v11069, 7
          %v11071 = vsub.s32 0, %v11070
          %v11072 = vrot.slane %v10911, %v11071
          %v11073 = vlaneseq
          %v11074 = vshrl.u32 %v11073, 7
          %v11075 = vsub.s32 0, %v11074
          %v11076 = vrot.slane %v10912, %v11075
          %v11077 = vlaneseq
          %v11078 = vshrl.u32 %v11077, 7
          %v11079 = vsub.s32 0, %v11078
          %v11080 = vrot.slane %v10913, %v11079
          %v11081 = vlaneseq
          %v11082 = vshrl.u32 %v11081, 7
          %v11083 = vsub.s32 0, %v11082
          %v11084 = vrot.slane %v10914, %v11083
          %v11085 = vlaneseq
          %v11086 = vshrl.u32 %v11085, 7
          %v11087 = vsub.s32 0, %v11086
          %v11088 = vrot.slane %v10915, %v11087
          %v11089 = vlaneseq
          %v11090 = vshrl.u32 %v11089, 7
          %v11091 = vsub.s32 0, %v11090
          %v11092 = vrot.slane %v10916, %v11091
          %v11093 = vlaneseq
          %v11094 = vshrl.u32 %v11093, 7
          %v11095 = vsub.s32 0, %v11094
          %v11096 = vrot.slane %v10917, %v11095
          %v11097 = vlaneseq
          %v11098 = vshrl.u32 %v11097, 7
          %v11099 = vsub.s32 0, %v11098
          %v11100 = vrot.slane %v10918, %v11099
          %v11101 = vlaneseq
          %v11102 = vshrl.u32 %v11101, 7
          %v11103 = vsub.s32 0, %v11102
          %v11104 = vrot.slane %v10919, %v11103
          %v11105 = vlaneseq
          %v11106 = vshrl.u32 %v11105, 7
          %v11107 = vsub.s32 0, %v11106
          %v11108 = vrot.slane %v10920, %v11107
          %v11109 = vlaneseq
          %v11110 = vshrl.u32 %v11109, 7
          %v11111 = vsub.s32 0, %v11110
          %v11112 = vrot.slane %v10921, %v11111
          %v11113 = vlaneseq
          %v11114 = vshrl.u32 %v11113, 7
          %v11115 = vsub.s32 0, %v11114
          %v11116 = vrot.slane %v10922, %v11115
          %v11117 = vlaneseq
          %v11118 = vshrl.u32 %v11117, 7
          %v11119 = vsub.s32 0, %v11118
          %v11120 = vrot.slane %v10923, %v11119
          %v11121 = vlaneseq
          %v11122 = vshrl.u32 %v11121, 7
          %v11123 = vsub.s32 0, %v11122
          %v11124 = vrot.slane %v10924, %v11123
          %v11125 = vlaneseq
          %v11126 = vshrl.u32 %v11125, 7
          %v11127 = vsub.s32 0, %v11126
          %v11128 = vrot.slane %v10925, %v11127
          %v11129 = vlaneseq
          %v11130 = vshrl.u32 %v11129, 7
          %v11131 = vsub.s32 0, %v11130
          %v11132 = vrot.slane %v10926, %v11131
          %v11133 = vlaneseq
          %v11134 = vshrl.u32 %v11133, 7
          %v11135 = vsub.s32 0, %v11134
          %v11136 = vrot.slane %v10927, %v11135
          %v11137 = vlaneseq
          %v11138 = vshrl.u32 %v11137, 7
          %v11139 = vsub.s32 0, %v11138
          %v11140 = vrot.slane %v10928, %v11139
          %v11141 = vlaneseq
          %v11142 = vshrl.u32 %v11141, 7
          %v11143 = vsub.s32 0, %v11142
          %v11144 = vrot.slane %v10929, %v11143
          %v11145 = vlaneseq
          %v11146 = vshrl.u32 %v11145, 7
          %v11147 = vsub.s32 0, %v11146
          %v11148 = vrot.slane %v10930, %v11147
          %v11149 = vlaneseq
          %v11150 = vshrl.u32 %v11149, 7
          %v11151 = vsub.s32 0, %v11150
          %v11152 = vrot.slane %v10931, %v11151
          %v11153 = vlaneseq
          %v11154 = vshrl.u32 %v11153, 7
          %v11155 = vsub.s32 0, %v11154
          %v11156 = vrot.slane %v10932, %v11155
          %v11157 = vlaneseq
          %v11158 = vshrl.u32 %v11157, 7
          %v11159 = vsub.s32 0, %v11158
          %v11160 = vrot.slane %v10933, %v11159
          %v11161 = vlaneseq
          %v11162 = vshrl.u32 %v11161, 7
          %v11163 = vsub.s32 0, %v11162
          %v11164 = vrot.slane %v10934, %v11163
          %v11165 = vlaneseq
          %v11166 = vshrl.u32 %v11165, 7
          %v11167 = vsub.s32 0, %v11166
          %v11168 = vrot.slane %v10935, %v11167
          %v11169 = vlaneseq
          %v11170 = vshrl.u32 %v11169, 7
          %v11171 = vsub.s32 0, %v11170
          %v11172 = vrot.slane %v10936, %v11171
          %v11173 = vlaneseq
          %v11174 = vshrl.u32 %v11173, 7
          %v11175 = vsub.s32 0, %v11174
          %v11176 = vrot.slane %v10937, %v11175
          %v11177 = vlaneseq
          %v11178 = vshrl.u32 %v11177, 7
          %v11179 = vsub.s32 0, %v11178
          %v11180 = vrot.slane %v10938, %v11179
          %v11181 = vlaneseq
          %v11182 = vshrl.u32 %v11181, 7
          %v11183 = vsub.s32 0, %v11182
          %v11184 = vrot.slane %v10939, %v11183
          %v11185 = vlaneseq
          %v11186 = vshrl.u32 %v11185, 7
          %v11187 = vsub.s32 0, %v11186
          %v11188 = vrot.slane %v10940, %v11187
          %v11189 = vlaneseq
          %v11190 = vshrl.u32 %v11189, 7
          %v11191 = vsub.s32 0, %v11190
          %v11192 = vrot.slane %v10941, %v11191
          %v11193 = vlaneseq
          %v11194 = vshrl.u32 %v11193, 7
          %v11195 = vsub.s32 0, %v11194
          %v11196 = vrot.slane %v10942, %v11195
          %v11197 = vlaneseq
          %v11198 = vshrl.u32 %v11197, 7
          %v11199 = vsub.s32 0, %v11198
          %v11200 = vrot.slane %v10943, %v11199
          %v11201 = vlaneseq
          %v11202 = vshrl.u32 %v11201, 7
          %v11203 = vsub.s32 0, %v11202
          %v11204 = vrot.slane %v10944, %v11203
          %v11205 = vlaneseq
          %v11206 = vshrl.u32 %v11205, 7
          %v11207 = vsub.s32 0, %v11206
          %v11208 = vrot.slane %v10945, %v11207
          %v11209 = vlaneseq
          %v11210 = vshrl.u32 %v11209, 7
          %v11211 = vsub.s32 0, %v11210
          %v11212 = vrot.slane %v10946, %v11211
          %v11213 = vlaneseq
          %v11214 = vshrl.u32 %v11213, 7
          %v11215 = vsub.s32 0, %v11214
          %v11216 = vrot.slane %v10947, %v11215
          %v11217 = vlaneseq
          %v11218 = vshrl.u32 %v11217, 7
          %v11219 = vsub.s32 0, %v11218
          %v11220 = vrot.slane %v10948, %v11219
          %v11221 = vlaneseq
          %v11222 = vshrl.u32 %v11221, 7
          %v11223 = vsub.s32 0, %v11222
          %v11224 = vrot.slane %v10949, %v11223
          %v11225 = vlaneseq
          %v11226 = vshrl.u32 %v11225, 7
          %v11227 = vsub.s32 0, %v11226
          %v11228 = vrot.slane %v10950, %v11227
          %v11229 = vlaneseq
          %v11230 = vshrl.u32 %v11229, 7
          %v11231 = vsub.s32 0, %v11230
          %v11232 = vrot.slane %v10951, %v11231
          %v11233 = vlaneseq
          %v11234 = vshrl.u32 %v11233, 7
          %v11235 = vsub.s32 0, %v11234
          %v11236 = vrot.slane %v10952, %v11235
          %v11237 = vlaneseq
          %v11238 = vshrl.u32 %v11237, 7
          %v11239 = vsub.s32 0, %v11238
          %v11240 = vrot.slane %v10953, %v11239
          %v11241 = vlaneseq
          %v11242 = vshrl.u32 %v11241, 7
          %v11243 = vsub.s32 0, %v11242
          %v11244 = vrot.slane %v10954, %v11243
          %v11245 = vlaneseq
          %v11246 = vshrl.u32 %v11245, 7
          %v11247 = vsub.s32 0, %v11246
          %v11248 = vrot.slane %v10955, %v11247
          %v11249 = vlaneseq
          %v11250 = vshrl.u32 %v11249, 7
          %v11251 = vsub.s32 0, %v11250
          %v11252 = vrot.slane %v10956, %v11251
          %v11253 = vlaneseq
          %v11254 = vshrl.u32 %v11253, 7
          %v11255 = vsub.s32 0, %v11254
          %v11256 = vrot.slane %v10957, %v11255
          %v11257 = vlaneseq
          %v11258 = vshrl.u32 %v11257, 7
          %v11259 = vsub.s32 0, %v11258
          %v11260 = vrot.slane %v10958, %v11259
          %v11261 = vlaneseq
          %v11262 = vshrl.u32 %v11261, 7
          %v11263 = vsub.s32 0, %v11262
          %v11264 = vrot.slane %v10959, %v11263
          %v11265 = vlaneseq
          %v11266 = vshrl.u32 %v11265, 7
          %v11267 = vsub.s32 0, %v11266
          %v11268 = vrot.slane %v10960, %v11267
          %v11269 = vlaneseq
          %v11270 = vshrl.u32 %v11269, 7
          %v11271 = vsub.s32 0, %v11270
          %v11272 = vrot.slane %v10961, %v11271
          %v11273 = vlaneseq
          %v11274 = vshrl.u32 %v11273, 7
          %v11275 = vsub.s32 0, %v11274
          %v11276 = vrot.slane %v10962, %v11275
          %v11277 = vlaneseq
          %v11278 = vshrl.u32 %v11277, 7
          %v11279 = vsub.s32 0, %v11278
          %v11280 = vrot.slane %v10963, %v11279
          %v11281 = vlaneseq
          %v11282 = vshrl.u32 %v11281, 7
          %v11283 = vsub.s32 0, %v11282
          %v11284 = vrot.slane %v10964, %v11283
          %vm11285 = vcmask 1041409
          %v11286 = vsel %vm11285, %v11036, %v11032
          %vm11287 = vcmask 1042434
          %v11288 = vsel %vm11287, %v11040, %v11286
          %vm11289 = vcmask 1043459
          %v11290 = vsel %vm11289, %v11044, %v11288
          %vm11291 = vcmask 1044484
          %v11292 = vsel %vm11291, %v11048, %v11290
          %vm11293 = vcmask 1045509
          %v11294 = vsel %vm11293, %v11052, %v11292
          %vm11295 = vcmask 1046534
          %v11296 = vsel %vm11295, %v11056, %v11294
          %vm11297 = vcmask 1047559
          %v11298 = vsel %vm11297, %v11060, %v11296
          %v11299 = vsel %vm11285, %v11068, %v11064
          %v11300 = vsel %vm11287, %v11072, %v11299
          %v11301 = vsel %vm11289, %v11076, %v11300
          %v11302 = vsel %vm11291, %v11080, %v11301
          %v11303 = vsel %vm11293, %v11084, %v11302
          %v11304 = vsel %vm11295, %v11088, %v11303
          %v11305 = vsel %vm11297, %v11092, %v11304
          %v11306 = vsel %vm11285, %v11100, %v11096
          %v11307 = vsel %vm11287, %v11104, %v11306
          %v11308 = vsel %vm11289, %v11108, %v11307
          %v11309 = vsel %vm11291, %v11112, %v11308
          %v11310 = vsel %vm11293, %v11116, %v11309
          %v11311 = vsel %vm11295, %v11120, %v11310
          %v11312 = vsel %vm11297, %v11124, %v11311
          %v11313 = vsel %vm11285, %v11132, %v11128
          %v11314 = vsel %vm11287, %v11136, %v11313
          %v11315 = vsel %vm11289, %v11140, %v11314
          %v11316 = vsel %vm11291, %v11144, %v11315
          %v11317 = vsel %vm11293, %v11148, %v11316
          %v11318 = vsel %vm11295, %v11152, %v11317
          %v11319 = vsel %vm11297, %v11156, %v11318
          %v11320 = vsel %vm11285, %v11164, %v11160
          %v11321 = vsel %vm11287, %v11168, %v11320
          %v11322 = vsel %vm11289, %v11172, %v11321
          %v11323 = vsel %vm11291, %v11176, %v11322
          %v11324 = vsel %vm11293, %v11180, %v11323
          %v11325 = vsel %vm11295, %v11184, %v11324
          %v11326 = vsel %vm11297, %v11188, %v11325
          %v11327 = vsel %vm11285, %v11196, %v11192
          %v11328 = vsel %vm11287, %v11200, %v11327
          %v11329 = vsel %vm11289, %v11204, %v11328
          %v11330 = vsel %vm11291, %v11208, %v11329
          %v11331 = vsel %vm11293, %v11212, %v11330
          %v11332 = vsel %vm11295, %v11216, %v11331
          %v11333 = vsel %vm11297, %v11220, %v11332
          %v11334 = vsel %vm11285, %v11228, %v11224
          %v11335 = vsel %vm11287, %v11232, %v11334
          %v11336 = vsel %vm11289, %v11236, %v11335
          %v11337 = vsel %vm11291, %v11240, %v11336
          %v11338 = vsel %vm11293, %v11244, %v11337
          %v11339 = vsel %vm11295, %v11248, %v11338
          %v11340 = vsel %vm11297, %v11252, %v11339
          %v11341 = vsel %vm11285, %v11260, %v11256
          %v11342 = vsel %vm11287, %v11264, %v11341
          %v11343 = vsel %vm11289, %v11268, %v11342
          %v11344 = vsel %vm11291, %v11272, %v11343
          %v11345 = vsel %vm11293, %v11276, %v11344
          %v11346 = vsel %vm11295, %v11280, %v11345
          %v11347 = vsel %vm11297, %v11284, %v11346
          %vm11356 = vcmask 523264
          %11357 = vst.msk [vmem:[%s258] sm:$0xff] %vm11356, %v11298
          %11358 = vst.msk [vmem:[%s258 + $0x8] sm:$0xff] %vm11356, %v11305
          %11359 = vst.msk [vmem:[%s258 + $0x10] sm:$0xff] %vm11356, %v11312
          %11360 = vst.msk [vmem:[%s258 + $0x18] sm:$0xff] %vm11356, %v11319
          %11361 = vst.msk [vmem:[%s258 + $0x20] sm:$0xff] %vm11356, %v11326
          %11362 = vst.msk [vmem:[%s258 + $0x28] sm:$0xff] %vm11356, %v11333
          %11363 = vst.msk [vmem:[%s258 + $0x30] sm:$0xff] %vm11356, %v11340
          %11364 = vst.msk [vmem:[%s258 + $0x38] sm:$0xff] %vm11356, %v11347
          %vm11365 = vcmp.ge.f32.partialorder %v9277, %v10181
          %vm11366 = vcmp.ge.f32.partialorder %v9278, %v10182
          %vm11367 = vcmp.ge.f32.partialorder %v9279, %v10183
          %vm11368 = vcmp.ge.f32.partialorder %v9280, %v10184
          %vm11369 = vcmp.ge.f32.partialorder %v9281, %v10185
          %vm11370 = vcmp.ge.f32.partialorder %v9282, %v10186
          %vm11371 = vcmp.ge.f32.partialorder %v9283, %v10187
          %vm11372 = vcmp.ge.f32.partialorder %v9284, %v10188
          %vm11373 = vcmp.ge.f32.partialorder %v9285, %v10189
          %vm11374 = vcmp.ge.f32.partialorder %v9286, %v10190
          %vm11375 = vcmp.ge.f32.partialorder %v9287, %v10191
          %vm11376 = vcmp.ge.f32.partialorder %v9288, %v10192
          %vm11377 = vcmp.ge.f32.partialorder %v9289, %v10193
          %vm11378 = vcmp.ge.f32.partialorder %v9290, %v10194
          %vm11379 = vcmp.ge.f32.partialorder %v9291, %v10195
          %vm11380 = vcmp.ge.f32.partialorder %v9292, %v10196
          %vm11381 = vcmp.ge.f32.partialorder %v9293, %v10197
          %vm11382 = vcmp.ge.f32.partialorder %v9294, %v10198
          %vm11383 = vcmp.ge.f32.partialorder %v9295, %v10199
          %vm11384 = vcmp.ge.f32.partialorder %v9296, %v10200
          %vm11385 = vcmp.ge.f32.partialorder %v9297, %v10201
          %vm11386 = vcmp.ge.f32.partialorder %v9298, %v10202
          %vm11387 = vcmp.ge.f32.partialorder %v9299, %v10203
          %vm11388 = vcmp.ge.f32.partialorder %v9300, %v10204
          %vm11389 = vcmp.ge.f32.partialorder %v9301, %v10205
          %vm11390 = vcmp.ge.f32.partialorder %v9302, %v10206
          %vm11391 = vcmp.ge.f32.partialorder %v9303, %v10207
          %vm11392 = vcmp.ge.f32.partialorder %v9304, %v10208
          %vm11393 = vcmp.ge.f32.partialorder %v9305, %v10209
          %vm11394 = vcmp.ge.f32.partialorder %v9306, %v10210
          %vm11395 = vcmp.ge.f32.partialorder %v9307, %v10211
          %vm11396 = vcmp.ge.f32.partialorder %v9308, %v10212
          %vm11397 = vcmp.ge.f32.partialorder %v9309, %v10213
          %vm11398 = vcmp.ge.f32.partialorder %v9310, %v10214
          %vm11399 = vcmp.ge.f32.partialorder %v9311, %v10215
          %vm11400 = vcmp.ge.f32.partialorder %v9312, %v10216
          %vm11401 = vcmp.ge.f32.partialorder %v9313, %v10217
          %vm11402 = vcmp.ge.f32.partialorder %v9314, %v10218
          %vm11403 = vcmp.ge.f32.partialorder %v9315, %v10219
          %vm11404 = vcmp.ge.f32.partialorder %v9316, %v10220
          %vm11405 = vcmp.ge.f32.partialorder %v9317, %v10221
          %vm11406 = vcmp.ge.f32.partialorder %v9318, %v10222
          %vm11407 = vcmp.ge.f32.partialorder %v9319, %v10223
          %vm11408 = vcmp.ge.f32.partialorder %v9320, %v10224
          %vm11409 = vcmp.ge.f32.partialorder %v9321, %v10225
          %vm11410 = vcmp.ge.f32.partialorder %v9322, %v10226
          %vm11411 = vcmp.ge.f32.partialorder %v9323, %v10227
          %vm11412 = vcmp.ge.f32.partialorder %v9324, %v10228
          %vm11413 = vcmp.ge.f32.partialorder %v9325, %v10229
          %vm11414 = vcmp.ge.f32.partialorder %v9326, %v10230
          %vm11415 = vcmp.ge.f32.partialorder %v9327, %v10231
          %vm11416 = vcmp.ge.f32.partialorder %v9328, %v10232
          %vm11417 = vcmp.ge.f32.partialorder %v9329, %v10233
          %vm11418 = vcmp.ge.f32.partialorder %v9330, %v10234
          %vm11419 = vcmp.ge.f32.partialorder %v9331, %v10235
          %vm11420 = vcmp.ge.f32.partialorder %v9332, %v10236
          %vm11421 = vcmp.ge.f32.partialorder %v9333, %v10237
          %vm11422 = vcmp.ge.f32.partialorder %v9334, %v10238
          %vm11423 = vcmp.ge.f32.partialorder %v9335, %v10239
          %vm11424 = vcmp.ge.f32.partialorder %v9336, %v10240
          %vm11425 = vcmp.ge.f32.partialorder %v9337, %v10241
          %vm11426 = vcmp.ge.f32.partialorder %v9338, %v10242
          %vm11427 = vcmp.ge.f32.partialorder %v9339, %v10243
          %vm11428 = vcmp.ge.f32.partialorder %v9340, %v10244
          %v11429 = vsel %vm11365, %v9925, %v10837
          %v11430 = vsel %vm11366, %v9926, %v10838
          %v11431 = vsel %vm11367, %v9927, %v10839
          %v11432 = vsel %vm11368, %v9928, %v10840
          %v11433 = vsel %vm11369, %v9929, %v10841
          %v11434 = vsel %vm11370, %v9930, %v10842
          %v11435 = vsel %vm11371, %v9931, %v10843
          %v11436 = vsel %vm11372, %v9932, %v10844
          %v11437 = vsel %vm11373, %v9933, %v10845
          %v11438 = vsel %vm11374, %v9934, %v10846
          %v11439 = vsel %vm11375, %v9935, %v10847
          %v11440 = vsel %vm11376, %v9936, %v10848
          %v11441 = vsel %vm11377, %v9937, %v10849
          %v11442 = vsel %vm11378, %v9938, %v10850
          %v11443 = vsel %vm11379, %v9939, %v10851
          %v11444 = vsel %vm11380, %v9940, %v10852
          %v11445 = vsel %vm11381, %v9941, %v10853
          %v11446 = vsel %vm11382, %v9942, %v10854
          %v11447 = vsel %vm11383, %v9943, %v10855
          %v11448 = vsel %vm11384, %v9944, %v10856
          %v11449 = vsel %vm11385, %v9945, %v10857
          %v11450 = vsel %vm11386, %v9946, %v10858
          %v11451 = vsel %vm11387, %v9947, %v10859
          %v11452 = vsel %vm11388, %v9948, %v10860
          %v11453 = vsel %vm11389, %v9949, %v10861
          %v11454 = vsel %vm11390, %v9950, %v10862
          %v11455 = vsel %vm11391, %v9951, %v10863
          %v11456 = vsel %vm11392, %v9952, %v10864
          %v11457 = vsel %vm11393, %v9953, %v10865
          %v11458 = vsel %vm11394, %v9954, %v10866
          %v11459 = vsel %vm11395, %v9955, %v10867
          %v11460 = vsel %vm11396, %v9956, %v10868
          %v11461 = vsel %vm11397, %v9957, %v10869
          %v11462 = vsel %vm11398, %v9958, %v10870
          %v11463 = vsel %vm11399, %v9959, %v10871
          %v11464 = vsel %vm11400, %v9960, %v10872
          %v11465 = vsel %vm11401, %v9961, %v10873
          %v11466 = vsel %vm11402, %v9962, %v10874
          %v11467 = vsel %vm11403, %v9963, %v10875
          %v11468 = vsel %vm11404, %v9964, %v10876
          %v11469 = vsel %vm11405, %v9965, %v10877
          %v11470 = vsel %vm11406, %v9966, %v10878
          %v11471 = vsel %vm11407, %v9967, %v10879
          %v11472 = vsel %vm11408, %v9968, %v10880
          %v11473 = vsel %vm11409, %v9969, %v10881
          %v11474 = vsel %vm11410, %v9970, %v10882
          %v11475 = vsel %vm11411, %v9971, %v10883
          %v11476 = vsel %vm11412, %v9972, %v10884
          %v11477 = vsel %vm11413, %v9973, %v10885
          %v11478 = vsel %vm11414, %v9974, %v10886
          %v11479 = vsel %vm11415, %v9975, %v10887
          %v11480 = vsel %vm11416, %v9976, %v10888
          %v11481 = vsel %vm11417, %v9977, %v10889
          %v11482 = vsel %vm11418, %v9978, %v10890
          %v11483 = vsel %vm11419, %v9979, %v10891
          %v11484 = vsel %vm11420, %v9980, %v10892
          %v11485 = vsel %vm11421, %v9981, %v10893
          %v11486 = vsel %vm11422, %v9982, %v10894
          %v11487 = vsel %vm11423, %v9983, %v10895
          %v11488 = vsel %vm11424, %v9984, %v10896
          %v11489 = vsel %vm11425, %v9985, %v10897
          %v11490 = vsel %vm11426, %v9986, %v10898
          %v11491 = vsel %vm11427, %v9987, %v10899
          %v11492 = vsel %vm11428, %v9988, %v10900
          %v11493 = vlaneseq
          %v11494 = vshrl.u32 %v11493, 7
          %v11495 = vsub.s32 0, %v11494
          %v11496 = vrot.slane %v11429, %v11495
          %v11497 = vlaneseq
          %v11498 = vshrl.u32 %v11497, 7
          %v11499 = vsub.s32 0, %v11498
          %v11500 = vrot.slane %v11430, %v11499
          %v11501 = vlaneseq
          %v11502 = vshrl.u32 %v11501, 7
          %v11503 = vsub.s32 0, %v11502
          %v11504 = vrot.slane %v11431, %v11503
          %v11505 = vlaneseq
          %v11506 = vshrl.u32 %v11505, 7
          %v11507 = vsub.s32 0, %v11506
          %v11508 = vrot.slane %v11432, %v11507
          %v11509 = vlaneseq
          %v11510 = vshrl.u32 %v11509, 7
          %v11511 = vsub.s32 0, %v11510
          %v11512 = vrot.slane %v11433, %v11511
          %v11513 = vlaneseq
          %v11514 = vshrl.u32 %v11513, 7
          %v11515 = vsub.s32 0, %v11514
          %v11516 = vrot.slane %v11434, %v11515
          %v11517 = vlaneseq
          %v11518 = vshrl.u32 %v11517, 7
          %v11519 = vsub.s32 0, %v11518
          %v11520 = vrot.slane %v11435, %v11519
          %v11521 = vlaneseq
          %v11522 = vshrl.u32 %v11521, 7
          %v11523 = vsub.s32 0, %v11522
          %v11524 = vrot.slane %v11436, %v11523
          %v11525 = vlaneseq
          %v11526 = vshrl.u32 %v11525, 7
          %v11527 = vsub.s32 0, %v11526
          %v11528 = vrot.slane %v11437, %v11527
          %v11529 = vlaneseq
          %v11530 = vshrl.u32 %v11529, 7
          %v11531 = vsub.s32 0, %v11530
          %v11532 = vrot.slane %v11438, %v11531
          %v11533 = vlaneseq
          %v11534 = vshrl.u32 %v11533, 7
          %v11535 = vsub.s32 0, %v11534
          %v11536 = vrot.slane %v11439, %v11535
          %v11537 = vlaneseq
          %v11538 = vshrl.u32 %v11537, 7
          %v11539 = vsub.s32 0, %v11538
          %v11540 = vrot.slane %v11440, %v11539
          %v11541 = vlaneseq
          %v11542 = vshrl.u32 %v11541, 7
          %v11543 = vsub.s32 0, %v11542
          %v11544 = vrot.slane %v11441, %v11543
          %v11545 = vlaneseq
          %v11546 = vshrl.u32 %v11545, 7
          %v11547 = vsub.s32 0, %v11546
          %v11548 = vrot.slane %v11442, %v11547
          %v11549 = vlaneseq
          %v11550 = vshrl.u32 %v11549, 7
          %v11551 = vsub.s32 0, %v11550
          %v11552 = vrot.slane %v11443, %v11551
          %v11553 = vlaneseq
          %v11554 = vshrl.u32 %v11553, 7
          %v11555 = vsub.s32 0, %v11554
          %v11556 = vrot.slane %v11444, %v11555
          %v11557 = vlaneseq
          %v11558 = vshrl.u32 %v11557, 7
          %v11559 = vsub.s32 0, %v11558
          %v11560 = vrot.slane %v11445, %v11559
          %v11561 = vlaneseq
          %v11562 = vshrl.u32 %v11561, 7
          %v11563 = vsub.s32 0, %v11562
          %v11564 = vrot.slane %v11446, %v11563
          %v11565 = vlaneseq
          %v11566 = vshrl.u32 %v11565, 7
          %v11567 = vsub.s32 0, %v11566
          %v11568 = vrot.slane %v11447, %v11567
          %v11569 = vlaneseq
          %v11570 = vshrl.u32 %v11569, 7
          %v11571 = vsub.s32 0, %v11570
          %v11572 = vrot.slane %v11448, %v11571
          %v11573 = vlaneseq
          %v11574 = vshrl.u32 %v11573, 7
          %v11575 = vsub.s32 0, %v11574
          %v11576 = vrot.slane %v11449, %v11575
          %v11577 = vlaneseq
          %v11578 = vshrl.u32 %v11577, 7
          %v11579 = vsub.s32 0, %v11578
          %v11580 = vrot.slane %v11450, %v11579
          %v11581 = vlaneseq
          %v11582 = vshrl.u32 %v11581, 7
          %v11583 = vsub.s32 0, %v11582
          %v11584 = vrot.slane %v11451, %v11583
          %v11585 = vlaneseq
          %v11586 = vshrl.u32 %v11585, 7
          %v11587 = vsub.s32 0, %v11586
          %v11588 = vrot.slane %v11452, %v11587
          %v11589 = vlaneseq
          %v11590 = vshrl.u32 %v11589, 7
          %v11591 = vsub.s32 0, %v11590
          %v11592 = vrot.slane %v11453, %v11591
          %v11593 = vlaneseq
          %v11594 = vshrl.u32 %v11593, 7
          %v11595 = vsub.s32 0, %v11594
          %v11596 = vrot.slane %v11454, %v11595
          %v11597 = vlaneseq
          %v11598 = vshrl.u32 %v11597, 7
          %v11599 = vsub.s32 0, %v11598
          %v11600 = vrot.slane %v11455, %v11599
          %v11601 = vlaneseq
          %v11602 = vshrl.u32 %v11601, 7
          %v11603 = vsub.s32 0, %v11602
          %v11604 = vrot.slane %v11456, %v11603
          %v11605 = vlaneseq
          %v11606 = vshrl.u32 %v11605, 7
          %v11607 = vsub.s32 0, %v11606
          %v11608 = vrot.slane %v11457, %v11607
          %v11609 = vlaneseq
          %v11610 = vshrl.u32 %v11609, 7
          %v11611 = vsub.s32 0, %v11610
          %v11612 = vrot.slane %v11458, %v11611
          %v11613 = vlaneseq
          %v11614 = vshrl.u32 %v11613, 7
          %v11615 = vsub.s32 0, %v11614
          %v11616 = vrot.slane %v11459, %v11615
          %v11617 = vlaneseq
          %v11618 = vshrl.u32 %v11617, 7
          %v11619 = vsub.s32 0, %v11618
          %v11620 = vrot.slane %v11460, %v11619
          %v11621 = vlaneseq
          %v11622 = vshrl.u32 %v11621, 7
          %v11623 = vsub.s32 0, %v11622
          %v11624 = vrot.slane %v11461, %v11623
          %v11625 = vlaneseq
          %v11626 = vshrl.u32 %v11625, 7
          %v11627 = vsub.s32 0, %v11626
          %v11628 = vrot.slane %v11462, %v11627
          %v11629 = vlaneseq
          %v11630 = vshrl.u32 %v11629, 7
          %v11631 = vsub.s32 0, %v11630
          %v11632 = vrot.slane %v11463, %v11631
          %v11633 = vlaneseq
          %v11634 = vshrl.u32 %v11633, 7
          %v11635 = vsub.s32 0, %v11634
          %v11636 = vrot.slane %v11464, %v11635
          %v11637 = vlaneseq
          %v11638 = vshrl.u32 %v11637, 7
          %v11639 = vsub.s32 0, %v11638
          %v11640 = vrot.slane %v11465, %v11639
          %v11641 = vlaneseq
          %v11642 = vshrl.u32 %v11641, 7
          %v11643 = vsub.s32 0, %v11642
          %v11644 = vrot.slane %v11466, %v11643
          %v11645 = vlaneseq
          %v11646 = vshrl.u32 %v11645, 7
          %v11647 = vsub.s32 0, %v11646
          %v11648 = vrot.slane %v11467, %v11647
          %v11649 = vlaneseq
          %v11650 = vshrl.u32 %v11649, 7
          %v11651 = vsub.s32 0, %v11650
          %v11652 = vrot.slane %v11468, %v11651
          %v11653 = vlaneseq
          %v11654 = vshrl.u32 %v11653, 7
          %v11655 = vsub.s32 0, %v11654
          %v11656 = vrot.slane %v11469, %v11655
          %v11657 = vlaneseq
          %v11658 = vshrl.u32 %v11657, 7
          %v11659 = vsub.s32 0, %v11658
          %v11660 = vrot.slane %v11470, %v11659
          %v11661 = vlaneseq
          %v11662 = vshrl.u32 %v11661, 7
          %v11663 = vsub.s32 0, %v11662
          %v11664 = vrot.slane %v11471, %v11663
          %v11665 = vlaneseq
          %v11666 = vshrl.u32 %v11665, 7
          %v11667 = vsub.s32 0, %v11666
          %v11668 = vrot.slane %v11472, %v11667
          %v11669 = vlaneseq
          %v11670 = vshrl.u32 %v11669, 7
          %v11671 = vsub.s32 0, %v11670
          %v11672 = vrot.slane %v11473, %v11671
          %v11673 = vlaneseq
          %v11674 = vshrl.u32 %v11673, 7
          %v11675 = vsub.s32 0, %v11674
          %v11676 = vrot.slane %v11474, %v11675
          %v11677 = vlaneseq
          %v11678 = vshrl.u32 %v11677, 7
          %v11679 = vsub.s32 0, %v11678
          %v11680 = vrot.slane %v11475, %v11679
          %v11681 = vlaneseq
          %v11682 = vshrl.u32 %v11681, 7
          %v11683 = vsub.s32 0, %v11682
          %v11684 = vrot.slane %v11476, %v11683
          %v11685 = vlaneseq
          %v11686 = vshrl.u32 %v11685, 7
          %v11687 = vsub.s32 0, %v11686
          %v11688 = vrot.slane %v11477, %v11687
          %v11689 = vlaneseq
          %v11690 = vshrl.u32 %v11689, 7
          %v11691 = vsub.s32 0, %v11690
          %v11692 = vrot.slane %v11478, %v11691
          %v11693 = vlaneseq
          %v11694 = vshrl.u32 %v11693, 7
          %v11695 = vsub.s32 0, %v11694
          %v11696 = vrot.slane %v11479, %v11695
          %v11697 = vlaneseq
          %v11698 = vshrl.u32 %v11697, 7
          %v11699 = vsub.s32 0, %v11698
          %v11700 = vrot.slane %v11480, %v11699
          %v11701 = vlaneseq
          %v11702 = vshrl.u32 %v11701, 7
          %v11703 = vsub.s32 0, %v11702
          %v11704 = vrot.slane %v11481, %v11703
          %v11705 = vlaneseq
          %v11706 = vshrl.u32 %v11705, 7
          %v11707 = vsub.s32 0, %v11706
          %v11708 = vrot.slane %v11482, %v11707
          %v11709 = vlaneseq
          %v11710 = vshrl.u32 %v11709, 7
          %v11711 = vsub.s32 0, %v11710
          %v11712 = vrot.slane %v11483, %v11711
          %v11713 = vlaneseq
          %v11714 = vshrl.u32 %v11713, 7
          %v11715 = vsub.s32 0, %v11714
          %v11716 = vrot.slane %v11484, %v11715
          %v11717 = vlaneseq
          %v11718 = vshrl.u32 %v11717, 7
          %v11719 = vsub.s32 0, %v11718
          %v11720 = vrot.slane %v11485, %v11719
          %v11721 = vlaneseq
          %v11722 = vshrl.u32 %v11721, 7
          %v11723 = vsub.s32 0, %v11722
          %v11724 = vrot.slane %v11486, %v11723
          %v11725 = vlaneseq
          %v11726 = vshrl.u32 %v11725, 7
          %v11727 = vsub.s32 0, %v11726
          %v11728 = vrot.slane %v11487, %v11727
          %v11729 = vlaneseq
          %v11730 = vshrl.u32 %v11729, 7
          %v11731 = vsub.s32 0, %v11730
          %v11732 = vrot.slane %v11488, %v11731
          %v11733 = vlaneseq
          %v11734 = vshrl.u32 %v11733, 7
          %v11735 = vsub.s32 0, %v11734
          %v11736 = vrot.slane %v11489, %v11735
          %v11737 = vlaneseq
          %v11738 = vshrl.u32 %v11737, 7
          %v11739 = vsub.s32 0, %v11738
          %v11740 = vrot.slane %v11490, %v11739
          %v11741 = vlaneseq
          %v11742 = vshrl.u32 %v11741, 7
          %v11743 = vsub.s32 0, %v11742
          %v11744 = vrot.slane %v11491, %v11743
          %v11745 = vlaneseq
          %v11746 = vshrl.u32 %v11745, 7
          %v11747 = vsub.s32 0, %v11746
          %v11748 = vrot.slane %v11492, %v11747
          %v11749 = vsel %vm11285, %v11500, %v11496
          %v11750 = vsel %vm11287, %v11504, %v11749
          %v11751 = vsel %vm11289, %v11508, %v11750
          %v11752 = vsel %vm11291, %v11512, %v11751
          %v11753 = vsel %vm11293, %v11516, %v11752
          %v11754 = vsel %vm11295, %v11520, %v11753
          %v11755 = vsel %vm11297, %v11524, %v11754
          %v11756 = vsel %vm11285, %v11532, %v11528
          %v11757 = vsel %vm11287, %v11536, %v11756
          %v11758 = vsel %vm11289, %v11540, %v11757
          %v11759 = vsel %vm11291, %v11544, %v11758
          %v11760 = vsel %vm11293, %v11548, %v11759
          %v11761 = vsel %vm11295, %v11552, %v11760
          %v11762 = vsel %vm11297, %v11556, %v11761
          %v11763 = vsel %vm11285, %v11564, %v11560
          %v11764 = vsel %vm11287, %v11568, %v11763
          %v11765 = vsel %vm11289, %v11572, %v11764
          %v11766 = vsel %vm11291, %v11576, %v11765
          %v11767 = vsel %vm11293, %v11580, %v11766
          %v11768 = vsel %vm11295, %v11584, %v11767
          %v11769 = vsel %vm11297, %v11588, %v11768
          %v11770 = vsel %vm11285, %v11596, %v11592
          %v11771 = vsel %vm11287, %v11600, %v11770
          %v11772 = vsel %vm11289, %v11604, %v11771
          %v11773 = vsel %vm11291, %v11608, %v11772
          %v11774 = vsel %vm11293, %v11612, %v11773
          %v11775 = vsel %vm11295, %v11616, %v11774
          %v11776 = vsel %vm11297, %v11620, %v11775
          %v11777 = vsel %vm11285, %v11628, %v11624
          %v11778 = vsel %vm11287, %v11632, %v11777
          %v11779 = vsel %vm11289, %v11636, %v11778
          %v11780 = vsel %vm11291, %v11640, %v11779
          %v11781 = vsel %vm11293, %v11644, %v11780
          %v11782 = vsel %vm11295, %v11648, %v11781
          %v11783 = vsel %vm11297, %v11652, %v11782
          %v11784 = vsel %vm11285, %v11660, %v11656
          %v11785 = vsel %vm11287, %v11664, %v11784
          %v11786 = vsel %vm11289, %v11668, %v11785
          %v11787 = vsel %vm11291, %v11672, %v11786
          %v11788 = vsel %vm11293, %v11676, %v11787
          %v11789 = vsel %vm11295, %v11680, %v11788
          %v11790 = vsel %vm11297, %v11684, %v11789
          %v11791 = vsel %vm11285, %v11692, %v11688
          %v11792 = vsel %vm11287, %v11696, %v11791
          %v11793 = vsel %vm11289, %v11700, %v11792
          %v11794 = vsel %vm11291, %v11704, %v11793
          %v11795 = vsel %vm11293, %v11708, %v11794
          %v11796 = vsel %vm11295, %v11712, %v11795
          %v11797 = vsel %vm11297, %v11716, %v11796
          %v11798 = vsel %vm11285, %v11724, %v11720
          %v11799 = vsel %vm11287, %v11728, %v11798
          %v11800 = vsel %vm11289, %v11732, %v11799
          %v11801 = vsel %vm11291, %v11736, %v11800
          %v11802 = vsel %vm11293, %v11740, %v11801
          %v11803 = vsel %vm11295, %v11744, %v11802
          %v11804 = vsel %vm11297, %v11748, %v11803
          %11805 = vst.msk [vmem:[%s265] sm:$0xff] %vm11356, %v11755
          %11806 = vst.msk [vmem:[%s265 + $0x8] sm:$0xff] %vm11356, %v11762
          %11807 = vst.msk [vmem:[%s265 + $0x10] sm:$0xff] %vm11356, %v11769
          %11808 = vst.msk [vmem:[%s265 + $0x18] sm:$0xff] %vm11356, %v11776
          %11809 = vst.msk [vmem:[%s265 + $0x20] sm:$0xff] %vm11356, %v11783
          %11810 = vst.msk [vmem:[%s265 + $0x28] sm:$0xff] %vm11356, %v11790
          %11811 = vst.msk [vmem:[%s265 + $0x30] sm:$0xff] %vm11356, %v11797
          %11812 = vst.msk [vmem:[%s265 + $0x38] sm:$0xff] %vm11356, %v11804
        $region56: #{tpu_custom_call.1} parent=35 // pred_fallthru
          _
        %s11813 = sand.u32 %s135, 1
        %s11814 = scalar_lea.sflag [#allocation6], %s11813
        %s11815 = sand.u32 %s135, 1
        %s11816 = smul.addr %s11815, 64
        %s11817 = scalar_lea.vmem [#allocation7], %s11816
        %s11818 = sand.u32 %s161, 1
        %s11819 = scalar_lea.sflag [#allocation9], %s11818
        %s11820 = sand.u32 %s161, 1
        %s11821 = smul.addr %s11820, 64
        %s11822 = scalar_lea.vmem [#allocation8], %s11821
        // Predicated region
        $region57: #{tpu_custom_call.1} parent=35 // pred_check
          %p11823 = pneg %p145
        $region58: #{tpu_custom_call.1} parent=35 // pred_check_branch
          %11825 = sbr.rel (%p11823) target = $region60
        $region59: #{tpu_custom_call.1} parent=35 // pred_region
          %s11827 = ssub.s32 1024, 1024
          %11828 = vsyncadd %s11814, %s11827
          %s11829 = smul.addr %s30, 8
          %s11830 = smul.addr %s11829, 128
          %s11831 = scalar_lea.hbm %s4, %s11830
          %s11832 = sshll.u32 %s11817, 4
          %s11833 = int_to_ptr.vmem [resolvable:$true] %s11832
          %11838 = dma.vmem_to_hbm [thread:$0]  %s11833, 1024, %s11831, %s11814, 128, 128, 8
        $region60: #{tpu_custom_call.1} parent=35 // pred_fallthru
          _
        // Predicated region
        $region61: #{tpu_custom_call.1} parent=35 // pred_check
          %p11839 = pneg %p171
        $region62: #{tpu_custom_call.1} parent=35 // pred_check_branch
          %11841 = sbr.rel (%p11839) target = $region64
        $region63: #{tpu_custom_call.1} parent=35 // pred_region
          %s11843 = ssub.s32 1024, 1024
          %11844 = vsyncadd %s11819, %s11843
          %s11845 = smul.addr %s30, 8
          %s11846 = smul.addr %s11845, 128
          %s11847 = scalar_lea.hbm %s5, %s11846
          %s11848 = sshll.u32 %s11822, 4
          %s11849 = int_to_ptr.vmem [resolvable:$true] %s11848
          %11854 = dma.vmem_to_hbm [thread:$0]  %s11849, 1024, %s11847, %s11819, 128, 128, 8
        $region64: #{tpu_custom_call.1} parent=35 // pred_fallthru
          _
      $region36: #{tpu_custom_call.1} parent=5 // pred_fallthru
        _
      %p11855 = scmp.le.s32.totalorder 2, %s21
      // Predicated region
      $region65: #{tpu_custom_call.1} parent=5 // pred_check
        %p11856 = pneg %p11855
      $region66: #{tpu_custom_call.1} parent=5 // pred_check_branch
        %11858 = sbr.rel (%p11856) target = $region68
      $region67: #{tpu_custom_call.1} parent=5 // pred_region
        %s11859 = ssub.s32 %s21, 2
        // Predicated region
        $region69: #{tpu_custom_call.1} parent=67 // pred_check
          %p11860 = pneg %p151
        $region70: #{tpu_custom_call.1} parent=67 // pred_check_branch
          %11862 = sbr.rel (%p11860) target = $region72
        $region71: #{tpu_custom_call.1} parent=67 // pred_region
          %s11863 = sand.u32 %s136, 1
          %s11864 = scalar_lea.sflag [#allocation6], %s11863
          %s11865 = sand.u32 %s136, 1
          %s11866 = smul.addr %s11865, 64
          %s11867 = scalar_lea.vmem [#allocation7], %s11866
          %11868 = dma.done %s11864, 1024
        $region72: #{tpu_custom_call.1} parent=67 // pred_fallthru
          _
        // Predicated region
        $region73: #{tpu_custom_call.1} parent=67 // pred_check
          %p11869 = pneg %p177
        $region74: #{tpu_custom_call.1} parent=67 // pred_check_branch
          %11871 = sbr.rel (%p11869) target = $region76
        $region75: #{tpu_custom_call.1} parent=67 // pred_region
          %s11872 = sand.u32 %s162, 1
          %s11873 = scalar_lea.sflag [#allocation9], %s11872
          %s11874 = sand.u32 %s162, 1
          %s11875 = smul.addr %s11874, 64
          %s11876 = scalar_lea.vmem [#allocation8], %s11875
          %11877 = dma.done %s11873, 1024
        $region76: #{tpu_custom_call.1} parent=67 // pred_fallthru
          _
      $region68: #{tpu_custom_call.1} parent=5 // pred_fallthru
        _
    $region6: #{tpu_custom_call.1} parent=1 // loop_footer
      %s25 = sadd.s32 1, %s21
    $region7: #{tpu_custom_call.1} parent=1 // loop_footer_branch
      %20 = sbr.rel target = $region3
    $region8: #{tpu_custom_call.1} parent=1 // loop_exit
      _
    %11878 = vsyncpa [#allocation5], 1
    %s11879 = scalar_lea.sflag [#allocation5], 1
    %11880 = vsyncpa %s11879, 1
    %11881 = vsyncpa [#allocation6], 1
    %s11882 = scalar_lea.sflag [#allocation6], 1
    %11883 = vsyncpa %s11882, 1
    %11884 = vsyncpa [#allocation9], 1
    %s11885 = scalar_lea.sflag [#allocation9], 1
    %11886 = vsyncpa %s11885, 1

</llo_original>
